<compile_context>
chip_gen: v5e
topology: v5e:2x2
jax: 0.10.0
libtpu: 0.0.40
codegen_flags: <defaults>
</compile_context>

<pallas_src>
import functools

import numpy as np
import jax
import jax.numpy as jnp
from jax.experimental import pallas as pl
from jax.experimental.pallas import tpu as pltpu

BN_EPS = 1e-5  # PyTorch BatchNorm default eps


# ----------------------------------------------------------------------------
# Pallas kernel: fused chain of  y = act(bn(y @ w [+ extra @ w_extra] + b))
# layer_cfg is a static tuple of (has_extra, use_bn, act) per layer.
# All operands are whole-array resident in VMEM (shapes are tiny at this scale;
# total weights per stack << 1 MiB).
# ----------------------------------------------------------------------------
def _fused_stack_kernel(num_extra, layer_cfg, *refs):
    it = iter(refs)
    y = next(it)[...]                                   # primary input (f32)
    extras = [next(it)[...] for _ in range(num_extra)]  # side inputs (f32)
    for has_extra, use_bn, act in layer_cfg:
        w = next(it)[...]
        # bf16 operands -> MXU-native matmul, f32 accumulation/epilogue.
        y32 = jnp.dot(y.astype(jnp.bfloat16), w.astype(jnp.bfloat16),
                      preferred_element_type=jnp.float32)
        if has_extra:
            we = next(it)[...]
            e = extras.pop(0)
            y32 = y32 + jnp.dot(e.astype(jnp.bfloat16), we.astype(jnp.bfloat16),
                                preferred_element_type=jnp.float32)
        y = y32 + next(it)[...]                         # bias [1, dout]
        if use_bn:
            g = next(it)[...]
            be = next(it)[...]
            # One-pass batch stats + single affine (one VPU traversal fewer).
            mean = jnp.mean(y, axis=0, keepdims=True)
            var = jnp.mean(y * y, axis=0, keepdims=True) - mean * mean
            scale = g * jax.lax.rsqrt(var + BN_EPS)
            y = y * scale + (be - mean * scale)
        if act == "relu":
            y = jnp.maximum(y, 0.0)
        elif act == "sigmoid":
            y = jax.nn.sigmoid(y)
    out_ref = next(it)
    out_ref[...] = y


def fused_stack(x, extras, layers, layer_cfg):
    """x: [rows, din]; extras: list of [rows, d_extra]; layers: list of dicts
    with keys w, b, optional w_extra, gamma, beta matching layer_cfg."""
    args = [x] + list(extras)
    for lyr, (has_extra, use_bn, _act) in zip(layers, layer_cfg):
        args.append(lyr["w"])
        if has_extra:
            args.append(lyr["w_extra"])
        args.append(lyr["b"].reshape(1, -1))
        if use_bn:
            args.append(lyr["gamma"].reshape(1, -1))
            args.append(lyr["beta"].reshape(1, -1))
    rows = x.shape[0]
    dout = layers[-1]["w"].shape[1]
    kernel = functools.partial(_fused_stack_kernel, len(extras), tuple(layer_cfg))
    # TODO(synk): at large batch on v7x, add a parallel row grid (2 TCs) with a
    # split BN-stats pass; gridless whole-array residency is fine at this scale.
    return pl.pallas_call(
        kernel,
        out_shape=jax.ShapeDtypeStruct((rows, dout), jnp.float32),
        in_specs=[pl.BlockSpec(memory_space=pltpu.MemorySpace.VMEM)] * len(args),
        out_specs=pl.BlockSpec(memory_space=pltpu.MemorySpace.VMEM),
        compiler_params=pltpu.CompilerParams(vmem_limit_bytes=32 * 1024 * 1024),
    )(*args)


# ----------------------------------------------------------------------------
# Glue: im2col patch extraction, 2x2 max-pool (plain JAX).
# ----------------------------------------------------------------------------
def _im2col(x_nhwc, kh, kw):
    # TODO(synk): could be folded into the conv kernel (accumulate over (kh,kw)
    # offsets in VMEM) to avoid the HBM patch matrix; marginal at this batch.
    n, h, w, c = x_nhwc.shape
    ho, wo = h - kh + 1, w - kw + 1
    cols = []
    for i in range(kh):
        for j in range(kw):
            cols.append(x_nhwc[:, i:i + ho, j:j + wo, :])
    patches = jnp.stack(cols, axis=3)  # [N, Ho, Wo, KH*KW, C]
    return patches.reshape(n * ho * wo, kh * kw * c), (n, ho, wo)


def conv_bn_relu(x_nhwc, cp, k):
    """Valid conv (padding=0, stride=1) + BatchNorm2d(train) + ReLU, fused."""
    patches, (n, ho, wo) = _im2col(x_nhwc, k, k)
    cout = cp["w"].shape[1]
    y = fused_stack(patches, [], [cp], [(False, True, "relu")])
    return y.reshape(n, ho, wo, cout)


def maxpool2x2(x_nhwc):
    # TODO(synk): max-pool kept as plain-JAX glue (tiny reduction, not hot path).
    n, h, w, c = x_nhwc.shape
    return x_nhwc.reshape(n, h // 2, 2, w // 2, 2, c).max(axis=(2, 4))


# ----------------------------------------------------------------------------
# cVAE forward
# ----------------------------------------------------------------------------
_ENC_TAIL_CFG = ((False, True, "relu"),   # enc_mlp L0: 576 -> 256
                 (False, True, "relu"),   # enc_mlp L1: 256 -> 128
                 (True, True, "relu"),    # fused head hidden: (128|+16) -> 128
                 (False, False, None))    # fused head final:  128 -> 2*nhid

_DEC_CFG = ((True, True, "relu"),         # (nhid|+ncond) -> 64
            (False, True, "relu"),        # 64 -> 128
            (False, True, "relu"),        # 128 -> 256
            (False, False, "sigmoid"))    # 256 -> 896 (padded from c*w*h)


def encoder_forward(pp, x_nchw, y_emb, nhid):
    x = jnp.transpose(x_nchw, (0, 2, 3, 1))  # NCHW -> NHWC for conv path
    x = conv_bn_relu(x, pp["conv1"], 5)      # (N, 24, 24, 16)
    x = conv_bn_relu(x, pp["conv2"], 5)      # (N, 20, 20, 32)
    x = maxpool2x2(x)                        # (N, 10, 10, 32)
    x = conv_bn_relu(x, pp["conv3"], 3)      # (N, 8, 8, 64)
    x = conv_bn_relu(x, pp["conv4"], 3)      # (N, 6, 6, 64)
    x = maxpool2x2(x)                        # (N, 3, 3, 64)
    n = x.shape[0]
    # NHWC flatten; the PyTorch NCHW-flatten permutation is folded into the
    # first enc_mlp weight's rows, so no transpose is needed here.
    feat = x.reshape(n, -1)
    ml = fused_stack(feat, [y_emb], pp["enc_tail"], _ENC_TAIL_CFG)  # (N, 2*nhid)
    return ml[:, :nhid], ml[:, nhid:]


def decoder_forward(pp, z, y_emb, shape):
    c, w, h = shape  # matches torch Decoder's `c, w, h = shape`
    x = fused_stack(z, [y_emb], pp["dec_stack"], _DEC_CFG)  # (N, 896) padded
    x = x[:, :c * w * h]  # drop lane padding added for unmasked stores
    return x.reshape(-1, c, w, h)


def cvae_forward(pp, x, y_labels, eps, shape, nhid):
    y_emb = jnp.take(pp["embed"], y_labels, axis=0)
    mean, logvar = encoder_forward(pp, x, y_emb, nhid)
    sigma = 0.5 * jnp.exp(logvar)  # faithfully reproduces torch code (not exp(0.5*lv))
    z = mean + eps * sigma
    recon = decoder_forward(pp, z, y_emb, shape)
    return recon, mean, logvar


# ----------------------------------------------------------------------------
# Deterministic parameter construction (synthetic weights, PyTorch shapes)
# ----------------------------------------------------------------------------
def init_params(key, shape=(1, 28, 28), nclass=10, nhid=16, ncond=16):
    c, h, w = shape
    ww = ((w - 8) // 2 - 4) // 2
    hh = ((h - 8) // 2 - 4) // 2
    keys = iter(jax.random.split(key, 64))

    def dense(din, dout):
        return {"w": 0.05 * jax.random.normal(next(keys), (din, dout), jnp.float32),
                "b": 0.05 * jax.random.normal(next(keys), (dout,), jnp.float32)}

    def bn(d):
        return {"gamma": jnp.ones((d,), jnp.float32),
                "beta": jnp.zeros((d,), jnp.float32)}

    def conv(cin, cout, k):
        return {"w": 0.05 * jax.random.normal(next(keys), (cout, cin, k, k),
                                              jnp.float32),
                "b": 0.05 * jax.random.normal(next(keys), (cout,), jnp.float32),
                **bn(cout)}

    return {
        "embed": 0.5 * jax.random.normal(next(keys), (nclass, ncond), jnp.float32),
        "conv1": conv(c, 16, 5),
        "conv2": conv(16, 32, 5),
        "conv3": conv(32, 64, 3),
        "conv4": conv(64, 64, 3),
        "enc_mlp": [{**dense(ww * hh * 64, 256), **bn(256)},
                    {**dense(256, 128), **bn(128)}],
        "mean_mlp": [{**dense(128 + ncond, 64), **bn(64)},
                     dense(64, nhid)],
        "logvar_mlp": [{**dense(128 + ncond, 64), **bn(64)},
                       dense(64, nhid)],
        "dec_mlp": [{**dense(nhid + ncond, 64), **bn(64)},
                    {**dense(64, 128), **bn(128)},
                    {**dense(128, 256), **bn(256)},
                    dense(256, c * w * h)],
    }


def preprocess_params(params, shape, nhid=16, ncond=16):
    """One-time layout rework of PyTorch-style params for the fused kernels."""
    c, h, w = shape
    ww = ((w - 8) // 2 - 4) // 2
    hh = ((h - 8) // 2 - 4) // 2

    def conv_as_mat(cp):
        w_oihw = cp["w"]  # [Cout, Cin, KH, KW]
        cout, cin, kh, kw = w_oihw.shape
        return {"w": jnp.transpose(w_oihw, (2, 3, 1, 0)).reshape(kh * kw * cin, cout),
                "b": cp["b"], "gamma": cp["gamma"], "beta": cp["beta"]}

    # Fold PyTorch NCHW-flatten (C,H,W order) into the first enc_mlp weight's
    # rows so the forward pass can flatten NHWC directly.
    perm = np.arange(64 * hh * ww).reshape(64, hh, ww).transpose(1, 2, 0).reshape(-1)
    enc0 = dict(params["enc_mlp"][0])
    enc0["w"] = params["enc_mlp"][0]["w"][perm]

    # Fuse mean / logvar heads: shared hidden layer concatenated column-wise
    # (-> 128-lane output), final layer block-diagonal (-> 2*nhid output).
    m0, m1 = params["mean_mlp"]
    l0, l1 = params["logvar_mlp"]
    head_hidden = {
        "w": jnp.concatenate([m0["w"][:128], l0["w"][:128]], axis=1),        # feat part
        "w_extra": jnp.concatenate([m0["w"][128:], l0["w"][128:]], axis=1),  # y_emb part
        "b": jnp.concatenate([m0["b"], l0["b"]]),
        "gamma": jnp.concatenate([m0["gamma"], l0["gamma"]]),
        "beta": jnp.concatenate([m0["beta"], l0["beta"]]),
    }
    zm = jnp.zeros_like(m1["w"])
    zl = jnp.zeros_like(l1["w"])
    head_final = {
        "w": jnp.concatenate([jnp.concatenate([m1["w"], zm], axis=1),
                              jnp.concatenate([zl, l1["w"]], axis=1)], axis=0),
        "b": jnp.concatenate([m1["b"], l1["b"]]),
    }

    # Decoder: split first weight into z / y_emb parts (no concat needed) and
    # pad the final layer's output width up to a multiple of 128 lanes.
    d0 = params["dec_mlp"][0]
    dec0 = {"w": d0["w"][:nhid], "w_extra": d0["w"][nhid:], "b": d0["b"],
            "gamma": d0["gamma"], "beta": d0["beta"]}
    dlast = params["dec_mlp"][-1]
    dout = dlast["w"].shape[1]
    pad = (-dout) % 128
    dec_last = {"w": jnp.pad(dlast["w"], ((0, 0), (0, pad))),
                "b": jnp.pad(dlast["b"], (0, pad))}

    return {
        "embed": params["embed"],
        "conv1": conv_as_mat(params["conv1"]),
        "conv2": conv_as_mat(params["conv2"]),
        "conv3": conv_as_mat(params["conv3"]),
        "conv4": conv_as_mat(params["conv4"]),
        "enc_tail": [enc0, params["enc_mlp"][1], head_hidden, head_final],
        "dec_stack": [dec0, params["dec_mlp"][1], params["dec_mlp"][2], dec_last],
    }


if __name__ == "__main__":
    key = jax.random.PRNGKey(0)
    kp, kx, ky, ke = jax.random.split(key, 4)

    shape = (1, 28, 28)   # (C, H, W) — MNIST-like, smallest natural fit
    batch = 2
    nclass = 10
    nhid, ncond = 16, 16

    params = init_params(kp, shape, nclass, nhid, ncond)
    pp = preprocess_params(params, shape, nhid, ncond)   # one-time, outside jit

    x = jax.random.normal(kx, (batch,) + shape, jnp.float32)       # NCHW
    y = jax.random.randint(ky, (batch,), 0, nclass, jnp.int32)     # class ids
    eps = jax.random.normal(ke, (batch, nhid), jnp.float32)        # reparam noise

    fwd = jax.jit(functools.partial(cvae_forward, shape=shape, nhid=nhid))
    recon, mean, logvar = fwd(pp, x, y, eps)
    jax.block_until_ready((recon, mean, logvar))

    assert recon.shape == (batch,) + shape
    assert mean.shape == (batch, nhid) and logvar.shape == (batch, nhid)
    print("KERNEL_OK")
</pallas_src>

<mosaic_0001>
module attributes {stable_mosaic.version = 11 : i64} {
  func.func @_fused_stack_kernel(%arg0: memref<1152x25xf32, #tpu.memory_space<vmem>>, %arg1: memref<25x16xf32, #tpu.memory_space<vmem>>, %arg2: memref<1x16xf32, #tpu.memory_space<vmem>>, %arg3: memref<1x16xf32, #tpu.memory_space<vmem>>, %arg4: memref<1x16xf32, #tpu.memory_space<vmem>>, %arg5: memref<1152x16xf32, #tpu.memory_space<vmem>>) attributes {dimension_semantics = [], scalar_prefetch = 0 : i64, scratch_operands = 0 : i64, tpu.core_type = #tpu.core_type<tc>} {
    %c0 = arith.constant 0 : index
    %c0_0 = arith.constant 0 : index
    %0 = vector.load %arg0[%c0, %c0_0] : memref<1152x25xf32, #tpu.memory_space<vmem>>, vector<1152x25xf32>
    %c0_1 = arith.constant 0 : index
    %c0_2 = arith.constant 0 : index
    %1 = vector.load %arg1[%c0_1, %c0_2] : memref<25x16xf32, #tpu.memory_space<vmem>>, vector<25x16xf32>
    %2 = arith.truncf %0 : vector<1152x25xf32> to vector<1152x25xbf16>
    %3 = arith.truncf %1 : vector<25x16xf32> to vector<25x16xbf16>
    %cst = arith.constant dense<0.000000e+00> : vector<1152x16xf32>
    %4 = tpu.matmul %2, %3, %cst {dimension_numbers = #tpu.dot_dimension_numbers<[1], [0], [0], [1], [0, 0, 1, 1], [], []>} : vector<1152x25xbf16>, vector<25x16xbf16>, vector<1152x16xf32> -> vector<1152x16xf32>
    %c0_3 = arith.constant 0 : index
    %c0_4 = arith.constant 0 : index
    %5 = vector.load %arg2[%c0_3, %c0_4] : memref<1x16xf32, #tpu.memory_space<vmem>>, vector<1x16xf32>
    %6 = vector.broadcast %5 : vector<1x16xf32> to vector<1152x16xf32>
    %7 = arith.addf %4, %6 : vector<1152x16xf32>
    %c0_5 = arith.constant 0 : index
    %c0_6 = arith.constant 0 : index
    %8 = vector.load %arg3[%c0_5, %c0_6] : memref<1x16xf32, #tpu.memory_space<vmem>>, vector<1x16xf32>
    %c0_7 = arith.constant 0 : index
    %c0_8 = arith.constant 0 : index
    %9 = vector.load %arg4[%c0_7, %c0_8] : memref<1x16xf32, #tpu.memory_space<vmem>>, vector<1x16xf32>
    %cst_9 = arith.constant dense<0.000000e+00> : vector<16xf32>
    %10 = vector.multi_reduction <add>, %7, %cst_9 [0] : vector<1152x16xf32> to vector<16xf32>
    %11 = vector.shape_cast %10 : vector<16xf32> to vector<1x16xf32>
    %cst_10 = arith.constant 1.152000e+03 : f32
    %12 = vector.broadcast %cst_10 : f32 to vector<1x16xf32>
    %13 = arith.divf %11, %12 : vector<1x16xf32>
    %14 = arith.mulf %7, %7 : vector<1152x16xf32>
    %cst_11 = arith.constant dense<0.000000e+00> : vector<16xf32>
    %15 = vector.multi_reduction <add>, %14, %cst_11 [0] : vector<1152x16xf32> to vector<16xf32>
    %16 = vector.shape_cast %15 : vector<16xf32> to vector<1x16xf32>
    %cst_12 = arith.constant 1.152000e+03 : f32
    %17 = vector.broadcast %cst_12 : f32 to vector<1x16xf32>
    %18 = arith.divf %16, %17 : vector<1x16xf32>
    %19 = arith.mulf %13, %13 : vector<1x16xf32>
    %20 = arith.subf %18, %19 : vector<1x16xf32>
    %cst_13 = arith.constant 9.99999974E-6 : f32
    %21 = vector.broadcast %cst_13 : f32 to vector<1x16xf32>
    %22 = arith.addf %20, %21 : vector<1x16xf32>
    %23 = math.rsqrt %22 : vector<1x16xf32>
    %24 = arith.mulf %8, %23 : vector<1x16xf32>
    %25 = vector.broadcast %24 : vector<1x16xf32> to vector<1152x16xf32>
    %26 = arith.mulf %7, %25 : vector<1152x16xf32>
    %27 = arith.mulf %13, %24 : vector<1x16xf32>
    %28 = arith.subf %9, %27 : vector<1x16xf32>
    %29 = vector.broadcast %28 : vector<1x16xf32> to vector<1152x16xf32>
    %30 = arith.addf %26, %29 : vector<1152x16xf32>
    %cst_14 = arith.constant 0.000000e+00 : f32
    %31 = vector.broadcast %cst_14 : f32 to vector<1152x16xf32>
    %32 = arith.maximumf %30, %31 : vector<1152x16xf32>
    %c0_15 = arith.constant 0 : index
    %c0_16 = arith.constant 0 : index
    %33 = vector.load %arg5[%c0_15, %c0_16] : memref<1152x16xf32, #tpu.memory_space<vmem>>, vector<1152x16xf32>
    tpu.vector_store %arg5[%c0_15, %c0_16], %32 {strides = array<i32>} : memref<1152x16xf32, #tpu.memory_space<vmem>>, vector<1152x16xf32>,
    return
  }
}

module attributes {stable_mosaic.version = 11 : i64} {
  func.func @_fused_stack_kernel(%arg0: memref<800x400xf32, #tpu.memory_space<vmem>>, %arg1: memref<400x32xf32, #tpu.memory_space<vmem>>, %arg2: memref<1x32xf32, #tpu.memory_space<vmem>>, %arg3: memref<1x32xf32, #tpu.memory_space<vmem>>, %arg4: memref<1x32xf32, #tpu.memory_space<vmem>>, %arg5: memref<800x32xf32, #tpu.memory_space<vmem>>) attributes {dimension_semantics = [], scalar_prefetch = 0 : i64, scratch_operands = 0 : i64, tpu.core_type = #tpu.core_type<tc>} {
    %c0 = arith.constant 0 : index
    %c0_0 = arith.constant 0 : index
    %0 = vector.load %arg0[%c0, %c0_0] : memref<800x400xf32, #tpu.memory_space<vmem>>, vector<800x400xf32>
    %c0_1 = arith.constant 0 : index
    %c0_2 = arith.constant 0 : index
    %1 = vector.load %arg1[%c0_1, %c0_2] : memref<400x32xf32, #tpu.memory_space<vmem>>, vector<400x32xf32>
    %2 = arith.truncf %0 : vector<800x400xf32> to vector<800x400xbf16>
    %3 = arith.truncf %1 : vector<400x32xf32> to vector<400x32xbf16>
    %cst = arith.constant dense<0.000000e+00> : vector<800x32xf32>
    %4 = tpu.matmul %2, %3, %cst {dimension_numbers = #tpu.dot_dimension_numbers<[1], [0], [0], [1], [0, 0, 1, 1], [], []>} : vector<800x400xbf16>, vector<400x32xbf16>, vector<800x32xf32> -> vector<800x32xf32>
    %c0_3 = arith.constant 0 : index
    %c0_4 = arith.constant 0 : index
    %5 = vector.load %arg2[%c0_3, %c0_4] : memref<1x32xf32, #tpu.memory_space<vmem>>, vector<1x32xf32>
    %6 = vector.broadcast %5 : vector<1x32xf32> to vector<800x32xf32>
    %7 = arith.addf %4, %6 : vector<800x32xf32>
    %c0_5 = arith.constant 0 : index
    %c0_6 = arith.constant 0 : index
    %8 = vector.load %arg3[%c0_5, %c0_6] : memref<1x32xf32, #tpu.memory_space<vmem>>, vector<1x32xf32>
    %c0_7 = arith.constant 0 : index
    %c0_8 = arith.constant 0 : index
    %9 = vector.load %arg4[%c0_7, %c0_8] : memref<1x32xf32, #tpu.memory_space<vmem>>, vector<1x32xf32>
    %cst_9 = arith.constant dense<0.000000e+00> : vector<32xf32>
    %10 = vector.multi_reduction <add>, %7, %cst_9 [0] : vector<800x32xf32> to vector<32xf32>
    %11 = vector.shape_cast %10 : vector<32xf32> to vector<1x32xf32>
    %cst_10 = arith.constant 8.000000e+02 : f32
    %12 = vector.broadcast %cst_10 : f32 to vector<1x32xf32>
    %13 = arith.divf %11, %12 : vector<1x32xf32>
    %14 = arith.mulf %7, %7 : vector<800x32xf32>
    %cst_11 = arith.constant dense<0.000000e+00> : vector<32xf32>
    %15 = vector.multi_reduction <add>, %14, %cst_11 [0] : vector<800x32xf32> to vector<32xf32>
    %16 = vector.shape_cast %15 : vector<32xf32> to vector<1x32xf32>
    %cst_12 = arith.constant 8.000000e+02 : f32
    %17 = vector.broadcast %cst_12 : f32 to vector<1x32xf32>
    %18 = arith.divf %16, %17 : vector<1x32xf32>
    %19 = arith.mulf %13, %13 : vector<1x32xf32>
    %20 = arith.subf %18, %19 : vector<1x32xf32>
    %cst_13 = arith.constant 9.99999974E-6 : f32
    %21 = vector.broadcast %cst_13 : f32 to vector<1x32xf32>
    %22 = arith.addf %20, %21 : vector<1x32xf32>
    %23 = math.rsqrt %22 : vector<1x32xf32>
    %24 = arith.mulf %8, %23 : vector<1x32xf32>
    %25 = vector.broadcast %24 : vector<1x32xf32> to vector<800x32xf32>
    %26 = arith.mulf %7, %25 : vector<800x32xf32>
    %27 = arith.mulf %13, %24 : vector<1x32xf32>
    %28 = arith.subf %9, %27 : vector<1x32xf32>
    %29 = vector.broadcast %28 : vector<1x32xf32> to vector<800x32xf32>
    %30 = arith.addf %26, %29 : vector<800x32xf32>
    %cst_14 = arith.constant 0.000000e+00 : f32
    %31 = vector.broadcast %cst_14 : f32 to vector<800x32xf32>
    %32 = arith.maximumf %30, %31 : vector<800x32xf32>
    %c0_15 = arith.constant 0 : index
    %c0_16 = arith.constant 0 : index
    %33 = vector.load %arg5[%c0_15, %c0_16] : memref<800x32xf32, #tpu.memory_space<vmem>>, vector<800x32xf32>
    tpu.vector_store %arg5[%c0_15, %c0_16], %32 {strides = array<i32>} : memref<800x32xf32, #tpu.memory_space<vmem>>, vector<800x32xf32>,
    return
  }
}

module attributes {stable_mosaic.version = 11 : i64} {
  func.func @_fused_stack_kernel(%arg0: memref<128x288xf32, #tpu.memory_space<vmem>>, %arg1: memref<288x64xf32, #tpu.memory_space<vmem>>, %arg2: memref<1x64xf32, #tpu.memory_space<vmem>>, %arg3: memref<1x64xf32, #tpu.memory_space<vmem>>, %arg4: memref<1x64xf32, #tpu.memory_space<vmem>>, %arg5: memref<128x64xf32, #tpu.memory_space<vmem>>) attributes {dimension_semantics = [], scalar_prefetch = 0 : i64, scratch_operands = 0 : i64, tpu.core_type = #tpu.core_type<tc>} {
    %c0 = arith.constant 0 : index
    %c0_0 = arith.constant 0 : index
    %0 = vector.load %arg0[%c0, %c0_0] : memref<128x288xf32, #tpu.memory_space<vmem>>, vector<128x288xf32>
    %c0_1 = arith.constant 0 : index
    %c0_2 = arith.constant 0 : index
    %1 = vector.load %arg1[%c0_1, %c0_2] : memref<288x64xf32, #tpu.memory_space<vmem>>, vector<288x64xf32>
    %2 = arith.truncf %0 : vector<128x288xf32> to vector<128x288xbf16>
    %3 = arith.truncf %1 : vector<288x64xf32> to vector<288x64xbf16>
    %cst = arith.constant dense<0.000000e+00> : vector<128x64xf32>
    %4 = tpu.matmul %2, %3, %cst {dimension_numbers = #tpu.dot_dimension_numbers<[1], [0], [0], [1], [0, 0, 1, 1], [], []>} : vector<128x288xbf16>, vector<288x64xbf16>, vector<128x64xf32> -> vector<128x64xf32>
    %c0_3 = arith.constant 0 : index
    %c0_4 = arith.constant 0 : index
    %5 = vector.load %arg2[%c0_3, %c0_4] : memref<1x64xf32, #tpu.memory_space<vmem>>, vector<1x64xf32>
    %6 = vector.broadcast %5 : vector<1x64xf32> to vector<128x64xf32>
    %7 = arith.addf %4, %6 : vector<128x64xf32>
    %c0_5 = arith.constant 0 : index
    %c0_6 = arith.constant 0 : index
    %8 = vector.load %arg3[%c0_5, %c0_6] : memref<1x64xf32, #tpu.memory_space<vmem>>, vector<1x64xf32>
    %c0_7 = arith.constant 0 : index
    %c0_8 = arith.constant 0 : index
    %9 = vector.load %arg4[%c0_7, %c0_8] : memref<1x64xf32, #tpu.memory_space<vmem>>, vector<1x64xf32>
    %cst_9 = arith.constant dense<0.000000e+00> : vector<64xf32>
    %10 = vector.multi_reduction <add>, %7, %cst_9 [0] : vector<128x64xf32> to vector<64xf32>
    %11 = vector.shape_cast %10 : vector<64xf32> to vector<1x64xf32>
    %cst_10 = arith.constant 1.280000e+02 : f32
    %12 = vector.broadcast %cst_10 : f32 to vector<1x64xf32>
    %13 = arith.divf %11, %12 : vector<1x64xf32>
    %14 = arith.mulf %7, %7 : vector<128x64xf32>
    %cst_11 = arith.constant dense<0.000000e+00> : vector<64xf32>
    %15 = vector.multi_reduction <add>, %14, %cst_11 [0] : vector<128x64xf32> to vector<64xf32>
    %16 = vector.shape_cast %15 : vector<64xf32> to vector<1x64xf32>
    %cst_12 = arith.constant 1.280000e+02 : f32
    %17 = vector.broadcast %cst_12 : f32 to vector<1x64xf32>
    %18 = arith.divf %16, %17 : vector<1x64xf32>
    %19 = arith.mulf %13, %13 : vector<1x64xf32>
    %20 = arith.subf %18, %19 : vector<1x64xf32>
    %cst_13 = arith.constant 9.99999974E-6 : f32
    %21 = vector.broadcast %cst_13 : f32 to vector<1x64xf32>
    %22 = arith.addf %20, %21 : vector<1x64xf32>
    %23 = math.rsqrt %22 : vector<1x64xf32>
    %24 = arith.mulf %8, %23 : vector<1x64xf32>
    %25 = vector.broadcast %24 : vector<1x64xf32> to vector<128x64xf32>
    %26 = arith.mulf %7, %25 : vector<128x64xf32>
    %27 = arith.mulf %13, %24 : vector<1x64xf32>
    %28 = arith.subf %9, %27 : vector<1x64xf32>
    %29 = vector.broadcast %28 : vector<1x64xf32> to vector<128x64xf32>
    %30 = arith.addf %26, %29 : vector<128x64xf32>
    %cst_14 = arith.constant 0.000000e+00 : f32
    %31 = vector.broadcast %cst_14 : f32 to vector<128x64xf32>
    %32 = arith.maximumf %30, %31 : vector<128x64xf32>
    %c0_15 = arith.constant 0 : index
    %c0_16 = arith.constant 0 : index
    %33 = vector.load %arg5[%c0_15, %c0_16] : memref<128x64xf32, #tpu.memory_space<vmem>>, vector<128x64xf32>
    tpu.vector_store %arg5[%c0_15, %c0_16], %32 {strides = array<i32>} : memref<128x64xf32, #tpu.memory_space<vmem>>, vector<128x64xf32>,
    return
  }
}

module attributes {stable_mosaic.version = 11 : i64} {
  func.func @_fused_stack_kernel(%arg0: memref<72x576xf32, #tpu.memory_space<vmem>>, %arg1: memref<576x64xf32, #tpu.memory_space<vmem>>, %arg2: memref<1x64xf32, #tpu.memory_space<vmem>>, %arg3: memref<1x64xf32, #tpu.memory_space<vmem>>, %arg4: memref<1x64xf32, #tpu.memory_space<vmem>>, %arg5: memref<72x64xf32, #tpu.memory_space<vmem>>) attributes {dimension_semantics = [], scalar_prefetch = 0 : i64, scratch_operands = 0 : i64, tpu.core_type = #tpu.core_type<tc>} {
    %c0 = arith.constant 0 : index
    %c0_0 = arith.constant 0 : index
    %0 = vector.load %arg0[%c0, %c0_0] : memref<72x576xf32, #tpu.memory_space<vmem>>, vector<72x576xf32>
    %c0_1 = arith.constant 0 : index
    %c0_2 = arith.constant 0 : index
    %1 = vector.load %arg1[%c0_1, %c0_2] : memref<576x64xf32, #tpu.memory_space<vmem>>, vector<576x64xf32>
    %2 = arith.truncf %0 : vector<72x576xf32> to vector<72x576xbf16>
    %3 = arith.truncf %1 : vector<576x64xf32> to vector<576x64xbf16>
    %cst = arith.constant dense<0.000000e+00> : vector<72x64xf32>
    %4 = tpu.matmul %2, %3, %cst {dimension_numbers = #tpu.dot_dimension_numbers<[1], [0], [0], [1], [0, 0, 1, 1], [], []>} : vector<72x576xbf16>, vector<576x64xbf16>, vector<72x64xf32> -> vector<72x64xf32>
    %c0_3 = arith.constant 0 : index
    %c0_4 = arith.constant 0 : index
    %5 = vector.load %arg2[%c0_3, %c0_4] : memref<1x64xf32, #tpu.memory_space<vmem>>, vector<1x64xf32>
    %6 = vector.broadcast %5 : vector<1x64xf32> to vector<72x64xf32>
    %7 = arith.addf %4, %6 : vector<72x64xf32>
    %c0_5 = arith.constant 0 : index
    %c0_6 = arith.constant 0 : index
    %8 = vector.load %arg3[%c0_5, %c0_6] : memref<1x64xf32, #tpu.memory_space<vmem>>, vector<1x64xf32>
    %c0_7 = arith.constant 0 : index
    %c0_8 = arith.constant 0 : index
    %9 = vector.load %arg4[%c0_7, %c0_8] : memref<1x64xf32, #tpu.memory_space<vmem>>, vector<1x64xf32>
    %cst_9 = arith.constant dense<0.000000e+00> : vector<64xf32>
    %10 = vector.multi_reduction <add>, %7, %cst_9 [0] : vector<72x64xf32> to vector<64xf32>
    %11 = vector.shape_cast %10 : vector<64xf32> to vector<1x64xf32>
    %cst_10 = arith.constant 7.200000e+01 : f32
    %12 = vector.broadcast %cst_10 : f32 to vector<1x64xf32>
    %13 = arith.divf %11, %12 : vector<1x64xf32>
    %14 = arith.mulf %7, %7 : vector<72x64xf32>
    %cst_11 = arith.constant dense<0.000000e+00> : vector<64xf32>
    %15 = vector.multi_reduction <add>, %14, %cst_11 [0] : vector<72x64xf32> to vector<64xf32>
    %16 = vector.shape_cast %15 : vector<64xf32> to vector<1x64xf32>
    %cst_12 = arith.constant 7.200000e+01 : f32
    %17 = vector.broadcast %cst_12 : f32 to vector<1x64xf32>
    %18 = arith.divf %16, %17 : vector<1x64xf32>
    %19 = arith.mulf %13, %13 : vector<1x64xf32>
    %20 = arith.subf %18, %19 : vector<1x64xf32>
    %cst_13 = arith.constant 9.99999974E-6 : f32
    %21 = vector.broadcast %cst_13 : f32 to vector<1x64xf32>
    %22 = arith.addf %20, %21 : vector<1x64xf32>
    %23 = math.rsqrt %22 : vector<1x64xf32>
    %24 = arith.mulf %8, %23 : vector<1x64xf32>
    %25 = vector.broadcast %24 : vector<1x64xf32> to vector<72x64xf32>
    %26 = arith.mulf %7, %25 : vector<72x64xf32>
    %27 = arith.mulf %13, %24 : vector<1x64xf32>
    %28 = arith.subf %9, %27 : vector<1x64xf32>
    %29 = vector.broadcast %28 : vector<1x64xf32> to vector<72x64xf32>
    %30 = arith.addf %26, %29 : vector<72x64xf32>
    %cst_14 = arith.constant 0.000000e+00 : f32
    %31 = vector.broadcast %cst_14 : f32 to vector<72x64xf32>
    %32 = arith.maximumf %30, %31 : vector<72x64xf32>
    %c0_15 = arith.constant 0 : index
    %c0_16 = arith.constant 0 : index
    %33 = vector.load %arg5[%c0_15, %c0_16] : memref<72x64xf32, #tpu.memory_space<vmem>>, vector<72x64xf32>
    tpu.vector_store %arg5[%c0_15, %c0_16], %32 {strides = array<i32>} : memref<72x64xf32, #tpu.memory_space<vmem>>, vector<72x64xf32>,
    return
  }
}

module attributes {stable_mosaic.version = 11 : i64} {
  func.func @_fused_stack_kernel(%arg0: memref<2x16xf32, #tpu.memory_space<vmem>>, %arg1: memref<2x16xf32, #tpu.memory_space<vmem>>, %arg2: memref<16x64xf32, #tpu.memory_space<vmem>>, %arg3: memref<16x64xf32, #tpu.memory_space<vmem>>, %arg4: memref<1x64xf32, #tpu.memory_space<vmem>>, %arg5: memref<1x64xf32, #tpu.memory_space<vmem>>, %arg6: memref<1x64xf32, #tpu.memory_space<vmem>>, %arg7: memref<64x128xf32, #tpu.memory_space<vmem>>, %arg8: memref<1x128xf32, #tpu.memory_space<vmem>>, %arg9: memref<1x128xf32, #tpu.memory_space<vmem>>, %arg10: memref<1x128xf32, #tpu.memory_space<vmem>>, %arg11: memref<128x256xf32, #tpu.memory_space<vmem>>, %arg12: memref<1x256xf32, #tpu.memory_space<vmem>>, %arg13: memref<1x256xf32, #tpu.memory_space<vmem>>, %arg14: memref<1x256xf32, #tpu.memory_space<vmem>>, %arg15: memref<256x896xf32, #tpu.memory_space<vmem>>, %arg16: memref<1x896xf32, #tpu.memory_space<vmem>>, %arg17: memref<2x896xf32, #tpu.memory_space<vmem>>) attributes {dimension_semantics = [], scalar_prefetch = 0 : i64, scratch_operands = 0 : i64, tpu.core_type = #tpu.core_type<tc>} {
    %c0 = arith.constant 0 : index
    %c0_0 = arith.constant 0 : index
    %0 = vector.load %arg0[%c0, %c0_0] : memref<2x16xf32, #tpu.memory_space<vmem>>, vector<2x16xf32>
    %c0_1 = arith.constant 0 : index
    %c0_2 = arith.constant 0 : index
    %1 = vector.load %arg1[%c0_1, %c0_2] : memref<2x16xf32, #tpu.memory_space<vmem>>, vector<2x16xf32>
    %c0_3 = arith.constant 0 : index
    %c0_4 = arith.constant 0 : index
    %2 = vector.load %arg2[%c0_3, %c0_4] : memref<16x64xf32, #tpu.memory_space<vmem>>, vector<16x64xf32>
    %3 = arith.truncf %0 : vector<2x16xf32> to vector<2x16xbf16>
    %4 = arith.truncf %2 : vector<16x64xf32> to vector<16x64xbf16>
    %cst = arith.constant dense<0.000000e+00> : vector<2x64xf32>
    %5 = tpu.matmul %3, %4, %cst {dimension_numbers = #tpu.dot_dimension_numbers<[1], [0], [0], [1], [0, 0, 1, 1], [], []>} : vector<2x16xbf16>, vector<16x64xbf16>, vector<2x64xf32> -> vector<2x64xf32>
    %c0_5 = arith.constant 0 : index
    %c0_6 = arith.constant 0 : index
    %6 = vector.load %arg3[%c0_5, %c0_6] : memref<16x64xf32, #tpu.memory_space<vmem>>, vector<16x64xf32>
    %7 = arith.truncf %1 : vector<2x16xf32> to vector<2x16xbf16>
    %8 = arith.truncf %6 : vector<16x64xf32> to vector<16x64xbf16>
    %cst_7 = arith.constant dense<0.000000e+00> : vector<2x64xf32>
    %9 = tpu.matmul %7, %8, %cst_7 {dimension_numbers = #tpu.dot_dimension_numbers<[1], [0], [0], [1], [0, 0, 1, 1], [], []>} : vector<2x16xbf16>, vector<16x64xbf16>, vector<2x64xf32> -> vector<2x64xf32>
    %10 = arith.addf %5, %9 : vector<2x64xf32>
    %c0_8 = arith.constant 0 : index
    %c0_9 = arith.constant 0 : index
    %11 = vector.load %arg4[%c0_8, %c0_9] : memref<1x64xf32, #tpu.memory_space<vmem>>, vector<1x64xf32>
    %12 = vector.broadcast %11 : vector<1x64xf32> to vector<2x64xf32>
    %13 = arith.addf %10, %12 : vector<2x64xf32>
    %c0_10 = arith.constant 0 : index
    %c0_11 = arith.constant 0 : index
    %14 = vector.load %arg5[%c0_10, %c0_11] : memref<1x64xf32, #tpu.memory_space<vmem>>, vector<1x64xf32>
    %c0_12 = arith.constant 0 : index
    %c0_13 = arith.constant 0 : index
    %15 = vector.load %arg6[%c0_12, %c0_13] : memref<1x64xf32, #tpu.memory_space<vmem>>, vector<1x64xf32>
    %cst_14 = arith.constant dense<0.000000e+00> : vector<64xf32>
    %16 = vector.multi_reduction <add>, %13, %cst_14 [0] : vector<2x64xf32> to vector<64xf32>
    %17 = vector.shape_cast %16 : vector<64xf32> to vector<1x64xf32>
    %cst_15 = arith.constant 2.000000e+00 : f32
    %18 = vector.broadcast %cst_15 : f32 to vector<1x64xf32>
    %19 = arith.divf %17, %18 : vector<1x64xf32>
    %20 = arith.mulf %13, %13 : vector<2x64xf32>
    %cst_16 = arith.constant dense<0.000000e+00> : vector<64xf32>
    %21 = vector.multi_reduction <add>, %20, %cst_16 [0] : vector<2x64xf32> to vector<64xf32>
    %22 = vector.shape_cast %21 : vector<64xf32> to vector<1x64xf32>
    %cst_17 = arith.constant 2.000000e+00 : f32
    %23 = vector.broadcast %cst_17 : f32 to vector<1x64xf32>
    %24 = arith.divf %22, %23 : vector<1x64xf32>
    %25 = arith.mulf %19, %19 : vector<1x64xf32>
    %26 = arith.subf %24, %25 : vector<1x64xf32>
    %cst_18 = arith.constant 9.99999974E-6 : f32
    %27 = vector.broadcast %cst_18 : f32 to vector<1x64xf32>
    %28 = arith.addf %26, %27 : vector<1x64xf32>
    %29 = math.rsqrt %28 : vector<1x64xf32>
    %30 = arith.mulf %14, %29 : vector<1x64xf32>
    %31 = vector.broadcast %30 : vector<1x64xf32> to vector<2x64xf32>
    %32 = arith.mulf %13, %31 : vector<2x64xf32>
    %33 = arith.mulf %19, %30 : vector<1x64xf32>
    %34 = arith.subf %15, %33 : vector<1x64xf32>
    %35 = vector.broadcast %34 : vector<1x64xf32> to vector<2x64xf32>
    %36 = arith.addf %32, %35 : vector<2x64xf32>
    %cst_19 = arith.constant 0.000000e+00 : f32
    %37 = vector.broadcast %cst_19 : f32 to vector<2x64xf32>
    %38 = arith.maximumf %36, %37 : vector<2x64xf32>
    %c0_20 = arith.constant 0 : index
    %c0_21 = arith.constant 0 : index
    %39 = vector.load %arg7[%c0_20, %c0_21] : memref<64x128xf32, #tpu.memory_space<vmem>>, vector<64x128xf32>
    %40 = arith.truncf %38 : vector<2x64xf32> to vector<2x64xbf16>
    %41 = arith.truncf %39 : vector<64x128xf32> to vector<64x128xbf16>
    %cst_22 = arith.constant dense<0.000000e+00> : vector<2x128xf32>
    %42 = tpu.matmul %40, %41, %cst_22 {dimension_numbers = #tpu.dot_dimension_numbers<[1], [0], [0], [1], [0, 0, 1, 1], [], []>} : vector<2x64xbf16>, vector<64x128xbf16>, vector<2x128xf32> -> vector<2x128xf32>
    %c0_23 = arith.constant 0 : index
    %c0_24 = arith.constant 0 : index
    %43 = vector.load %arg8[%c0_23, %c0_24] : memref<1x128xf32, #tpu.memory_space<vmem>>, vector<1x128xf32>
    %44 = vector.broadcast %43 : vector<1x128xf32> to vector<2x128xf32>
    %45 = arith.addf %42, %44 : vector<2x128xf32>
    %c0_25 = arith.constant 0 : index
    %c0_26 = arith.constant 0 : index
    %46 = vector.load %arg9[%c0_25, %c0_26] : memref<1x128xf32, #tpu.memory_space<vmem>>, vector<1x128xf32>
    %c0_27 = arith.constant 0 : index
    %c0_28 = arith.constant 0 : index
    %47 = vector.load %arg10[%c0_27, %c0_28] : memref<1x128xf32, #tpu.memory_space<vmem>>, vector<1x128xf32>
    %cst_29 = arith.constant dense<0.000000e+00> : vector<128xf32>
    %48 = vector.multi_reduction <add>, %45, %cst_29 [0] : vector<2x128xf32> to vector<128xf32>
    %49 = vector.shape_cast %48 : vector<128xf32> to vector<1x128xf32>
    %cst_30 = arith.constant 2.000000e+00 : f32
    %50 = vector.broadcast %cst_30 : f32 to vector<1x128xf32>
    %51 = arith.divf %49, %50 : vector<1x128xf32>
    %52 = arith.mulf %45, %45 : vector<2x128xf32>
    %cst_31 = arith.constant dense<0.000000e+00> : vector<128xf32>
    %53 = vector.multi_reduction <add>, %52, %cst_31 [0] : vector<2x128xf32> to vector<128xf32>
    %54 = vector.shape_cast %53 : vector<128xf32> to vector<1x128xf32>
    %cst_32 = arith.constant 2.000000e+00 : f32
    %55 = vector.broadcast %cst_32 : f32 to vector<1x128xf32>
    %56 = arith.divf %54, %55 : vector<1x128xf32>
    %57 = arith.mulf %51, %51 : vector<1x128xf32>
    %58 = arith.subf %56, %57 : vector<1x128xf32>
    %cst_33 = arith.constant 9.99999974E-6 : f32
    %59 = vector.broadcast %cst_33 : f32 to vector<1x128xf32>
    %60 = arith.addf %58, %59 : vector<1x128xf32>
    %61 = math.rsqrt %60 : vector<1x128xf32>
    %62 = arith.mulf %46, %61 : vector<1x128xf32>
    %63 = vector.broadcast %62 : vector<1x128xf32> to vector<2x128xf32>
    %64 = arith.mulf %45, %63 : vector<2x128xf32>
    %65 = arith.mulf %51, %62 : vector<1x128xf32>
    %66 = arith.subf %47, %65 : vector<1x128xf32>
    %67 = vector.broadcast %66 : vector<1x128xf32> to vector<2x128xf32>
    %68 = arith.addf %64, %67 : vector<2x128xf32>
    %cst_34 = arith.constant 0.000000e+00 : f32
    %69 = vector.broadcast %cst_34 : f32 to vector<2x128xf32>
    %70 = arith.maximumf %68, %69 : vector<2x128xf32>
    %c0_35 = arith.constant 0 : index
    %c0_36 = arith.constant 0 : index
    %71 = vector.load %arg11[%c0_35, %c0_36] : memref<128x256xf32, #tpu.memory_space<vmem>>, vector<128x256xf32>
    %72 = arith.truncf %70 : vector<2x128xf32> to vector<2x128xbf16>
    %73 = arith.truncf %71 : vector<128x256xf32> to vector<128x256xbf16>
    %cst_37 = arith.constant dense<0.000000e+00> : vector<2x256xf32>
    %74 = tpu.matmul %72, %73, %cst_37 {dimension_numbers = #tpu.dot_dimension_numbers<[1], [0], [0], [1], [0, 0, 1, 1], [], []>} : vector<2x128xbf16>, vector<128x256xbf16>, vector<2x256xf32> -> vector<2x256xf32>
    %c0_38 = arith.constant 0 : index
    %c0_39 = arith.constant 0 : index
    %75 = vector.load %arg12[%c0_38, %c0_39] : memref<1x256xf32, #tpu.memory_space<vmem>>, vector<1x256xf32>
    %76 = vector.broadcast %75 : vector<1x256xf32> to vector<2x256xf32>
    %77 = arith.addf %74, %76 : vector<2x256xf32>
    %c0_40 = arith.constant 0 : index
    %c0_41 = arith.constant 0 : index
    %78 = vector.load %arg13[%c0_40, %c0_41] : memref<1x256xf32, #tpu.memory_space<vmem>>, vector<1x256xf32>
    %c0_42 = arith.constant 0 : index
    %c0_43 = arith.constant 0 : index
    %79 = vector.load %arg14[%c0_42, %c0_43] : memref<1x256xf32, #tpu.memory_space<vmem>>, vector<1x256xf32>
    %cst_44 = arith.constant dense<0.000000e+00> : vector<256xf32>
    %80 = vector.multi_reduction <add>, %77, %cst_44 [0] : vector<2x256xf32> to vector<256xf32>
    %81 = vector.shape_cast %80 : vector<256xf32> to vector<1x256xf32>
    %cst_45 = arith.constant 2.000000e+00 : f32
    %82 = vector.broadcast %cst_45 : f32 to vector<1x256xf32>
    %83 = arith.divf %81, %82 : vector<1x256xf32>
    %84 = arith.mulf %77, %77 : vector<2x256xf32>
    %cst_46 = arith.constant dense<0.000000e+00> : vector<256xf32>
    %85 = vector.multi_reduction <add>, %84, %cst_46 [0] : vector<2x256xf32> to vector<256xf32>
    %86 = vector.shape_cast %85 : vector<256xf32> to vector<1x256xf32>
    %cst_47 = arith.constant 2.000000e+00 : f32
    %87 = vector.broadcast %cst_47 : f32 to vector<1x256xf32>
    %88 = arith.divf %86, %87 : vector<1x256xf32>
    %89 = arith.mulf %83, %83 : vector<1x256xf32>
    %90 = arith.subf %88, %89 : vector<1x256xf32>
    %cst_48 = arith.constant 9.99999974E-6 : f32
    %91 = vector.broadcast %cst_48 : f32 to vector<1x256xf32>
    %92 = arith.addf %90, %91 : vector<1x256xf32>
    %93 = math.rsqrt %92 : vector<1x256xf32>
    %94 = arith.mulf %78, %93 : vector<1x256xf32>
    %95 = vector.broadcast %94 : vector<1x256xf32> to vector<2x256xf32>
    %96 = arith.mulf %77, %95 : vector<2x256xf32>
    %97 = arith.mulf %83, %94 : vector<1x256xf32>
    %98 = arith.subf %79, %97 : vector<1x256xf32>
    %99 = vector.broadcast %98 : vector<1x256xf32> to vector<2x256xf32>
    %100 = arith.addf %96, %99 : vector<2x256xf32>
    %cst_49 = arith.constant 0.000000e+00 : f32
    %101 = vector.broadcast %cst_49 : f32 to vector<2x256xf32>
    %102 = arith.maximumf %100, %101 : vector<2x256xf32>
    %c0_50 = arith.constant 0 : index
    %c0_51 = arith.constant 0 : index
    %103 = vector.load %arg15[%c0_50, %c0_51] : memref<256x896xf32, #tpu.memory_space<vmem>>, vector<256x896xf32>
    %104 = arith.truncf %102 : vector<2x256xf32> to vector<2x256xbf16>
    %105 = arith.truncf %103 : vector<256x896xf32> to vector<256x896xbf16>
    %cst_52 = arith.constant dense<0.000000e+00> : vector<2x896xf32>
    %106 = tpu.matmul %104, %105, %cst_52 {dimension_numbers = #tpu.dot_dimension_numbers<[1], [0], [0], [1], [0, 0, 1, 1], [], []>} : vector<2x256xbf16>, vector<256x896xbf16>, vector<2x896xf32> -> vector<2x896xf32>
    %c0_53 = arith.constant 0 : index
    %c0_54 = arith.constant 0 : index
    %107 = vector.load %arg16[%c0_53, %c0_54] : memref<1x896xf32, #tpu.memory_space<vmem>>, vector<1x896xf32>
    %108 = vector.broadcast %107 : vector<1x896xf32> to vector<2x896xf32>
    %109 = arith.addf %106, %108 : vector<2x896xf32>
    %110 = arith.negf %109 : vector<2x896xf32>
    %111 = math.exp %110 : vector<2x896xf32>
    %cst_55 = arith.constant 1.000000e+00 : f32
    %112 = vector.broadcast %cst_55 : f32 to vector<2x896xf32>
    %113 = arith.addf %112, %111 : vector<2x896xf32>
    %114 = arith.divf %112, %113 : vector<2x896xf32>
    %c0_56 = arith.constant 0 : index
    %c0_57 = arith.constant 0 : index
    %115 = vector.load %arg17[%c0_56, %c0_57] : memref<2x896xf32, #tpu.memory_space<vmem>>, vector<2x896xf32>
    tpu.vector_store %arg17[%c0_56, %c0_57], %114 {strides = array<i32>} : memref<2x896xf32, #tpu.memory_space<vmem>>, vector<2x896xf32>,
    return
  }
}

module attributes {stable_mosaic.version = 11 : i64} {
  func.func @_fused_stack_kernel(%arg0: memref<2x576xf32, #tpu.memory_space<vmem>>, %arg1: memref<2x16xf32, #tpu.memory_space<vmem>>, %arg2: memref<576x256xf32, #tpu.memory_space<vmem>>, %arg3: memref<1x256xf32, #tpu.memory_space<vmem>>, %arg4: memref<1x256xf32, #tpu.memory_space<vmem>>, %arg5: memref<1x256xf32, #tpu.memory_space<vmem>>, %arg6: memref<256x128xf32, #tpu.memory_space<vmem>>, %arg7: memref<1x128xf32, #tpu.memory_space<vmem>>, %arg8: memref<1x128xf32, #tpu.memory_space<vmem>>, %arg9: memref<1x128xf32, #tpu.memory_space<vmem>>, %arg10: memref<128x128xf32, #tpu.memory_space<vmem>>, %arg11: memref<16x128xf32, #tpu.memory_space<vmem>>, %arg12: memref<1x128xf32, #tpu.memory_space<vmem>>, %arg13: memref<1x128xf32, #tpu.memory_space<vmem>>, %arg14: memref<1x128xf32, #tpu.memory_space<vmem>>, %arg15: memref<128x32xf32, #tpu.memory_space<vmem>>, %arg16: memref<1x32xf32, #tpu.memory_space<vmem>>, %arg17: memref<2x32xf32, #tpu.memory_space<vmem>>) attributes {dimension_semantics = [], scalar_prefetch = 0 : i64, scratch_operands = 0 : i64, tpu.core_type = #tpu.core_type<tc>} {
    %c0 = arith.constant 0 : index
    %c0_0 = arith.constant 0 : index
    %0 = vector.load %arg0[%c0, %c0_0] : memref<2x576xf32, #tpu.memory_space<vmem>>, vector<2x576xf32>
    %c0_1 = arith.constant 0 : index
    %c0_2 = arith.constant 0 : index
    %1 = vector.load %arg1[%c0_1, %c0_2] : memref<2x16xf32, #tpu.memory_space<vmem>>, vector<2x16xf32>
    %c0_3 = arith.constant 0 : index
    %c0_4 = arith.constant 0 : index
    %2 = vector.load %arg2[%c0_3, %c0_4] : memref<576x256xf32, #tpu.memory_space<vmem>>, vector<576x256xf32>
    %3 = arith.truncf %0 : vector<2x576xf32> to vector<2x576xbf16>
    %4 = arith.truncf %2 : vector<576x256xf32> to vector<576x256xbf16>
    %cst = arith.constant dense<0.000000e+00> : vector<2x256xf32>
    %5 = tpu.matmul %3, %4, %cst {dimension_numbers = #tpu.dot_dimension_numbers<[1], [0], [0], [1], [0, 0, 1, 1], [], []>} : vector<2x576xbf16>, vector<576x256xbf16>, vector<2x256xf32> -> vector<2x256xf32>
    %c0_5 = arith.constant 0 : index
    %c0_6 = arith.constant 0 : index
    %6 = vector.load %arg3[%c0_5, %c0_6] : memref<1x256xf32, #tpu.memory_space<vmem>>, vector<1x256xf32>
    %7 = vector.broadcast %6 : vector<1x256xf32> to vector<2x256xf32>
    %8 = arith.addf %5, %7 : vector<2x256xf32>
    %c0_7 = arith.constant 0 : index
    %c0_8 = arith.constant 0 : index
    %9 = vector.load %arg4[%c0_7, %c0_8] : memref<1x256xf32, #tpu.memory_space<vmem>>, vector<1x256xf32>
    %c0_9 = arith.constant 0 : index
    %c0_10 = arith.constant 0 : index
    %10 = vector.load %arg5[%c0_9, %c0_10] : memref<1x256xf32, #tpu.memory_space<vmem>>, vector<1x256xf32>
    %cst_11 = arith.constant dense<0.000000e+00> : vector<256xf32>
    %11 = vector.multi_reduction <add>, %8, %cst_11 [0] : vector<2x256xf32> to vector<256xf32>
    %12 = vector.shape_cast %11 : vector<256xf32> to vector<1x256xf32>
    %cst_12 = arith.constant 2.000000e+00 : f32
    %13 = vector.broadcast %cst_12 : f32 to vector<1x256xf32>
    %14 = arith.divf %12, %13 : vector<1x256xf32>
    %15 = arith.mulf %8, %8 : vector<2x256xf32>
    %cst_13 = arith.constant dense<0.000000e+00> : vector<256xf32>
    %16 = vector.multi_reduction <add>, %15, %cst_13 [0] : vector<2x256xf32> to vector<256xf32>
    %17 = vector.shape_cast %16 : vector<256xf32> to vector<1x256xf32>
    %cst_14 = arith.constant 2.000000e+00 : f32
    %18 = vector.broadcast %cst_14 : f32 to vector<1x256xf32>
    %19 = arith.divf %17, %18 : vector<1x256xf32>
    %20 = arith.mulf %14, %14 : vector<1x256xf32>
    %21 = arith.subf %19, %20 : vector<1x256xf32>
    %cst_15 = arith.constant 9.99999974E-6 : f32
    %22 = vector.broadcast %cst_15 : f32 to vector<1x256xf32>
    %23 = arith.addf %21, %22 : vector<1x256xf32>
    %24 = math.rsqrt %23 : vector<1x256xf32>
    %25 = arith.mulf %9, %24 : vector<1x256xf32>
    %26 = vector.broadcast %25 : vector<1x256xf32> to vector<2x256xf32>
    %27 = arith.mulf %8, %26 : vector<2x256xf32>
    %28 = arith.mulf %14, %25 : vector<1x256xf32>
    %29 = arith.subf %10, %28 : vector<1x256xf32>
    %30 = vector.broadcast %29 : vector<1x256xf32> to vector<2x256xf32>
    %31 = arith.addf %27, %30 : vector<2x256xf32>
    %cst_16 = arith.constant 0.000000e+00 : f32
    %32 = vector.broadcast %cst_16 : f32 to vector<2x256xf32>
    %33 = arith.maximumf %31, %32 : vector<2x256xf32>
    %c0_17 = arith.constant 0 : index
    %c0_18 = arith.constant 0 : index
    %34 = vector.load %arg6[%c0_17, %c0_18] : memref<256x128xf32, #tpu.memory_space<vmem>>, vector<256x128xf32>
    %35 = arith.truncf %33 : vector<2x256xf32> to vector<2x256xbf16>
    %36 = arith.truncf %34 : vector<256x128xf32> to vector<256x128xbf16>
    %cst_19 = arith.constant dense<0.000000e+00> : vector<2x128xf32>
    %37 = tpu.matmul %35, %36, %cst_19 {dimension_numbers = #tpu.dot_dimension_numbers<[1], [0], [0], [1], [0, 0, 1, 1], [], []>} : vector<2x256xbf16>, vector<256x128xbf16>, vector<2x128xf32> -> vector<2x128xf32>
    %c0_20 = arith.constant 0 : index
    %c0_21 = arith.constant 0 : index
    %38 = vector.load %arg7[%c0_20, %c0_21] : memref<1x128xf32, #tpu.memory_space<vmem>>, vector<1x128xf32>
    %39 = vector.broadcast %38 : vector<1x128xf32> to vector<2x128xf32>
    %40 = arith.addf %37, %39 : vector<2x128xf32>
    %c0_22 = arith.constant 0 : index
    %c0_23 = arith.constant 0 : index
    %41 = vector.load %arg8[%c0_22, %c0_23] : memref<1x128xf32, #tpu.memory_space<vmem>>, vector<1x128xf32>
    %c0_24 = arith.constant 0 : index
    %c0_25 = arith.constant 0 : index
    %42 = vector.load %arg9[%c0_24, %c0_25] : memref<1x128xf32, #tpu.memory_space<vmem>>, vector<1x128xf32>
    %cst_26 = arith.constant dense<0.000000e+00> : vector<128xf32>
    %43 = vector.multi_reduction <add>, %40, %cst_26 [0] : vector<2x128xf32> to vector<128xf32>
    %44 = vector.shape_cast %43 : vector<128xf32> to vector<1x128xf32>
    %cst_27 = arith.constant 2.000000e+00 : f32
    %45 = vector.broadcast %cst_27 : f32 to vector<1x128xf32>
    %46 = arith.divf %44, %45 : vector<1x128xf32>
    %47 = arith.mulf %40, %40 : vector<2x128xf32>
    %cst_28 = arith.constant dense<0.000000e+00> : vector<128xf32>
    %48 = vector.multi_reduction <add>, %47, %cst_28 [0] : vector<2x128xf32> to vector<128xf32>
    %49 = vector.shape_cast %48 : vector<128xf32> to vector<1x128xf32>
    %cst_29 = arith.constant 2.000000e+00 : f32
    %50 = vector.broadcast %cst_29 : f32 to vector<1x128xf32>
    %51 = arith.divf %49, %50 : vector<1x128xf32>
    %52 = arith.mulf %46, %46 : vector<1x128xf32>
    %53 = arith.subf %51, %52 : vector<1x128xf32>
    %cst_30 = arith.constant 9.99999974E-6 : f32
    %54 = vector.broadcast %cst_30 : f32 to vector<1x128xf32>
    %55 = arith.addf %53, %54 : vector<1x128xf32>
    %56 = math.rsqrt %55 : vector<1x128xf32>
    %57 = arith.mulf %41, %56 : vector<1x128xf32>
    %58 = vector.broadcast %57 : vector<1x128xf32> to vector<2x128xf32>
    %59 = arith.mulf %40, %58 : vector<2x128xf32>
    %60 = arith.mulf %46, %57 : vector<1x128xf32>
    %61 = arith.subf %42, %60 : vector<1x128xf32>
    %62 = vector.broadcast %61 : vector<1x128xf32> to vector<2x128xf32>
    %63 = arith.addf %59, %62 : vector<2x128xf32>
    %cst_31 = arith.constant 0.000000e+00 : f32
    %64 = vector.broadcast %cst_31 : f32 to vector<2x128xf32>
    %65 = arith.maximumf %63, %64 : vector<2x128xf32>
    %c0_32 = arith.constant 0 : index
    %c0_33 = arith.constant 0 : index
    %66 = vector.load %arg10[%c0_32, %c0_33] : memref<128x128xf32, #tpu.memory_space<vmem>>, vector<128x128xf32>
    %67 = arith.truncf %65 : vector<2x128xf32> to vector<2x128xbf16>
    %68 = arith.truncf %66 : vector<128x128xf32> to vector<128x128xbf16>
    %cst_34 = arith.constant dense<0.000000e+00> : vector<2x128xf32>
    %69 = tpu.matmul %67, %68, %cst_34 {dimension_numbers = #tpu.dot_dimension_numbers<[1], [0], [0], [1], [0, 0, 1, 1], [], []>} : vector<2x128xbf16>, vector<128x128xbf16>, vector<2x128xf32> -> vector<2x128xf32>
    %c0_35 = arith.constant 0 : index
    %c0_36 = arith.constant 0 : index
    %70 = vector.load %arg11[%c0_35, %c0_36] : memref<16x128xf32, #tpu.memory_space<vmem>>, vector<16x128xf32>
    %71 = arith.truncf %1 : vector<2x16xf32> to vector<2x16xbf16>
    %72 = arith.truncf %70 : vector<16x128xf32> to vector<16x128xbf16>
    %cst_37 = arith.constant dense<0.000000e+00> : vector<2x128xf32>
    %73 = tpu.matmul %71, %72, %cst_37 {dimension_numbers = #tpu.dot_dimension_numbers<[1], [0], [0], [1], [0, 0, 1, 1], [], []>} : vector<2x16xbf16>, vector<16x128xbf16>, vector<2x128xf32> -> vector<2x128xf32>
    %74 = arith.addf %69, %73 : vector<2x128xf32>
    %c0_38 = arith.constant 0 : index
    %c0_39 = arith.constant 0 : index
    %75 = vector.load %arg12[%c0_38, %c0_39] : memref<1x128xf32, #tpu.memory_space<vmem>>, vector<1x128xf32>
    %76 = vector.broadcast %75 : vector<1x128xf32> to vector<2x128xf32>
    %77 = arith.addf %74, %76 : vector<2x128xf32>
    %c0_40 = arith.constant 0 : index
    %c0_41 = arith.constant 0 : index
    %78 = vector.load %arg13[%c0_40, %c0_41] : memref<1x128xf32, #tpu.memory_space<vmem>>, vector<1x128xf32>
    %c0_42 = arith.constant 0 : index
    %c0_43 = arith.constant 0 : index
    %79 = vector.load %arg14[%c0_42, %c0_43] : memref<1x128xf32, #tpu.memory_space<vmem>>, vector<1x128xf32>
    %cst_44 = arith.constant dense<0.000000e+00> : vector<128xf32>
    %80 = vector.multi_reduction <add>, %77, %cst_44 [0] : vector<2x128xf32> to vector<128xf32>
    %81 = vector.shape_cast %80 : vector<128xf32> to vector<1x128xf32>
    %cst_45 = arith.constant 2.000000e+00 : f32
    %82 = vector.broadcast %cst_45 : f32 to vector<1x128xf32>
    %83 = arith.divf %81, %82 : vector<1x128xf32>
    %84 = arith.mulf %77, %77 : vector<2x128xf32>
    %cst_46 = arith.constant dense<0.000000e+00> : vector<128xf32>
    %85 = vector.multi_reduction <add>, %84, %cst_46 [0] : vector<2x128xf32> to vector<128xf32>
    %86 = vector.shape_cast %85 : vector<128xf32> to vector<1x128xf32>
    %cst_47 = arith.constant 2.000000e+00 : f32
    %87 = vector.broadcast %cst_47 : f32 to vector<1x128xf32>
    %88 = arith.divf %86, %87 : vector<1x128xf32>
    %89 = arith.mulf %83, %83 : vector<1x128xf32>
    %90 = arith.subf %88, %89 : vector<1x128xf32>
    %cst_48 = arith.constant 9.99999974E-6 : f32
    %91 = vector.broadcast %cst_48 : f32 to vector<1x128xf32>
    %92 = arith.addf %90, %91 : vector<1x128xf32>
    %93 = math.rsqrt %92 : vector<1x128xf32>
    %94 = arith.mulf %78, %93 : vector<1x128xf32>
    %95 = vector.broadcast %94 : vector<1x128xf32> to vector<2x128xf32>
    %96 = arith.mulf %77, %95 : vector<2x128xf32>
    %97 = arith.mulf %83, %94 : vector<1x128xf32>
    %98 = arith.subf %79, %97 : vector<1x128xf32>
    %99 = vector.broadcast %98 : vector<1x128xf32> to vector<2x128xf32>
    %100 = arith.addf %96, %99 : vector<2x128xf32>
    %cst_49 = arith.constant 0.000000e+00 : f32
    %101 = vector.broadcast %cst_49 : f32 to vector<2x128xf32>
    %102 = arith.maximumf %100, %101 : vector<2x128xf32>
    %c0_50 = arith.constant 0 : index
    %c0_51 = arith.constant 0 : index
    %103 = vector.load %arg15[%c0_50, %c0_51] : memref<128x32xf32, #tpu.memory_space<vmem>>, vector<128x32xf32>
    %104 = arith.truncf %102 : vector<2x128xf32> to vector<2x128xbf16>
    %105 = arith.truncf %103 : vector<128x32xf32> to vector<128x32xbf16>
    %cst_52 = arith.constant dense<0.000000e+00> : vector<2x32xf32>
    %106 = tpu.matmul %104, %105, %cst_52 {dimension_numbers = #tpu.dot_dimension_numbers<[1], [0], [0], [1], [0, 0, 1, 1], [], []>} : vector<2x128xbf16>, vector<128x32xbf16>, vector<2x32xf32> -> vector<2x32xf32>
    %c0_53 = arith.constant 0 : index
    %c0_54 = arith.constant 0 : index
    %107 = vector.load %arg16[%c0_53, %c0_54] : memref<1x32xf32, #tpu.memory_space<vmem>>, vector<1x32xf32>
    %108 = vector.broadcast %107 : vector<1x32xf32> to vector<2x32xf32>
    %109 = arith.addf %106, %108 : vector<2x32xf32>
    %c0_55 = arith.constant 0 : index
    %c0_56 = arith.constant 0 : index
    %110 = vector.load %arg17[%c0_55, %c0_56] : memref<2x32xf32, #tpu.memory_space<vmem>>, vector<2x32xf32>
    tpu.vector_store %arg17[%c0_55, %c0_56], %109 {strides = array<i32>} : memref<2x32xf32, #tpu.memory_space<vmem>>, vector<2x32xf32>,
    return
  }
}

</mosaic_0001>

<llo_original>
// kernel: cvae_forward.6
$region0: #{cvae_forward.6}
  #allocation0 [shape = 'u32[]', space=smem, size = 0x4, offset = 0x4, fixed_abs, tag = 'smem constant byte address 0x4 - core index']
  #allocation1 [shape = 'u32[72,128]{1,0:T(1,128)}', space=vmem, size = 0x9000, scoped, tag = 'internal scratch']
  %s0 = inlined_call_operand.vmem [shape: f32[1152,25], index: 0, kind: input, shape index: {}]
  %s1 = inlined_call_operand.vmem [shape: f32[25,16], index: 1, kind: input, shape index: {}]
  %s2 = inlined_call_operand.hbm [shape: f32[1,16], index: 2, kind: input, shape index: {}]
  %s3 = inlined_call_operand.hbm [shape: f32[1,16], index: 3, kind: input, shape index: {}]
  %s4 = inlined_call_operand.hbm [shape: f32[1,16], index: 4, kind: input, shape index: {}]
  %s5 = inlined_call_operand.vmem [shape: f32[1152,16], index: 5, kind: output, shape index: {}]
  %s6 = sld [smem:[#allocation0]]
  $region42: #{cvae_forward.6} parent=0
    _
  %s8 = ssub.s32 1, %s6
  %s9 = scalar_select 0, %s8, %s6
  $region1: #{cvae_forward.6} parent=0
    #allocation2 [shape = 'u8[512]{0}', space=vmem, size = 0x400, scoped, tag = 'input window, operand 2, single buffered']
    #allocation3 [shape = 's32[1]{0}', space=sflag, size = 0x4, scoped, tag = 'scoped memory for cvae_forward.6']
    #allocation4 [shape = 'u8[512]{0}', space=vmem, size = 0x400, scoped, tag = 'input window, operand 3, single buffered']
    #allocation5 [shape = 's32[1]{0}', space=sflag, size = 0x4, scoped, tag = 'scoped memory for cvae_forward.6']
    #allocation6 [shape = 'u8[512]{0}', space=vmem, size = 0x400, scoped, tag = 'input window, operand 4, single buffered']
    %10 = vsyncpa [#allocation3], 0
    %11 = vsyncpa [#allocation5], 0
    // Predicated region
    $region2: #{cvae_forward.6} parent=1 // pred_check
      _
    $region3: #{cvae_forward.6} parent=1 // pred_check_branch
      %13 = sbr.rel (0) target = $region5
    $region4: #{cvae_forward.6} parent=1 // pred_region
      _
    $region5: #{cvae_forward.6} parent=1 // pred_fallthru
      _
    // Predicated region
    $region6: #{cvae_forward.6} parent=1 // pred_check
      _
    $region7: #{cvae_forward.6} parent=1 // pred_check_branch
      %15 = sbr.rel (0) target = $region9
    $region8: #{cvae_forward.6} parent=1 // pred_region
      _
    $region9: #{cvae_forward.6} parent=1 // pred_fallthru
      _
    // Predicated region
    $region10: #{cvae_forward.6} parent=1 // pred_check
      _
    $region11: #{cvae_forward.6} parent=1 // pred_check_branch
      %17 = sbr.rel (0) target = $region13
    $region12: #{cvae_forward.6} parent=1 // pred_region
      %19 = vsyncadd [#allocation3], 0
      %s21 = sshll.u32 %s2, 4
      %s22 = int_to_ptr.hbm [resolvable:$true] %s21
      %s23 = sshll.u32 [#allocation2], 4
      %s24 = int_to_ptr.vmem [resolvable:$true] %s23
      %26 = dma.hbm_to_vmem [thread:$0]  %s22, 16, %s24, [#allocation3]
    $region13: #{cvae_forward.6} parent=1 // pred_fallthru
      _
    // Predicated region
    $region14: #{cvae_forward.6} parent=1 // pred_check
      _
    $region15: #{cvae_forward.6} parent=1 // pred_check_branch
      %28 = sbr.rel (0) target = $region17
    $region16: #{cvae_forward.6} parent=1 // pred_region
      %30 = vsyncadd [#allocation5], 0
      %s32 = sshll.u32 %s3, 4
      %s33 = int_to_ptr.hbm [resolvable:$true] %s32
      %s34 = sshll.u32 [#allocation4], 4
      %s35 = int_to_ptr.vmem [resolvable:$true] %s34
      %37 = dma.hbm_to_vmem [thread:$0]  %s33, 16, %s35, [#allocation5]
    $region17: #{cvae_forward.6} parent=1 // pred_fallthru
      _
    // Predicated region
    $region18: #{cvae_forward.6} parent=1 // pred_check
      _
    $region19: #{cvae_forward.6} parent=1 // pred_check_branch
      %39 = sbr.rel (0) target = $region21
    $region20: #{cvae_forward.6} parent=1 // pred_region
      %41 = vsyncadd [#allocation5], 0
      %s43 = sshll.u32 %s4, 4
      %s44 = int_to_ptr.hbm [resolvable:$true] %s43
      %s45 = sshll.u32 [#allocation6], 4
      %s46 = int_to_ptr.vmem [resolvable:$true] %s45
      %48 = dma.hbm_to_vmem [thread:$0]  %s44, 16, %s46, [#allocation5]
    $region21: #{cvae_forward.6} parent=1 // pred_fallthru
      _
    // Predicated region
    $region22: #{cvae_forward.6} parent=1 // pred_check
      _
    $region23: #{cvae_forward.6} parent=1 // pred_check_branch
      %50 = sbr.rel (0) target = $region25
    $region24: #{cvae_forward.6} parent=1 // pred_region
      %52 = dma.done [#allocation3], 16
    $region25: #{cvae_forward.6} parent=1 // pred_fallthru
      _
    // Predicated region
    $region26: #{cvae_forward.6} parent=1 // pred_check
      _
    $region27: #{cvae_forward.6} parent=1 // pred_check_branch
      %54 = sbr.rel (0) target = $region29
    $region28: #{cvae_forward.6} parent=1 // pred_region
      %56 = dma.done [#allocation5], 16
    $region29: #{cvae_forward.6} parent=1 // pred_fallthru
      _
    // Predicated region
    $region30: #{cvae_forward.6} parent=1 // pred_check
      _
    $region31: #{cvae_forward.6} parent=1 // pred_check_branch
      %58 = sbr.rel (0) target = $region33
    $region32: #{cvae_forward.6} parent=1 // pred_region
      %60 = dma.done [#allocation5], 16
    $region33: #{cvae_forward.6} parent=1 // pred_fallthru
      _
    %v62 = vld [vmem:[%s0] sm:$0xff]
    %v63 = vld [vmem:[%s0 + $0x8] sm:$0xff]
    %v64 = vld [vmem:[%s0 + $0x10] sm:$0xff]
    %v65 = vld [vmem:[%s0 + $0x18] sm:$0xff]
    %v66 = vld [vmem:[%s0 + $0x20] sm:$0xff]
    %v67 = vld [vmem:[%s0 + $0x28] sm:$0xff]
    %v68 = vld [vmem:[%s0 + $0x30] sm:$0xff]
    %v69 = vld [vmem:[%s0 + $0x38] sm:$0xff]
    %v70 = vld [vmem:[%s0 + $0x40] sm:$0xff]
    %v71 = vld [vmem:[%s0 + $0x48] sm:$0xff]
    %v72 = vld [vmem:[%s0 + $0x50] sm:$0xff]
    %v73 = vld [vmem:[%s0 + $0x58] sm:$0xff]
    %v74 = vld [vmem:[%s0 + $0x60] sm:$0xff]
    %v75 = vld [vmem:[%s0 + $0x68] sm:$0xff]
    %v76 = vld [vmem:[%s0 + $0x70] sm:$0xff]
    %v77 = vld [vmem:[%s0 + $0x78] sm:$0xff]
    %v78 = vld [vmem:[%s0 + $0x80] sm:$0xff]
    %v79 = vld [vmem:[%s0 + $0x88] sm:$0xff]
    %v80 = vld [vmem:[%s0 + $0x90] sm:$0xff]
    %v81 = vld [vmem:[%s0 + $0x98] sm:$0xff]
    %v82 = vld [vmem:[%s0 + $0xa0] sm:$0xff]
    %v83 = vld [vmem:[%s0 + $0xa8] sm:$0xff]
    %v84 = vld [vmem:[%s0 + $0xb0] sm:$0xff]
    %v85 = vld [vmem:[%s0 + $0xb8] sm:$0xff]
    %v86 = vld [vmem:[%s0 + $0xc0] sm:$0xff]
    %v87 = vld [vmem:[%s0 + $0xc8] sm:$0xff]
    %v88 = vld [vmem:[%s0 + $0xd0] sm:$0xff]
    %v89 = vld [vmem:[%s0 + $0xd8] sm:$0xff]
    %v90 = vld [vmem:[%s0 + $0xe0] sm:$0xff]
    %v91 = vld [vmem:[%s0 + $0xe8] sm:$0xff]
    %v92 = vld [vmem:[%s0 + $0xf0] sm:$0xff]
    %v93 = vld [vmem:[%s0 + $0xf8] sm:$0xff]
    %v94 = vld [vmem:[%s0 + $0x100] sm:$0xff]
    %v95 = vld [vmem:[%s0 + $0x108] sm:$0xff]
    %v96 = vld [vmem:[%s0 + $0x110] sm:$0xff]
    %v97 = vld [vmem:[%s0 + $0x118] sm:$0xff]
    %v98 = vld [vmem:[%s0 + $0x120] sm:$0xff]
    %v99 = vld [vmem:[%s0 + $0x128] sm:$0xff]
    %v100 = vld [vmem:[%s0 + $0x130] sm:$0xff]
    %v101 = vld [vmem:[%s0 + $0x138] sm:$0xff]
    %v102 = vld [vmem:[%s0 + $0x140] sm:$0xff]
    %v103 = vld [vmem:[%s0 + $0x148] sm:$0xff]
    %v104 = vld [vmem:[%s0 + $0x150] sm:$0xff]
    %v105 = vld [vmem:[%s0 + $0x158] sm:$0xff]
    %v106 = vld [vmem:[%s0 + $0x160] sm:$0xff]
    %v107 = vld [vmem:[%s0 + $0x168] sm:$0xff]
    %v108 = vld [vmem:[%s0 + $0x170] sm:$0xff]
    %v109 = vld [vmem:[%s0 + $0x178] sm:$0xff]
    %v110 = vld [vmem:[%s0 + $0x180] sm:$0xff]
    %v111 = vld [vmem:[%s0 + $0x188] sm:$0xff]
    %v112 = vld [vmem:[%s0 + $0x190] sm:$0xff]
    %v113 = vld [vmem:[%s0 + $0x198] sm:$0xff]
    %v114 = vld [vmem:[%s0 + $0x1a0] sm:$0xff]
    %v115 = vld [vmem:[%s0 + $0x1a8] sm:$0xff]
    %v116 = vld [vmem:[%s0 + $0x1b0] sm:$0xff]
    %v117 = vld [vmem:[%s0 + $0x1b8] sm:$0xff]
    %v118 = vld [vmem:[%s0 + $0x1c0] sm:$0xff]
    %v119 = vld [vmem:[%s0 + $0x1c8] sm:$0xff]
    %v120 = vld [vmem:[%s0 + $0x1d0] sm:$0xff]
    %v121 = vld [vmem:[%s0 + $0x1d8] sm:$0xff]
    %v122 = vld [vmem:[%s0 + $0x1e0] sm:$0xff]
    %v123 = vld [vmem:[%s0 + $0x1e8] sm:$0xff]
    %v124 = vld [vmem:[%s0 + $0x1f0] sm:$0xff]
    %v125 = vld [vmem:[%s0 + $0x1f8] sm:$0xff]
    %v126 = vld [vmem:[%s0 + $0x200] sm:$0xff]
    %v127 = vld [vmem:[%s0 + $0x208] sm:$0xff]
    %v128 = vld [vmem:[%s0 + $0x210] sm:$0xff]
    %v129 = vld [vmem:[%s0 + $0x218] sm:$0xff]
    %v130 = vld [vmem:[%s0 + $0x220] sm:$0xff]
    %v131 = vld [vmem:[%s0 + $0x228] sm:$0xff]
    %v132 = vld [vmem:[%s0 + $0x230] sm:$0xff]
    %v133 = vld [vmem:[%s0 + $0x238] sm:$0xff]
    %v134 = vld [vmem:[%s0 + $0x240] sm:$0xff]
    %v135 = vld [vmem:[%s0 + $0x248] sm:$0xff]
    %v136 = vld [vmem:[%s0 + $0x250] sm:$0xff]
    %v137 = vld [vmem:[%s0 + $0x258] sm:$0xff]
    %v138 = vld [vmem:[%s0 + $0x260] sm:$0xff]
    %v139 = vld [vmem:[%s0 + $0x268] sm:$0xff]
    %v140 = vld [vmem:[%s0 + $0x270] sm:$0xff]
    %v141 = vld [vmem:[%s0 + $0x278] sm:$0xff]
    %v142 = vld [vmem:[%s0 + $0x280] sm:$0xff]
    %v143 = vld [vmem:[%s0 + $0x288] sm:$0xff]
    %v144 = vld [vmem:[%s0 + $0x290] sm:$0xff]
    %v145 = vld [vmem:[%s0 + $0x298] sm:$0xff]
    %v146 = vld [vmem:[%s0 + $0x2a0] sm:$0xff]
    %v147 = vld [vmem:[%s0 + $0x2a8] sm:$0xff]
    %v148 = vld [vmem:[%s0 + $0x2b0] sm:$0xff]
    %v149 = vld [vmem:[%s0 + $0x2b8] sm:$0xff]
    %v150 = vld [vmem:[%s0 + $0x2c0] sm:$0xff]
    %v151 = vld [vmem:[%s0 + $0x2c8] sm:$0xff]
    %v152 = vld [vmem:[%s0 + $0x2d0] sm:$0xff]
    %v153 = vld [vmem:[%s0 + $0x2d8] sm:$0xff]
    %v154 = vld [vmem:[%s0 + $0x2e0] sm:$0xff]
    %v155 = vld [vmem:[%s0 + $0x2e8] sm:$0xff]
    %v156 = vld [vmem:[%s0 + $0x2f0] sm:$0xff]
    %v157 = vld [vmem:[%s0 + $0x2f8] sm:$0xff]
    %v158 = vld [vmem:[%s0 + $0x300] sm:$0xff]
    %v159 = vld [vmem:[%s0 + $0x308] sm:$0xff]
    %v160 = vld [vmem:[%s0 + $0x310] sm:$0xff]
    %v161 = vld [vmem:[%s0 + $0x318] sm:$0xff]
    %v162 = vld [vmem:[%s0 + $0x320] sm:$0xff]
    %v163 = vld [vmem:[%s0 + $0x328] sm:$0xff]
    %v164 = vld [vmem:[%s0 + $0x330] sm:$0xff]
    %v165 = vld [vmem:[%s0 + $0x338] sm:$0xff]
    %v166 = vld [vmem:[%s0 + $0x340] sm:$0xff]
    %v167 = vld [vmem:[%s0 + $0x348] sm:$0xff]
    %v168 = vld [vmem:[%s0 + $0x350] sm:$0xff]
    %v169 = vld [vmem:[%s0 + $0x358] sm:$0xff]
    %v170 = vld [vmem:[%s0 + $0x360] sm:$0xff]
    %v171 = vld [vmem:[%s0 + $0x368] sm:$0xff]
    %v172 = vld [vmem:[%s0 + $0x370] sm:$0xff]
    %v173 = vld [vmem:[%s0 + $0x378] sm:$0xff]
    %v174 = vld [vmem:[%s0 + $0x380] sm:$0xff]
    %v175 = vld [vmem:[%s0 + $0x388] sm:$0xff]
    %v176 = vld [vmem:[%s0 + $0x390] sm:$0xff]
    %v177 = vld [vmem:[%s0 + $0x398] sm:$0xff]
    %v178 = vld [vmem:[%s0 + $0x3a0] sm:$0xff]
    %v179 = vld [vmem:[%s0 + $0x3a8] sm:$0xff]
    %v180 = vld [vmem:[%s0 + $0x3b0] sm:$0xff]
    %v181 = vld [vmem:[%s0 + $0x3b8] sm:$0xff]
    %v182 = vld [vmem:[%s0 + $0x3c0] sm:$0xff]
    %v183 = vld [vmem:[%s0 + $0x3c8] sm:$0xff]
    %v184 = vld [vmem:[%s0 + $0x3d0] sm:$0xff]
    %v185 = vld [vmem:[%s0 + $0x3d8] sm:$0xff]
    %v186 = vld [vmem:[%s0 + $0x3e0] sm:$0xff]
    %v187 = vld [vmem:[%s0 + $0x3e8] sm:$0xff]
    %v188 = vld [vmem:[%s0 + $0x3f0] sm:$0xff]
    %v189 = vld [vmem:[%s0 + $0x3f8] sm:$0xff]
    %v190 = vld [vmem:[%s0 + $0x400] sm:$0xff]
    %v191 = vld [vmem:[%s0 + $0x408] sm:$0xff]
    %v192 = vld [vmem:[%s0 + $0x410] sm:$0xff]
    %v193 = vld [vmem:[%s0 + $0x418] sm:$0xff]
    %v194 = vld [vmem:[%s0 + $0x420] sm:$0xff]
    %v195 = vld [vmem:[%s0 + $0x428] sm:$0xff]
    %v196 = vld [vmem:[%s0 + $0x430] sm:$0xff]
    %v197 = vld [vmem:[%s0 + $0x438] sm:$0xff]
    %v198 = vld [vmem:[%s0 + $0x440] sm:$0xff]
    %v199 = vld [vmem:[%s0 + $0x448] sm:$0xff]
    %v200 = vld [vmem:[%s0 + $0x450] sm:$0xff]
    %v201 = vld [vmem:[%s0 + $0x458] sm:$0xff]
    %v202 = vld [vmem:[%s0 + $0x460] sm:$0xff]
    %v203 = vld [vmem:[%s0 + $0x468] sm:$0xff]
    %v204 = vld [vmem:[%s0 + $0x470] sm:$0xff]
    %v205 = vld [vmem:[%s0 + $0x478] sm:$0xff]
    %v206 = vld [vmem:[%s1] sm:$0xff]
    %v207 = vld [vmem:[%s1 + $0x8] sm:$0xff]
    %v208 = vld [vmem:[%s1 + $0x10] sm:$0xff]
    %v209 = vld [vmem:[%s1 + $0x18] sm:$0x1]
    %v210 = vpack.c.bf16 %v63, %v62
    %v211 = vpack.c.bf16 %v65, %v64
    %v212 = vpack.c.bf16 %v67, %v66
    %v213 = vpack.c.bf16 %v69, %v68
    %v214 = vpack.c.bf16 %v71, %v70
    %v215 = vpack.c.bf16 %v73, %v72
    %v216 = vpack.c.bf16 %v75, %v74
    %v217 = vpack.c.bf16 %v77, %v76
    %v218 = vpack.c.bf16 %v79, %v78
    %v219 = vpack.c.bf16 %v81, %v80
    %v220 = vpack.c.bf16 %v83, %v82
    %v221 = vpack.c.bf16 %v85, %v84
    %v222 = vpack.c.bf16 %v87, %v86
    %v223 = vpack.c.bf16 %v89, %v88
    %v224 = vpack.c.bf16 %v91, %v90
    %v225 = vpack.c.bf16 %v93, %v92
    %v226 = vpack.c.bf16 %v95, %v94
    %v227 = vpack.c.bf16 %v97, %v96
    %v228 = vpack.c.bf16 %v99, %v98
    %v229 = vpack.c.bf16 %v101, %v100
    %v230 = vpack.c.bf16 %v103, %v102
    %v231 = vpack.c.bf16 %v105, %v104
    %v232 = vpack.c.bf16 %v107, %v106
    %v233 = vpack.c.bf16 %v109, %v108
    %v234 = vpack.c.bf16 %v111, %v110
    %v235 = vpack.c.bf16 %v113, %v112
    %v236 = vpack.c.bf16 %v115, %v114
    %v237 = vpack.c.bf16 %v117, %v116
    %v238 = vpack.c.bf16 %v119, %v118
    %v239 = vpack.c.bf16 %v121, %v120
    %v240 = vpack.c.bf16 %v123, %v122
    %v241 = vpack.c.bf16 %v125, %v124
    %v242 = vpack.c.bf16 %v127, %v126
    %v243 = vpack.c.bf16 %v129, %v128
    %v244 = vpack.c.bf16 %v131, %v130
    %v245 = vpack.c.bf16 %v133, %v132
    %v246 = vpack.c.bf16 %v135, %v134
    %v247 = vpack.c.bf16 %v137, %v136
    %v248 = vpack.c.bf16 %v139, %v138
    %v249 = vpack.c.bf16 %v141, %v140
    %v250 = vpack.c.bf16 %v143, %v142
    %v251 = vpack.c.bf16 %v145, %v144
    %v252 = vpack.c.bf16 %v147, %v146
    %v253 = vpack.c.bf16 %v149, %v148
    %v254 = vpack.c.bf16 %v151, %v150
    %v255 = vpack.c.bf16 %v153, %v152
    %v256 = vpack.c.bf16 %v155, %v154
    %v257 = vpack.c.bf16 %v157, %v156
    %v258 = vpack.c.bf16 %v159, %v158
    %v259 = vpack.c.bf16 %v161, %v160
    %v260 = vpack.c.bf16 %v163, %v162
    %v261 = vpack.c.bf16 %v165, %v164
    %v262 = vpack.c.bf16 %v167, %v166
    %v263 = vpack.c.bf16 %v169, %v168
    %v264 = vpack.c.bf16 %v171, %v170
    %v265 = vpack.c.bf16 %v173, %v172
    %v266 = vpack.c.bf16 %v175, %v174
    %v267 = vpack.c.bf16 %v177, %v176
    %v268 = vpack.c.bf16 %v179, %v178
    %v269 = vpack.c.bf16 %v181, %v180
    %v270 = vpack.c.bf16 %v183, %v182
    %v271 = vpack.c.bf16 %v185, %v184
    %v272 = vpack.c.bf16 %v187, %v186
    %v273 = vpack.c.bf16 %v189, %v188
    %v274 = vpack.c.bf16 %v191, %v190
    %v275 = vpack.c.bf16 %v193, %v192
    %v276 = vpack.c.bf16 %v195, %v194
    %v277 = vpack.c.bf16 %v197, %v196
    %v278 = vpack.c.bf16 %v199, %v198
    %v279 = vpack.c.bf16 %v201, %v200
    %v280 = vpack.c.bf16 %v203, %v202
    %v281 = vpack.c.bf16 %v205, %v204
    %v282 = vpack.c.bf16 %v207, %v206
    %v283 = vpack.c.bf16 %v209, %v208
    %v284 = vld [vmem:[#allocation2] sm:$0x1]
    %v286 = vperm.slane %v284, 0
    %vm288 = vcmask 203776
    %v290 = vsel %vm288, %v210, 0
    %v293 = vsel %vm288, %v211, 0
    %v296 = vsel %vm288, %v212, 0
    %v299 = vsel %vm288, %v213, 0
    %v302 = vsel %vm288, %v214, 0
    %v305 = vsel %vm288, %v215, 0
    %v308 = vsel %vm288, %v216, 0
    %v311 = vsel %vm288, %v217, 0
    %v314 = vsel %vm288, %v218, 0
    %v317 = vsel %vm288, %v219, 0
    %v320 = vsel %vm288, %v220, 0
    %v323 = vsel %vm288, %v221, 0
    %v326 = vsel %vm288, %v222, 0
    %v329 = vsel %vm288, %v223, 0
    %v332 = vsel %vm288, %v224, 0
    %v335 = vsel %vm288, %v225, 0
    %v338 = vsel %vm288, %v226, 0
    %v341 = vsel %vm288, %v227, 0
    %v344 = vsel %vm288, %v228, 0
    %v347 = vsel %vm288, %v229, 0
    %v350 = vsel %vm288, %v230, 0
    %v353 = vsel %vm288, %v231, 0
    %v356 = vsel %vm288, %v232, 0
    %v359 = vsel %vm288, %v233, 0
    %v362 = vsel %vm288, %v234, 0
    %v365 = vsel %vm288, %v235, 0
    %v368 = vsel %vm288, %v236, 0
    %v371 = vsel %vm288, %v237, 0
    %v374 = vsel %vm288, %v238, 0
    %v377 = vsel %vm288, %v239, 0
    %v380 = vsel %vm288, %v240, 0
    %v383 = vsel %vm288, %v241, 0
    %v386 = vsel %vm288, %v242, 0
    %v389 = vsel %vm288, %v243, 0
    %v392 = vsel %vm288, %v244, 0
    %v395 = vsel %vm288, %v245, 0
    %v398 = vsel %vm288, %v246, 0
    %v401 = vsel %vm288, %v247, 0
    %v404 = vsel %vm288, %v248, 0
    %v407 = vsel %vm288, %v249, 0
    %v410 = vsel %vm288, %v250, 0
    %v413 = vsel %vm288, %v251, 0
    %v416 = vsel %vm288, %v252, 0
    %v419 = vsel %vm288, %v253, 0
    %v422 = vsel %vm288, %v254, 0
    %v425 = vsel %vm288, %v255, 0
    %v428 = vsel %vm288, %v256, 0
    %v431 = vsel %vm288, %v257, 0
    %v434 = vsel %vm288, %v258, 0
    %v437 = vsel %vm288, %v259, 0
    %v440 = vsel %vm288, %v260, 0
    %v443 = vsel %vm288, %v261, 0
    %v446 = vsel %vm288, %v262, 0
    %v449 = vsel %vm288, %v263, 0
    %v452 = vsel %vm288, %v264, 0
    %v455 = vsel %vm288, %v265, 0
    %v458 = vsel %vm288, %v266, 0
    %v461 = vsel %vm288, %v267, 0
    %v464 = vsel %vm288, %v268, 0
    %v467 = vsel %vm288, %v269, 0
    %v470 = vsel %vm288, %v270, 0
    %v473 = vsel %vm288, %v271, 0
    %v476 = vsel %vm288, %v272, 0
    %v479 = vsel %vm288, %v273, 0
    %v482 = vsel %vm288, %v274, 0
    %v485 = vsel %vm288, %v275, 0
    %v488 = vsel %vm288, %v276, 0
    %v491 = vsel %vm288, %v277, 0
    %v494 = vsel %vm288, %v278, 0
    %v497 = vsel %vm288, %v279, 0
    %v500 = vsel %vm288, %v280, 0
    %v503 = vsel %vm288, %v281, 0
    %vm505 = vcmask 1043456
    %vm506 = vcmask 1044480
    %v507 = vsel %vm505, 4294967295, 65535
    %v508 = vsel %vm506, %v507, 0
    %v510 = vand.u32 %v283, %v508
    %512 = vmatpush.bf16.msra.mxu0 0
    %513 = vmatpush.bf16.msra.mxu0 0
    %514 = vmatpush.bf16.msra.mxu0 0
    %515 = vmatpush.bf16.msra.mxu0 0
    %516 = vmatpush.bf16.msra.mxu0 0
    %517 = vmatpush.bf16.msra.mxu0 0
    %518 = vmatpush.bf16.msra.mxu0 %v510
    %519 = vmatpush.bf16.msra.mxu0 %v282
    %520 = vmatmul.bf16.gmra.mxu0 %v290
    %v521 = vpop.f32.mrf.mxu0
    %v522 = vadd.f32 %v286, %v521
    %v523 = vpop.f32.mrf.mxu0
    %v524 = vadd.f32 %v286, %v523
    %525 = vmatmul.bf16.gmra.mxu0 %v293
    %v526 = vpop.f32.mrf.mxu0
    %v527 = vadd.f32 %v286, %v526
    %v528 = vpop.f32.mrf.mxu0
    %v529 = vadd.f32 %v286, %v528
    %530 = vmatmul.bf16.gmra.mxu0 %v296
    %v531 = vpop.f32.mrf.mxu0
    %v532 = vadd.f32 %v286, %v531
    %v533 = vpop.f32.mrf.mxu0
    %v534 = vadd.f32 %v286, %v533
    %535 = vmatmul.bf16.gmra.mxu0 %v299
    %v536 = vpop.f32.mrf.mxu0
    %v537 = vadd.f32 %v286, %v536
    %v538 = vpop.f32.mrf.mxu0
    %v539 = vadd.f32 %v286, %v538
    %540 = vmatmul.bf16.gmra.mxu0 %v302
    %v541 = vpop.f32.mrf.mxu0
    %v542 = vadd.f32 %v286, %v541
    %v543 = vpop.f32.mrf.mxu0
    %v544 = vadd.f32 %v286, %v543
    %545 = vmatmul.bf16.gmra.mxu0 %v305
    %v546 = vpop.f32.mrf.mxu0
    %v547 = vadd.f32 %v286, %v546
    %v548 = vpop.f32.mrf.mxu0
    %v549 = vadd.f32 %v286, %v548
    %550 = vmatmul.bf16.gmra.mxu0 %v308
    %v551 = vpop.f32.mrf.mxu0
    %v552 = vadd.f32 %v286, %v551
    %v553 = vpop.f32.mrf.mxu0
    %v554 = vadd.f32 %v286, %v553
    %555 = vmatmul.bf16.gmra.mxu0 %v311
    %v556 = vpop.f32.mrf.mxu0
    %v557 = vadd.f32 %v286, %v556
    %v558 = vpop.f32.mrf.mxu0
    %v559 = vadd.f32 %v286, %v558
    %560 = vmatmul.bf16.gmra.mxu0 %v314
    %v561 = vpop.f32.mrf.mxu0
    %v562 = vadd.f32 %v286, %v561
    %v563 = vpop.f32.mrf.mxu0
    %v564 = vadd.f32 %v286, %v563
    %565 = vmatmul.bf16.gmra.mxu0 %v317
    %v566 = vpop.f32.mrf.mxu0
    %v567 = vadd.f32 %v286, %v566
    %v568 = vpop.f32.mrf.mxu0
    %v569 = vadd.f32 %v286, %v568
    %570 = vmatmul.bf16.gmra.mxu0 %v320
    %v571 = vpop.f32.mrf.mxu0
    %v572 = vadd.f32 %v286, %v571
    %v573 = vpop.f32.mrf.mxu0
    %v574 = vadd.f32 %v286, %v573
    %575 = vmatmul.bf16.gmra.mxu0 %v323
    %v576 = vpop.f32.mrf.mxu0
    %v577 = vadd.f32 %v286, %v576
    %v578 = vpop.f32.mrf.mxu0
    %v579 = vadd.f32 %v286, %v578
    %580 = vmatmul.bf16.gmra.mxu0 %v326
    %v581 = vpop.f32.mrf.mxu0
    %v582 = vadd.f32 %v286, %v581
    %v583 = vpop.f32.mrf.mxu0
    %v584 = vadd.f32 %v286, %v583
    %585 = vmatmul.bf16.gmra.mxu0 %v329
    %v586 = vpop.f32.mrf.mxu0
    %v587 = vadd.f32 %v286, %v586
    %v588 = vpop.f32.mrf.mxu0
    %v589 = vadd.f32 %v286, %v588
    %590 = vmatmul.bf16.gmra.mxu0 %v332
    %v591 = vpop.f32.mrf.mxu0
    %v592 = vadd.f32 %v286, %v591
    %v593 = vpop.f32.mrf.mxu0
    %v594 = vadd.f32 %v286, %v593
    %595 = vmatmul.bf16.gmra.mxu0 %v335
    %v596 = vpop.f32.mrf.mxu0
    %v597 = vadd.f32 %v286, %v596
    %v598 = vpop.f32.mrf.mxu0
    %v599 = vadd.f32 %v286, %v598
    %600 = vmatmul.bf16.gmra.mxu0 %v338
    %v601 = vpop.f32.mrf.mxu0
    %v602 = vadd.f32 %v286, %v601
    %v603 = vpop.f32.mrf.mxu0
    %v604 = vadd.f32 %v286, %v603
    %605 = vmatmul.bf16.gmra.mxu0 %v341
    %v606 = vpop.f32.mrf.mxu0
    %v607 = vadd.f32 %v286, %v606
    %v608 = vpop.f32.mrf.mxu0
    %v609 = vadd.f32 %v286, %v608
    %610 = vmatmul.bf16.gmra.mxu0 %v344
    %v611 = vpop.f32.mrf.mxu0
    %v612 = vadd.f32 %v286, %v611
    %v613 = vpop.f32.mrf.mxu0
    %v614 = vadd.f32 %v286, %v613
    %615 = vmatmul.bf16.gmra.mxu0 %v347
    %v616 = vpop.f32.mrf.mxu0
    %v617 = vadd.f32 %v286, %v616
    %v618 = vpop.f32.mrf.mxu0
    %v619 = vadd.f32 %v286, %v618
    %620 = vmatmul.bf16.gmra.mxu0 %v350
    %v621 = vpop.f32.mrf.mxu0
    %v622 = vadd.f32 %v286, %v621
    %v623 = vpop.f32.mrf.mxu0
    %v624 = vadd.f32 %v286, %v623
    %625 = vmatmul.bf16.gmra.mxu0 %v353
    %v626 = vpop.f32.mrf.mxu0
    %v627 = vadd.f32 %v286, %v626
    %v628 = vpop.f32.mrf.mxu0
    %v629 = vadd.f32 %v286, %v628
    %630 = vmatmul.bf16.gmra.mxu0 %v356
    %v631 = vpop.f32.mrf.mxu0
    %v632 = vadd.f32 %v286, %v631
    %v633 = vpop.f32.mrf.mxu0
    %v634 = vadd.f32 %v286, %v633
    %635 = vmatmul.bf16.gmra.mxu0 %v359
    %v636 = vpop.f32.mrf.mxu0
    %v637 = vadd.f32 %v286, %v636
    %v638 = vpop.f32.mrf.mxu0
    %v639 = vadd.f32 %v286, %v638
    %640 = vmatmul.bf16.gmra.mxu0 %v362
    %v641 = vpop.f32.mrf.mxu0
    %v642 = vadd.f32 %v286, %v641
    %v643 = vpop.f32.mrf.mxu0
    %v644 = vadd.f32 %v286, %v643
    %645 = vmatmul.bf16.gmra.mxu0 %v365
    %v646 = vpop.f32.mrf.mxu0
    %v647 = vadd.f32 %v286, %v646
    %v648 = vpop.f32.mrf.mxu0
    %v649 = vadd.f32 %v286, %v648
    %650 = vmatmul.bf16.gmra.mxu0 %v368
    %v651 = vpop.f32.mrf.mxu0
    %v652 = vadd.f32 %v286, %v651
    %v653 = vpop.f32.mrf.mxu0
    %v654 = vadd.f32 %v286, %v653
    %655 = vmatmul.bf16.gmra.mxu0 %v371
    %v656 = vpop.f32.mrf.mxu0
    %v657 = vadd.f32 %v286, %v656
    %v658 = vpop.f32.mrf.mxu0
    %v659 = vadd.f32 %v286, %v658
    %660 = vmatmul.bf16.gmra.mxu0 %v374
    %v661 = vpop.f32.mrf.mxu0
    %v662 = vadd.f32 %v286, %v661
    %v663 = vpop.f32.mrf.mxu0
    %v664 = vadd.f32 %v286, %v663
    %665 = vmatmul.bf16.gmra.mxu0 %v377
    %v666 = vpop.f32.mrf.mxu0
    %v667 = vadd.f32 %v286, %v666
    %v668 = vpop.f32.mrf.mxu0
    %v669 = vadd.f32 %v286, %v668
    %670 = vmatmul.bf16.gmra.mxu0 %v380
    %v671 = vpop.f32.mrf.mxu0
    %v672 = vadd.f32 %v286, %v671
    %v673 = vpop.f32.mrf.mxu0
    %v674 = vadd.f32 %v286, %v673
    %675 = vmatmul.bf16.gmra.mxu0 %v383
    %v676 = vpop.f32.mrf.mxu0
    %v677 = vadd.f32 %v286, %v676
    %v678 = vpop.f32.mrf.mxu0
    %v679 = vadd.f32 %v286, %v678
    %680 = vmatmul.bf16.gmra.mxu0 %v386
    %v681 = vpop.f32.mrf.mxu0
    %v682 = vadd.f32 %v286, %v681
    %v683 = vpop.f32.mrf.mxu0
    %v684 = vadd.f32 %v286, %v683
    %685 = vmatmul.bf16.gmra.mxu0 %v389
    %v686 = vpop.f32.mrf.mxu0
    %v687 = vadd.f32 %v286, %v686
    %v688 = vpop.f32.mrf.mxu0
    %v689 = vadd.f32 %v286, %v688
    %690 = vmatmul.bf16.gmra.mxu0 %v392
    %v691 = vpop.f32.mrf.mxu0
    %v692 = vadd.f32 %v286, %v691
    %v693 = vpop.f32.mrf.mxu0
    %v694 = vadd.f32 %v286, %v693
    %695 = vmatmul.bf16.gmra.mxu0 %v395
    %v696 = vpop.f32.mrf.mxu0
    %v697 = vadd.f32 %v286, %v696
    %v698 = vpop.f32.mrf.mxu0
    %v699 = vadd.f32 %v286, %v698
    %700 = vmatmul.bf16.gmra.mxu0 %v398
    %v701 = vpop.f32.mrf.mxu0
    %v702 = vadd.f32 %v286, %v701
    %v703 = vpop.f32.mrf.mxu0
    %v704 = vadd.f32 %v286, %v703
    %705 = vmatmul.bf16.gmra.mxu0 %v401
    %v706 = vpop.f32.mrf.mxu0
    %v707 = vadd.f32 %v286, %v706
    %v708 = vpop.f32.mrf.mxu0
    %v709 = vadd.f32 %v286, %v708
    %710 = vmatmul.bf16.gmra.mxu0 %v404
    %v711 = vpop.f32.mrf.mxu0
    %v712 = vadd.f32 %v286, %v711
    %v713 = vpop.f32.mrf.mxu0
    %v714 = vadd.f32 %v286, %v713
    %715 = vmatmul.bf16.gmra.mxu0 %v407
    %v716 = vpop.f32.mrf.mxu0
    %v717 = vadd.f32 %v286, %v716
    %v718 = vpop.f32.mrf.mxu0
    %v719 = vadd.f32 %v286, %v718
    %720 = vmatmul.bf16.gmra.mxu0 %v410
    %v721 = vpop.f32.mrf.mxu0
    %v722 = vadd.f32 %v286, %v721
    %v723 = vpop.f32.mrf.mxu0
    %v724 = vadd.f32 %v286, %v723
    %725 = vmatmul.bf16.gmra.mxu0 %v413
    %v726 = vpop.f32.mrf.mxu0
    %v727 = vadd.f32 %v286, %v726
    %v728 = vpop.f32.mrf.mxu0
    %v729 = vadd.f32 %v286, %v728
    %730 = vmatmul.bf16.gmra.mxu0 %v416
    %v731 = vpop.f32.mrf.mxu0
    %v732 = vadd.f32 %v286, %v731
    %v733 = vpop.f32.mrf.mxu0
    %v734 = vadd.f32 %v286, %v733
    %735 = vmatmul.bf16.gmra.mxu0 %v419
    %v736 = vpop.f32.mrf.mxu0
    %v737 = vadd.f32 %v286, %v736
    %v738 = vpop.f32.mrf.mxu0
    %v739 = vadd.f32 %v286, %v738
    %740 = vmatmul.bf16.gmra.mxu0 %v422
    %v741 = vpop.f32.mrf.mxu0
    %v742 = vadd.f32 %v286, %v741
    %v743 = vpop.f32.mrf.mxu0
    %v744 = vadd.f32 %v286, %v743
    %745 = vmatmul.bf16.gmra.mxu0 %v425
    %v746 = vpop.f32.mrf.mxu0
    %v747 = vadd.f32 %v286, %v746
    %v748 = vpop.f32.mrf.mxu0
    %v749 = vadd.f32 %v286, %v748
    %750 = vmatmul.bf16.gmra.mxu0 %v428
    %v751 = vpop.f32.mrf.mxu0
    %v752 = vadd.f32 %v286, %v751
    %v753 = vpop.f32.mrf.mxu0
    %v754 = vadd.f32 %v286, %v753
    %755 = vmatmul.bf16.gmra.mxu0 %v431
    %v756 = vpop.f32.mrf.mxu0
    %v757 = vadd.f32 %v286, %v756
    %v758 = vpop.f32.mrf.mxu0
    %v759 = vadd.f32 %v286, %v758
    %760 = vmatmul.bf16.gmra.mxu0 %v434
    %v761 = vpop.f32.mrf.mxu0
    %v762 = vadd.f32 %v286, %v761
    %v763 = vpop.f32.mrf.mxu0
    %v764 = vadd.f32 %v286, %v763
    %765 = vmatmul.bf16.gmra.mxu0 %v437
    %v766 = vpop.f32.mrf.mxu0
    %v767 = vadd.f32 %v286, %v766
    %v768 = vpop.f32.mrf.mxu0
    %v769 = vadd.f32 %v286, %v768
    %770 = vmatmul.bf16.gmra.mxu0 %v440
    %v771 = vpop.f32.mrf.mxu0
    %v772 = vadd.f32 %v286, %v771
    %v773 = vpop.f32.mrf.mxu0
    %v774 = vadd.f32 %v286, %v773
    %775 = vmatmul.bf16.gmra.mxu0 %v443
    %v776 = vpop.f32.mrf.mxu0
    %v777 = vadd.f32 %v286, %v776
    %v778 = vpop.f32.mrf.mxu0
    %v779 = vadd.f32 %v286, %v778
    %780 = vmatmul.bf16.gmra.mxu0 %v446
    %v781 = vpop.f32.mrf.mxu0
    %v782 = vadd.f32 %v286, %v781
    %v783 = vpop.f32.mrf.mxu0
    %v784 = vadd.f32 %v286, %v783
    %785 = vmatmul.bf16.gmra.mxu0 %v449
    %v786 = vpop.f32.mrf.mxu0
    %v787 = vadd.f32 %v286, %v786
    %v788 = vpop.f32.mrf.mxu0
    %v789 = vadd.f32 %v286, %v788
    %790 = vmatmul.bf16.gmra.mxu0 %v452
    %v791 = vpop.f32.mrf.mxu0
    %v792 = vadd.f32 %v286, %v791
    %v793 = vpop.f32.mrf.mxu0
    %v794 = vadd.f32 %v286, %v793
    %795 = vmatmul.bf16.gmra.mxu0 %v455
    %v796 = vpop.f32.mrf.mxu0
    %v797 = vadd.f32 %v286, %v796
    %v798 = vpop.f32.mrf.mxu0
    %v799 = vadd.f32 %v286, %v798
    %800 = vmatmul.bf16.gmra.mxu0 %v458
    %v801 = vpop.f32.mrf.mxu0
    %v802 = vadd.f32 %v286, %v801
    %v803 = vpop.f32.mrf.mxu0
    %v804 = vadd.f32 %v286, %v803
    %805 = vmatmul.bf16.gmra.mxu0 %v461
    %v806 = vpop.f32.mrf.mxu0
    %v807 = vadd.f32 %v286, %v806
    %v808 = vpop.f32.mrf.mxu0
    %v809 = vadd.f32 %v286, %v808
    %810 = vmatmul.bf16.gmra.mxu0 %v464
    %v811 = vpop.f32.mrf.mxu0
    %v812 = vadd.f32 %v286, %v811
    %v813 = vpop.f32.mrf.mxu0
    %v814 = vadd.f32 %v286, %v813
    %815 = vmatmul.bf16.gmra.mxu0 %v467
    %v816 = vpop.f32.mrf.mxu0
    %v817 = vadd.f32 %v286, %v816
    %v818 = vpop.f32.mrf.mxu0
    %v819 = vadd.f32 %v286, %v818
    %820 = vmatmul.bf16.gmra.mxu0 %v470
    %v821 = vpop.f32.mrf.mxu0
    %v822 = vadd.f32 %v286, %v821
    %v823 = vpop.f32.mrf.mxu0
    %v824 = vadd.f32 %v286, %v823
    %825 = vmatmul.bf16.gmra.mxu0 %v473
    %v826 = vpop.f32.mrf.mxu0
    %v827 = vadd.f32 %v286, %v826
    %v828 = vpop.f32.mrf.mxu0
    %v829 = vadd.f32 %v286, %v828
    %830 = vmatmul.bf16.gmra.mxu0 %v476
    %v831 = vpop.f32.mrf.mxu0
    %v832 = vadd.f32 %v286, %v831
    %v833 = vpop.f32.mrf.mxu0
    %v834 = vadd.f32 %v286, %v833
    %835 = vmatmul.bf16.gmra.mxu0 %v479
    %v836 = vpop.f32.mrf.mxu0
    %v837 = vadd.f32 %v286, %v836
    %v838 = vpop.f32.mrf.mxu0
    %v839 = vadd.f32 %v286, %v838
    %840 = vmatmul.bf16.gmra.mxu0 %v482
    %v841 = vpop.f32.mrf.mxu0
    %v842 = vadd.f32 %v286, %v841
    %v843 = vpop.f32.mrf.mxu0
    %v844 = vadd.f32 %v286, %v843
    %845 = vmatmul.bf16.gmra.mxu0 %v485
    %v846 = vpop.f32.mrf.mxu0
    %v847 = vadd.f32 %v286, %v846
    %v848 = vpop.f32.mrf.mxu0
    %v849 = vadd.f32 %v286, %v848
    %850 = vmatmul.bf16.gmra.mxu0 %v488
    %v851 = vpop.f32.mrf.mxu0
    %v852 = vadd.f32 %v286, %v851
    %v853 = vpop.f32.mrf.mxu0
    %v854 = vadd.f32 %v286, %v853
    %855 = vmatmul.bf16.gmra.mxu0 %v491
    %v856 = vpop.f32.mrf.mxu0
    %v857 = vadd.f32 %v286, %v856
    %v858 = vpop.f32.mrf.mxu0
    %v859 = vadd.f32 %v286, %v858
    %860 = vmatmul.bf16.gmra.mxu0 %v494
    %v861 = vpop.f32.mrf.mxu0
    %v862 = vadd.f32 %v286, %v861
    %v863 = vpop.f32.mrf.mxu0
    %v864 = vadd.f32 %v286, %v863
    %865 = vmatmul.bf16.gmra.mxu0 %v497
    %v866 = vpop.f32.mrf.mxu0
    %v867 = vadd.f32 %v286, %v866
    %v868 = vpop.f32.mrf.mxu0
    %v869 = vadd.f32 %v286, %v868
    %870 = vmatmul.bf16.gmra.mxu0 %v500
    %v871 = vpop.f32.mrf.mxu0
    %v872 = vadd.f32 %v286, %v871
    %v873 = vpop.f32.mrf.mxu0
    %v874 = vadd.f32 %v286, %v873
    %875 = vmatmul.bf16.gmra.mxu0 %v503
    %v876 = vpop.f32.mrf.mxu0
    %v877 = vadd.f32 %v286, %v876
    %v878 = vpop.f32.mrf.mxu0
    %v879 = vadd.f32 %v286, %v878
    %880 = vdwg.mxu0
    %v881 = vld [vmem:[#allocation4] sm:$0x1]
    %v882 = vld [vmem:[#allocation6] sm:$0x1]
    %vm883 = vcmask 130048
    %v884 = vsel %vm883, %v522, 0.0
    %v885 = vsel %vm883, %v524, 0.0
    %v886 = vadd.f32 %v884, %v885
    %v887 = vsel %vm883, %v527, 0.0
    %v888 = vadd.f32 %v886, %v887
    %v889 = vsel %vm883, %v529, 0.0
    %v890 = vadd.f32 %v888, %v889
    %v891 = vsel %vm883, %v532, 0.0
    %v892 = vadd.f32 %v890, %v891
    %v893 = vsel %vm883, %v534, 0.0
    %v894 = vadd.f32 %v892, %v893
    %v895 = vsel %vm883, %v537, 0.0
    %v896 = vadd.f32 %v894, %v895
    %v897 = vsel %vm883, %v539, 0.0
    %v898 = vadd.f32 %v896, %v897
    %v899 = vsel %vm883, %v542, 0.0
    %v900 = vadd.f32 %v898, %v899
    %v901 = vsel %vm883, %v544, 0.0
    %v902 = vadd.f32 %v900, %v901
    %v903 = vsel %vm883, %v547, 0.0
    %v904 = vadd.f32 %v902, %v903
    %v905 = vsel %vm883, %v549, 0.0
    %v906 = vadd.f32 %v904, %v905
    %v907 = vsel %vm883, %v552, 0.0
    %v908 = vadd.f32 %v906, %v907
    %v909 = vsel %vm883, %v554, 0.0
    %v910 = vadd.f32 %v908, %v909
    %v911 = vsel %vm883, %v557, 0.0
    %v912 = vadd.f32 %v910, %v911
    %v913 = vsel %vm883, %v559, 0.0
    %v914 = vadd.f32 %v912, %v913
    %v915 = vsel %vm883, %v562, 0.0
    %v916 = vadd.f32 %v914, %v915
    %v917 = vsel %vm883, %v564, 0.0
    %v918 = vadd.f32 %v916, %v917
    %v919 = vsel %vm883, %v567, 0.0
    %v920 = vadd.f32 %v918, %v919
    %v921 = vsel %vm883, %v569, 0.0
    %v922 = vadd.f32 %v920, %v921
    %v923 = vsel %vm883, %v572, 0.0
    %v924 = vadd.f32 %v922, %v923
    %v925 = vsel %vm883, %v574, 0.0
    %v926 = vadd.f32 %v924, %v925
    %v927 = vsel %vm883, %v577, 0.0
    %v928 = vadd.f32 %v926, %v927
    %v929 = vsel %vm883, %v579, 0.0
    %v930 = vadd.f32 %v928, %v929
    %v931 = vsel %vm883, %v582, 0.0
    %v932 = vadd.f32 %v930, %v931
    %v933 = vsel %vm883, %v584, 0.0
    %v934 = vadd.f32 %v932, %v933
    %v935 = vsel %vm883, %v587, 0.0
    %v936 = vadd.f32 %v934, %v935
    %v937 = vsel %vm883, %v589, 0.0
    %v938 = vadd.f32 %v936, %v937
    %v939 = vsel %vm883, %v592, 0.0
    %v940 = vadd.f32 %v938, %v939
    %v941 = vsel %vm883, %v594, 0.0
    %v942 = vadd.f32 %v940, %v941
    %v943 = vsel %vm883, %v597, 0.0
    %v944 = vadd.f32 %v942, %v943
    %v945 = vsel %vm883, %v599, 0.0
    %v946 = vadd.f32 %v944, %v945
    %v947 = vsel %vm883, %v602, 0.0
    %v948 = vadd.f32 %v946, %v947
    %v949 = vsel %vm883, %v604, 0.0
    %v950 = vadd.f32 %v948, %v949
    %v951 = vsel %vm883, %v607, 0.0
    %v952 = vadd.f32 %v950, %v951
    %v953 = vsel %vm883, %v609, 0.0
    %v954 = vadd.f32 %v952, %v953
    %v955 = vsel %vm883, %v612, 0.0
    %v956 = vadd.f32 %v954, %v955
    %v957 = vsel %vm883, %v614, 0.0
    %v958 = vadd.f32 %v956, %v957
    %v959 = vsel %vm883, %v617, 0.0
    %v960 = vadd.f32 %v958, %v959
    %v961 = vsel %vm883, %v619, 0.0
    %v962 = vadd.f32 %v960, %v961
    %v963 = vsel %vm883, %v622, 0.0
    %v964 = vadd.f32 %v962, %v963
    %v965 = vsel %vm883, %v624, 0.0
    %v966 = vadd.f32 %v964, %v965
    %v967 = vsel %vm883, %v627, 0.0
    %v968 = vadd.f32 %v966, %v967
    %v969 = vsel %vm883, %v629, 0.0
    %v970 = vadd.f32 %v968, %v969
    %v971 = vsel %vm883, %v632, 0.0
    %v972 = vadd.f32 %v970, %v971
    %v973 = vsel %vm883, %v634, 0.0
    %v974 = vadd.f32 %v972, %v973
    %v975 = vsel %vm883, %v637, 0.0
    %v976 = vadd.f32 %v974, %v975
    %v977 = vsel %vm883, %v639, 0.0
    %v978 = vadd.f32 %v976, %v977
    %v979 = vsel %vm883, %v642, 0.0
    %v980 = vadd.f32 %v978, %v979
    %v981 = vsel %vm883, %v644, 0.0
    %v982 = vadd.f32 %v980, %v981
    %v983 = vsel %vm883, %v647, 0.0
    %v984 = vadd.f32 %v982, %v983
    %v985 = vsel %vm883, %v649, 0.0
    %v986 = vadd.f32 %v984, %v985
    %v987 = vsel %vm883, %v652, 0.0
    %v988 = vadd.f32 %v986, %v987
    %v989 = vsel %vm883, %v654, 0.0
    %v990 = vadd.f32 %v988, %v989
    %v991 = vsel %vm883, %v657, 0.0
    %v992 = vadd.f32 %v990, %v991
    %v993 = vsel %vm883, %v659, 0.0
    %v994 = vadd.f32 %v992, %v993
    %v995 = vsel %vm883, %v662, 0.0
    %v996 = vadd.f32 %v994, %v995
    %v997 = vsel %vm883, %v664, 0.0
    %v998 = vadd.f32 %v996, %v997
    %v999 = vsel %vm883, %v667, 0.0
    %v1000 = vadd.f32 %v998, %v999
    %v1001 = vsel %vm883, %v669, 0.0
    %v1002 = vadd.f32 %v1000, %v1001
    %v1003 = vsel %vm883, %v672, 0.0
    %v1004 = vadd.f32 %v1002, %v1003
    %v1005 = vsel %vm883, %v674, 0.0
    %v1006 = vadd.f32 %v1004, %v1005
    %v1007 = vsel %vm883, %v677, 0.0
    %v1008 = vadd.f32 %v1006, %v1007
    %v1009 = vsel %vm883, %v679, 0.0
    %v1010 = vadd.f32 %v1008, %v1009
    %v1011 = vsel %vm883, %v682, 0.0
    %v1012 = vadd.f32 %v1010, %v1011
    %v1013 = vsel %vm883, %v684, 0.0
    %v1014 = vadd.f32 %v1012, %v1013
    %v1015 = vsel %vm883, %v687, 0.0
    %v1016 = vadd.f32 %v1014, %v1015
    %v1017 = vsel %vm883, %v689, 0.0
    %v1018 = vadd.f32 %v1016, %v1017
    %v1019 = vsel %vm883, %v692, 0.0
    %v1020 = vadd.f32 %v1018, %v1019
    %v1021 = vsel %vm883, %v694, 0.0
    %v1022 = vadd.f32 %v1020, %v1021
    %v1023 = vsel %vm883, %v697, 0.0
    %v1024 = vadd.f32 %v1022, %v1023
    %v1025 = vsel %vm883, %v699, 0.0
    %v1026 = vadd.f32 %v1024, %v1025
    %v1027 = vsel %vm883, %v702, 0.0
    %v1028 = vadd.f32 %v1026, %v1027
    %v1029 = vsel %vm883, %v704, 0.0
    %v1030 = vadd.f32 %v1028, %v1029
    %v1031 = vsel %vm883, %v707, 0.0
    %v1032 = vadd.f32 %v1030, %v1031
    %v1033 = vsel %vm883, %v709, 0.0
    %v1034 = vadd.f32 %v1032, %v1033
    %v1035 = vsel %vm883, %v712, 0.0
    %v1036 = vadd.f32 %v1034, %v1035
    %v1037 = vsel %vm883, %v714, 0.0
    %v1038 = vadd.f32 %v1036, %v1037
    %v1039 = vsel %vm883, %v717, 0.0
    %v1040 = vadd.f32 %v1038, %v1039
    %v1041 = vsel %vm883, %v719, 0.0
    %v1042 = vadd.f32 %v1040, %v1041
    %v1043 = vsel %vm883, %v722, 0.0
    %v1044 = vadd.f32 %v1042, %v1043
    %v1045 = vsel %vm883, %v724, 0.0
    %v1046 = vadd.f32 %v1044, %v1045
    %v1047 = vsel %vm883, %v727, 0.0
    %v1048 = vadd.f32 %v1046, %v1047
    %v1049 = vsel %vm883, %v729, 0.0
    %v1050 = vadd.f32 %v1048, %v1049
    %v1051 = vsel %vm883, %v732, 0.0
    %v1052 = vadd.f32 %v1050, %v1051
    %v1053 = vsel %vm883, %v734, 0.0
    %v1054 = vadd.f32 %v1052, %v1053
    %v1055 = vsel %vm883, %v737, 0.0
    %v1056 = vadd.f32 %v1054, %v1055
    %v1057 = vsel %vm883, %v739, 0.0
    %v1058 = vadd.f32 %v1056, %v1057
    %v1059 = vsel %vm883, %v742, 0.0
    %v1060 = vadd.f32 %v1058, %v1059
    %v1061 = vsel %vm883, %v744, 0.0
    %v1062 = vadd.f32 %v1060, %v1061
    %v1063 = vsel %vm883, %v747, 0.0
    %v1064 = vadd.f32 %v1062, %v1063
    %v1065 = vsel %vm883, %v749, 0.0
    %v1066 = vadd.f32 %v1064, %v1065
    %v1067 = vsel %vm883, %v752, 0.0
    %v1068 = vadd.f32 %v1066, %v1067
    %v1069 = vsel %vm883, %v754, 0.0
    %v1070 = vadd.f32 %v1068, %v1069
    %v1071 = vsel %vm883, %v757, 0.0
    %v1072 = vadd.f32 %v1070, %v1071
    %v1073 = vsel %vm883, %v759, 0.0
    %v1074 = vadd.f32 %v1072, %v1073
    %v1075 = vsel %vm883, %v762, 0.0
    %v1076 = vadd.f32 %v1074, %v1075
    %v1077 = vsel %vm883, %v764, 0.0
    %v1078 = vadd.f32 %v1076, %v1077
    %v1079 = vsel %vm883, %v767, 0.0
    %v1080 = vadd.f32 %v1078, %v1079
    %v1081 = vsel %vm883, %v769, 0.0
    %v1082 = vadd.f32 %v1080, %v1081
    %v1083 = vsel %vm883, %v772, 0.0
    %v1084 = vadd.f32 %v1082, %v1083
    %v1085 = vsel %vm883, %v774, 0.0
    %v1086 = vadd.f32 %v1084, %v1085
    %v1087 = vsel %vm883, %v777, 0.0
    %v1088 = vadd.f32 %v1086, %v1087
    %v1089 = vsel %vm883, %v779, 0.0
    %v1090 = vadd.f32 %v1088, %v1089
    %v1091 = vsel %vm883, %v782, 0.0
    %v1092 = vadd.f32 %v1090, %v1091
    %v1093 = vsel %vm883, %v784, 0.0
    %v1094 = vadd.f32 %v1092, %v1093
    %v1095 = vsel %vm883, %v787, 0.0
    %v1096 = vadd.f32 %v1094, %v1095
    %v1097 = vsel %vm883, %v789, 0.0
    %v1098 = vadd.f32 %v1096, %v1097
    %v1099 = vsel %vm883, %v792, 0.0
    %v1100 = vadd.f32 %v1098, %v1099
    %v1101 = vsel %vm883, %v794, 0.0
    %v1102 = vadd.f32 %v1100, %v1101
    %v1103 = vsel %vm883, %v797, 0.0
    %v1104 = vadd.f32 %v1102, %v1103
    %v1105 = vsel %vm883, %v799, 0.0
    %v1106 = vadd.f32 %v1104, %v1105
    %v1107 = vsel %vm883, %v802, 0.0
    %v1108 = vadd.f32 %v1106, %v1107
    %v1109 = vsel %vm883, %v804, 0.0
    %v1110 = vadd.f32 %v1108, %v1109
    %v1111 = vsel %vm883, %v807, 0.0
    %v1112 = vadd.f32 %v1110, %v1111
    %v1113 = vsel %vm883, %v809, 0.0
    %v1114 = vadd.f32 %v1112, %v1113
    %v1115 = vsel %vm883, %v812, 0.0
    %v1116 = vadd.f32 %v1114, %v1115
    %v1117 = vsel %vm883, %v814, 0.0
    %v1118 = vadd.f32 %v1116, %v1117
    %v1119 = vsel %vm883, %v817, 0.0
    %v1120 = vadd.f32 %v1118, %v1119
    %v1121 = vsel %vm883, %v819, 0.0
    %v1122 = vadd.f32 %v1120, %v1121
    %v1123 = vsel %vm883, %v822, 0.0
    %v1124 = vadd.f32 %v1122, %v1123
    %v1125 = vsel %vm883, %v824, 0.0
    %v1126 = vadd.f32 %v1124, %v1125
    %v1127 = vsel %vm883, %v827, 0.0
    %v1128 = vadd.f32 %v1126, %v1127
    %v1129 = vsel %vm883, %v829, 0.0
    %v1130 = vadd.f32 %v1128, %v1129
    %v1131 = vsel %vm883, %v832, 0.0
    %v1132 = vadd.f32 %v1130, %v1131
    %v1133 = vsel %vm883, %v834, 0.0
    %v1134 = vadd.f32 %v1132, %v1133
    %v1135 = vsel %vm883, %v837, 0.0
    %v1136 = vadd.f32 %v1134, %v1135
    %v1137 = vsel %vm883, %v839, 0.0
    %v1138 = vadd.f32 %v1136, %v1137
    %v1139 = vsel %vm883, %v842, 0.0
    %v1140 = vadd.f32 %v1138, %v1139
    %v1141 = vsel %vm883, %v844, 0.0
    %v1142 = vadd.f32 %v1140, %v1141
    %v1143 = vsel %vm883, %v847, 0.0
    %v1144 = vadd.f32 %v1142, %v1143
    %v1145 = vsel %vm883, %v849, 0.0
    %v1146 = vadd.f32 %v1144, %v1145
    %v1147 = vsel %vm883, %v852, 0.0
    %v1148 = vadd.f32 %v1146, %v1147
    %v1149 = vsel %vm883, %v854, 0.0
    %v1150 = vadd.f32 %v1148, %v1149
    %v1151 = vsel %vm883, %v857, 0.0
    %v1152 = vadd.f32 %v1150, %v1151
    %v1153 = vsel %vm883, %v859, 0.0
    %v1154 = vadd.f32 %v1152, %v1153
    %v1155 = vsel %vm883, %v862, 0.0
    %v1156 = vadd.f32 %v1154, %v1155
    %v1157 = vsel %vm883, %v864, 0.0
    %v1158 = vadd.f32 %v1156, %v1157
    %v1159 = vsel %vm883, %v867, 0.0
    %v1160 = vadd.f32 %v1158, %v1159
    %v1161 = vsel %vm883, %v869, 0.0
    %v1162 = vadd.f32 %v1160, %v1161
    %v1163 = vsel %vm883, %v872, 0.0
    %v1164 = vadd.f32 %v1162, %v1163
    %v1165 = vsel %vm883, %v874, 0.0
    %v1166 = vadd.f32 %v1164, %v1165
    %v1167 = vsel %vm883, %v877, 0.0
    %v1168 = vadd.f32 %v1166, %v1167
    %v1169 = vsel %vm883, %v879, 0.0
    %v1170 = vadd.f32 %v1168, %v1169
    %v1171 = vrot.slane %v1170, 4
    %v1172 = vadd.f32 %v1170, %v1171
    %v1173 = vrot.slane %v1172, 2
    %v1174 = vadd.f32 %v1172, %v1173
    %v1175 = vrot.slane %v1174, 1
    %v1176 = vadd.f32 %v1174, %v1175
    %v1177 = vrcp.pop 1152.0
    %v1178 = vmul.f32 1152.0, %v1177
    %v1179 = vsub.f32 1.0, %v1178
    %v1180 = vmul.f32 %v1177, %v1179
    %v1181 = vadd.f32 %v1177, %v1180
    %vm1182 = vweird.f32 %v1177
    %v1183 = vsel %vm1182, %v1177, %v1181
    %v1184 = vmul.f32 %v1176, %v1183
    %v1185 = vmul.f32 %v522, %v522
    %v1186 = vmul.f32 %v524, %v524
    %v1187 = vmul.f32 %v527, %v527
    %v1188 = vmul.f32 %v529, %v529
    %v1189 = vmul.f32 %v532, %v532
    %v1190 = vmul.f32 %v534, %v534
    %v1191 = vmul.f32 %v537, %v537
    %v1192 = vmul.f32 %v539, %v539
    %v1193 = vmul.f32 %v542, %v542
    %v1194 = vmul.f32 %v544, %v544
    %v1195 = vmul.f32 %v547, %v547
    %v1196 = vmul.f32 %v549, %v549
    %v1197 = vmul.f32 %v552, %v552
    %v1198 = vmul.f32 %v554, %v554
    %v1199 = vmul.f32 %v557, %v557
    %v1200 = vmul.f32 %v559, %v559
    %v1201 = vmul.f32 %v562, %v562
    %v1202 = vmul.f32 %v564, %v564
    %v1203 = vmul.f32 %v567, %v567
    %v1204 = vmul.f32 %v569, %v569
    %v1205 = vmul.f32 %v572, %v572
    %v1206 = vmul.f32 %v574, %v574
    %v1207 = vmul.f32 %v577, %v577
    %v1208 = vmul.f32 %v579, %v579
    %v1209 = vmul.f32 %v582, %v582
    %v1210 = vmul.f32 %v584, %v584
    %v1211 = vmul.f32 %v587, %v587
    %v1212 = vmul.f32 %v589, %v589
    %v1213 = vmul.f32 %v592, %v592
    %v1214 = vmul.f32 %v594, %v594
    %v1215 = vmul.f32 %v597, %v597
    %v1216 = vmul.f32 %v599, %v599
    %v1217 = vmul.f32 %v602, %v602
    %v1218 = vmul.f32 %v604, %v604
    %v1219 = vmul.f32 %v607, %v607
    %v1220 = vmul.f32 %v609, %v609
    %v1221 = vmul.f32 %v612, %v612
    %v1222 = vmul.f32 %v614, %v614
    %v1223 = vmul.f32 %v617, %v617
    %v1224 = vmul.f32 %v619, %v619
    %v1225 = vmul.f32 %v622, %v622
    %v1226 = vmul.f32 %v624, %v624
    %v1227 = vmul.f32 %v627, %v627
    %v1228 = vmul.f32 %v629, %v629
    %v1229 = vmul.f32 %v632, %v632
    %v1230 = vmul.f32 %v634, %v634
    %v1231 = vmul.f32 %v637, %v637
    %v1232 = vmul.f32 %v639, %v639
    %v1233 = vmul.f32 %v642, %v642
    %v1234 = vmul.f32 %v644, %v644
    %v1235 = vmul.f32 %v647, %v647
    %v1236 = vmul.f32 %v649, %v649
    %v1237 = vmul.f32 %v652, %v652
    %v1238 = vmul.f32 %v654, %v654
    %v1239 = vmul.f32 %v657, %v657
    %v1240 = vmul.f32 %v659, %v659
    %v1241 = vmul.f32 %v662, %v662
    %v1242 = vmul.f32 %v664, %v664
    %v1243 = vmul.f32 %v667, %v667
    %v1244 = vmul.f32 %v669, %v669
    %v1245 = vmul.f32 %v672, %v672
    %v1246 = vmul.f32 %v674, %v674
    %v1247 = vmul.f32 %v677, %v677
    %v1248 = vmul.f32 %v679, %v679
    %v1249 = vmul.f32 %v682, %v682
    %v1250 = vmul.f32 %v684, %v684
    %v1251 = vmul.f32 %v687, %v687
    %v1252 = vmul.f32 %v689, %v689
    %v1253 = vmul.f32 %v692, %v692
    %v1254 = vmul.f32 %v694, %v694
    %v1255 = vmul.f32 %v697, %v697
    %v1256 = vmul.f32 %v699, %v699
    %v1257 = vmul.f32 %v702, %v702
    %v1258 = vmul.f32 %v704, %v704
    %v1259 = vmul.f32 %v707, %v707
    %v1260 = vmul.f32 %v709, %v709
    %v1261 = vmul.f32 %v712, %v712
    %v1262 = vmul.f32 %v714, %v714
    %v1263 = vmul.f32 %v717, %v717
    %v1264 = vmul.f32 %v719, %v719
    %v1265 = vmul.f32 %v722, %v722
    %v1266 = vmul.f32 %v724, %v724
    %v1267 = vmul.f32 %v727, %v727
    %v1268 = vmul.f32 %v729, %v729
    %v1269 = vmul.f32 %v732, %v732
    %v1270 = vmul.f32 %v734, %v734
    %v1271 = vmul.f32 %v737, %v737
    %v1272 = vmul.f32 %v739, %v739
    %v1273 = vmul.f32 %v742, %v742
    %v1274 = vmul.f32 %v744, %v744
    %v1275 = vmul.f32 %v747, %v747
    %v1276 = vmul.f32 %v749, %v749
    %v1277 = vmul.f32 %v752, %v752
    %v1278 = vmul.f32 %v754, %v754
    %v1279 = vmul.f32 %v757, %v757
    %v1280 = vmul.f32 %v759, %v759
    %v1281 = vmul.f32 %v762, %v762
    %v1282 = vmul.f32 %v764, %v764
    %v1283 = vmul.f32 %v767, %v767
    %v1284 = vmul.f32 %v769, %v769
    %v1285 = vmul.f32 %v772, %v772
    %v1286 = vmul.f32 %v774, %v774
    %v1287 = vmul.f32 %v777, %v777
    %v1288 = vmul.f32 %v779, %v779
    %v1289 = vmul.f32 %v782, %v782
    %v1290 = vmul.f32 %v784, %v784
    %v1291 = vmul.f32 %v787, %v787
    %v1292 = vmul.f32 %v789, %v789
    %v1293 = vmul.f32 %v792, %v792
    %v1294 = vmul.f32 %v794, %v794
    %v1295 = vmul.f32 %v797, %v797
    %v1296 = vmul.f32 %v799, %v799
    %v1297 = vmul.f32 %v802, %v802
    %v1298 = vmul.f32 %v804, %v804
    %v1299 = vmul.f32 %v807, %v807
    %v1300 = vmul.f32 %v809, %v809
    %v1301 = vmul.f32 %v812, %v812
    %v1302 = vmul.f32 %v814, %v814
    %v1303 = vmul.f32 %v817, %v817
    %v1304 = vmul.f32 %v819, %v819
    %v1305 = vmul.f32 %v822, %v822
    %v1306 = vmul.f32 %v824, %v824
    %v1307 = vmul.f32 %v827, %v827
    %v1308 = vmul.f32 %v829, %v829
    %v1309 = vmul.f32 %v832, %v832
    %v1310 = vmul.f32 %v834, %v834
    %v1311 = vmul.f32 %v837, %v837
    %v1312 = vmul.f32 %v839, %v839
    %v1313 = vmul.f32 %v842, %v842
    %v1314 = vmul.f32 %v844, %v844
    %v1315 = vmul.f32 %v847, %v847
    %v1316 = vmul.f32 %v849, %v849
    %v1317 = vmul.f32 %v852, %v852
    %v1318 = vmul.f32 %v854, %v854
    %v1319 = vmul.f32 %v857, %v857
    %v1320 = vmul.f32 %v859, %v859
    %v1321 = vmul.f32 %v862, %v862
    %v1322 = vmul.f32 %v864, %v864
    %v1323 = vmul.f32 %v867, %v867
    %v1324 = vmul.f32 %v869, %v869
    %v1325 = vmul.f32 %v872, %v872
    %v1326 = vmul.f32 %v874, %v874
    %v1327 = vmul.f32 %v877, %v877
    %v1328 = vmul.f32 %v879, %v879
    %v1329 = vsel %vm883, %v1185, 0.0
    %v1330 = vsel %vm883, %v1186, 0.0
    %v1331 = vadd.f32 %v1329, %v1330
    %v1332 = vsel %vm883, %v1187, 0.0
    %v1333 = vadd.f32 %v1331, %v1332
    %v1334 = vsel %vm883, %v1188, 0.0
    %v1335 = vadd.f32 %v1333, %v1334
    %v1336 = vsel %vm883, %v1189, 0.0
    %v1337 = vadd.f32 %v1335, %v1336
    %v1338 = vsel %vm883, %v1190, 0.0
    %v1339 = vadd.f32 %v1337, %v1338
    %v1340 = vsel %vm883, %v1191, 0.0
    %v1341 = vadd.f32 %v1339, %v1340
    %v1342 = vsel %vm883, %v1192, 0.0
    %v1343 = vadd.f32 %v1341, %v1342
    %v1344 = vsel %vm883, %v1193, 0.0
    %v1345 = vadd.f32 %v1343, %v1344
    %v1346 = vsel %vm883, %v1194, 0.0
    %v1347 = vadd.f32 %v1345, %v1346
    %v1348 = vsel %vm883, %v1195, 0.0
    %v1349 = vadd.f32 %v1347, %v1348
    %v1350 = vsel %vm883, %v1196, 0.0
    %v1351 = vadd.f32 %v1349, %v1350
    %v1352 = vsel %vm883, %v1197, 0.0
    %v1353 = vadd.f32 %v1351, %v1352
    %v1354 = vsel %vm883, %v1198, 0.0
    %v1355 = vadd.f32 %v1353, %v1354
    %v1356 = vsel %vm883, %v1199, 0.0
    %v1357 = vadd.f32 %v1355, %v1356
    %v1358 = vsel %vm883, %v1200, 0.0
    %v1359 = vadd.f32 %v1357, %v1358
    %v1360 = vsel %vm883, %v1201, 0.0
    %v1361 = vadd.f32 %v1359, %v1360
    %v1362 = vsel %vm883, %v1202, 0.0
    %v1363 = vadd.f32 %v1361, %v1362
    %v1364 = vsel %vm883, %v1203, 0.0
    %v1365 = vadd.f32 %v1363, %v1364
    %v1366 = vsel %vm883, %v1204, 0.0
    %v1367 = vadd.f32 %v1365, %v1366
    %v1368 = vsel %vm883, %v1205, 0.0
    %v1369 = vadd.f32 %v1367, %v1368
    %v1370 = vsel %vm883, %v1206, 0.0
    %v1371 = vadd.f32 %v1369, %v1370
    %v1372 = vsel %vm883, %v1207, 0.0
    %v1373 = vadd.f32 %v1371, %v1372
    %v1374 = vsel %vm883, %v1208, 0.0
    %v1375 = vadd.f32 %v1373, %v1374
    %v1376 = vsel %vm883, %v1209, 0.0
    %v1377 = vadd.f32 %v1375, %v1376
    %v1378 = vsel %vm883, %v1210, 0.0
    %v1379 = vadd.f32 %v1377, %v1378
    %v1380 = vsel %vm883, %v1211, 0.0
    %v1381 = vadd.f32 %v1379, %v1380
    %v1382 = vsel %vm883, %v1212, 0.0
    %v1383 = vadd.f32 %v1381, %v1382
    %v1384 = vsel %vm883, %v1213, 0.0
    %v1385 = vadd.f32 %v1383, %v1384
    %v1386 = vsel %vm883, %v1214, 0.0
    %v1387 = vadd.f32 %v1385, %v1386
    %v1388 = vsel %vm883, %v1215, 0.0
    %v1389 = vadd.f32 %v1387, %v1388
    %v1390 = vsel %vm883, %v1216, 0.0
    %v1391 = vadd.f32 %v1389, %v1390
    %v1392 = vsel %vm883, %v1217, 0.0
    %v1393 = vadd.f32 %v1391, %v1392
    %v1394 = vsel %vm883, %v1218, 0.0
    %v1395 = vadd.f32 %v1393, %v1394
    %v1396 = vsel %vm883, %v1219, 0.0
    %v1397 = vadd.f32 %v1395, %v1396
    %v1398 = vsel %vm883, %v1220, 0.0
    %v1399 = vadd.f32 %v1397, %v1398
    %v1400 = vsel %vm883, %v1221, 0.0
    %v1401 = vadd.f32 %v1399, %v1400
    %v1402 = vsel %vm883, %v1222, 0.0
    %v1403 = vadd.f32 %v1401, %v1402
    %v1404 = vsel %vm883, %v1223, 0.0
    %v1405 = vadd.f32 %v1403, %v1404
    %v1406 = vsel %vm883, %v1224, 0.0
    %v1407 = vadd.f32 %v1405, %v1406
    %v1408 = vsel %vm883, %v1225, 0.0
    %v1409 = vadd.f32 %v1407, %v1408
    %v1410 = vsel %vm883, %v1226, 0.0
    %v1411 = vadd.f32 %v1409, %v1410
    %v1412 = vsel %vm883, %v1227, 0.0
    %v1413 = vadd.f32 %v1411, %v1412
    %v1414 = vsel %vm883, %v1228, 0.0
    %v1415 = vadd.f32 %v1413, %v1414
    %v1416 = vsel %vm883, %v1229, 0.0
    %v1417 = vadd.f32 %v1415, %v1416
    %v1418 = vsel %vm883, %v1230, 0.0
    %v1419 = vadd.f32 %v1417, %v1418
    %v1420 = vsel %vm883, %v1231, 0.0
    %v1421 = vadd.f32 %v1419, %v1420
    %v1422 = vsel %vm883, %v1232, 0.0
    %v1423 = vadd.f32 %v1421, %v1422
    %v1424 = vsel %vm883, %v1233, 0.0
    %v1425 = vadd.f32 %v1423, %v1424
    %v1426 = vsel %vm883, %v1234, 0.0
    %v1427 = vadd.f32 %v1425, %v1426
    %v1428 = vsel %vm883, %v1235, 0.0
    %v1429 = vadd.f32 %v1427, %v1428
    %v1430 = vsel %vm883, %v1236, 0.0
    %v1431 = vadd.f32 %v1429, %v1430
    %v1432 = vsel %vm883, %v1237, 0.0
    %v1433 = vadd.f32 %v1431, %v1432
    %v1434 = vsel %vm883, %v1238, 0.0
    %v1435 = vadd.f32 %v1433, %v1434
    %v1436 = vsel %vm883, %v1239, 0.0
    %v1437 = vadd.f32 %v1435, %v1436
    %v1438 = vsel %vm883, %v1240, 0.0
    %v1439 = vadd.f32 %v1437, %v1438
    %v1440 = vsel %vm883, %v1241, 0.0
    %v1441 = vadd.f32 %v1439, %v1440
    %v1442 = vsel %vm883, %v1242, 0.0
    %v1443 = vadd.f32 %v1441, %v1442
    %v1444 = vsel %vm883, %v1243, 0.0
    %v1445 = vadd.f32 %v1443, %v1444
    %v1446 = vsel %vm883, %v1244, 0.0
    %v1447 = vadd.f32 %v1445, %v1446
    %v1448 = vsel %vm883, %v1245, 0.0
    %v1449 = vadd.f32 %v1447, %v1448
    %v1450 = vsel %vm883, %v1246, 0.0
    %v1451 = vadd.f32 %v1449, %v1450
    %v1452 = vsel %vm883, %v1247, 0.0
    %v1453 = vadd.f32 %v1451, %v1452
    %v1454 = vsel %vm883, %v1248, 0.0
    %v1455 = vadd.f32 %v1453, %v1454
    %v1456 = vsel %vm883, %v1249, 0.0
    %v1457 = vadd.f32 %v1455, %v1456
    %v1458 = vsel %vm883, %v1250, 0.0
    %v1459 = vadd.f32 %v1457, %v1458
    %v1460 = vsel %vm883, %v1251, 0.0
    %v1461 = vadd.f32 %v1459, %v1460
    %v1462 = vsel %vm883, %v1252, 0.0
    %v1463 = vadd.f32 %v1461, %v1462
    %v1464 = vsel %vm883, %v1253, 0.0
    %v1465 = vadd.f32 %v1463, %v1464
    %v1466 = vsel %vm883, %v1254, 0.0
    %v1467 = vadd.f32 %v1465, %v1466
    %v1468 = vsel %vm883, %v1255, 0.0
    %v1469 = vadd.f32 %v1467, %v1468
    %v1470 = vsel %vm883, %v1256, 0.0
    %v1471 = vadd.f32 %v1469, %v1470
    %v1472 = vsel %vm883, %v1257, 0.0
    %v1473 = vadd.f32 %v1471, %v1472
    %v1474 = vsel %vm883, %v1258, 0.0
    %v1475 = vadd.f32 %v1473, %v1474
    %v1476 = vsel %vm883, %v1259, 0.0
    %v1477 = vadd.f32 %v1475, %v1476
    %v1478 = vsel %vm883, %v1260, 0.0
    %v1479 = vadd.f32 %v1477, %v1478
    %v1480 = vsel %vm883, %v1261, 0.0
    %v1481 = vadd.f32 %v1479, %v1480
    %v1482 = vsel %vm883, %v1262, 0.0
    %v1483 = vadd.f32 %v1481, %v1482
    %v1484 = vsel %vm883, %v1263, 0.0
    %v1485 = vadd.f32 %v1483, %v1484
    %v1486 = vsel %vm883, %v1264, 0.0
    %v1487 = vadd.f32 %v1485, %v1486
    %v1488 = vsel %vm883, %v1265, 0.0
    %v1489 = vadd.f32 %v1487, %v1488
    %v1490 = vsel %vm883, %v1266, 0.0
    %v1491 = vadd.f32 %v1489, %v1490
    %v1492 = vsel %vm883, %v1267, 0.0
    %v1493 = vadd.f32 %v1491, %v1492
    %v1494 = vsel %vm883, %v1268, 0.0
    %v1495 = vadd.f32 %v1493, %v1494
    %v1496 = vsel %vm883, %v1269, 0.0
    %v1497 = vadd.f32 %v1495, %v1496
    %v1498 = vsel %vm883, %v1270, 0.0
    %v1499 = vadd.f32 %v1497, %v1498
    %v1500 = vsel %vm883, %v1271, 0.0
    %v1501 = vadd.f32 %v1499, %v1500
    %v1502 = vsel %vm883, %v1272, 0.0
    %v1503 = vadd.f32 %v1501, %v1502
    %v1504 = vsel %vm883, %v1273, 0.0
    %v1505 = vadd.f32 %v1503, %v1504
    %v1506 = vsel %vm883, %v1274, 0.0
    %v1507 = vadd.f32 %v1505, %v1506
    %v1508 = vsel %vm883, %v1275, 0.0
    %v1509 = vadd.f32 %v1507, %v1508
    %v1510 = vsel %vm883, %v1276, 0.0
    %v1511 = vadd.f32 %v1509, %v1510
    %v1512 = vsel %vm883, %v1277, 0.0
    %v1513 = vadd.f32 %v1511, %v1512
    %v1514 = vsel %vm883, %v1278, 0.0
    %v1515 = vadd.f32 %v1513, %v1514
    %v1516 = vsel %vm883, %v1279, 0.0
    %v1517 = vadd.f32 %v1515, %v1516
    %v1518 = vsel %vm883, %v1280, 0.0
    %v1519 = vadd.f32 %v1517, %v1518
    %v1520 = vsel %vm883, %v1281, 0.0
    %v1521 = vadd.f32 %v1519, %v1520
    %v1522 = vsel %vm883, %v1282, 0.0
    %v1523 = vadd.f32 %v1521, %v1522
    %v1524 = vsel %vm883, %v1283, 0.0
    %v1525 = vadd.f32 %v1523, %v1524
    %v1526 = vsel %vm883, %v1284, 0.0
    %v1527 = vadd.f32 %v1525, %v1526
    %v1528 = vsel %vm883, %v1285, 0.0
    %v1529 = vadd.f32 %v1527, %v1528
    %v1530 = vsel %vm883, %v1286, 0.0
    %v1531 = vadd.f32 %v1529, %v1530
    %v1532 = vsel %vm883, %v1287, 0.0
    %v1533 = vadd.f32 %v1531, %v1532
    %v1534 = vsel %vm883, %v1288, 0.0
    %v1535 = vadd.f32 %v1533, %v1534
    %v1536 = vsel %vm883, %v1289, 0.0
    %v1537 = vadd.f32 %v1535, %v1536
    %v1538 = vsel %vm883, %v1290, 0.0
    %v1539 = vadd.f32 %v1537, %v1538
    %v1540 = vsel %vm883, %v1291, 0.0
    %v1541 = vadd.f32 %v1539, %v1540
    %v1542 = vsel %vm883, %v1292, 0.0
    %v1543 = vadd.f32 %v1541, %v1542
    %v1544 = vsel %vm883, %v1293, 0.0
    %v1545 = vadd.f32 %v1543, %v1544
    %v1546 = vsel %vm883, %v1294, 0.0
    %v1547 = vadd.f32 %v1545, %v1546
    %v1548 = vsel %vm883, %v1295, 0.0
    %v1549 = vadd.f32 %v1547, %v1548
    %v1550 = vsel %vm883, %v1296, 0.0
    %v1551 = vadd.f32 %v1549, %v1550
    %v1552 = vsel %vm883, %v1297, 0.0
    %v1553 = vadd.f32 %v1551, %v1552
    %v1554 = vsel %vm883, %v1298, 0.0
    %v1555 = vadd.f32 %v1553, %v1554
    %v1556 = vsel %vm883, %v1299, 0.0
    %v1557 = vadd.f32 %v1555, %v1556
    %v1558 = vsel %vm883, %v1300, 0.0
    %v1559 = vadd.f32 %v1557, %v1558
    %v1560 = vsel %vm883, %v1301, 0.0
    %v1561 = vadd.f32 %v1559, %v1560
    %v1562 = vsel %vm883, %v1302, 0.0
    %v1563 = vadd.f32 %v1561, %v1562
    %v1564 = vsel %vm883, %v1303, 0.0
    %v1565 = vadd.f32 %v1563, %v1564
    %v1566 = vsel %vm883, %v1304, 0.0
    %v1567 = vadd.f32 %v1565, %v1566
    %v1568 = vsel %vm883, %v1305, 0.0
    %v1569 = vadd.f32 %v1567, %v1568
    %v1570 = vsel %vm883, %v1306, 0.0
    %v1571 = vadd.f32 %v1569, %v1570
    %v1572 = vsel %vm883, %v1307, 0.0
    %v1573 = vadd.f32 %v1571, %v1572
    %v1574 = vsel %vm883, %v1308, 0.0
    %v1575 = vadd.f32 %v1573, %v1574
    %v1576 = vsel %vm883, %v1309, 0.0
    %v1577 = vadd.f32 %v1575, %v1576
    %v1578 = vsel %vm883, %v1310, 0.0
    %v1579 = vadd.f32 %v1577, %v1578
    %v1580 = vsel %vm883, %v1311, 0.0
    %v1581 = vadd.f32 %v1579, %v1580
    %v1582 = vsel %vm883, %v1312, 0.0
    %v1583 = vadd.f32 %v1581, %v1582
    %v1584 = vsel %vm883, %v1313, 0.0
    %v1585 = vadd.f32 %v1583, %v1584
    %v1586 = vsel %vm883, %v1314, 0.0
    %v1587 = vadd.f32 %v1585, %v1586
    %v1588 = vsel %vm883, %v1315, 0.0
    %v1589 = vadd.f32 %v1587, %v1588
    %v1590 = vsel %vm883, %v1316, 0.0
    %v1591 = vadd.f32 %v1589, %v1590
    %v1592 = vsel %vm883, %v1317, 0.0
    %v1593 = vadd.f32 %v1591, %v1592
    %v1594 = vsel %vm883, %v1318, 0.0
    %v1595 = vadd.f32 %v1593, %v1594
    %v1596 = vsel %vm883, %v1319, 0.0
    %v1597 = vadd.f32 %v1595, %v1596
    %v1598 = vsel %vm883, %v1320, 0.0
    %v1599 = vadd.f32 %v1597, %v1598
    %v1600 = vsel %vm883, %v1321, 0.0
    %v1601 = vadd.f32 %v1599, %v1600
    %v1602 = vsel %vm883, %v1322, 0.0
    %v1603 = vadd.f32 %v1601, %v1602
    %v1604 = vsel %vm883, %v1323, 0.0
    %v1605 = vadd.f32 %v1603, %v1604
    %v1606 = vsel %vm883, %v1324, 0.0
    %v1607 = vadd.f32 %v1605, %v1606
    %v1608 = vsel %vm883, %v1325, 0.0
    %v1609 = vadd.f32 %v1607, %v1608
    %v1610 = vsel %vm883, %v1326, 0.0
    %v1611 = vadd.f32 %v1609, %v1610
    %v1612 = vsel %vm883, %v1327, 0.0
    %v1613 = vadd.f32 %v1611, %v1612
    %v1614 = vsel %vm883, %v1328, 0.0
    %v1615 = vadd.f32 %v1613, %v1614
    %v1616 = vrot.slane %v1615, 4
    %v1617 = vadd.f32 %v1615, %v1616
    %v1618 = vrot.slane %v1617, 2
    %v1619 = vadd.f32 %v1617, %v1618
    %v1620 = vrot.slane %v1619, 1
    %v1621 = vadd.f32 %v1619, %v1620
    %v1622 = vmul.f32 %v1621, %v1183
    %v1623 = vmul.f32 %v1184, %v1184
    %v1624 = vsub.f32 %v1622, %v1623
    %v1625 = vadd.f32 %v1624, 1e-05
    %v1626 = vrsqrt.pop %v1625
    %v1627 = vmul.f32 %v1626, %v1625
    %v1628 = vmul.f32 %v1627, %v1626
    %v1629 = vmul.f32 0.5, %v1628
    %v1630 = vsub.f32 1.5, %v1629
    %v1631 = vmul.f32 %v1626, %v1630
    %vm1632 = vweird.f32 %v1625
    %vm1633 = vweird.f32 %v1626
    %vm1634 = vmor %vm1632, %vm1633
    %v1635 = vsel %vm1634, %v1626, %v1631
    %v1636 = vmul.f32 %v881, %v1635
    %v1638 = vperm.slane %v1636, 0
    %v1640 = vmul.f32 %v522, %v1638
    %v1641 = vmul.f32 %v524, %v1638
    %v1642 = vmul.f32 %v527, %v1638
    %v1643 = vmul.f32 %v529, %v1638
    %v1644 = vmul.f32 %v532, %v1638
    %v1645 = vmul.f32 %v534, %v1638
    %v1646 = vmul.f32 %v537, %v1638
    %v1647 = vmul.f32 %v539, %v1638
    %v1648 = vmul.f32 %v542, %v1638
    %v1649 = vmul.f32 %v544, %v1638
    %v1650 = vmul.f32 %v547, %v1638
    %v1651 = vmul.f32 %v549, %v1638
    %v1652 = vmul.f32 %v552, %v1638
    %v1653 = vmul.f32 %v554, %v1638
    %v1654 = vmul.f32 %v557, %v1638
    %v1655 = vmul.f32 %v559, %v1638
    %v1656 = vmul.f32 %v562, %v1638
    %v1657 = vmul.f32 %v564, %v1638
    %v1658 = vmul.f32 %v567, %v1638
    %v1659 = vmul.f32 %v569, %v1638
    %v1660 = vmul.f32 %v572, %v1638
    %v1661 = vmul.f32 %v574, %v1638
    %v1662 = vmul.f32 %v577, %v1638
    %v1663 = vmul.f32 %v579, %v1638
    %v1664 = vmul.f32 %v582, %v1638
    %v1665 = vmul.f32 %v584, %v1638
    %v1666 = vmul.f32 %v587, %v1638
    %v1667 = vmul.f32 %v589, %v1638
    %v1668 = vmul.f32 %v592, %v1638
    %v1669 = vmul.f32 %v594, %v1638
    %v1670 = vmul.f32 %v597, %v1638
    %v1671 = vmul.f32 %v599, %v1638
    %v1672 = vmul.f32 %v602, %v1638
    %v1673 = vmul.f32 %v604, %v1638
    %v1674 = vmul.f32 %v607, %v1638
    %v1675 = vmul.f32 %v609, %v1638
    %v1676 = vmul.f32 %v612, %v1638
    %v1677 = vmul.f32 %v614, %v1638
    %v1678 = vmul.f32 %v617, %v1638
    %v1679 = vmul.f32 %v619, %v1638
    %v1680 = vmul.f32 %v622, %v1638
    %v1681 = vmul.f32 %v624, %v1638
    %v1682 = vmul.f32 %v627, %v1638
    %v1683 = vmul.f32 %v629, %v1638
    %v1684 = vmul.f32 %v632, %v1638
    %v1685 = vmul.f32 %v634, %v1638
    %v1686 = vmul.f32 %v637, %v1638
    %v1687 = vmul.f32 %v639, %v1638
    %v1688 = vmul.f32 %v642, %v1638
    %v1689 = vmul.f32 %v644, %v1638
    %v1690 = vmul.f32 %v647, %v1638
    %v1691 = vmul.f32 %v649, %v1638
    %v1692 = vmul.f32 %v652, %v1638
    %v1693 = vmul.f32 %v654, %v1638
    %v1694 = vmul.f32 %v657, %v1638
    %v1695 = vmul.f32 %v659, %v1638
    %v1696 = vmul.f32 %v662, %v1638
    %v1697 = vmul.f32 %v664, %v1638
    %v1698 = vmul.f32 %v667, %v1638
    %v1699 = vmul.f32 %v669, %v1638
    %v1700 = vmul.f32 %v672, %v1638
    %v1701 = vmul.f32 %v674, %v1638
    %v1702 = vmul.f32 %v677, %v1638
    %v1703 = vmul.f32 %v679, %v1638
    %v1704 = vmul.f32 %v682, %v1638
    %v1705 = vmul.f32 %v684, %v1638
    %v1706 = vmul.f32 %v687, %v1638
    %v1707 = vmul.f32 %v689, %v1638
    %v1708 = vmul.f32 %v692, %v1638
    %v1709 = vmul.f32 %v694, %v1638
    %v1710 = vmul.f32 %v697, %v1638
    %v1711 = vmul.f32 %v699, %v1638
    %v1712 = vmul.f32 %v702, %v1638
    %v1713 = vmul.f32 %v704, %v1638
    %v1714 = vmul.f32 %v707, %v1638
    %v1715 = vmul.f32 %v709, %v1638
    %v1716 = vmul.f32 %v712, %v1638
    %v1717 = vmul.f32 %v714, %v1638
    %v1718 = vmul.f32 %v717, %v1638
    %v1719 = vmul.f32 %v719, %v1638
    %v1720 = vmul.f32 %v722, %v1638
    %v1721 = vmul.f32 %v724, %v1638
    %v1722 = vmul.f32 %v727, %v1638
    %v1723 = vmul.f32 %v729, %v1638
    %v1724 = vmul.f32 %v732, %v1638
    %v1725 = vmul.f32 %v734, %v1638
    %v1726 = vmul.f32 %v737, %v1638
    %v1727 = vmul.f32 %v739, %v1638
    %v1728 = vmul.f32 %v742, %v1638
    %v1729 = vmul.f32 %v744, %v1638
    %v1730 = vmul.f32 %v747, %v1638
    %v1731 = vmul.f32 %v749, %v1638
    %v1732 = vmul.f32 %v752, %v1638
    %v1733 = vmul.f32 %v754, %v1638
    %v1734 = vmul.f32 %v757, %v1638
    %v1735 = vmul.f32 %v759, %v1638
    %v1736 = vmul.f32 %v762, %v1638
    %v1737 = vmul.f32 %v764, %v1638
    %v1738 = vmul.f32 %v767, %v1638
    %v1739 = vmul.f32 %v769, %v1638
    %v1740 = vmul.f32 %v772, %v1638
    %v1741 = vmul.f32 %v774, %v1638
    %v1742 = vmul.f32 %v777, %v1638
    %v1743 = vmul.f32 %v779, %v1638
    %v1744 = vmul.f32 %v782, %v1638
    %v1745 = vmul.f32 %v784, %v1638
    %v1746 = vmul.f32 %v787, %v1638
    %v1747 = vmul.f32 %v789, %v1638
    %v1748 = vmul.f32 %v792, %v1638
    %v1749 = vmul.f32 %v794, %v1638
    %v1750 = vmul.f32 %v797, %v1638
    %v1751 = vmul.f32 %v799, %v1638
    %v1752 = vmul.f32 %v802, %v1638
    %v1753 = vmul.f32 %v804, %v1638
    %v1754 = vmul.f32 %v807, %v1638
    %v1755 = vmul.f32 %v809, %v1638
    %v1756 = vmul.f32 %v812, %v1638
    %v1757 = vmul.f32 %v814, %v1638
    %v1758 = vmul.f32 %v817, %v1638
    %v1759 = vmul.f32 %v819, %v1638
    %v1760 = vmul.f32 %v822, %v1638
    %v1761 = vmul.f32 %v824, %v1638
    %v1762 = vmul.f32 %v827, %v1638
    %v1763 = vmul.f32 %v829, %v1638
    %v1764 = vmul.f32 %v832, %v1638
    %v1765 = vmul.f32 %v834, %v1638
    %v1766 = vmul.f32 %v837, %v1638
    %v1767 = vmul.f32 %v839, %v1638
    %v1768 = vmul.f32 %v842, %v1638
    %v1769 = vmul.f32 %v844, %v1638
    %v1770 = vmul.f32 %v847, %v1638
    %v1771 = vmul.f32 %v849, %v1638
    %v1772 = vmul.f32 %v852, %v1638
    %v1773 = vmul.f32 %v854, %v1638
    %v1774 = vmul.f32 %v857, %v1638
    %v1775 = vmul.f32 %v859, %v1638
    %v1776 = vmul.f32 %v862, %v1638
    %v1777 = vmul.f32 %v864, %v1638
    %v1778 = vmul.f32 %v867, %v1638
    %v1779 = vmul.f32 %v869, %v1638
    %v1780 = vmul.f32 %v872, %v1638
    %v1781 = vmul.f32 %v874, %v1638
    %v1782 = vmul.f32 %v877, %v1638
    %v1783 = vmul.f32 %v879, %v1638
    %v1784 = vmul.f32 %v1184, %v1636
    %v1785 = vsub.f32 %v882, %v1784
    %v1787 = vperm.slane %v1785, 0
    %v1789 = vadd.f32 %v1640, %v1787
    %v1790 = vadd.f32 %v1641, %v1787
    %v1791 = vadd.f32 %v1642, %v1787
    %v1792 = vadd.f32 %v1643, %v1787
    %v1793 = vadd.f32 %v1644, %v1787
    %v1794 = vadd.f32 %v1645, %v1787
    %v1795 = vadd.f32 %v1646, %v1787
    %v1796 = vadd.f32 %v1647, %v1787
    %v1797 = vadd.f32 %v1648, %v1787
    %v1798 = vadd.f32 %v1649, %v1787
    %v1799 = vadd.f32 %v1650, %v1787
    %v1800 = vadd.f32 %v1651, %v1787
    %v1801 = vadd.f32 %v1652, %v1787
    %v1802 = vadd.f32 %v1653, %v1787
    %v1803 = vadd.f32 %v1654, %v1787
    %v1804 = vadd.f32 %v1655, %v1787
    %v1805 = vadd.f32 %v1656, %v1787
    %v1806 = vadd.f32 %v1657, %v1787
    %v1807 = vadd.f32 %v1658, %v1787
    %v1808 = vadd.f32 %v1659, %v1787
    %v1809 = vadd.f32 %v1660, %v1787
    %v1810 = vadd.f32 %v1661, %v1787
    %v1811 = vadd.f32 %v1662, %v1787
    %v1812 = vadd.f32 %v1663, %v1787
    %v1813 = vadd.f32 %v1664, %v1787
    %v1814 = vadd.f32 %v1665, %v1787
    %v1815 = vadd.f32 %v1666, %v1787
    %v1816 = vadd.f32 %v1667, %v1787
    %v1817 = vadd.f32 %v1668, %v1787
    %v1818 = vadd.f32 %v1669, %v1787
    %v1819 = vadd.f32 %v1670, %v1787
    %v1820 = vadd.f32 %v1671, %v1787
    %v1821 = vadd.f32 %v1672, %v1787
    %v1822 = vadd.f32 %v1673, %v1787
    %v1823 = vadd.f32 %v1674, %v1787
    %v1824 = vadd.f32 %v1675, %v1787
    %v1825 = vadd.f32 %v1676, %v1787
    %v1826 = vadd.f32 %v1677, %v1787
    %v1827 = vadd.f32 %v1678, %v1787
    %v1828 = vadd.f32 %v1679, %v1787
    %v1829 = vadd.f32 %v1680, %v1787
    %v1830 = vadd.f32 %v1681, %v1787
    %v1831 = vadd.f32 %v1682, %v1787
    %v1832 = vadd.f32 %v1683, %v1787
    %v1833 = vadd.f32 %v1684, %v1787
    %v1834 = vadd.f32 %v1685, %v1787
    %v1835 = vadd.f32 %v1686, %v1787
    %v1836 = vadd.f32 %v1687, %v1787
    %v1837 = vadd.f32 %v1688, %v1787
    %v1838 = vadd.f32 %v1689, %v1787
    %v1839 = vadd.f32 %v1690, %v1787
    %v1840 = vadd.f32 %v1691, %v1787
    %v1841 = vadd.f32 %v1692, %v1787
    %v1842 = vadd.f32 %v1693, %v1787
    %v1843 = vadd.f32 %v1694, %v1787
    %v1844 = vadd.f32 %v1695, %v1787
    %v1845 = vadd.f32 %v1696, %v1787
    %v1846 = vadd.f32 %v1697, %v1787
    %v1847 = vadd.f32 %v1698, %v1787
    %v1848 = vadd.f32 %v1699, %v1787
    %v1849 = vadd.f32 %v1700, %v1787
    %v1850 = vadd.f32 %v1701, %v1787
    %v1851 = vadd.f32 %v1702, %v1787
    %v1852 = vadd.f32 %v1703, %v1787
    %v1853 = vadd.f32 %v1704, %v1787
    %v1854 = vadd.f32 %v1705, %v1787
    %v1855 = vadd.f32 %v1706, %v1787
    %v1856 = vadd.f32 %v1707, %v1787
    %v1857 = vadd.f32 %v1708, %v1787
    %v1858 = vadd.f32 %v1709, %v1787
    %v1859 = vadd.f32 %v1710, %v1787
    %v1860 = vadd.f32 %v1711, %v1787
    %v1861 = vadd.f32 %v1712, %v1787
    %v1862 = vadd.f32 %v1713, %v1787
    %v1863 = vadd.f32 %v1714, %v1787
    %v1864 = vadd.f32 %v1715, %v1787
    %v1865 = vadd.f32 %v1716, %v1787
    %v1866 = vadd.f32 %v1717, %v1787
    %v1867 = vadd.f32 %v1718, %v1787
    %v1868 = vadd.f32 %v1719, %v1787
    %v1869 = vadd.f32 %v1720, %v1787
    %v1870 = vadd.f32 %v1721, %v1787
    %v1871 = vadd.f32 %v1722, %v1787
    %v1872 = vadd.f32 %v1723, %v1787
    %v1873 = vadd.f32 %v1724, %v1787
    %v1874 = vadd.f32 %v1725, %v1787
    %v1875 = vadd.f32 %v1726, %v1787
    %v1876 = vadd.f32 %v1727, %v1787
    %v1877 = vadd.f32 %v1728, %v1787
    %v1878 = vadd.f32 %v1729, %v1787
    %v1879 = vadd.f32 %v1730, %v1787
    %v1880 = vadd.f32 %v1731, %v1787
    %v1881 = vadd.f32 %v1732, %v1787
    %v1882 = vadd.f32 %v1733, %v1787
    %v1883 = vadd.f32 %v1734, %v1787
    %v1884 = vadd.f32 %v1735, %v1787
    %v1885 = vadd.f32 %v1736, %v1787
    %v1886 = vadd.f32 %v1737, %v1787
    %v1887 = vadd.f32 %v1738, %v1787
    %v1888 = vadd.f32 %v1739, %v1787
    %v1889 = vadd.f32 %v1740, %v1787
    %v1890 = vadd.f32 %v1741, %v1787
    %v1891 = vadd.f32 %v1742, %v1787
    %v1892 = vadd.f32 %v1743, %v1787
    %v1893 = vadd.f32 %v1744, %v1787
    %v1894 = vadd.f32 %v1745, %v1787
    %v1895 = vadd.f32 %v1746, %v1787
    %v1896 = vadd.f32 %v1747, %v1787
    %v1897 = vadd.f32 %v1748, %v1787
    %v1898 = vadd.f32 %v1749, %v1787
    %v1899 = vadd.f32 %v1750, %v1787
    %v1900 = vadd.f32 %v1751, %v1787
    %v1901 = vadd.f32 %v1752, %v1787
    %v1902 = vadd.f32 %v1753, %v1787
    %v1903 = vadd.f32 %v1754, %v1787
    %v1904 = vadd.f32 %v1755, %v1787
    %v1905 = vadd.f32 %v1756, %v1787
    %v1906 = vadd.f32 %v1757, %v1787
    %v1907 = vadd.f32 %v1758, %v1787
    %v1908 = vadd.f32 %v1759, %v1787
    %v1909 = vadd.f32 %v1760, %v1787
    %v1910 = vadd.f32 %v1761, %v1787
    %v1911 = vadd.f32 %v1762, %v1787
    %v1912 = vadd.f32 %v1763, %v1787
    %v1913 = vadd.f32 %v1764, %v1787
    %v1914 = vadd.f32 %v1765, %v1787
    %v1915 = vadd.f32 %v1766, %v1787
    %v1916 = vadd.f32 %v1767, %v1787
    %v1917 = vadd.f32 %v1768, %v1787
    %v1918 = vadd.f32 %v1769, %v1787
    %v1919 = vadd.f32 %v1770, %v1787
    %v1920 = vadd.f32 %v1771, %v1787
    %v1921 = vadd.f32 %v1772, %v1787
    %v1922 = vadd.f32 %v1773, %v1787
    %v1923 = vadd.f32 %v1774, %v1787
    %v1924 = vadd.f32 %v1775, %v1787
    %v1925 = vadd.f32 %v1776, %v1787
    %v1926 = vadd.f32 %v1777, %v1787
    %v1927 = vadd.f32 %v1778, %v1787
    %v1928 = vadd.f32 %v1779, %v1787
    %v1929 = vadd.f32 %v1780, %v1787
    %v1930 = vadd.f32 %v1781, %v1787
    %v1931 = vadd.f32 %v1782, %v1787
    %v1932 = vadd.f32 %v1783, %v1787
    %v1933 = vmax.f32 %v1789, 0.0
    %v1934 = vmax.f32 %v1790, 0.0
    %v1935 = vmax.f32 %v1791, 0.0
    %v1936 = vmax.f32 %v1792, 0.0
    %v1937 = vmax.f32 %v1793, 0.0
    %v1938 = vmax.f32 %v1794, 0.0
    %v1939 = vmax.f32 %v1795, 0.0
    %v1940 = vmax.f32 %v1796, 0.0
    %v1941 = vmax.f32 %v1797, 0.0
    %v1942 = vmax.f32 %v1798, 0.0
    %v1943 = vmax.f32 %v1799, 0.0
    %v1944 = vmax.f32 %v1800, 0.0
    %v1945 = vmax.f32 %v1801, 0.0
    %v1946 = vmax.f32 %v1802, 0.0
    %v1947 = vmax.f32 %v1803, 0.0
    %v1948 = vmax.f32 %v1804, 0.0
    %v1949 = vmax.f32 %v1805, 0.0
    %v1950 = vmax.f32 %v1806, 0.0
    %v1951 = vmax.f32 %v1807, 0.0
    %v1952 = vmax.f32 %v1808, 0.0
    %v1953 = vmax.f32 %v1809, 0.0
    %v1954 = vmax.f32 %v1810, 0.0
    %v1955 = vmax.f32 %v1811, 0.0
    %v1956 = vmax.f32 %v1812, 0.0
    %v1957 = vmax.f32 %v1813, 0.0
    %v1958 = vmax.f32 %v1814, 0.0
    %v1959 = vmax.f32 %v1815, 0.0
    %v1960 = vmax.f32 %v1816, 0.0
    %v1961 = vmax.f32 %v1817, 0.0
    %v1962 = vmax.f32 %v1818, 0.0
    %v1963 = vmax.f32 %v1819, 0.0
    %v1964 = vmax.f32 %v1820, 0.0
    %v1965 = vmax.f32 %v1821, 0.0
    %v1966 = vmax.f32 %v1822, 0.0
    %v1967 = vmax.f32 %v1823, 0.0
    %v1968 = vmax.f32 %v1824, 0.0
    %v1969 = vmax.f32 %v1825, 0.0
    %v1970 = vmax.f32 %v1826, 0.0
    %v1971 = vmax.f32 %v1827, 0.0
    %v1972 = vmax.f32 %v1828, 0.0
    %v1973 = vmax.f32 %v1829, 0.0
    %v1974 = vmax.f32 %v1830, 0.0
    %v1975 = vmax.f32 %v1831, 0.0
    %v1976 = vmax.f32 %v1832, 0.0
    %v1977 = vmax.f32 %v1833, 0.0
    %v1978 = vmax.f32 %v1834, 0.0
    %v1979 = vmax.f32 %v1835, 0.0
    %v1980 = vmax.f32 %v1836, 0.0
    %v1981 = vmax.f32 %v1837, 0.0
    %v1982 = vmax.f32 %v1838, 0.0
    %v1983 = vmax.f32 %v1839, 0.0
    %v1984 = vmax.f32 %v1840, 0.0
    %v1985 = vmax.f32 %v1841, 0.0
    %v1986 = vmax.f32 %v1842, 0.0
    %v1987 = vmax.f32 %v1843, 0.0
    %v1988 = vmax.f32 %v1844, 0.0
    %v1989 = vmax.f32 %v1845, 0.0
    %v1990 = vmax.f32 %v1846, 0.0
    %v1991 = vmax.f32 %v1847, 0.0
    %v1992 = vmax.f32 %v1848, 0.0
    %v1993 = vmax.f32 %v1849, 0.0
    %v1994 = vmax.f32 %v1850, 0.0
    %v1995 = vmax.f32 %v1851, 0.0
    %v1996 = vmax.f32 %v1852, 0.0
    %v1997 = vmax.f32 %v1853, 0.0
    %v1998 = vmax.f32 %v1854, 0.0
    %v1999 = vmax.f32 %v1855, 0.0
    %v2000 = vmax.f32 %v1856, 0.0
    %v2001 = vmax.f32 %v1857, 0.0
    %v2002 = vmax.f32 %v1858, 0.0
    %v2003 = vmax.f32 %v1859, 0.0
    %v2004 = vmax.f32 %v1860, 0.0
    %v2005 = vmax.f32 %v1861, 0.0
    %v2006 = vmax.f32 %v1862, 0.0
    %v2007 = vmax.f32 %v1863, 0.0
    %v2008 = vmax.f32 %v1864, 0.0
    %v2009 = vmax.f32 %v1865, 0.0
    %v2010 = vmax.f32 %v1866, 0.0
    %v2011 = vmax.f32 %v1867, 0.0
    %v2012 = vmax.f32 %v1868, 0.0
    %v2013 = vmax.f32 %v1869, 0.0
    %v2014 = vmax.f32 %v1870, 0.0
    %v2015 = vmax.f32 %v1871, 0.0
    %v2016 = vmax.f32 %v1872, 0.0
    %v2017 = vmax.f32 %v1873, 0.0
    %v2018 = vmax.f32 %v1874, 0.0
    %v2019 = vmax.f32 %v1875, 0.0
    %v2020 = vmax.f32 %v1876, 0.0
    %v2021 = vmax.f32 %v1877, 0.0
    %v2022 = vmax.f32 %v1878, 0.0
    %v2023 = vmax.f32 %v1879, 0.0
    %v2024 = vmax.f32 %v1880, 0.0
    %v2025 = vmax.f32 %v1881, 0.0
    %v2026 = vmax.f32 %v1882, 0.0
    %v2027 = vmax.f32 %v1883, 0.0
    %v2028 = vmax.f32 %v1884, 0.0
    %v2029 = vmax.f32 %v1885, 0.0
    %v2030 = vmax.f32 %v1886, 0.0
    %v2031 = vmax.f32 %v1887, 0.0
    %v2032 = vmax.f32 %v1888, 0.0
    %v2033 = vmax.f32 %v1889, 0.0
    %v2034 = vmax.f32 %v1890, 0.0
    %v2035 = vmax.f32 %v1891, 0.0
    %v2036 = vmax.f32 %v1892, 0.0
    %v2037 = vmax.f32 %v1893, 0.0
    %v2038 = vmax.f32 %v1894, 0.0
    %v2039 = vmax.f32 %v1895, 0.0
    %v2040 = vmax.f32 %v1896, 0.0
    %v2041 = vmax.f32 %v1897, 0.0
    %v2042 = vmax.f32 %v1898, 0.0
    %v2043 = vmax.f32 %v1899, 0.0
    %v2044 = vmax.f32 %v1900, 0.0
    %v2045 = vmax.f32 %v1901, 0.0
    %v2046 = vmax.f32 %v1902, 0.0
    %v2047 = vmax.f32 %v1903, 0.0
    %v2048 = vmax.f32 %v1904, 0.0
    %v2049 = vmax.f32 %v1905, 0.0
    %v2050 = vmax.f32 %v1906, 0.0
    %v2051 = vmax.f32 %v1907, 0.0
    %v2052 = vmax.f32 %v1908, 0.0
    %v2053 = vmax.f32 %v1909, 0.0
    %v2054 = vmax.f32 %v1910, 0.0
    %v2055 = vmax.f32 %v1911, 0.0
    %v2056 = vmax.f32 %v1912, 0.0
    %v2057 = vmax.f32 %v1913, 0.0
    %v2058 = vmax.f32 %v1914, 0.0
    %v2059 = vmax.f32 %v1915, 0.0
    %v2060 = vmax.f32 %v1916, 0.0
    %v2061 = vmax.f32 %v1917, 0.0
    %v2062 = vmax.f32 %v1918, 0.0
    %v2063 = vmax.f32 %v1919, 0.0
    %v2064 = vmax.f32 %v1920, 0.0
    %v2065 = vmax.f32 %v1921, 0.0
    %v2066 = vmax.f32 %v1922, 0.0
    %v2067 = vmax.f32 %v1923, 0.0
    %v2068 = vmax.f32 %v1924, 0.0
    %v2069 = vmax.f32 %v1925, 0.0
    %v2070 = vmax.f32 %v1926, 0.0
    %v2071 = vmax.f32 %v1927, 0.0
    %v2072 = vmax.f32 %v1928, 0.0
    %v2073 = vmax.f32 %v1929, 0.0
    %v2074 = vmax.f32 %v1930, 0.0
    %v2075 = vmax.f32 %v1931, 0.0
    %v2076 = vmax.f32 %v1932, 0.0
    %2077 = vst.msk [vmem:[%s5] sm:$0xff] %vm883, %v1933
    %2078 = vst.msk [vmem:[%s5 + $0x8] sm:$0xff] %vm883, %v1934
    %2079 = vst.msk [vmem:[%s5 + $0x10] sm:$0xff] %vm883, %v1935
    %2080 = vst.msk [vmem:[%s5 + $0x18] sm:$0xff] %vm883, %v1936
    %2081 = vst.msk [vmem:[%s5 + $0x20] sm:$0xff] %vm883, %v1937
    %2082 = vst.msk [vmem:[%s5 + $0x28] sm:$0xff] %vm883, %v1938
    %2083 = vst.msk [vmem:[%s5 + $0x30] sm:$0xff] %vm883, %v1939
    %2084 = vst.msk [vmem:[%s5 + $0x38] sm:$0xff] %vm883, %v1940
    %2085 = vst.msk [vmem:[%s5 + $0x40] sm:$0xff] %vm883, %v1941
    %2086 = vst.msk [vmem:[%s5 + $0x48] sm:$0xff] %vm883, %v1942
    %2087 = vst.msk [vmem:[%s5 + $0x50] sm:$0xff] %vm883, %v1943
    %2088 = vst.msk [vmem:[%s5 + $0x58] sm:$0xff] %vm883, %v1944
    %2089 = vst.msk [vmem:[%s5 + $0x60] sm:$0xff] %vm883, %v1945
    %2090 = vst.msk [vmem:[%s5 + $0x68] sm:$0xff] %vm883, %v1946
    %2091 = vst.msk [vmem:[%s5 + $0x70] sm:$0xff] %vm883, %v1947
    %2092 = vst.msk [vmem:[%s5 + $0x78] sm:$0xff] %vm883, %v1948
    %2093 = vst.msk [vmem:[%s5 + $0x80] sm:$0xff] %vm883, %v1949
    %2094 = vst.msk [vmem:[%s5 + $0x88] sm:$0xff] %vm883, %v1950
    %2095 = vst.msk [vmem:[%s5 + $0x90] sm:$0xff] %vm883, %v1951
    %2096 = vst.msk [vmem:[%s5 + $0x98] sm:$0xff] %vm883, %v1952
    %2097 = vst.msk [vmem:[%s5 + $0xa0] sm:$0xff] %vm883, %v1953
    %2098 = vst.msk [vmem:[%s5 + $0xa8] sm:$0xff] %vm883, %v1954
    %2099 = vst.msk [vmem:[%s5 + $0xb0] sm:$0xff] %vm883, %v1955
    %2100 = vst.msk [vmem:[%s5 + $0xb8] sm:$0xff] %vm883, %v1956
    %2101 = vst.msk [vmem:[%s5 + $0xc0] sm:$0xff] %vm883, %v1957
    %2102 = vst.msk [vmem:[%s5 + $0xc8] sm:$0xff] %vm883, %v1958
    %2103 = vst.msk [vmem:[%s5 + $0xd0] sm:$0xff] %vm883, %v1959
    %2104 = vst.msk [vmem:[%s5 + $0xd8] sm:$0xff] %vm883, %v1960
    %2105 = vst.msk [vmem:[%s5 + $0xe0] sm:$0xff] %vm883, %v1961
    %2106 = vst.msk [vmem:[%s5 + $0xe8] sm:$0xff] %vm883, %v1962
    %2107 = vst.msk [vmem:[%s5 + $0xf0] sm:$0xff] %vm883, %v1963
    %2108 = vst.msk [vmem:[%s5 + $0xf8] sm:$0xff] %vm883, %v1964
    %2109 = vst.msk [vmem:[%s5 + $0x100] sm:$0xff] %vm883, %v1965
    %2110 = vst.msk [vmem:[%s5 + $0x108] sm:$0xff] %vm883, %v1966
    %2111 = vst.msk [vmem:[%s5 + $0x110] sm:$0xff] %vm883, %v1967
    %2112 = vst.msk [vmem:[%s5 + $0x118] sm:$0xff] %vm883, %v1968
    %2113 = vst.msk [vmem:[%s5 + $0x120] sm:$0xff] %vm883, %v1969
    %2114 = vst.msk [vmem:[%s5 + $0x128] sm:$0xff] %vm883, %v1970
    %2115 = vst.msk [vmem:[%s5 + $0x130] sm:$0xff] %vm883, %v1971
    %2116 = vst.msk [vmem:[%s5 + $0x138] sm:$0xff] %vm883, %v1972
    %2117 = vst.msk [vmem:[%s5 + $0x140] sm:$0xff] %vm883, %v1973
    %2118 = vst.msk [vmem:[%s5 + $0x148] sm:$0xff] %vm883, %v1974
    %2119 = vst.msk [vmem:[%s5 + $0x150] sm:$0xff] %vm883, %v1975
    %2120 = vst.msk [vmem:[%s5 + $0x158] sm:$0xff] %vm883, %v1976
    %2121 = vst.msk [vmem:[%s5 + $0x160] sm:$0xff] %vm883, %v1977
    %2122 = vst.msk [vmem:[%s5 + $0x168] sm:$0xff] %vm883, %v1978
    %2123 = vst.msk [vmem:[%s5 + $0x170] sm:$0xff] %vm883, %v1979
    %2124 = vst.msk [vmem:[%s5 + $0x178] sm:$0xff] %vm883, %v1980
    %2125 = vst.msk [vmem:[%s5 + $0x180] sm:$0xff] %vm883, %v1981
    %2126 = vst.msk [vmem:[%s5 + $0x188] sm:$0xff] %vm883, %v1982
    %2127 = vst.msk [vmem:[%s5 + $0x190] sm:$0xff] %vm883, %v1983
    %2128 = vst.msk [vmem:[%s5 + $0x198] sm:$0xff] %vm883, %v1984
    %2129 = vst.msk [vmem:[%s5 + $0x1a0] sm:$0xff] %vm883, %v1985
    %2130 = vst.msk [vmem:[%s5 + $0x1a8] sm:$0xff] %vm883, %v1986
    %2131 = vst.msk [vmem:[%s5 + $0x1b0] sm:$0xff] %vm883, %v1987
    %2132 = vst.msk [vmem:[%s5 + $0x1b8] sm:$0xff] %vm883, %v1988
    %2133 = vst.msk [vmem:[%s5 + $0x1c0] sm:$0xff] %vm883, %v1989
    %2134 = vst.msk [vmem:[%s5 + $0x1c8] sm:$0xff] %vm883, %v1990
    %2135 = vst.msk [vmem:[%s5 + $0x1d0] sm:$0xff] %vm883, %v1991
    %2136 = vst.msk [vmem:[%s5 + $0x1d8] sm:$0xff] %vm883, %v1992
    %2137 = vst.msk [vmem:[%s5 + $0x1e0] sm:$0xff] %vm883, %v1993
    %2138 = vst.msk [vmem:[%s5 + $0x1e8] sm:$0xff] %vm883, %v1994
    %2139 = vst.msk [vmem:[%s5 + $0x1f0] sm:$0xff] %vm883, %v1995
    %2140 = vst.msk [vmem:[%s5 + $0x1f8] sm:$0xff] %vm883, %v1996
    %2141 = vst.msk [vmem:[%s5 + $0x200] sm:$0xff] %vm883, %v1997
    %2142 = vst.msk [vmem:[%s5 + $0x208] sm:$0xff] %vm883, %v1998
    %2143 = vst.msk [vmem:[%s5 + $0x210] sm:$0xff] %vm883, %v1999
    %2144 = vst.msk [vmem:[%s5 + $0x218] sm:$0xff] %vm883, %v2000
    %2145 = vst.msk [vmem:[%s5 + $0x220] sm:$0xff] %vm883, %v2001
    %2146 = vst.msk [vmem:[%s5 + $0x228] sm:$0xff] %vm883, %v2002
    %2147 = vst.msk [vmem:[%s5 + $0x230] sm:$0xff] %vm883, %v2003
    %2148 = vst.msk [vmem:[%s5 + $0x238] sm:$0xff] %vm883, %v2004
    %2149 = vst.msk [vmem:[%s5 + $0x240] sm:$0xff] %vm883, %v2005
    %2150 = vst.msk [vmem:[%s5 + $0x248] sm:$0xff] %vm883, %v2006
    %2151 = vst.msk [vmem:[%s5 + $0x250] sm:$0xff] %vm883, %v2007
    %2152 = vst.msk [vmem:[%s5 + $0x258] sm:$0xff] %vm883, %v2008
    %2153 = vst.msk [vmem:[%s5 + $0x260] sm:$0xff] %vm883, %v2009
    %2154 = vst.msk [vmem:[%s5 + $0x268] sm:$0xff] %vm883, %v2010
    %2155 = vst.msk [vmem:[%s5 + $0x270] sm:$0xff] %vm883, %v2011
    %2156 = vst.msk [vmem:[%s5 + $0x278] sm:$0xff] %vm883, %v2012
    %2157 = vst.msk [vmem:[%s5 + $0x280] sm:$0xff] %vm883, %v2013
    %2158 = vst.msk [vmem:[%s5 + $0x288] sm:$0xff] %vm883, %v2014
    %2159 = vst.msk [vmem:[%s5 + $0x290] sm:$0xff] %vm883, %v2015
    %2160 = vst.msk [vmem:[%s5 + $0x298] sm:$0xff] %vm883, %v2016
    %2161 = vst.msk [vmem:[%s5 + $0x2a0] sm:$0xff] %vm883, %v2017
    %2162 = vst.msk [vmem:[%s5 + $0x2a8] sm:$0xff] %vm883, %v2018
    %2163 = vst.msk [vmem:[%s5 + $0x2b0] sm:$0xff] %vm883, %v2019
    %2164 = vst.msk [vmem:[%s5 + $0x2b8] sm:$0xff] %vm883, %v2020
    %2165 = vst.msk [vmem:[%s5 + $0x2c0] sm:$0xff] %vm883, %v2021
    %2166 = vst.msk [vmem:[%s5 + $0x2c8] sm:$0xff] %vm883, %v2022
    %2167 = vst.msk [vmem:[%s5 + $0x2d0] sm:$0xff] %vm883, %v2023
    %2168 = vst.msk [vmem:[%s5 + $0x2d8] sm:$0xff] %vm883, %v2024
    %2169 = vst.msk [vmem:[%s5 + $0x2e0] sm:$0xff] %vm883, %v2025
    %2170 = vst.msk [vmem:[%s5 + $0x2e8] sm:$0xff] %vm883, %v2026
    %2171 = vst.msk [vmem:[%s5 + $0x2f0] sm:$0xff] %vm883, %v2027
    %2172 = vst.msk [vmem:[%s5 + $0x2f8] sm:$0xff] %vm883, %v2028
    %2173 = vst.msk [vmem:[%s5 + $0x300] sm:$0xff] %vm883, %v2029
    %2174 = vst.msk [vmem:[%s5 + $0x308] sm:$0xff] %vm883, %v2030
    %2175 = vst.msk [vmem:[%s5 + $0x310] sm:$0xff] %vm883, %v2031
    %2176 = vst.msk [vmem:[%s5 + $0x318] sm:$0xff] %vm883, %v2032
    %2177 = vst.msk [vmem:[%s5 + $0x320] sm:$0xff] %vm883, %v2033
    %2178 = vst.msk [vmem:[%s5 + $0x328] sm:$0xff] %vm883, %v2034
    %2179 = vst.msk [vmem:[%s5 + $0x330] sm:$0xff] %vm883, %v2035
    %2180 = vst.msk [vmem:[%s5 + $0x338] sm:$0xff] %vm883, %v2036
    %2181 = vst.msk [vmem:[%s5 + $0x340] sm:$0xff] %vm883, %v2037
    %2182 = vst.msk [vmem:[%s5 + $0x348] sm:$0xff] %vm883, %v2038
    %2183 = vst.msk [vmem:[%s5 + $0x350] sm:$0xff] %vm883, %v2039
    %2184 = vst.msk [vmem:[%s5 + $0x358] sm:$0xff] %vm883, %v2040
    %2185 = vst.msk [vmem:[%s5 + $0x360] sm:$0xff] %vm883, %v2041
    %2186 = vst.msk [vmem:[%s5 + $0x368] sm:$0xff] %vm883, %v2042
    %2187 = vst.msk [vmem:[%s5 + $0x370] sm:$0xff] %vm883, %v2043
    %2188 = vst.msk [vmem:[%s5 + $0x378] sm:$0xff] %vm883, %v2044
    %2189 = vst.msk [vmem:[%s5 + $0x380] sm:$0xff] %vm883, %v2045
    %2190 = vst.msk [vmem:[%s5 + $0x388] sm:$0xff] %vm883, %v2046
    %2191 = vst.msk [vmem:[%s5 + $0x390] sm:$0xff] %vm883, %v2047
    %2192 = vst.msk [vmem:[%s5 + $0x398] sm:$0xff] %vm883, %v2048
    %2193 = vst.msk [vmem:[%s5 + $0x3a0] sm:$0xff] %vm883, %v2049
    %2194 = vst.msk [vmem:[%s5 + $0x3a8] sm:$0xff] %vm883, %v2050
    %2195 = vst.msk [vmem:[%s5 + $0x3b0] sm:$0xff] %vm883, %v2051
    %2196 = vst.msk [vmem:[%s5 + $0x3b8] sm:$0xff] %vm883, %v2052
    %2197 = vst.msk [vmem:[%s5 + $0x3c0] sm:$0xff] %vm883, %v2053
    %2198 = vst.msk [vmem:[%s5 + $0x3c8] sm:$0xff] %vm883, %v2054
    %2199 = vst.msk [vmem:[%s5 + $0x3d0] sm:$0xff] %vm883, %v2055
    %2200 = vst.msk [vmem:[%s5 + $0x3d8] sm:$0xff] %vm883, %v2056
    %2201 = vst.msk [vmem:[%s5 + $0x3e0] sm:$0xff] %vm883, %v2057
    %2202 = vst.msk [vmem:[%s5 + $0x3e8] sm:$0xff] %vm883, %v2058
    %2203 = vst.msk [vmem:[%s5 + $0x3f0] sm:$0xff] %vm883, %v2059
    %2204 = vst.msk [vmem:[%s5 + $0x3f8] sm:$0xff] %vm883, %v2060
    %2205 = vst.msk [vmem:[%s5 + $0x400] sm:$0xff] %vm883, %v2061
    %2206 = vst.msk [vmem:[%s5 + $0x408] sm:$0xff] %vm883, %v2062
    %2207 = vst.msk [vmem:[%s5 + $0x410] sm:$0xff] %vm883, %v2063
    %2208 = vst.msk [vmem:[%s5 + $0x418] sm:$0xff] %vm883, %v2064
    %2209 = vst.msk [vmem:[%s5 + $0x420] sm:$0xff] %vm883, %v2065
    %2210 = vst.msk [vmem:[%s5 + $0x428] sm:$0xff] %vm883, %v2066
    %2211 = vst.msk [vmem:[%s5 + $0x430] sm:$0xff] %vm883, %v2067
    %2212 = vst.msk [vmem:[%s5 + $0x438] sm:$0xff] %vm883, %v2068
    %2213 = vst.msk [vmem:[%s5 + $0x440] sm:$0xff] %vm883, %v2069
    %2214 = vst.msk [vmem:[%s5 + $0x448] sm:$0xff] %vm883, %v2070
    %2215 = vst.msk [vmem:[%s5 + $0x450] sm:$0xff] %vm883, %v2071
    %2216 = vst.msk [vmem:[%s5 + $0x458] sm:$0xff] %vm883, %v2072
    %2217 = vst.msk [vmem:[%s5 + $0x460] sm:$0xff] %vm883, %v2073
    %2218 = vst.msk [vmem:[%s5 + $0x468] sm:$0xff] %vm883, %v2074
    %2219 = vst.msk [vmem:[%s5 + $0x470] sm:$0xff] %vm883, %v2075
    %2220 = vst.msk [vmem:[%s5 + $0x478] sm:$0xff] %vm883, %v2076
    // Predicated region
    $region34: #{cvae_forward.6} parent=1 // pred_check
      _
    $region35: #{cvae_forward.6} parent=1 // pred_check_branch
      %2222 = sbr.rel (0) target = $region37
    $region36: #{cvae_forward.6} parent=1 // pred_region
      _
    $region37: #{cvae_forward.6} parent=1 // pred_fallthru
      _
    // Predicated region
    $region38: #{cvae_forward.6} parent=1 // pred_check
      _
    $region39: #{cvae_forward.6} parent=1 // pred_check_branch
      %2224 = sbr.rel (0) target = $region41
    $region40: #{cvae_forward.6} parent=1 // pred_region
      _
    $region41: #{cvae_forward.6} parent=1 // pred_fallthru
      _
    %2225 = vsyncpa [#allocation3], 1
    %2226 = vsyncpa [#allocation5], 1

// kernel: cvae_forward.7
$region0: #{cvae_forward.7}
  #allocation0 [shape = 'u32[]', space=smem, size = 0x4, offset = 0x4, fixed_abs, tag = 'smem constant byte address 0x4 - core index']
  #allocation1 [shape = 'u32[72,128]{1,0:T(1,128)}', space=vmem, size = 0x9000, scoped, tag = 'internal scratch']
  %s0 = inlined_call_operand.vmem [shape: f32[800,400], index: 0, kind: input, shape index: {}]
  %s1 = inlined_call_operand.vmem [shape: f32[400,32], index: 1, kind: input, shape index: {}]
  %s2 = inlined_call_operand.vmem [shape: f32[1,32], index: 2, kind: input, shape index: {}]
  %s3 = inlined_call_operand.vmem [shape: f32[1,32], index: 3, kind: input, shape index: {}]
  %s4 = inlined_call_operand.vmem [shape: f32[1,32], index: 4, kind: input, shape index: {}]
  %s5 = inlined_call_operand.vmem [shape: f32[800,32], index: 5, kind: output, shape index: {}]
  %s6 = sld [smem:[#allocation0]]
  $region30: #{cvae_forward.7} parent=0
    _
  %s8 = ssub.s32 1, %s6
  %s9 = scalar_select 0, %s8, %s6
  // Predicated region
  $region2: #{cvae_forward.7} parent=0 // pred_check
    _
  $region3: #{cvae_forward.7} parent=0 // pred_check_branch
    %11 = sbr.rel (0) target = $region5
  $region4: #{cvae_forward.7} parent=0 // pred_region
    _
  $region5: #{cvae_forward.7} parent=0 // pred_fallthru
    _
  // Predicated region
  $region6: #{cvae_forward.7} parent=0 // pred_check
    _
  $region7: #{cvae_forward.7} parent=0 // pred_check_branch
    %13 = sbr.rel (0) target = $region9
  $region8: #{cvae_forward.7} parent=0 // pred_region
    _
  $region9: #{cvae_forward.7} parent=0 // pred_fallthru
    _
  // Predicated region
  $region10: #{cvae_forward.7} parent=0 // pred_check
    _
  $region11: #{cvae_forward.7} parent=0 // pred_check_branch
    %15 = sbr.rel (0) target = $region13
  $region12: #{cvae_forward.7} parent=0 // pred_region
    _
  $region13: #{cvae_forward.7} parent=0 // pred_fallthru
    _
  // Predicated region
  $region14: #{cvae_forward.7} parent=0 // pred_check
    _
  $region15: #{cvae_forward.7} parent=0 // pred_check_branch
    %17 = sbr.rel (0) target = $region17
  $region16: #{cvae_forward.7} parent=0 // pred_region
    _
  $region17: #{cvae_forward.7} parent=0 // pred_fallthru
    _
  // Predicated region
  $region18: #{cvae_forward.7} parent=0 // pred_check
    _
  $region19: #{cvae_forward.7} parent=0 // pred_check_branch
    %19 = sbr.rel (0) target = $region21
  $region20: #{cvae_forward.7} parent=0 // pred_region
    _
  $region21: #{cvae_forward.7} parent=0 // pred_fallthru
    _
  %v21 = vld [vmem:[%s0] sm:$0xff]
  %v22 = vld [vmem:[%s0 + $0x8] sm:$0xff]
  %v23 = vld [vmem:[%s0 + $0x10] sm:$0xff]
  %v24 = vld [vmem:[%s0 + $0x18] sm:$0xff]
  %v25 = vld [vmem:[%s0 + $0x20] sm:$0xff]
  %v26 = vld [vmem:[%s0 + $0x28] sm:$0xff]
  %v27 = vld [vmem:[%s0 + $0x30] sm:$0xff]
  %v28 = vld [vmem:[%s0 + $0x38] sm:$0xff]
  %v29 = vld [vmem:[%s0 + $0x40] sm:$0xff]
  %v30 = vld [vmem:[%s0 + $0x48] sm:$0xff]
  %v31 = vld [vmem:[%s0 + $0x50] sm:$0xff]
  %v32 = vld [vmem:[%s0 + $0x58] sm:$0xff]
  %v33 = vld [vmem:[%s0 + $0x60] sm:$0xff]
  %v34 = vld [vmem:[%s0 + $0x68] sm:$0xff]
  %v35 = vld [vmem:[%s0 + $0x70] sm:$0xff]
  %v36 = vld [vmem:[%s0 + $0x78] sm:$0xff]
  %v37 = vld [vmem:[%s0 + $0x80] sm:$0xff]
  %v38 = vld [vmem:[%s0 + $0x88] sm:$0xff]
  %v39 = vld [vmem:[%s0 + $0x90] sm:$0xff]
  %v40 = vld [vmem:[%s0 + $0x98] sm:$0xff]
  %v41 = vld [vmem:[%s0 + $0xa0] sm:$0xff]
  %v42 = vld [vmem:[%s0 + $0xa8] sm:$0xff]
  %v43 = vld [vmem:[%s0 + $0xb0] sm:$0xff]
  %v44 = vld [vmem:[%s0 + $0xb8] sm:$0xff]
  %v45 = vld [vmem:[%s0 + $0xc0] sm:$0xff]
  %v46 = vld [vmem:[%s0 + $0xc8] sm:$0xff]
  %v47 = vld [vmem:[%s0 + $0xd0] sm:$0xff]
  %v48 = vld [vmem:[%s0 + $0xd8] sm:$0xff]
  %v49 = vld [vmem:[%s0 + $0xe0] sm:$0xff]
  %v50 = vld [vmem:[%s0 + $0xe8] sm:$0xff]
  %v51 = vld [vmem:[%s0 + $0xf0] sm:$0xff]
  %v52 = vld [vmem:[%s0 + $0xf8] sm:$0xff]
  %v53 = vld [vmem:[%s0 + $0x100] sm:$0xff]
  %v54 = vld [vmem:[%s0 + $0x108] sm:$0xff]
  %v55 = vld [vmem:[%s0 + $0x110] sm:$0xff]
  %v56 = vld [vmem:[%s0 + $0x118] sm:$0xff]
  %v57 = vld [vmem:[%s0 + $0x120] sm:$0xff]
  %v58 = vld [vmem:[%s0 + $0x128] sm:$0xff]
  %v59 = vld [vmem:[%s0 + $0x130] sm:$0xff]
  %v60 = vld [vmem:[%s0 + $0x138] sm:$0xff]
  %v61 = vld [vmem:[%s0 + $0x140] sm:$0xff]
  %v62 = vld [vmem:[%s0 + $0x148] sm:$0xff]
  %v63 = vld [vmem:[%s0 + $0x150] sm:$0xff]
  %v64 = vld [vmem:[%s0 + $0x158] sm:$0xff]
  %v65 = vld [vmem:[%s0 + $0x160] sm:$0xff]
  %v66 = vld [vmem:[%s0 + $0x168] sm:$0xff]
  %v67 = vld [vmem:[%s0 + $0x170] sm:$0xff]
  %v68 = vld [vmem:[%s0 + $0x178] sm:$0xff]
  %v69 = vld [vmem:[%s0 + $0x180] sm:$0xff]
  %v70 = vld [vmem:[%s0 + $0x188] sm:$0xff]
  %v71 = vld [vmem:[%s0 + $0x190] sm:$0xff]
  %v72 = vld [vmem:[%s0 + $0x198] sm:$0xff]
  %v73 = vld [vmem:[%s0 + $0x1a0] sm:$0xff]
  %v74 = vld [vmem:[%s0 + $0x1a8] sm:$0xff]
  %v75 = vld [vmem:[%s0 + $0x1b0] sm:$0xff]
  %v76 = vld [vmem:[%s0 + $0x1b8] sm:$0xff]
  %v77 = vld [vmem:[%s0 + $0x1c0] sm:$0xff]
  %v78 = vld [vmem:[%s0 + $0x1c8] sm:$0xff]
  %v79 = vld [vmem:[%s0 + $0x1d0] sm:$0xff]
  %v80 = vld [vmem:[%s0 + $0x1d8] sm:$0xff]
  %v81 = vld [vmem:[%s0 + $0x1e0] sm:$0xff]
  %v82 = vld [vmem:[%s0 + $0x1e8] sm:$0xff]
  %v83 = vld [vmem:[%s0 + $0x1f0] sm:$0xff]
  %v84 = vld [vmem:[%s0 + $0x1f8] sm:$0xff]
  %v85 = vld [vmem:[%s0 + $0x200] sm:$0xff]
  %v86 = vld [vmem:[%s0 + $0x208] sm:$0xff]
  %v87 = vld [vmem:[%s0 + $0x210] sm:$0xff]
  %v88 = vld [vmem:[%s0 + $0x218] sm:$0xff]
  %v89 = vld [vmem:[%s0 + $0x220] sm:$0xff]
  %v90 = vld [vmem:[%s0 + $0x228] sm:$0xff]
  %v91 = vld [vmem:[%s0 + $0x230] sm:$0xff]
  %v92 = vld [vmem:[%s0 + $0x238] sm:$0xff]
  %v93 = vld [vmem:[%s0 + $0x240] sm:$0xff]
  %v94 = vld [vmem:[%s0 + $0x248] sm:$0xff]
  %v95 = vld [vmem:[%s0 + $0x250] sm:$0xff]
  %v96 = vld [vmem:[%s0 + $0x258] sm:$0xff]
  %v97 = vld [vmem:[%s0 + $0x260] sm:$0xff]
  %v98 = vld [vmem:[%s0 + $0x268] sm:$0xff]
  %v99 = vld [vmem:[%s0 + $0x270] sm:$0xff]
  %v100 = vld [vmem:[%s0 + $0x278] sm:$0xff]
  %v101 = vld [vmem:[%s0 + $0x280] sm:$0xff]
  %v102 = vld [vmem:[%s0 + $0x288] sm:$0xff]
  %v103 = vld [vmem:[%s0 + $0x290] sm:$0xff]
  %v104 = vld [vmem:[%s0 + $0x298] sm:$0xff]
  %v105 = vld [vmem:[%s0 + $0x2a0] sm:$0xff]
  %v106 = vld [vmem:[%s0 + $0x2a8] sm:$0xff]
  %v107 = vld [vmem:[%s0 + $0x2b0] sm:$0xff]
  %v108 = vld [vmem:[%s0 + $0x2b8] sm:$0xff]
  %v109 = vld [vmem:[%s0 + $0x2c0] sm:$0xff]
  %v110 = vld [vmem:[%s0 + $0x2c8] sm:$0xff]
  %v111 = vld [vmem:[%s0 + $0x2d0] sm:$0xff]
  %v112 = vld [vmem:[%s0 + $0x2d8] sm:$0xff]
  %v113 = vld [vmem:[%s0 + $0x2e0] sm:$0xff]
  %v114 = vld [vmem:[%s0 + $0x2e8] sm:$0xff]
  %v115 = vld [vmem:[%s0 + $0x2f0] sm:$0xff]
  %v116 = vld [vmem:[%s0 + $0x2f8] sm:$0xff]
  %v117 = vld [vmem:[%s0 + $0x300] sm:$0xff]
  %v118 = vld [vmem:[%s0 + $0x308] sm:$0xff]
  %v119 = vld [vmem:[%s0 + $0x310] sm:$0xff]
  %v120 = vld [vmem:[%s0 + $0x318] sm:$0xff]
  %v121 = vld [vmem:[%s0 + $0x320] sm:$0xff]
  %v122 = vld [vmem:[%s0 + $0x328] sm:$0xff]
  %v123 = vld [vmem:[%s0 + $0x330] sm:$0xff]
  %v124 = vld [vmem:[%s0 + $0x338] sm:$0xff]
  %v125 = vld [vmem:[%s0 + $0x340] sm:$0xff]
  %v126 = vld [vmem:[%s0 + $0x348] sm:$0xff]
  %v127 = vld [vmem:[%s0 + $0x350] sm:$0xff]
  %v128 = vld [vmem:[%s0 + $0x358] sm:$0xff]
  %v129 = vld [vmem:[%s0 + $0x360] sm:$0xff]
  %v130 = vld [vmem:[%s0 + $0x368] sm:$0xff]
  %v131 = vld [vmem:[%s0 + $0x370] sm:$0xff]
  %v132 = vld [vmem:[%s0 + $0x378] sm:$0xff]
  %v133 = vld [vmem:[%s0 + $0x380] sm:$0xff]
  %v134 = vld [vmem:[%s0 + $0x388] sm:$0xff]
  %v135 = vld [vmem:[%s0 + $0x390] sm:$0xff]
  %v136 = vld [vmem:[%s0 + $0x398] sm:$0xff]
  %v137 = vld [vmem:[%s0 + $0x3a0] sm:$0xff]
  %v138 = vld [vmem:[%s0 + $0x3a8] sm:$0xff]
  %v139 = vld [vmem:[%s0 + $0x3b0] sm:$0xff]
  %v140 = vld [vmem:[%s0 + $0x3b8] sm:$0xff]
  %v141 = vld [vmem:[%s0 + $0x3c0] sm:$0xff]
  %v142 = vld [vmem:[%s0 + $0x3c8] sm:$0xff]
  %v143 = vld [vmem:[%s0 + $0x3d0] sm:$0xff]
  %v144 = vld [vmem:[%s0 + $0x3d8] sm:$0xff]
  %v145 = vld [vmem:[%s0 + $0x3e0] sm:$0xff]
  %v146 = vld [vmem:[%s0 + $0x3e8] sm:$0xff]
  %v147 = vld [vmem:[%s0 + $0x3f0] sm:$0xff]
  %v148 = vld [vmem:[%s0 + $0x3f8] sm:$0xff]
  %v149 = vld [vmem:[%s0 + $0x400] sm:$0xff]
  %v150 = vld [vmem:[%s0 + $0x408] sm:$0xff]
  %v151 = vld [vmem:[%s0 + $0x410] sm:$0xff]
  %v152 = vld [vmem:[%s0 + $0x418] sm:$0xff]
  %v153 = vld [vmem:[%s0 + $0x420] sm:$0xff]
  %v154 = vld [vmem:[%s0 + $0x428] sm:$0xff]
  %v155 = vld [vmem:[%s0 + $0x430] sm:$0xff]
  %v156 = vld [vmem:[%s0 + $0x438] sm:$0xff]
  %v157 = vld [vmem:[%s0 + $0x440] sm:$0xff]
  %v158 = vld [vmem:[%s0 + $0x448] sm:$0xff]
  %v159 = vld [vmem:[%s0 + $0x450] sm:$0xff]
  %v160 = vld [vmem:[%s0 + $0x458] sm:$0xff]
  %v161 = vld [vmem:[%s0 + $0x460] sm:$0xff]
  %v162 = vld [vmem:[%s0 + $0x468] sm:$0xff]
  %v163 = vld [vmem:[%s0 + $0x470] sm:$0xff]
  %v164 = vld [vmem:[%s0 + $0x478] sm:$0xff]
  %v165 = vld [vmem:[%s0 + $0x480] sm:$0xff]
  %v166 = vld [vmem:[%s0 + $0x488] sm:$0xff]
  %v167 = vld [vmem:[%s0 + $0x490] sm:$0xff]
  %v168 = vld [vmem:[%s0 + $0x498] sm:$0xff]
  %v169 = vld [vmem:[%s0 + $0x4a0] sm:$0xff]
  %v170 = vld [vmem:[%s0 + $0x4a8] sm:$0xff]
  %v171 = vld [vmem:[%s0 + $0x4b0] sm:$0xff]
  %v172 = vld [vmem:[%s0 + $0x4b8] sm:$0xff]
  %v173 = vld [vmem:[%s0 + $0x4c0] sm:$0xff]
  %v174 = vld [vmem:[%s0 + $0x4c8] sm:$0xff]
  %v175 = vld [vmem:[%s0 + $0x4d0] sm:$0xff]
  %v176 = vld [vmem:[%s0 + $0x4d8] sm:$0xff]
  %v177 = vld [vmem:[%s0 + $0x4e0] sm:$0xff]
  %v178 = vld [vmem:[%s0 + $0x4e8] sm:$0xff]
  %v179 = vld [vmem:[%s0 + $0x4f0] sm:$0xff]
  %v180 = vld [vmem:[%s0 + $0x4f8] sm:$0xff]
  %v181 = vld [vmem:[%s0 + $0x500] sm:$0xff]
  %v182 = vld [vmem:[%s0 + $0x508] sm:$0xff]
  %v183 = vld [vmem:[%s0 + $0x510] sm:$0xff]
  %v184 = vld [vmem:[%s0 + $0x518] sm:$0xff]
  %v185 = vld [vmem:[%s0 + $0x520] sm:$0xff]
  %v186 = vld [vmem:[%s0 + $0x528] sm:$0xff]
  %v187 = vld [vmem:[%s0 + $0x530] sm:$0xff]
  %v188 = vld [vmem:[%s0 + $0x538] sm:$0xff]
  %v189 = vld [vmem:[%s0 + $0x540] sm:$0xff]
  %v190 = vld [vmem:[%s0 + $0x548] sm:$0xff]
  %v191 = vld [vmem:[%s0 + $0x550] sm:$0xff]
  %v192 = vld [vmem:[%s0 + $0x558] sm:$0xff]
  %v193 = vld [vmem:[%s0 + $0x560] sm:$0xff]
  %v194 = vld [vmem:[%s0 + $0x568] sm:$0xff]
  %v195 = vld [vmem:[%s0 + $0x570] sm:$0xff]
  %v196 = vld [vmem:[%s0 + $0x578] sm:$0xff]
  %v197 = vld [vmem:[%s0 + $0x580] sm:$0xff]
  %v198 = vld [vmem:[%s0 + $0x588] sm:$0xff]
  %v199 = vld [vmem:[%s0 + $0x590] sm:$0xff]
  %v200 = vld [vmem:[%s0 + $0x598] sm:$0xff]
  %v201 = vld [vmem:[%s0 + $0x5a0] sm:$0xff]
  %v202 = vld [vmem:[%s0 + $0x5a8] sm:$0xff]
  %v203 = vld [vmem:[%s0 + $0x5b0] sm:$0xff]
  %v204 = vld [vmem:[%s0 + $0x5b8] sm:$0xff]
  %v205 = vld [vmem:[%s0 + $0x5c0] sm:$0xff]
  %v206 = vld [vmem:[%s0 + $0x5c8] sm:$0xff]
  %v207 = vld [vmem:[%s0 + $0x5d0] sm:$0xff]
  %v208 = vld [vmem:[%s0 + $0x5d8] sm:$0xff]
  %v209 = vld [vmem:[%s0 + $0x5e0] sm:$0xff]
  %v210 = vld [vmem:[%s0 + $0x5e8] sm:$0xff]
  %v211 = vld [vmem:[%s0 + $0x5f0] sm:$0xff]
  %v212 = vld [vmem:[%s0 + $0x5f8] sm:$0xff]
  %v213 = vld [vmem:[%s0 + $0x600] sm:$0xff]
  %v214 = vld [vmem:[%s0 + $0x608] sm:$0xff]
  %v215 = vld [vmem:[%s0 + $0x610] sm:$0xff]
  %v216 = vld [vmem:[%s0 + $0x618] sm:$0xff]
  %v217 = vld [vmem:[%s0 + $0x620] sm:$0xff]
  %v218 = vld [vmem:[%s0 + $0x628] sm:$0xff]
  %v219 = vld [vmem:[%s0 + $0x630] sm:$0xff]
  %v220 = vld [vmem:[%s0 + $0x638] sm:$0xff]
  %v221 = vld [vmem:[%s0 + $0x640] sm:$0xff]
  %v222 = vld [vmem:[%s0 + $0x648] sm:$0xff]
  %v223 = vld [vmem:[%s0 + $0x650] sm:$0xff]
  %v224 = vld [vmem:[%s0 + $0x658] sm:$0xff]
  %v225 = vld [vmem:[%s0 + $0x660] sm:$0xff]
  %v226 = vld [vmem:[%s0 + $0x668] sm:$0xff]
  %v227 = vld [vmem:[%s0 + $0x670] sm:$0xff]
  %v228 = vld [vmem:[%s0 + $0x678] sm:$0xff]
  %v229 = vld [vmem:[%s0 + $0x680] sm:$0xff]
  %v230 = vld [vmem:[%s0 + $0x688] sm:$0xff]
  %v231 = vld [vmem:[%s0 + $0x690] sm:$0xff]
  %v232 = vld [vmem:[%s0 + $0x698] sm:$0xff]
  %v233 = vld [vmem:[%s0 + $0x6a0] sm:$0xff]
  %v234 = vld [vmem:[%s0 + $0x6a8] sm:$0xff]
  %v235 = vld [vmem:[%s0 + $0x6b0] sm:$0xff]
  %v236 = vld [vmem:[%s0 + $0x6b8] sm:$0xff]
  %v237 = vld [vmem:[%s0 + $0x6c0] sm:$0xff]
  %v238 = vld [vmem:[%s0 + $0x6c8] sm:$0xff]
  %v239 = vld [vmem:[%s0 + $0x6d0] sm:$0xff]
  %v240 = vld [vmem:[%s0 + $0x6d8] sm:$0xff]
  %v241 = vld [vmem:[%s0 + $0x6e0] sm:$0xff]
  %v242 = vld [vmem:[%s0 + $0x6e8] sm:$0xff]
  %v243 = vld [vmem:[%s0 + $0x6f0] sm:$0xff]
  %v244 = vld [vmem:[%s0 + $0x6f8] sm:$0xff]
  %v245 = vld [vmem:[%s0 + $0x700] sm:$0xff]
  %v246 = vld [vmem:[%s0 + $0x708] sm:$0xff]
  %v247 = vld [vmem:[%s0 + $0x710] sm:$0xff]
  %v248 = vld [vmem:[%s0 + $0x718] sm:$0xff]
  %v249 = vld [vmem:[%s0 + $0x720] sm:$0xff]
  %v250 = vld [vmem:[%s0 + $0x728] sm:$0xff]
  %v251 = vld [vmem:[%s0 + $0x730] sm:$0xff]
  %v252 = vld [vmem:[%s0 + $0x738] sm:$0xff]
  %v253 = vld [vmem:[%s0 + $0x740] sm:$0xff]
  %v254 = vld [vmem:[%s0 + $0x748] sm:$0xff]
  %v255 = vld [vmem:[%s0 + $0x750] sm:$0xff]
  %v256 = vld [vmem:[%s0 + $0x758] sm:$0xff]
  %v257 = vld [vmem:[%s0 + $0x760] sm:$0xff]
  %v258 = vld [vmem:[%s0 + $0x768] sm:$0xff]
  %v259 = vld [vmem:[%s0 + $0x770] sm:$0xff]
  %v260 = vld [vmem:[%s0 + $0x778] sm:$0xff]
  %v261 = vld [vmem:[%s0 + $0x780] sm:$0xff]
  %v262 = vld [vmem:[%s0 + $0x788] sm:$0xff]
  %v263 = vld [vmem:[%s0 + $0x790] sm:$0xff]
  %v264 = vld [vmem:[%s0 + $0x798] sm:$0xff]
  %v265 = vld [vmem:[%s0 + $0x7a0] sm:$0xff]
  %v266 = vld [vmem:[%s0 + $0x7a8] sm:$0xff]
  %v267 = vld [vmem:[%s0 + $0x7b0] sm:$0xff]
  %v268 = vld [vmem:[%s0 + $0x7b8] sm:$0xff]
  %v269 = vld [vmem:[%s0 + $0x7c0] sm:$0xff]
  %v270 = vld [vmem:[%s0 + $0x7c8] sm:$0xff]
  %v271 = vld [vmem:[%s0 + $0x7d0] sm:$0xff]
  %v272 = vld [vmem:[%s0 + $0x7d8] sm:$0xff]
  %v273 = vld [vmem:[%s0 + $0x7e0] sm:$0xff]
  %v274 = vld [vmem:[%s0 + $0x7e8] sm:$0xff]
  %v275 = vld [vmem:[%s0 + $0x7f0] sm:$0xff]
  %v276 = vld [vmem:[%s0 + $0x7f8] sm:$0xff]
  %v277 = vld [vmem:[%s0 + $0x800] sm:$0xff]
  %v278 = vld [vmem:[%s0 + $0x808] sm:$0xff]
  %v279 = vld [vmem:[%s0 + $0x810] sm:$0xff]
  %v280 = vld [vmem:[%s0 + $0x818] sm:$0xff]
  %v281 = vld [vmem:[%s0 + $0x820] sm:$0xff]
  %v282 = vld [vmem:[%s0 + $0x828] sm:$0xff]
  %v283 = vld [vmem:[%s0 + $0x830] sm:$0xff]
  %v284 = vld [vmem:[%s0 + $0x838] sm:$0xff]
  %v285 = vld [vmem:[%s0 + $0x840] sm:$0xff]
  %v286 = vld [vmem:[%s0 + $0x848] sm:$0xff]
  %v287 = vld [vmem:[%s0 + $0x850] sm:$0xff]
  %v288 = vld [vmem:[%s0 + $0x858] sm:$0xff]
  %v289 = vld [vmem:[%s0 + $0x860] sm:$0xff]
  %v290 = vld [vmem:[%s0 + $0x868] sm:$0xff]
  %v291 = vld [vmem:[%s0 + $0x870] sm:$0xff]
  %v292 = vld [vmem:[%s0 + $0x878] sm:$0xff]
  %v293 = vld [vmem:[%s0 + $0x880] sm:$0xff]
  %v294 = vld [vmem:[%s0 + $0x888] sm:$0xff]
  %v295 = vld [vmem:[%s0 + $0x890] sm:$0xff]
  %v296 = vld [vmem:[%s0 + $0x898] sm:$0xff]
  %v297 = vld [vmem:[%s0 + $0x8a0] sm:$0xff]
  %v298 = vld [vmem:[%s0 + $0x8a8] sm:$0xff]
  %v299 = vld [vmem:[%s0 + $0x8b0] sm:$0xff]
  %v300 = vld [vmem:[%s0 + $0x8b8] sm:$0xff]
  %v301 = vld [vmem:[%s0 + $0x8c0] sm:$0xff]
  %v302 = vld [vmem:[%s0 + $0x8c8] sm:$0xff]
  %v303 = vld [vmem:[%s0 + $0x8d0] sm:$0xff]
  %v304 = vld [vmem:[%s0 + $0x8d8] sm:$0xff]
  %v305 = vld [vmem:[%s0 + $0x8e0] sm:$0xff]
  %v306 = vld [vmem:[%s0 + $0x8e8] sm:$0xff]
  %v307 = vld [vmem:[%s0 + $0x8f0] sm:$0xff]
  %v308 = vld [vmem:[%s0 + $0x8f8] sm:$0xff]
  %v309 = vld [vmem:[%s0 + $0x900] sm:$0xff]
  %v310 = vld [vmem:[%s0 + $0x908] sm:$0xff]
  %v311 = vld [vmem:[%s0 + $0x910] sm:$0xff]
  %v312 = vld [vmem:[%s0 + $0x918] sm:$0xff]
  %v313 = vld [vmem:[%s0 + $0x920] sm:$0xff]
  %v314 = vld [vmem:[%s0 + $0x928] sm:$0xff]
  %v315 = vld [vmem:[%s0 + $0x930] sm:$0xff]
  %v316 = vld [vmem:[%s0 + $0x938] sm:$0xff]
  %v317 = vld [vmem:[%s0 + $0x940] sm:$0xff]
  %v318 = vld [vmem:[%s0 + $0x948] sm:$0xff]
  %v319 = vld [vmem:[%s0 + $0x950] sm:$0xff]
  %v320 = vld [vmem:[%s0 + $0x958] sm:$0xff]
  %v321 = vld [vmem:[%s0 + $0x960] sm:$0xff]
  %v322 = vld [vmem:[%s0 + $0x968] sm:$0xff]
  %v323 = vld [vmem:[%s0 + $0x970] sm:$0xff]
  %v324 = vld [vmem:[%s0 + $0x978] sm:$0xff]
  %v325 = vld [vmem:[%s0 + $0x980] sm:$0xff]
  %v326 = vld [vmem:[%s0 + $0x988] sm:$0xff]
  %v327 = vld [vmem:[%s0 + $0x990] sm:$0xff]
  %v328 = vld [vmem:[%s0 + $0x998] sm:$0xff]
  %v329 = vld [vmem:[%s0 + $0x9a0] sm:$0xff]
  %v330 = vld [vmem:[%s0 + $0x9a8] sm:$0xff]
  %v331 = vld [vmem:[%s0 + $0x9b0] sm:$0xff]
  %v332 = vld [vmem:[%s0 + $0x9b8] sm:$0xff]
  %v333 = vld [vmem:[%s0 + $0x9c0] sm:$0xff]
  %v334 = vld [vmem:[%s0 + $0x9c8] sm:$0xff]
  %v335 = vld [vmem:[%s0 + $0x9d0] sm:$0xff]
  %v336 = vld [vmem:[%s0 + $0x9d8] sm:$0xff]
  %v337 = vld [vmem:[%s0 + $0x9e0] sm:$0xff]
  %v338 = vld [vmem:[%s0 + $0x9e8] sm:$0xff]
  %v339 = vld [vmem:[%s0 + $0x9f0] sm:$0xff]
  %v340 = vld [vmem:[%s0 + $0x9f8] sm:$0xff]
  %v341 = vld [vmem:[%s0 + $0xa00] sm:$0xff]
  %v342 = vld [vmem:[%s0 + $0xa08] sm:$0xff]
  %v343 = vld [vmem:[%s0 + $0xa10] sm:$0xff]
  %v344 = vld [vmem:[%s0 + $0xa18] sm:$0xff]
  %v345 = vld [vmem:[%s0 + $0xa20] sm:$0xff]
  %v346 = vld [vmem:[%s0 + $0xa28] sm:$0xff]
  %v347 = vld [vmem:[%s0 + $0xa30] sm:$0xff]
  %v348 = vld [vmem:[%s0 + $0xa38] sm:$0xff]
  %v349 = vld [vmem:[%s0 + $0xa40] sm:$0xff]
  %v350 = vld [vmem:[%s0 + $0xa48] sm:$0xff]
  %v351 = vld [vmem:[%s0 + $0xa50] sm:$0xff]
  %v352 = vld [vmem:[%s0 + $0xa58] sm:$0xff]
  %v353 = vld [vmem:[%s0 + $0xa60] sm:$0xff]
  %v354 = vld [vmem:[%s0 + $0xa68] sm:$0xff]
  %v355 = vld [vmem:[%s0 + $0xa70] sm:$0xff]
  %v356 = vld [vmem:[%s0 + $0xa78] sm:$0xff]
  %v357 = vld [vmem:[%s0 + $0xa80] sm:$0xff]
  %v358 = vld [vmem:[%s0 + $0xa88] sm:$0xff]
  %v359 = vld [vmem:[%s0 + $0xa90] sm:$0xff]
  %v360 = vld [vmem:[%s0 + $0xa98] sm:$0xff]
  %v361 = vld [vmem:[%s0 + $0xaa0] sm:$0xff]
  %v362 = vld [vmem:[%s0 + $0xaa8] sm:$0xff]
  %v363 = vld [vmem:[%s0 + $0xab0] sm:$0xff]
  %v364 = vld [vmem:[%s0 + $0xab8] sm:$0xff]
  %v365 = vld [vmem:[%s0 + $0xac0] sm:$0xff]
  %v366 = vld [vmem:[%s0 + $0xac8] sm:$0xff]
  %v367 = vld [vmem:[%s0 + $0xad0] sm:$0xff]
  %v368 = vld [vmem:[%s0 + $0xad8] sm:$0xff]
  %v369 = vld [vmem:[%s0 + $0xae0] sm:$0xff]
  %v370 = vld [vmem:[%s0 + $0xae8] sm:$0xff]
  %v371 = vld [vmem:[%s0 + $0xaf0] sm:$0xff]
  %v372 = vld [vmem:[%s0 + $0xaf8] sm:$0xff]
  %v373 = vld [vmem:[%s0 + $0xb00] sm:$0xff]
  %v374 = vld [vmem:[%s0 + $0xb08] sm:$0xff]
  %v375 = vld [vmem:[%s0 + $0xb10] sm:$0xff]
  %v376 = vld [vmem:[%s0 + $0xb18] sm:$0xff]
  %v377 = vld [vmem:[%s0 + $0xb20] sm:$0xff]
  %v378 = vld [vmem:[%s0 + $0xb28] sm:$0xff]
  %v379 = vld [vmem:[%s0 + $0xb30] sm:$0xff]
  %v380 = vld [vmem:[%s0 + $0xb38] sm:$0xff]
  %v381 = vld [vmem:[%s0 + $0xb40] sm:$0xff]
  %v382 = vld [vmem:[%s0 + $0xb48] sm:$0xff]
  %v383 = vld [vmem:[%s0 + $0xb50] sm:$0xff]
  %v384 = vld [vmem:[%s0 + $0xb58] sm:$0xff]
  %v385 = vld [vmem:[%s0 + $0xb60] sm:$0xff]
  %v386 = vld [vmem:[%s0 + $0xb68] sm:$0xff]
  %v387 = vld [vmem:[%s0 + $0xb70] sm:$0xff]
  %v388 = vld [vmem:[%s0 + $0xb78] sm:$0xff]
  %v389 = vld [vmem:[%s0 + $0xb80] sm:$0xff]
  %v390 = vld [vmem:[%s0 + $0xb88] sm:$0xff]
  %v391 = vld [vmem:[%s0 + $0xb90] sm:$0xff]
  %v392 = vld [vmem:[%s0 + $0xb98] sm:$0xff]
  %v393 = vld [vmem:[%s0 + $0xba0] sm:$0xff]
  %v394 = vld [vmem:[%s0 + $0xba8] sm:$0xff]
  %v395 = vld [vmem:[%s0 + $0xbb0] sm:$0xff]
  %v396 = vld [vmem:[%s0 + $0xbb8] sm:$0xff]
  %v397 = vld [vmem:[%s0 + $0xbc0] sm:$0xff]
  %v398 = vld [vmem:[%s0 + $0xbc8] sm:$0xff]
  %v399 = vld [vmem:[%s0 + $0xbd0] sm:$0xff]
  %v400 = vld [vmem:[%s0 + $0xbd8] sm:$0xff]
  %v401 = vld [vmem:[%s0 + $0xbe0] sm:$0xff]
  %v402 = vld [vmem:[%s0 + $0xbe8] sm:$0xff]
  %v403 = vld [vmem:[%s0 + $0xbf0] sm:$0xff]
  %v404 = vld [vmem:[%s0 + $0xbf8] sm:$0xff]
  %v405 = vld [vmem:[%s0 + $0xc00] sm:$0xff]
  %v406 = vld [vmem:[%s0 + $0xc08] sm:$0xff]
  %v407 = vld [vmem:[%s0 + $0xc10] sm:$0xff]
  %v408 = vld [vmem:[%s0 + $0xc18] sm:$0xff]
  %v409 = vld [vmem:[%s0 + $0xc20] sm:$0xff]
  %v410 = vld [vmem:[%s0 + $0xc28] sm:$0xff]
  %v411 = vld [vmem:[%s0 + $0xc30] sm:$0xff]
  %v412 = vld [vmem:[%s0 + $0xc38] sm:$0xff]
  %v413 = vld [vmem:[%s0 + $0xc40] sm:$0xff]
  %v414 = vld [vmem:[%s0 + $0xc48] sm:$0xff]
  %v415 = vld [vmem:[%s0 + $0xc50] sm:$0xff]
  %v416 = vld [vmem:[%s0 + $0xc58] sm:$0xff]
  %v417 = vld [vmem:[%s0 + $0xc60] sm:$0xff]
  %v418 = vld [vmem:[%s0 + $0xc68] sm:$0xff]
  %v419 = vld [vmem:[%s0 + $0xc70] sm:$0xff]
  %v420 = vld [vmem:[%s0 + $0xc78] sm:$0xff]
  %v421 = vld [vmem:[%s1] sm:$0xff]
  %v422 = vld [vmem:[%s1 + $0x8] sm:$0xff]
  %v423 = vld [vmem:[%s1 + $0x10] sm:$0xff]
  %v424 = vld [vmem:[%s1 + $0x18] sm:$0xff]
  %v425 = vld [vmem:[%s1 + $0x20] sm:$0xff]
  %v426 = vld [vmem:[%s1 + $0x28] sm:$0xff]
  %v427 = vld [vmem:[%s1 + $0x30] sm:$0xff]
  %v428 = vld [vmem:[%s1 + $0x38] sm:$0xff]
  %v429 = vld [vmem:[%s1 + $0x40] sm:$0xff]
  %v430 = vld [vmem:[%s1 + $0x48] sm:$0xff]
  %v431 = vld [vmem:[%s1 + $0x50] sm:$0xff]
  %v432 = vld [vmem:[%s1 + $0x58] sm:$0xff]
  %v433 = vld [vmem:[%s1 + $0x60] sm:$0xff]
  %v434 = vld [vmem:[%s1 + $0x68] sm:$0xff]
  %v435 = vld [vmem:[%s1 + $0x70] sm:$0xff]
  %v436 = vld [vmem:[%s1 + $0x78] sm:$0xff]
  %v437 = vld [vmem:[%s1 + $0x80] sm:$0xff]
  %v438 = vld [vmem:[%s1 + $0x88] sm:$0xff]
  %v439 = vld [vmem:[%s1 + $0x90] sm:$0xff]
  %v440 = vld [vmem:[%s1 + $0x98] sm:$0xff]
  %v441 = vld [vmem:[%s1 + $0xa0] sm:$0xff]
  %v442 = vld [vmem:[%s1 + $0xa8] sm:$0xff]
  %v443 = vld [vmem:[%s1 + $0xb0] sm:$0xff]
  %v444 = vld [vmem:[%s1 + $0xb8] sm:$0xff]
  %v445 = vld [vmem:[%s1 + $0xc0] sm:$0xff]
  %v446 = vld [vmem:[%s1 + $0xc8] sm:$0xff]
  %v447 = vld [vmem:[%s1 + $0xd0] sm:$0xff]
  %v448 = vld [vmem:[%s1 + $0xd8] sm:$0xff]
  %v449 = vld [vmem:[%s1 + $0xe0] sm:$0xff]
  %v450 = vld [vmem:[%s1 + $0xe8] sm:$0xff]
  %v451 = vld [vmem:[%s1 + $0xf0] sm:$0xff]
  %v452 = vld [vmem:[%s1 + $0xf8] sm:$0xff]
  %v453 = vld [vmem:[%s1 + $0x100] sm:$0xff]
  %v454 = vld [vmem:[%s1 + $0x108] sm:$0xff]
  %v455 = vld [vmem:[%s1 + $0x110] sm:$0xff]
  %v456 = vld [vmem:[%s1 + $0x118] sm:$0xff]
  %v457 = vld [vmem:[%s1 + $0x120] sm:$0xff]
  %v458 = vld [vmem:[%s1 + $0x128] sm:$0xff]
  %v459 = vld [vmem:[%s1 + $0x130] sm:$0xff]
  %v460 = vld [vmem:[%s1 + $0x138] sm:$0xff]
  %v461 = vld [vmem:[%s1 + $0x140] sm:$0xff]
  %v462 = vld [vmem:[%s1 + $0x148] sm:$0xff]
  %v463 = vld [vmem:[%s1 + $0x150] sm:$0xff]
  %v464 = vld [vmem:[%s1 + $0x158] sm:$0xff]
  %v465 = vld [vmem:[%s1 + $0x160] sm:$0xff]
  %v466 = vld [vmem:[%s1 + $0x168] sm:$0xff]
  %v467 = vld [vmem:[%s1 + $0x170] sm:$0xff]
  %v468 = vld [vmem:[%s1 + $0x178] sm:$0xff]
  %v469 = vld [vmem:[%s1 + $0x180] sm:$0xff]
  %v470 = vld [vmem:[%s1 + $0x188] sm:$0xff]
  %v471 = vpack.c.bf16 %v25, %v21
  %v472 = vpack.c.bf16 %v26, %v22
  %v473 = vpack.c.bf16 %v27, %v23
  %v474 = vpack.c.bf16 %v28, %v24
  %v475 = vpack.c.bf16 %v33, %v29
  %v476 = vpack.c.bf16 %v34, %v30
  %v477 = vpack.c.bf16 %v35, %v31
  %v478 = vpack.c.bf16 %v36, %v32
  %v479 = vpack.c.bf16 %v41, %v37
  %v480 = vpack.c.bf16 %v42, %v38
  %v481 = vpack.c.bf16 %v43, %v39
  %v482 = vpack.c.bf16 %v44, %v40
  %v483 = vpack.c.bf16 %v49, %v45
  %v484 = vpack.c.bf16 %v50, %v46
  %v485 = vpack.c.bf16 %v51, %v47
  %v486 = vpack.c.bf16 %v52, %v48
  %v487 = vpack.c.bf16 %v57, %v53
  %v488 = vpack.c.bf16 %v58, %v54
  %v489 = vpack.c.bf16 %v59, %v55
  %v490 = vpack.c.bf16 %v60, %v56
  %v491 = vpack.c.bf16 %v65, %v61
  %v492 = vpack.c.bf16 %v66, %v62
  %v493 = vpack.c.bf16 %v67, %v63
  %v494 = vpack.c.bf16 %v68, %v64
  %v495 = vpack.c.bf16 %v73, %v69
  %v496 = vpack.c.bf16 %v74, %v70
  %v497 = vpack.c.bf16 %v75, %v71
  %v498 = vpack.c.bf16 %v76, %v72
  %v499 = vpack.c.bf16 %v81, %v77
  %v500 = vpack.c.bf16 %v82, %v78
  %v501 = vpack.c.bf16 %v83, %v79
  %v502 = vpack.c.bf16 %v84, %v80
  %v503 = vpack.c.bf16 %v89, %v85
  %v504 = vpack.c.bf16 %v90, %v86
  %v505 = vpack.c.bf16 %v91, %v87
  %v506 = vpack.c.bf16 %v92, %v88
  %v507 = vpack.c.bf16 %v97, %v93
  %v508 = vpack.c.bf16 %v98, %v94
  %v509 = vpack.c.bf16 %v99, %v95
  %v510 = vpack.c.bf16 %v100, %v96
  %v511 = vpack.c.bf16 %v105, %v101
  %v512 = vpack.c.bf16 %v106, %v102
  %v513 = vpack.c.bf16 %v107, %v103
  %v514 = vpack.c.bf16 %v108, %v104
  %v515 = vpack.c.bf16 %v113, %v109
  %v516 = vpack.c.bf16 %v114, %v110
  %v517 = vpack.c.bf16 %v115, %v111
  %v518 = vpack.c.bf16 %v116, %v112
  %v519 = vpack.c.bf16 %v121, %v117
  %v520 = vpack.c.bf16 %v122, %v118
  %v521 = vpack.c.bf16 %v123, %v119
  %v522 = vpack.c.bf16 %v124, %v120
  %v523 = vpack.c.bf16 %v129, %v125
  %v524 = vpack.c.bf16 %v130, %v126
  %v525 = vpack.c.bf16 %v131, %v127
  %v526 = vpack.c.bf16 %v132, %v128
  %v527 = vpack.c.bf16 %v137, %v133
  %v528 = vpack.c.bf16 %v138, %v134
  %v529 = vpack.c.bf16 %v139, %v135
  %v530 = vpack.c.bf16 %v140, %v136
  %v531 = vpack.c.bf16 %v145, %v141
  %v532 = vpack.c.bf16 %v146, %v142
  %v533 = vpack.c.bf16 %v147, %v143
  %v534 = vpack.c.bf16 %v148, %v144
  %v535 = vpack.c.bf16 %v153, %v149
  %v536 = vpack.c.bf16 %v154, %v150
  %v537 = vpack.c.bf16 %v155, %v151
  %v538 = vpack.c.bf16 %v156, %v152
  %v539 = vpack.c.bf16 %v161, %v157
  %v540 = vpack.c.bf16 %v162, %v158
  %v541 = vpack.c.bf16 %v163, %v159
  %v542 = vpack.c.bf16 %v164, %v160
  %v543 = vpack.c.bf16 %v169, %v165
  %v544 = vpack.c.bf16 %v170, %v166
  %v545 = vpack.c.bf16 %v171, %v167
  %v546 = vpack.c.bf16 %v172, %v168
  %v547 = vpack.c.bf16 %v177, %v173
  %v548 = vpack.c.bf16 %v178, %v174
  %v549 = vpack.c.bf16 %v179, %v175
  %v550 = vpack.c.bf16 %v180, %v176
  %v551 = vpack.c.bf16 %v185, %v181
  %v552 = vpack.c.bf16 %v186, %v182
  %v553 = vpack.c.bf16 %v187, %v183
  %v554 = vpack.c.bf16 %v188, %v184
  %v555 = vpack.c.bf16 %v193, %v189
  %v556 = vpack.c.bf16 %v194, %v190
  %v557 = vpack.c.bf16 %v195, %v191
  %v558 = vpack.c.bf16 %v196, %v192
  %v559 = vpack.c.bf16 %v201, %v197
  %v560 = vpack.c.bf16 %v202, %v198
  %v561 = vpack.c.bf16 %v203, %v199
  %v562 = vpack.c.bf16 %v204, %v200
  %v563 = vpack.c.bf16 %v209, %v205
  %v564 = vpack.c.bf16 %v210, %v206
  %v565 = vpack.c.bf16 %v211, %v207
  %v566 = vpack.c.bf16 %v212, %v208
  %v567 = vpack.c.bf16 %v217, %v213
  %v568 = vpack.c.bf16 %v218, %v214
  %v569 = vpack.c.bf16 %v219, %v215
  %v570 = vpack.c.bf16 %v220, %v216
  %v571 = vpack.c.bf16 %v225, %v221
  %v572 = vpack.c.bf16 %v226, %v222
  %v573 = vpack.c.bf16 %v227, %v223
  %v574 = vpack.c.bf16 %v228, %v224
  %v575 = vpack.c.bf16 %v233, %v229
  %v576 = vpack.c.bf16 %v234, %v230
  %v577 = vpack.c.bf16 %v235, %v231
  %v578 = vpack.c.bf16 %v236, %v232
  %v579 = vpack.c.bf16 %v241, %v237
  %v580 = vpack.c.bf16 %v242, %v238
  %v581 = vpack.c.bf16 %v243, %v239
  %v582 = vpack.c.bf16 %v244, %v240
  %v583 = vpack.c.bf16 %v249, %v245
  %v584 = vpack.c.bf16 %v250, %v246
  %v585 = vpack.c.bf16 %v251, %v247
  %v586 = vpack.c.bf16 %v252, %v248
  %v587 = vpack.c.bf16 %v257, %v253
  %v588 = vpack.c.bf16 %v258, %v254
  %v589 = vpack.c.bf16 %v259, %v255
  %v590 = vpack.c.bf16 %v260, %v256
  %v591 = vpack.c.bf16 %v265, %v261
  %v592 = vpack.c.bf16 %v266, %v262
  %v593 = vpack.c.bf16 %v267, %v263
  %v594 = vpack.c.bf16 %v268, %v264
  %v595 = vpack.c.bf16 %v273, %v269
  %v596 = vpack.c.bf16 %v274, %v270
  %v597 = vpack.c.bf16 %v275, %v271
  %v598 = vpack.c.bf16 %v276, %v272
  %v599 = vpack.c.bf16 %v281, %v277
  %v600 = vpack.c.bf16 %v282, %v278
  %v601 = vpack.c.bf16 %v283, %v279
  %v602 = vpack.c.bf16 %v284, %v280
  %v603 = vpack.c.bf16 %v289, %v285
  %v604 = vpack.c.bf16 %v290, %v286
  %v605 = vpack.c.bf16 %v291, %v287
  %v606 = vpack.c.bf16 %v292, %v288
  %v607 = vpack.c.bf16 %v297, %v293
  %v608 = vpack.c.bf16 %v298, %v294
  %v609 = vpack.c.bf16 %v299, %v295
  %v610 = vpack.c.bf16 %v300, %v296
  %v611 = vpack.c.bf16 %v305, %v301
  %v612 = vpack.c.bf16 %v306, %v302
  %v613 = vpack.c.bf16 %v307, %v303
  %v614 = vpack.c.bf16 %v308, %v304
  %v615 = vpack.c.bf16 %v313, %v309
  %v616 = vpack.c.bf16 %v314, %v310
  %v617 = vpack.c.bf16 %v315, %v311
  %v618 = vpack.c.bf16 %v316, %v312
  %v619 = vpack.c.bf16 %v321, %v317
  %v620 = vpack.c.bf16 %v322, %v318
  %v621 = vpack.c.bf16 %v323, %v319
  %v622 = vpack.c.bf16 %v324, %v320
  %v623 = vpack.c.bf16 %v329, %v325
  %v624 = vpack.c.bf16 %v330, %v326
  %v625 = vpack.c.bf16 %v331, %v327
  %v626 = vpack.c.bf16 %v332, %v328
  %v627 = vpack.c.bf16 %v337, %v333
  %v628 = vpack.c.bf16 %v338, %v334
  %v629 = vpack.c.bf16 %v339, %v335
  %v630 = vpack.c.bf16 %v340, %v336
  %v631 = vpack.c.bf16 %v345, %v341
  %v632 = vpack.c.bf16 %v346, %v342
  %v633 = vpack.c.bf16 %v347, %v343
  %v634 = vpack.c.bf16 %v348, %v344
  %v635 = vpack.c.bf16 %v353, %v349
  %v636 = vpack.c.bf16 %v354, %v350
  %v637 = vpack.c.bf16 %v355, %v351
  %v638 = vpack.c.bf16 %v356, %v352
  %v639 = vpack.c.bf16 %v361, %v357
  %v640 = vpack.c.bf16 %v362, %v358
  %v641 = vpack.c.bf16 %v363, %v359
  %v642 = vpack.c.bf16 %v364, %v360
  %v643 = vpack.c.bf16 %v369, %v365
  %v644 = vpack.c.bf16 %v370, %v366
  %v645 = vpack.c.bf16 %v371, %v367
  %v646 = vpack.c.bf16 %v372, %v368
  %v647 = vpack.c.bf16 %v377, %v373
  %v648 = vpack.c.bf16 %v378, %v374
  %v649 = vpack.c.bf16 %v379, %v375
  %v650 = vpack.c.bf16 %v380, %v376
  %v651 = vpack.c.bf16 %v385, %v381
  %v652 = vpack.c.bf16 %v386, %v382
  %v653 = vpack.c.bf16 %v387, %v383
  %v654 = vpack.c.bf16 %v388, %v384
  %v655 = vpack.c.bf16 %v393, %v389
  %v656 = vpack.c.bf16 %v394, %v390
  %v657 = vpack.c.bf16 %v395, %v391
  %v658 = vpack.c.bf16 %v396, %v392
  %v659 = vpack.c.bf16 %v401, %v397
  %v660 = vpack.c.bf16 %v402, %v398
  %v661 = vpack.c.bf16 %v403, %v399
  %v662 = vpack.c.bf16 %v404, %v400
  %v663 = vpack.c.bf16 %v409, %v405
  %v664 = vpack.c.bf16 %v410, %v406
  %v665 = vpack.c.bf16 %v411, %v407
  %v666 = vpack.c.bf16 %v412, %v408
  %v667 = vpack.c.bf16 %v417, %v413
  %v668 = vpack.c.bf16 %v418, %v414
  %v669 = vpack.c.bf16 %v419, %v415
  %v670 = vpack.c.bf16 %v420, %v416
  %v671 = vpack.c.bf16 %v422, %v421
  %v672 = vpack.c.bf16 %v424, %v423
  %v673 = vpack.c.bf16 %v426, %v425
  %v674 = vpack.c.bf16 %v428, %v427
  %v675 = vpack.c.bf16 %v430, %v429
  %v676 = vpack.c.bf16 %v432, %v431
  %v677 = vpack.c.bf16 %v434, %v433
  %v678 = vpack.c.bf16 %v436, %v435
  %v679 = vpack.c.bf16 %v438, %v437
  %v680 = vpack.c.bf16 %v440, %v439
  %v681 = vpack.c.bf16 %v442, %v441
  %v682 = vpack.c.bf16 %v444, %v443
  %v683 = vpack.c.bf16 %v446, %v445
  %v684 = vpack.c.bf16 %v448, %v447
  %v685 = vpack.c.bf16 %v450, %v449
  %v686 = vpack.c.bf16 %v452, %v451
  %v687 = vpack.c.bf16 %v454, %v453
  %v688 = vpack.c.bf16 %v456, %v455
  %v689 = vpack.c.bf16 %v458, %v457
  %v690 = vpack.c.bf16 %v460, %v459
  %v691 = vpack.c.bf16 %v462, %v461
  %v692 = vpack.c.bf16 %v464, %v463
  %v693 = vpack.c.bf16 %v466, %v465
  %v694 = vpack.c.bf16 %v468, %v467
  %v695 = vpack.c.bf16 %v470, %v469
  %v696 = vld [vmem:[%s2] sm:$0x1]
  %v698 = vperm.slane %v696, 0
  %vm700 = vcmask 130048
  %v702 = vsel %vm700, %v474, 0
  %v705 = vsel %vm700, %v478, 0
  %v708 = vsel %vm700, %v482, 0
  %v711 = vsel %vm700, %v486, 0
  %v714 = vsel %vm700, %v490, 0
  %v717 = vsel %vm700, %v494, 0
  %v720 = vsel %vm700, %v498, 0
  %v723 = vsel %vm700, %v502, 0
  %v726 = vsel %vm700, %v506, 0
  %v729 = vsel %vm700, %v510, 0
  %v732 = vsel %vm700, %v514, 0
  %v735 = vsel %vm700, %v518, 0
  %v738 = vsel %vm700, %v522, 0
  %v741 = vsel %vm700, %v526, 0
  %v744 = vsel %vm700, %v530, 0
  %v747 = vsel %vm700, %v534, 0
  %v750 = vsel %vm700, %v538, 0
  %v753 = vsel %vm700, %v542, 0
  %v756 = vsel %vm700, %v546, 0
  %v759 = vsel %vm700, %v550, 0
  %v762 = vsel %vm700, %v554, 0
  %v765 = vsel %vm700, %v558, 0
  %v768 = vsel %vm700, %v562, 0
  %v771 = vsel %vm700, %v566, 0
  %v774 = vsel %vm700, %v570, 0
  %v777 = vsel %vm700, %v574, 0
  %v780 = vsel %vm700, %v578, 0
  %v783 = vsel %vm700, %v582, 0
  %v786 = vsel %vm700, %v586, 0
  %v789 = vsel %vm700, %v590, 0
  %v792 = vsel %vm700, %v594, 0
  %v795 = vsel %vm700, %v598, 0
  %v798 = vsel %vm700, %v602, 0
  %v801 = vsel %vm700, %v606, 0
  %v804 = vsel %vm700, %v610, 0
  %v807 = vsel %vm700, %v614, 0
  %v810 = vsel %vm700, %v618, 0
  %v813 = vsel %vm700, %v622, 0
  %v816 = vsel %vm700, %v626, 0
  %v819 = vsel %vm700, %v630, 0
  %v822 = vsel %vm700, %v634, 0
  %v825 = vsel %vm700, %v638, 0
  %v828 = vsel %vm700, %v642, 0
  %v831 = vsel %vm700, %v646, 0
  %v834 = vsel %vm700, %v650, 0
  %v837 = vsel %vm700, %v654, 0
  %v840 = vsel %vm700, %v658, 0
  %v843 = vsel %vm700, %v662, 0
  %v846 = vsel %vm700, %v666, 0
  %v849 = vsel %vm700, %v670, 0
  %851 = vmatpush.bf16.msra.mxu0 %v678
  %852 = vmatpush.bf16.msra.mxu0 %v677
  %853 = vmatpush.bf16.msra.mxu0 %v676
  %854 = vmatpush.bf16.msra.mxu0 %v675
  %855 = vmatpush.bf16.msra.mxu0 %v674
  %856 = vmatpush.bf16.msra.mxu0 %v673
  %857 = vmatpush.bf16.msra.mxu0 %v672
  %858 = vmatpush.bf16.msra.mxu0 %v671
  %859 = vmatmul.bf16.gmra.mxu0 %v471
  %v860 = vpop.f32.mrf.mxu0
  %v861 = vadd.f32 %v698, %v860
  %v862 = vpop.f32.mrf.mxu0
  %v863 = vadd.f32 %v698, %v862
  %864 = vmatmul.bf16.gmra.mxu0 %v475
  %v865 = vpop.f32.mrf.mxu0
  %v866 = vadd.f32 %v698, %v865
  %v867 = vpop.f32.mrf.mxu0
  %v868 = vadd.f32 %v698, %v867
  %869 = vmatmul.bf16.gmra.mxu0 %v479
  %v870 = vpop.f32.mrf.mxu0
  %v871 = vadd.f32 %v698, %v870
  %v872 = vpop.f32.mrf.mxu0
  %v873 = vadd.f32 %v698, %v872
  %874 = vmatmul.bf16.gmra.mxu0 %v483
  %v875 = vpop.f32.mrf.mxu0
  %v876 = vadd.f32 %v698, %v875
  %v877 = vpop.f32.mrf.mxu0
  %v878 = vadd.f32 %v698, %v877
  %879 = vmatmul.bf16.gmra.mxu0 %v487
  %v880 = vpop.f32.mrf.mxu0
  %v881 = vadd.f32 %v698, %v880
  %v882 = vpop.f32.mrf.mxu0
  %v883 = vadd.f32 %v698, %v882
  %884 = vmatmul.bf16.gmra.mxu0 %v491
  %v885 = vpop.f32.mrf.mxu0
  %v886 = vadd.f32 %v698, %v885
  %v887 = vpop.f32.mrf.mxu0
  %v888 = vadd.f32 %v698, %v887
  %889 = vmatmul.bf16.gmra.mxu0 %v495
  %v890 = vpop.f32.mrf.mxu0
  %v891 = vadd.f32 %v698, %v890
  %v892 = vpop.f32.mrf.mxu0
  %v893 = vadd.f32 %v698, %v892
  %894 = vmatmul.bf16.gmra.mxu0 %v499
  %v895 = vpop.f32.mrf.mxu0
  %v896 = vadd.f32 %v698, %v895
  %v897 = vpop.f32.mrf.mxu0
  %v898 = vadd.f32 %v698, %v897
  %899 = vmatmul.bf16.gmra.mxu0 %v503
  %v900 = vpop.f32.mrf.mxu0
  %v901 = vadd.f32 %v698, %v900
  %v902 = vpop.f32.mrf.mxu0
  %v903 = vadd.f32 %v698, %v902
  %904 = vmatmul.bf16.gmra.mxu0 %v507
  %v905 = vpop.f32.mrf.mxu0
  %v906 = vadd.f32 %v698, %v905
  %v907 = vpop.f32.mrf.mxu0
  %v908 = vadd.f32 %v698, %v907
  %909 = vmatmul.bf16.gmra.mxu0 %v511
  %v910 = vpop.f32.mrf.mxu0
  %v911 = vadd.f32 %v698, %v910
  %v912 = vpop.f32.mrf.mxu0
  %v913 = vadd.f32 %v698, %v912
  %914 = vmatmul.bf16.gmra.mxu0 %v515
  %v915 = vpop.f32.mrf.mxu0
  %v916 = vadd.f32 %v698, %v915
  %v917 = vpop.f32.mrf.mxu0
  %v918 = vadd.f32 %v698, %v917
  %919 = vmatmul.bf16.gmra.mxu0 %v519
  %v920 = vpop.f32.mrf.mxu0
  %v921 = vadd.f32 %v698, %v920
  %v922 = vpop.f32.mrf.mxu0
  %v923 = vadd.f32 %v698, %v922
  %924 = vmatmul.bf16.gmra.mxu0 %v523
  %v925 = vpop.f32.mrf.mxu0
  %v926 = vadd.f32 %v698, %v925
  %v927 = vpop.f32.mrf.mxu0
  %v928 = vadd.f32 %v698, %v927
  %929 = vmatmul.bf16.gmra.mxu0 %v527
  %v930 = vpop.f32.mrf.mxu0
  %v931 = vadd.f32 %v698, %v930
  %v932 = vpop.f32.mrf.mxu0
  %v933 = vadd.f32 %v698, %v932
  %934 = vmatmul.bf16.gmra.mxu0 %v531
  %v935 = vpop.f32.mrf.mxu0
  %v936 = vadd.f32 %v698, %v935
  %v937 = vpop.f32.mrf.mxu0
  %v938 = vadd.f32 %v698, %v937
  %939 = vmatmul.bf16.gmra.mxu0 %v535
  %v940 = vpop.f32.mrf.mxu0
  %v941 = vadd.f32 %v698, %v940
  %v942 = vpop.f32.mrf.mxu0
  %v943 = vadd.f32 %v698, %v942
  %944 = vmatmul.bf16.gmra.mxu0 %v539
  %v945 = vpop.f32.mrf.mxu0
  %v946 = vadd.f32 %v698, %v945
  %v947 = vpop.f32.mrf.mxu0
  %v948 = vadd.f32 %v698, %v947
  %949 = vmatmul.bf16.gmra.mxu0 %v543
  %v950 = vpop.f32.mrf.mxu0
  %v951 = vadd.f32 %v698, %v950
  %v952 = vpop.f32.mrf.mxu0
  %v953 = vadd.f32 %v698, %v952
  %954 = vmatmul.bf16.gmra.mxu0 %v547
  %v955 = vpop.f32.mrf.mxu0
  %v956 = vadd.f32 %v698, %v955
  %v957 = vpop.f32.mrf.mxu0
  %v958 = vadd.f32 %v698, %v957
  %959 = vmatmul.bf16.gmra.mxu0 %v551
  %v960 = vpop.f32.mrf.mxu0
  %v961 = vadd.f32 %v698, %v960
  %v962 = vpop.f32.mrf.mxu0
  %v963 = vadd.f32 %v698, %v962
  %964 = vmatmul.bf16.gmra.mxu0 %v555
  %v965 = vpop.f32.mrf.mxu0
  %v966 = vadd.f32 %v698, %v965
  %v967 = vpop.f32.mrf.mxu0
  %v968 = vadd.f32 %v698, %v967
  %969 = vmatmul.bf16.gmra.mxu0 %v559
  %v970 = vpop.f32.mrf.mxu0
  %v971 = vadd.f32 %v698, %v970
  %v972 = vpop.f32.mrf.mxu0
  %v973 = vadd.f32 %v698, %v972
  %974 = vmatmul.bf16.gmra.mxu0 %v563
  %v975 = vpop.f32.mrf.mxu0
  %v976 = vadd.f32 %v698, %v975
  %v977 = vpop.f32.mrf.mxu0
  %v978 = vadd.f32 %v698, %v977
  %979 = vmatmul.bf16.gmra.mxu0 %v567
  %v980 = vpop.f32.mrf.mxu0
  %v981 = vadd.f32 %v698, %v980
  %v982 = vpop.f32.mrf.mxu0
  %v983 = vadd.f32 %v698, %v982
  %984 = vmatmul.bf16.gmra.mxu0 %v571
  %v985 = vpop.f32.mrf.mxu0
  %v986 = vadd.f32 %v698, %v985
  %v987 = vpop.f32.mrf.mxu0
  %v988 = vadd.f32 %v698, %v987
  %989 = vmatmul.bf16.gmra.mxu0 %v575
  %v990 = vpop.f32.mrf.mxu0
  %v991 = vadd.f32 %v698, %v990
  %v992 = vpop.f32.mrf.mxu0
  %v993 = vadd.f32 %v698, %v992
  %994 = vmatmul.bf16.gmra.mxu0 %v579
  %v995 = vpop.f32.mrf.mxu0
  %v996 = vadd.f32 %v698, %v995
  %v997 = vpop.f32.mrf.mxu0
  %v998 = vadd.f32 %v698, %v997
  %999 = vmatmul.bf16.gmra.mxu0 %v583
  %v1000 = vpop.f32.mrf.mxu0
  %v1001 = vadd.f32 %v698, %v1000
  %v1002 = vpop.f32.mrf.mxu0
  %v1003 = vadd.f32 %v698, %v1002
  %1004 = vmatmul.bf16.gmra.mxu0 %v587
  %v1005 = vpop.f32.mrf.mxu0
  %v1006 = vadd.f32 %v698, %v1005
  %v1007 = vpop.f32.mrf.mxu0
  %v1008 = vadd.f32 %v698, %v1007
  %1009 = vmatmul.bf16.gmra.mxu0 %v591
  %v1010 = vpop.f32.mrf.mxu0
  %v1011 = vadd.f32 %v698, %v1010
  %v1012 = vpop.f32.mrf.mxu0
  %v1013 = vadd.f32 %v698, %v1012
  %1014 = vmatmul.bf16.gmra.mxu0 %v595
  %v1015 = vpop.f32.mrf.mxu0
  %v1016 = vadd.f32 %v698, %v1015
  %v1017 = vpop.f32.mrf.mxu0
  %v1018 = vadd.f32 %v698, %v1017
  %1019 = vmatmul.bf16.gmra.mxu0 %v599
  %v1020 = vpop.f32.mrf.mxu0
  %v1021 = vadd.f32 %v698, %v1020
  %v1022 = vpop.f32.mrf.mxu0
  %v1023 = vadd.f32 %v698, %v1022
  %1024 = vmatmul.bf16.gmra.mxu0 %v603
  %v1025 = vpop.f32.mrf.mxu0
  %v1026 = vadd.f32 %v698, %v1025
  %v1027 = vpop.f32.mrf.mxu0
  %v1028 = vadd.f32 %v698, %v1027
  %1029 = vmatmul.bf16.gmra.mxu0 %v607
  %v1030 = vpop.f32.mrf.mxu0
  %v1031 = vadd.f32 %v698, %v1030
  %v1032 = vpop.f32.mrf.mxu0
  %v1033 = vadd.f32 %v698, %v1032
  %1034 = vmatmul.bf16.gmra.mxu0 %v611
  %v1035 = vpop.f32.mrf.mxu0
  %v1036 = vadd.f32 %v698, %v1035
  %v1037 = vpop.f32.mrf.mxu0
  %v1038 = vadd.f32 %v698, %v1037
  %1039 = vmatmul.bf16.gmra.mxu0 %v615
  %v1040 = vpop.f32.mrf.mxu0
  %v1041 = vadd.f32 %v698, %v1040
  %v1042 = vpop.f32.mrf.mxu0
  %v1043 = vadd.f32 %v698, %v1042
  %1044 = vmatmul.bf16.gmra.mxu0 %v619
  %v1045 = vpop.f32.mrf.mxu0
  %v1046 = vadd.f32 %v698, %v1045
  %v1047 = vpop.f32.mrf.mxu0
  %v1048 = vadd.f32 %v698, %v1047
  %1049 = vmatmul.bf16.gmra.mxu0 %v623
  %v1050 = vpop.f32.mrf.mxu0
  %v1051 = vadd.f32 %v698, %v1050
  %v1052 = vpop.f32.mrf.mxu0
  %v1053 = vadd.f32 %v698, %v1052
  %1054 = vmatmul.bf16.gmra.mxu0 %v627
  %v1055 = vpop.f32.mrf.mxu0
  %v1056 = vadd.f32 %v698, %v1055
  %v1057 = vpop.f32.mrf.mxu0
  %v1058 = vadd.f32 %v698, %v1057
  %1059 = vmatmul.bf16.gmra.mxu0 %v631
  %v1060 = vpop.f32.mrf.mxu0
  %v1061 = vadd.f32 %v698, %v1060
  %v1062 = vpop.f32.mrf.mxu0
  %v1063 = vadd.f32 %v698, %v1062
  %1064 = vmatmul.bf16.gmra.mxu0 %v635
  %v1065 = vpop.f32.mrf.mxu0
  %v1066 = vadd.f32 %v698, %v1065
  %v1067 = vpop.f32.mrf.mxu0
  %v1068 = vadd.f32 %v698, %v1067
  %1069 = vmatmul.bf16.gmra.mxu0 %v639
  %v1070 = vpop.f32.mrf.mxu0
  %v1071 = vadd.f32 %v698, %v1070
  %v1072 = vpop.f32.mrf.mxu0
  %v1073 = vadd.f32 %v698, %v1072
  %1074 = vmatmul.bf16.gmra.mxu0 %v643
  %v1075 = vpop.f32.mrf.mxu0
  %v1076 = vadd.f32 %v698, %v1075
  %v1077 = vpop.f32.mrf.mxu0
  %v1078 = vadd.f32 %v698, %v1077
  %1079 = vmatmul.bf16.gmra.mxu0 %v647
  %v1080 = vpop.f32.mrf.mxu0
  %v1081 = vadd.f32 %v698, %v1080
  %v1082 = vpop.f32.mrf.mxu0
  %v1083 = vadd.f32 %v698, %v1082
  %1084 = vmatmul.bf16.gmra.mxu0 %v651
  %v1085 = vpop.f32.mrf.mxu0
  %v1086 = vadd.f32 %v698, %v1085
  %v1087 = vpop.f32.mrf.mxu0
  %v1088 = vadd.f32 %v698, %v1087
  %1089 = vmatmul.bf16.gmra.mxu0 %v655
  %v1090 = vpop.f32.mrf.mxu0
  %v1091 = vadd.f32 %v698, %v1090
  %v1092 = vpop.f32.mrf.mxu0
  %v1093 = vadd.f32 %v698, %v1092
  %1094 = vmatmul.bf16.gmra.mxu0 %v659
  %v1095 = vpop.f32.mrf.mxu0
  %v1096 = vadd.f32 %v698, %v1095
  %v1097 = vpop.f32.mrf.mxu0
  %v1098 = vadd.f32 %v698, %v1097
  %1099 = vmatmul.bf16.gmra.mxu0 %v663
  %v1100 = vpop.f32.mrf.mxu0
  %v1101 = vadd.f32 %v698, %v1100
  %v1102 = vpop.f32.mrf.mxu0
  %v1103 = vadd.f32 %v698, %v1102
  %1104 = vmatmul.bf16.gmra.mxu0 %v667
  %v1105 = vpop.f32.mrf.mxu0
  %v1106 = vadd.f32 %v698, %v1105
  %v1107 = vpop.f32.mrf.mxu0
  %v1108 = vadd.f32 %v698, %v1107
  %1109 = vdwg.mxu0
  %1110 = vmatpush.bf16.msra.mxu0 %v686
  %1111 = vmatpush.bf16.msra.mxu0 %v685
  %1112 = vmatpush.bf16.msra.mxu0 %v684
  %1113 = vmatpush.bf16.msra.mxu0 %v683
  %1114 = vmatpush.bf16.msra.mxu0 %v682
  %1115 = vmatpush.bf16.msra.mxu0 %v681
  %1116 = vmatpush.bf16.msra.mxu0 %v680
  %1117 = vmatpush.bf16.msra.mxu0 %v679
  %1118 = vmatmul.bf16.gmra.mxu0 %v472
  %v1119 = vpop.f32.mrf.mxu0
  %v1120 = vadd.f32 %v861, %v1119
  %v1121 = vpop.f32.mrf.mxu0
  %v1122 = vadd.f32 %v863, %v1121
  %1123 = vmatmul.bf16.gmra.mxu0 %v476
  %v1124 = vpop.f32.mrf.mxu0
  %v1125 = vadd.f32 %v866, %v1124
  %v1126 = vpop.f32.mrf.mxu0
  %v1127 = vadd.f32 %v868, %v1126
  %1128 = vmatmul.bf16.gmra.mxu0 %v480
  %v1129 = vpop.f32.mrf.mxu0
  %v1130 = vadd.f32 %v871, %v1129
  %v1131 = vpop.f32.mrf.mxu0
  %v1132 = vadd.f32 %v873, %v1131
  %1133 = vmatmul.bf16.gmra.mxu0 %v484
  %v1134 = vpop.f32.mrf.mxu0
  %v1135 = vadd.f32 %v876, %v1134
  %v1136 = vpop.f32.mrf.mxu0
  %v1137 = vadd.f32 %v878, %v1136
  %1138 = vmatmul.bf16.gmra.mxu0 %v488
  %v1139 = vpop.f32.mrf.mxu0
  %v1140 = vadd.f32 %v881, %v1139
  %v1141 = vpop.f32.mrf.mxu0
  %v1142 = vadd.f32 %v883, %v1141
  %1143 = vmatmul.bf16.gmra.mxu0 %v492
  %v1144 = vpop.f32.mrf.mxu0
  %v1145 = vadd.f32 %v886, %v1144
  %v1146 = vpop.f32.mrf.mxu0
  %v1147 = vadd.f32 %v888, %v1146
  %1148 = vmatmul.bf16.gmra.mxu0 %v496
  %v1149 = vpop.f32.mrf.mxu0
  %v1150 = vadd.f32 %v891, %v1149
  %v1151 = vpop.f32.mrf.mxu0
  %v1152 = vadd.f32 %v893, %v1151
  %1153 = vmatmul.bf16.gmra.mxu0 %v500
  %v1154 = vpop.f32.mrf.mxu0
  %v1155 = vadd.f32 %v896, %v1154
  %v1156 = vpop.f32.mrf.mxu0
  %v1157 = vadd.f32 %v898, %v1156
  %1158 = vmatmul.bf16.gmra.mxu0 %v504
  %v1159 = vpop.f32.mrf.mxu0
  %v1160 = vadd.f32 %v901, %v1159
  %v1161 = vpop.f32.mrf.mxu0
  %v1162 = vadd.f32 %v903, %v1161
  %1163 = vmatmul.bf16.gmra.mxu0 %v508
  %v1164 = vpop.f32.mrf.mxu0
  %v1165 = vadd.f32 %v906, %v1164
  %v1166 = vpop.f32.mrf.mxu0
  %v1167 = vadd.f32 %v908, %v1166
  %1168 = vmatmul.bf16.gmra.mxu0 %v512
  %v1169 = vpop.f32.mrf.mxu0
  %v1170 = vadd.f32 %v911, %v1169
  %v1171 = vpop.f32.mrf.mxu0
  %v1172 = vadd.f32 %v913, %v1171
  %1173 = vmatmul.bf16.gmra.mxu0 %v516
  %v1174 = vpop.f32.mrf.mxu0
  %v1175 = vadd.f32 %v916, %v1174
  %v1176 = vpop.f32.mrf.mxu0
  %v1177 = vadd.f32 %v918, %v1176
  %1178 = vmatmul.bf16.gmra.mxu0 %v520
  %v1179 = vpop.f32.mrf.mxu0
  %v1180 = vadd.f32 %v921, %v1179
  %v1181 = vpop.f32.mrf.mxu0
  %v1182 = vadd.f32 %v923, %v1181
  %1183 = vmatmul.bf16.gmra.mxu0 %v524
  %v1184 = vpop.f32.mrf.mxu0
  %v1185 = vadd.f32 %v926, %v1184
  %v1186 = vpop.f32.mrf.mxu0
  %v1187 = vadd.f32 %v928, %v1186
  %1188 = vmatmul.bf16.gmra.mxu0 %v528
  %v1189 = vpop.f32.mrf.mxu0
  %v1190 = vadd.f32 %v931, %v1189
  %v1191 = vpop.f32.mrf.mxu0
  %v1192 = vadd.f32 %v933, %v1191
  %1193 = vmatmul.bf16.gmra.mxu0 %v532
  %v1194 = vpop.f32.mrf.mxu0
  %v1195 = vadd.f32 %v936, %v1194
  %v1196 = vpop.f32.mrf.mxu0
  %v1197 = vadd.f32 %v938, %v1196
  %1198 = vmatmul.bf16.gmra.mxu0 %v536
  %v1199 = vpop.f32.mrf.mxu0
  %v1200 = vadd.f32 %v941, %v1199
  %v1201 = vpop.f32.mrf.mxu0
  %v1202 = vadd.f32 %v943, %v1201
  %1203 = vmatmul.bf16.gmra.mxu0 %v540
  %v1204 = vpop.f32.mrf.mxu0
  %v1205 = vadd.f32 %v946, %v1204
  %v1206 = vpop.f32.mrf.mxu0
  %v1207 = vadd.f32 %v948, %v1206
  %1208 = vmatmul.bf16.gmra.mxu0 %v544
  %v1209 = vpop.f32.mrf.mxu0
  %v1210 = vadd.f32 %v951, %v1209
  %v1211 = vpop.f32.mrf.mxu0
  %v1212 = vadd.f32 %v953, %v1211
  %1213 = vmatmul.bf16.gmra.mxu0 %v548
  %v1214 = vpop.f32.mrf.mxu0
  %v1215 = vadd.f32 %v956, %v1214
  %v1216 = vpop.f32.mrf.mxu0
  %v1217 = vadd.f32 %v958, %v1216
  %1218 = vmatmul.bf16.gmra.mxu0 %v552
  %v1219 = vpop.f32.mrf.mxu0
  %v1220 = vadd.f32 %v961, %v1219
  %v1221 = vpop.f32.mrf.mxu0
  %v1222 = vadd.f32 %v963, %v1221
  %1223 = vmatmul.bf16.gmra.mxu0 %v556
  %v1224 = vpop.f32.mrf.mxu0
  %v1225 = vadd.f32 %v966, %v1224
  %v1226 = vpop.f32.mrf.mxu0
  %v1227 = vadd.f32 %v968, %v1226
  %1228 = vmatmul.bf16.gmra.mxu0 %v560
  %v1229 = vpop.f32.mrf.mxu0
  %v1230 = vadd.f32 %v971, %v1229
  %v1231 = vpop.f32.mrf.mxu0
  %v1232 = vadd.f32 %v973, %v1231
  %1233 = vmatmul.bf16.gmra.mxu0 %v564
  %v1234 = vpop.f32.mrf.mxu0
  %v1235 = vadd.f32 %v976, %v1234
  %v1236 = vpop.f32.mrf.mxu0
  %v1237 = vadd.f32 %v978, %v1236
  %1238 = vmatmul.bf16.gmra.mxu0 %v568
  %v1239 = vpop.f32.mrf.mxu0
  %v1240 = vadd.f32 %v981, %v1239
  %v1241 = vpop.f32.mrf.mxu0
  %v1242 = vadd.f32 %v983, %v1241
  %1243 = vmatmul.bf16.gmra.mxu0 %v572
  %v1244 = vpop.f32.mrf.mxu0
  %v1245 = vadd.f32 %v986, %v1244
  %v1246 = vpop.f32.mrf.mxu0
  %v1247 = vadd.f32 %v988, %v1246
  %1248 = vmatmul.bf16.gmra.mxu0 %v576
  %v1249 = vpop.f32.mrf.mxu0
  %v1250 = vadd.f32 %v991, %v1249
  %v1251 = vpop.f32.mrf.mxu0
  %v1252 = vadd.f32 %v993, %v1251
  %1253 = vmatmul.bf16.gmra.mxu0 %v580
  %v1254 = vpop.f32.mrf.mxu0
  %v1255 = vadd.f32 %v996, %v1254
  %v1256 = vpop.f32.mrf.mxu0
  %v1257 = vadd.f32 %v998, %v1256
  %1258 = vmatmul.bf16.gmra.mxu0 %v584
  %v1259 = vpop.f32.mrf.mxu0
  %v1260 = vadd.f32 %v1001, %v1259
  %v1261 = vpop.f32.mrf.mxu0
  %v1262 = vadd.f32 %v1003, %v1261
  %1263 = vmatmul.bf16.gmra.mxu0 %v588
  %v1264 = vpop.f32.mrf.mxu0
  %v1265 = vadd.f32 %v1006, %v1264
  %v1266 = vpop.f32.mrf.mxu0
  %v1267 = vadd.f32 %v1008, %v1266
  %1268 = vmatmul.bf16.gmra.mxu0 %v592
  %v1269 = vpop.f32.mrf.mxu0
  %v1270 = vadd.f32 %v1011, %v1269
  %v1271 = vpop.f32.mrf.mxu0
  %v1272 = vadd.f32 %v1013, %v1271
  %1273 = vmatmul.bf16.gmra.mxu0 %v596
  %v1274 = vpop.f32.mrf.mxu0
  %v1275 = vadd.f32 %v1016, %v1274
  %v1276 = vpop.f32.mrf.mxu0
  %v1277 = vadd.f32 %v1018, %v1276
  %1278 = vmatmul.bf16.gmra.mxu0 %v600
  %v1279 = vpop.f32.mrf.mxu0
  %v1280 = vadd.f32 %v1021, %v1279
  %v1281 = vpop.f32.mrf.mxu0
  %v1282 = vadd.f32 %v1023, %v1281
  %1283 = vmatmul.bf16.gmra.mxu0 %v604
  %v1284 = vpop.f32.mrf.mxu0
  %v1285 = vadd.f32 %v1026, %v1284
  %v1286 = vpop.f32.mrf.mxu0
  %v1287 = vadd.f32 %v1028, %v1286
  %1288 = vmatmul.bf16.gmra.mxu0 %v608
  %v1289 = vpop.f32.mrf.mxu0
  %v1290 = vadd.f32 %v1031, %v1289
  %v1291 = vpop.f32.mrf.mxu0
  %v1292 = vadd.f32 %v1033, %v1291
  %1293 = vmatmul.bf16.gmra.mxu0 %v612
  %v1294 = vpop.f32.mrf.mxu0
  %v1295 = vadd.f32 %v1036, %v1294
  %v1296 = vpop.f32.mrf.mxu0
  %v1297 = vadd.f32 %v1038, %v1296
  %1298 = vmatmul.bf16.gmra.mxu0 %v616
  %v1299 = vpop.f32.mrf.mxu0
  %v1300 = vadd.f32 %v1041, %v1299
  %v1301 = vpop.f32.mrf.mxu0
  %v1302 = vadd.f32 %v1043, %v1301
  %1303 = vmatmul.bf16.gmra.mxu0 %v620
  %v1304 = vpop.f32.mrf.mxu0
  %v1305 = vadd.f32 %v1046, %v1304
  %v1306 = vpop.f32.mrf.mxu0
  %v1307 = vadd.f32 %v1048, %v1306
  %1308 = vmatmul.bf16.gmra.mxu0 %v624
  %v1309 = vpop.f32.mrf.mxu0
  %v1310 = vadd.f32 %v1051, %v1309
  %v1311 = vpop.f32.mrf.mxu0
  %v1312 = vadd.f32 %v1053, %v1311
  %1313 = vmatmul.bf16.gmra.mxu0 %v628
  %v1314 = vpop.f32.mrf.mxu0
  %v1315 = vadd.f32 %v1056, %v1314
  %v1316 = vpop.f32.mrf.mxu0
  %v1317 = vadd.f32 %v1058, %v1316
  %1318 = vmatmul.bf16.gmra.mxu0 %v632
  %v1319 = vpop.f32.mrf.mxu0
  %v1320 = vadd.f32 %v1061, %v1319
  %v1321 = vpop.f32.mrf.mxu0
  %v1322 = vadd.f32 %v1063, %v1321
  %1323 = vmatmul.bf16.gmra.mxu0 %v636
  %v1324 = vpop.f32.mrf.mxu0
  %v1325 = vadd.f32 %v1066, %v1324
  %v1326 = vpop.f32.mrf.mxu0
  %v1327 = vadd.f32 %v1068, %v1326
  %1328 = vmatmul.bf16.gmra.mxu0 %v640
  %v1329 = vpop.f32.mrf.mxu0
  %v1330 = vadd.f32 %v1071, %v1329
  %v1331 = vpop.f32.mrf.mxu0
  %v1332 = vadd.f32 %v1073, %v1331
  %1333 = vmatmul.bf16.gmra.mxu0 %v644
  %v1334 = vpop.f32.mrf.mxu0
  %v1335 = vadd.f32 %v1076, %v1334
  %v1336 = vpop.f32.mrf.mxu0
  %v1337 = vadd.f32 %v1078, %v1336
  %1338 = vmatmul.bf16.gmra.mxu0 %v648
  %v1339 = vpop.f32.mrf.mxu0
  %v1340 = vadd.f32 %v1081, %v1339
  %v1341 = vpop.f32.mrf.mxu0
  %v1342 = vadd.f32 %v1083, %v1341
  %1343 = vmatmul.bf16.gmra.mxu0 %v652
  %v1344 = vpop.f32.mrf.mxu0
  %v1345 = vadd.f32 %v1086, %v1344
  %v1346 = vpop.f32.mrf.mxu0
  %v1347 = vadd.f32 %v1088, %v1346
  %1348 = vmatmul.bf16.gmra.mxu0 %v656
  %v1349 = vpop.f32.mrf.mxu0
  %v1350 = vadd.f32 %v1091, %v1349
  %v1351 = vpop.f32.mrf.mxu0
  %v1352 = vadd.f32 %v1093, %v1351
  %1353 = vmatmul.bf16.gmra.mxu0 %v660
  %v1354 = vpop.f32.mrf.mxu0
  %v1355 = vadd.f32 %v1096, %v1354
  %v1356 = vpop.f32.mrf.mxu0
  %v1357 = vadd.f32 %v1098, %v1356
  %1358 = vmatmul.bf16.gmra.mxu0 %v664
  %v1359 = vpop.f32.mrf.mxu0
  %v1360 = vadd.f32 %v1101, %v1359
  %v1361 = vpop.f32.mrf.mxu0
  %v1362 = vadd.f32 %v1103, %v1361
  %1363 = vmatmul.bf16.gmra.mxu0 %v668
  %v1364 = vpop.f32.mrf.mxu0
  %v1365 = vadd.f32 %v1106, %v1364
  %v1366 = vpop.f32.mrf.mxu0
  %v1367 = vadd.f32 %v1108, %v1366
  %1368 = vdwg.mxu0
  %1369 = vmatpush.bf16.msra.mxu0 %v694
  %1370 = vmatpush.bf16.msra.mxu0 %v693
  %1371 = vmatpush.bf16.msra.mxu0 %v692
  %1372 = vmatpush.bf16.msra.mxu0 %v691
  %1373 = vmatpush.bf16.msra.mxu0 %v690
  %1374 = vmatpush.bf16.msra.mxu0 %v689
  %1375 = vmatpush.bf16.msra.mxu0 %v688
  %1376 = vmatpush.bf16.msra.mxu0 %v687
  %1377 = vmatmul.bf16.gmra.mxu0 %v473
  %v1378 = vpop.f32.mrf.mxu0
  %v1379 = vadd.f32 %v1120, %v1378
  %v1380 = vpop.f32.mrf.mxu0
  %v1381 = vadd.f32 %v1122, %v1380
  %1382 = vmatmul.bf16.gmra.mxu0 %v477
  %v1383 = vpop.f32.mrf.mxu0
  %v1384 = vadd.f32 %v1125, %v1383
  %v1385 = vpop.f32.mrf.mxu0
  %v1386 = vadd.f32 %v1127, %v1385
  %1387 = vmatmul.bf16.gmra.mxu0 %v481
  %v1388 = vpop.f32.mrf.mxu0
  %v1389 = vadd.f32 %v1130, %v1388
  %v1390 = vpop.f32.mrf.mxu0
  %v1391 = vadd.f32 %v1132, %v1390
  %1392 = vmatmul.bf16.gmra.mxu0 %v485
  %v1393 = vpop.f32.mrf.mxu0
  %v1394 = vadd.f32 %v1135, %v1393
  %v1395 = vpop.f32.mrf.mxu0
  %v1396 = vadd.f32 %v1137, %v1395
  %1397 = vmatmul.bf16.gmra.mxu0 %v489
  %v1398 = vpop.f32.mrf.mxu0
  %v1399 = vadd.f32 %v1140, %v1398
  %v1400 = vpop.f32.mrf.mxu0
  %v1401 = vadd.f32 %v1142, %v1400
  %1402 = vmatmul.bf16.gmra.mxu0 %v493
  %v1403 = vpop.f32.mrf.mxu0
  %v1404 = vadd.f32 %v1145, %v1403
  %v1405 = vpop.f32.mrf.mxu0
  %v1406 = vadd.f32 %v1147, %v1405
  %1407 = vmatmul.bf16.gmra.mxu0 %v497
  %v1408 = vpop.f32.mrf.mxu0
  %v1409 = vadd.f32 %v1150, %v1408
  %v1410 = vpop.f32.mrf.mxu0
  %v1411 = vadd.f32 %v1152, %v1410
  %1412 = vmatmul.bf16.gmra.mxu0 %v501
  %v1413 = vpop.f32.mrf.mxu0
  %v1414 = vadd.f32 %v1155, %v1413
  %v1415 = vpop.f32.mrf.mxu0
  %v1416 = vadd.f32 %v1157, %v1415
  %1417 = vmatmul.bf16.gmra.mxu0 %v505
  %v1418 = vpop.f32.mrf.mxu0
  %v1419 = vadd.f32 %v1160, %v1418
  %v1420 = vpop.f32.mrf.mxu0
  %v1421 = vadd.f32 %v1162, %v1420
  %1422 = vmatmul.bf16.gmra.mxu0 %v509
  %v1423 = vpop.f32.mrf.mxu0
  %v1424 = vadd.f32 %v1165, %v1423
  %v1425 = vpop.f32.mrf.mxu0
  %v1426 = vadd.f32 %v1167, %v1425
  %1427 = vmatmul.bf16.gmra.mxu0 %v513
  %v1428 = vpop.f32.mrf.mxu0
  %v1429 = vadd.f32 %v1170, %v1428
  %v1430 = vpop.f32.mrf.mxu0
  %v1431 = vadd.f32 %v1172, %v1430
  %1432 = vmatmul.bf16.gmra.mxu0 %v517
  %v1433 = vpop.f32.mrf.mxu0
  %v1434 = vadd.f32 %v1175, %v1433
  %v1435 = vpop.f32.mrf.mxu0
  %v1436 = vadd.f32 %v1177, %v1435
  %1437 = vmatmul.bf16.gmra.mxu0 %v521
  %v1438 = vpop.f32.mrf.mxu0
  %v1439 = vadd.f32 %v1180, %v1438
  %v1440 = vpop.f32.mrf.mxu0
  %v1441 = vadd.f32 %v1182, %v1440
  %1442 = vmatmul.bf16.gmra.mxu0 %v525
  %v1443 = vpop.f32.mrf.mxu0
  %v1444 = vadd.f32 %v1185, %v1443
  %v1445 = vpop.f32.mrf.mxu0
  %v1446 = vadd.f32 %v1187, %v1445
  %1447 = vmatmul.bf16.gmra.mxu0 %v529
  %v1448 = vpop.f32.mrf.mxu0
  %v1449 = vadd.f32 %v1190, %v1448
  %v1450 = vpop.f32.mrf.mxu0
  %v1451 = vadd.f32 %v1192, %v1450
  %1452 = vmatmul.bf16.gmra.mxu0 %v533
  %v1453 = vpop.f32.mrf.mxu0
  %v1454 = vadd.f32 %v1195, %v1453
  %v1455 = vpop.f32.mrf.mxu0
  %v1456 = vadd.f32 %v1197, %v1455
  %1457 = vmatmul.bf16.gmra.mxu0 %v537
  %v1458 = vpop.f32.mrf.mxu0
  %v1459 = vadd.f32 %v1200, %v1458
  %v1460 = vpop.f32.mrf.mxu0
  %v1461 = vadd.f32 %v1202, %v1460
  %1462 = vmatmul.bf16.gmra.mxu0 %v541
  %v1463 = vpop.f32.mrf.mxu0
  %v1464 = vadd.f32 %v1205, %v1463
  %v1465 = vpop.f32.mrf.mxu0
  %v1466 = vadd.f32 %v1207, %v1465
  %1467 = vmatmul.bf16.gmra.mxu0 %v545
  %v1468 = vpop.f32.mrf.mxu0
  %v1469 = vadd.f32 %v1210, %v1468
  %v1470 = vpop.f32.mrf.mxu0
  %v1471 = vadd.f32 %v1212, %v1470
  %1472 = vmatmul.bf16.gmra.mxu0 %v549
  %v1473 = vpop.f32.mrf.mxu0
  %v1474 = vadd.f32 %v1215, %v1473
  %v1475 = vpop.f32.mrf.mxu0
  %v1476 = vadd.f32 %v1217, %v1475
  %1477 = vmatmul.bf16.gmra.mxu0 %v553
  %v1478 = vpop.f32.mrf.mxu0
  %v1479 = vadd.f32 %v1220, %v1478
  %v1480 = vpop.f32.mrf.mxu0
  %v1481 = vadd.f32 %v1222, %v1480
  %1482 = vmatmul.bf16.gmra.mxu0 %v557
  %v1483 = vpop.f32.mrf.mxu0
  %v1484 = vadd.f32 %v1225, %v1483
  %v1485 = vpop.f32.mrf.mxu0
  %v1486 = vadd.f32 %v1227, %v1485
  %1487 = vmatmul.bf16.gmra.mxu0 %v561
  %v1488 = vpop.f32.mrf.mxu0
  %v1489 = vadd.f32 %v1230, %v1488
  %v1490 = vpop.f32.mrf.mxu0
  %v1491 = vadd.f32 %v1232, %v1490
  %1492 = vmatmul.bf16.gmra.mxu0 %v565
  %v1493 = vpop.f32.mrf.mxu0
  %v1494 = vadd.f32 %v1235, %v1493
  %v1495 = vpop.f32.mrf.mxu0
  %v1496 = vadd.f32 %v1237, %v1495
  %1497 = vmatmul.bf16.gmra.mxu0 %v569
  %v1498 = vpop.f32.mrf.mxu0
  %v1499 = vadd.f32 %v1240, %v1498
  %v1500 = vpop.f32.mrf.mxu0
  %v1501 = vadd.f32 %v1242, %v1500
  %1502 = vmatmul.bf16.gmra.mxu0 %v573
  %v1503 = vpop.f32.mrf.mxu0
  %v1504 = vadd.f32 %v1245, %v1503
  %v1505 = vpop.f32.mrf.mxu0
  %v1506 = vadd.f32 %v1247, %v1505
  %1507 = vmatmul.bf16.gmra.mxu0 %v577
  %v1508 = vpop.f32.mrf.mxu0
  %v1509 = vadd.f32 %v1250, %v1508
  %v1510 = vpop.f32.mrf.mxu0
  %v1511 = vadd.f32 %v1252, %v1510
  %1512 = vmatmul.bf16.gmra.mxu0 %v581
  %v1513 = vpop.f32.mrf.mxu0
  %v1514 = vadd.f32 %v1255, %v1513
  %v1515 = vpop.f32.mrf.mxu0
  %v1516 = vadd.f32 %v1257, %v1515
  %1517 = vmatmul.bf16.gmra.mxu0 %v585
  %v1518 = vpop.f32.mrf.mxu0
  %v1519 = vadd.f32 %v1260, %v1518
  %v1520 = vpop.f32.mrf.mxu0
  %v1521 = vadd.f32 %v1262, %v1520
  %1522 = vmatmul.bf16.gmra.mxu0 %v589
  %v1523 = vpop.f32.mrf.mxu0
  %v1524 = vadd.f32 %v1265, %v1523
  %v1525 = vpop.f32.mrf.mxu0
  %v1526 = vadd.f32 %v1267, %v1525
  %1527 = vmatmul.bf16.gmra.mxu0 %v593
  %v1528 = vpop.f32.mrf.mxu0
  %v1529 = vadd.f32 %v1270, %v1528
  %v1530 = vpop.f32.mrf.mxu0
  %v1531 = vadd.f32 %v1272, %v1530
  %1532 = vmatmul.bf16.gmra.mxu0 %v597
  %v1533 = vpop.f32.mrf.mxu0
  %v1534 = vadd.f32 %v1275, %v1533
  %v1535 = vpop.f32.mrf.mxu0
  %v1536 = vadd.f32 %v1277, %v1535
  %1537 = vmatmul.bf16.gmra.mxu0 %v601
  %v1538 = vpop.f32.mrf.mxu0
  %v1539 = vadd.f32 %v1280, %v1538
  %v1540 = vpop.f32.mrf.mxu0
  %v1541 = vadd.f32 %v1282, %v1540
  %1542 = vmatmul.bf16.gmra.mxu0 %v605
  %v1543 = vpop.f32.mrf.mxu0
  %v1544 = vadd.f32 %v1285, %v1543
  %v1545 = vpop.f32.mrf.mxu0
  %v1546 = vadd.f32 %v1287, %v1545
  %1547 = vmatmul.bf16.gmra.mxu0 %v609
  %v1548 = vpop.f32.mrf.mxu0
  %v1549 = vadd.f32 %v1290, %v1548
  %v1550 = vpop.f32.mrf.mxu0
  %v1551 = vadd.f32 %v1292, %v1550
  %1552 = vmatmul.bf16.gmra.mxu0 %v613
  %v1553 = vpop.f32.mrf.mxu0
  %v1554 = vadd.f32 %v1295, %v1553
  %v1555 = vpop.f32.mrf.mxu0
  %v1556 = vadd.f32 %v1297, %v1555
  %1557 = vmatmul.bf16.gmra.mxu0 %v617
  %v1558 = vpop.f32.mrf.mxu0
  %v1559 = vadd.f32 %v1300, %v1558
  %v1560 = vpop.f32.mrf.mxu0
  %v1561 = vadd.f32 %v1302, %v1560
  %1562 = vmatmul.bf16.gmra.mxu0 %v621
  %v1563 = vpop.f32.mrf.mxu0
  %v1564 = vadd.f32 %v1305, %v1563
  %v1565 = vpop.f32.mrf.mxu0
  %v1566 = vadd.f32 %v1307, %v1565
  %1567 = vmatmul.bf16.gmra.mxu0 %v625
  %v1568 = vpop.f32.mrf.mxu0
  %v1569 = vadd.f32 %v1310, %v1568
  %v1570 = vpop.f32.mrf.mxu0
  %v1571 = vadd.f32 %v1312, %v1570
  %1572 = vmatmul.bf16.gmra.mxu0 %v629
  %v1573 = vpop.f32.mrf.mxu0
  %v1574 = vadd.f32 %v1315, %v1573
  %v1575 = vpop.f32.mrf.mxu0
  %v1576 = vadd.f32 %v1317, %v1575
  %1577 = vmatmul.bf16.gmra.mxu0 %v633
  %v1578 = vpop.f32.mrf.mxu0
  %v1579 = vadd.f32 %v1320, %v1578
  %v1580 = vpop.f32.mrf.mxu0
  %v1581 = vadd.f32 %v1322, %v1580
  %1582 = vmatmul.bf16.gmra.mxu0 %v637
  %v1583 = vpop.f32.mrf.mxu0
  %v1584 = vadd.f32 %v1325, %v1583
  %v1585 = vpop.f32.mrf.mxu0
  %v1586 = vadd.f32 %v1327, %v1585
  %1587 = vmatmul.bf16.gmra.mxu0 %v641
  %v1588 = vpop.f32.mrf.mxu0
  %v1589 = vadd.f32 %v1330, %v1588
  %v1590 = vpop.f32.mrf.mxu0
  %v1591 = vadd.f32 %v1332, %v1590
  %1592 = vmatmul.bf16.gmra.mxu0 %v645
  %v1593 = vpop.f32.mrf.mxu0
  %v1594 = vadd.f32 %v1335, %v1593
  %v1595 = vpop.f32.mrf.mxu0
  %v1596 = vadd.f32 %v1337, %v1595
  %1597 = vmatmul.bf16.gmra.mxu0 %v649
  %v1598 = vpop.f32.mrf.mxu0
  %v1599 = vadd.f32 %v1340, %v1598
  %v1600 = vpop.f32.mrf.mxu0
  %v1601 = vadd.f32 %v1342, %v1600
  %1602 = vmatmul.bf16.gmra.mxu0 %v653
  %v1603 = vpop.f32.mrf.mxu0
  %v1604 = vadd.f32 %v1345, %v1603
  %v1605 = vpop.f32.mrf.mxu0
  %v1606 = vadd.f32 %v1347, %v1605
  %1607 = vmatmul.bf16.gmra.mxu0 %v657
  %v1608 = vpop.f32.mrf.mxu0
  %v1609 = vadd.f32 %v1350, %v1608
  %v1610 = vpop.f32.mrf.mxu0
  %v1611 = vadd.f32 %v1352, %v1610
  %1612 = vmatmul.bf16.gmra.mxu0 %v661
  %v1613 = vpop.f32.mrf.mxu0
  %v1614 = vadd.f32 %v1355, %v1613
  %v1615 = vpop.f32.mrf.mxu0
  %v1616 = vadd.f32 %v1357, %v1615
  %1617 = vmatmul.bf16.gmra.mxu0 %v665
  %v1618 = vpop.f32.mrf.mxu0
  %v1619 = vadd.f32 %v1360, %v1618
  %v1620 = vpop.f32.mrf.mxu0
  %v1621 = vadd.f32 %v1362, %v1620
  %1622 = vmatmul.bf16.gmra.mxu0 %v669
  %v1623 = vpop.f32.mrf.mxu0
  %v1624 = vadd.f32 %v1365, %v1623
  %v1625 = vpop.f32.mrf.mxu0
  %v1626 = vadd.f32 %v1367, %v1625
  %1627 = vdwg.mxu0
  %1628 = vmatpush.bf16.msra.mxu0 0
  %1629 = vmatpush.bf16.msra.mxu0 0
  %1630 = vmatpush.bf16.msra.mxu0 0
  %1631 = vmatpush.bf16.msra.mxu0 0
  %1632 = vmatpush.bf16.msra.mxu0 0
  %1633 = vmatpush.bf16.msra.mxu0 0
  %1634 = vmatpush.bf16.msra.mxu0 0
  %1635 = vmatpush.bf16.msra.mxu0 %v695
  %1636 = vmatmul.bf16.gmra.mxu0 %v702
  %v1637 = vpop.f32.mrf.mxu0
  %v1638 = vadd.f32 %v1379, %v1637
  %v1639 = vpop.f32.mrf.mxu0
  %v1640 = vadd.f32 %v1381, %v1639
  %1641 = vmatmul.bf16.gmra.mxu0 %v705
  %v1642 = vpop.f32.mrf.mxu0
  %v1643 = vadd.f32 %v1384, %v1642
  %v1644 = vpop.f32.mrf.mxu0
  %v1645 = vadd.f32 %v1386, %v1644
  %1646 = vmatmul.bf16.gmra.mxu0 %v708
  %v1647 = vpop.f32.mrf.mxu0
  %v1648 = vadd.f32 %v1389, %v1647
  %v1649 = vpop.f32.mrf.mxu0
  %v1650 = vadd.f32 %v1391, %v1649
  %1651 = vmatmul.bf16.gmra.mxu0 %v711
  %v1652 = vpop.f32.mrf.mxu0
  %v1653 = vadd.f32 %v1394, %v1652
  %v1654 = vpop.f32.mrf.mxu0
  %v1655 = vadd.f32 %v1396, %v1654
  %1656 = vmatmul.bf16.gmra.mxu0 %v714
  %v1657 = vpop.f32.mrf.mxu0
  %v1658 = vadd.f32 %v1399, %v1657
  %v1659 = vpop.f32.mrf.mxu0
  %v1660 = vadd.f32 %v1401, %v1659
  %1661 = vmatmul.bf16.gmra.mxu0 %v717
  %v1662 = vpop.f32.mrf.mxu0
  %v1663 = vadd.f32 %v1404, %v1662
  %v1664 = vpop.f32.mrf.mxu0
  %v1665 = vadd.f32 %v1406, %v1664
  %1666 = vmatmul.bf16.gmra.mxu0 %v720
  %v1667 = vpop.f32.mrf.mxu0
  %v1668 = vadd.f32 %v1409, %v1667
  %v1669 = vpop.f32.mrf.mxu0
  %v1670 = vadd.f32 %v1411, %v1669
  %1671 = vmatmul.bf16.gmra.mxu0 %v723
  %v1672 = vpop.f32.mrf.mxu0
  %v1673 = vadd.f32 %v1414, %v1672
  %v1674 = vpop.f32.mrf.mxu0
  %v1675 = vadd.f32 %v1416, %v1674
  %1676 = vmatmul.bf16.gmra.mxu0 %v726
  %v1677 = vpop.f32.mrf.mxu0
  %v1678 = vadd.f32 %v1419, %v1677
  %v1679 = vpop.f32.mrf.mxu0
  %v1680 = vadd.f32 %v1421, %v1679
  %1681 = vmatmul.bf16.gmra.mxu0 %v729
  %v1682 = vpop.f32.mrf.mxu0
  %v1683 = vadd.f32 %v1424, %v1682
  %v1684 = vpop.f32.mrf.mxu0
  %v1685 = vadd.f32 %v1426, %v1684
  %1686 = vmatmul.bf16.gmra.mxu0 %v732
  %v1687 = vpop.f32.mrf.mxu0
  %v1688 = vadd.f32 %v1429, %v1687
  %v1689 = vpop.f32.mrf.mxu0
  %v1690 = vadd.f32 %v1431, %v1689
  %1691 = vmatmul.bf16.gmra.mxu0 %v735
  %v1692 = vpop.f32.mrf.mxu0
  %v1693 = vadd.f32 %v1434, %v1692
  %v1694 = vpop.f32.mrf.mxu0
  %v1695 = vadd.f32 %v1436, %v1694
  %1696 = vmatmul.bf16.gmra.mxu0 %v738
  %v1697 = vpop.f32.mrf.mxu0
  %v1698 = vadd.f32 %v1439, %v1697
  %v1699 = vpop.f32.mrf.mxu0
  %v1700 = vadd.f32 %v1441, %v1699
  %1701 = vmatmul.bf16.gmra.mxu0 %v741
  %v1702 = vpop.f32.mrf.mxu0
  %v1703 = vadd.f32 %v1444, %v1702
  %v1704 = vpop.f32.mrf.mxu0
  %v1705 = vadd.f32 %v1446, %v1704
  %1706 = vmatmul.bf16.gmra.mxu0 %v744
  %v1707 = vpop.f32.mrf.mxu0
  %v1708 = vadd.f32 %v1449, %v1707
  %v1709 = vpop.f32.mrf.mxu0
  %v1710 = vadd.f32 %v1451, %v1709
  %1711 = vmatmul.bf16.gmra.mxu0 %v747
  %v1712 = vpop.f32.mrf.mxu0
  %v1713 = vadd.f32 %v1454, %v1712
  %v1714 = vpop.f32.mrf.mxu0
  %v1715 = vadd.f32 %v1456, %v1714
  %1716 = vmatmul.bf16.gmra.mxu0 %v750
  %v1717 = vpop.f32.mrf.mxu0
  %v1718 = vadd.f32 %v1459, %v1717
  %v1719 = vpop.f32.mrf.mxu0
  %v1720 = vadd.f32 %v1461, %v1719
  %1721 = vmatmul.bf16.gmra.mxu0 %v753
  %v1722 = vpop.f32.mrf.mxu0
  %v1723 = vadd.f32 %v1464, %v1722
  %v1724 = vpop.f32.mrf.mxu0
  %v1725 = vadd.f32 %v1466, %v1724
  %1726 = vmatmul.bf16.gmra.mxu0 %v756
  %v1727 = vpop.f32.mrf.mxu0
  %v1728 = vadd.f32 %v1469, %v1727
  %v1729 = vpop.f32.mrf.mxu0
  %v1730 = vadd.f32 %v1471, %v1729
  %1731 = vmatmul.bf16.gmra.mxu0 %v759
  %v1732 = vpop.f32.mrf.mxu0
  %v1733 = vadd.f32 %v1474, %v1732
  %v1734 = vpop.f32.mrf.mxu0
  %v1735 = vadd.f32 %v1476, %v1734
  %1736 = vmatmul.bf16.gmra.mxu0 %v762
  %v1737 = vpop.f32.mrf.mxu0
  %v1738 = vadd.f32 %v1479, %v1737
  %v1739 = vpop.f32.mrf.mxu0
  %v1740 = vadd.f32 %v1481, %v1739
  %1741 = vmatmul.bf16.gmra.mxu0 %v765
  %v1742 = vpop.f32.mrf.mxu0
  %v1743 = vadd.f32 %v1484, %v1742
  %v1744 = vpop.f32.mrf.mxu0
  %v1745 = vadd.f32 %v1486, %v1744
  %1746 = vmatmul.bf16.gmra.mxu0 %v768
  %v1747 = vpop.f32.mrf.mxu0
  %v1748 = vadd.f32 %v1489, %v1747
  %v1749 = vpop.f32.mrf.mxu0
  %v1750 = vadd.f32 %v1491, %v1749
  %1751 = vmatmul.bf16.gmra.mxu0 %v771
  %v1752 = vpop.f32.mrf.mxu0
  %v1753 = vadd.f32 %v1494, %v1752
  %v1754 = vpop.f32.mrf.mxu0
  %v1755 = vadd.f32 %v1496, %v1754
  %1756 = vmatmul.bf16.gmra.mxu0 %v774
  %v1757 = vpop.f32.mrf.mxu0
  %v1758 = vadd.f32 %v1499, %v1757
  %v1759 = vpop.f32.mrf.mxu0
  %v1760 = vadd.f32 %v1501, %v1759
  %1761 = vmatmul.bf16.gmra.mxu0 %v777
  %v1762 = vpop.f32.mrf.mxu0
  %v1763 = vadd.f32 %v1504, %v1762
  %v1764 = vpop.f32.mrf.mxu0
  %v1765 = vadd.f32 %v1506, %v1764
  %1766 = vmatmul.bf16.gmra.mxu0 %v780
  %v1767 = vpop.f32.mrf.mxu0
  %v1768 = vadd.f32 %v1509, %v1767
  %v1769 = vpop.f32.mrf.mxu0
  %v1770 = vadd.f32 %v1511, %v1769
  %1771 = vmatmul.bf16.gmra.mxu0 %v783
  %v1772 = vpop.f32.mrf.mxu0
  %v1773 = vadd.f32 %v1514, %v1772
  %v1774 = vpop.f32.mrf.mxu0
  %v1775 = vadd.f32 %v1516, %v1774
  %1776 = vmatmul.bf16.gmra.mxu0 %v786
  %v1777 = vpop.f32.mrf.mxu0
  %v1778 = vadd.f32 %v1519, %v1777
  %v1779 = vpop.f32.mrf.mxu0
  %v1780 = vadd.f32 %v1521, %v1779
  %1781 = vmatmul.bf16.gmra.mxu0 %v789
  %v1782 = vpop.f32.mrf.mxu0
  %v1783 = vadd.f32 %v1524, %v1782
  %v1784 = vpop.f32.mrf.mxu0
  %v1785 = vadd.f32 %v1526, %v1784
  %1786 = vmatmul.bf16.gmra.mxu0 %v792
  %v1787 = vpop.f32.mrf.mxu0
  %v1788 = vadd.f32 %v1529, %v1787
  %v1789 = vpop.f32.mrf.mxu0
  %v1790 = vadd.f32 %v1531, %v1789
  %1791 = vmatmul.bf16.gmra.mxu0 %v795
  %v1792 = vpop.f32.mrf.mxu0
  %v1793 = vadd.f32 %v1534, %v1792
  %v1794 = vpop.f32.mrf.mxu0
  %v1795 = vadd.f32 %v1536, %v1794
  %1796 = vmatmul.bf16.gmra.mxu0 %v798
  %v1797 = vpop.f32.mrf.mxu0
  %v1798 = vadd.f32 %v1539, %v1797
  %v1799 = vpop.f32.mrf.mxu0
  %v1800 = vadd.f32 %v1541, %v1799
  %1801 = vmatmul.bf16.gmra.mxu0 %v801
  %v1802 = vpop.f32.mrf.mxu0
  %v1803 = vadd.f32 %v1544, %v1802
  %v1804 = vpop.f32.mrf.mxu0
  %v1805 = vadd.f32 %v1546, %v1804
  %1806 = vmatmul.bf16.gmra.mxu0 %v804
  %v1807 = vpop.f32.mrf.mxu0
  %v1808 = vadd.f32 %v1549, %v1807
  %v1809 = vpop.f32.mrf.mxu0
  %v1810 = vadd.f32 %v1551, %v1809
  %1811 = vmatmul.bf16.gmra.mxu0 %v807
  %v1812 = vpop.f32.mrf.mxu0
  %v1813 = vadd.f32 %v1554, %v1812
  %v1814 = vpop.f32.mrf.mxu0
  %v1815 = vadd.f32 %v1556, %v1814
  %1816 = vmatmul.bf16.gmra.mxu0 %v810
  %v1817 = vpop.f32.mrf.mxu0
  %v1818 = vadd.f32 %v1559, %v1817
  %v1819 = vpop.f32.mrf.mxu0
  %v1820 = vadd.f32 %v1561, %v1819
  %1821 = vmatmul.bf16.gmra.mxu0 %v813
  %v1822 = vpop.f32.mrf.mxu0
  %v1823 = vadd.f32 %v1564, %v1822
  %v1824 = vpop.f32.mrf.mxu0
  %v1825 = vadd.f32 %v1566, %v1824
  %1826 = vmatmul.bf16.gmra.mxu0 %v816
  %v1827 = vpop.f32.mrf.mxu0
  %v1828 = vadd.f32 %v1569, %v1827
  %v1829 = vpop.f32.mrf.mxu0
  %v1830 = vadd.f32 %v1571, %v1829
  %1831 = vmatmul.bf16.gmra.mxu0 %v819
  %v1832 = vpop.f32.mrf.mxu0
  %v1833 = vadd.f32 %v1574, %v1832
  %v1834 = vpop.f32.mrf.mxu0
  %v1835 = vadd.f32 %v1576, %v1834
  %1836 = vmatmul.bf16.gmra.mxu0 %v822
  %v1837 = vpop.f32.mrf.mxu0
  %v1838 = vadd.f32 %v1579, %v1837
  %v1839 = vpop.f32.mrf.mxu0
  %v1840 = vadd.f32 %v1581, %v1839
  %1841 = vmatmul.bf16.gmra.mxu0 %v825
  %v1842 = vpop.f32.mrf.mxu0
  %v1843 = vadd.f32 %v1584, %v1842
  %v1844 = vpop.f32.mrf.mxu0
  %v1845 = vadd.f32 %v1586, %v1844
  %1846 = vmatmul.bf16.gmra.mxu0 %v828
  %v1847 = vpop.f32.mrf.mxu0
  %v1848 = vadd.f32 %v1589, %v1847
  %v1849 = vpop.f32.mrf.mxu0
  %v1850 = vadd.f32 %v1591, %v1849
  %1851 = vmatmul.bf16.gmra.mxu0 %v831
  %v1852 = vpop.f32.mrf.mxu0
  %v1853 = vadd.f32 %v1594, %v1852
  %v1854 = vpop.f32.mrf.mxu0
  %v1855 = vadd.f32 %v1596, %v1854
  %1856 = vmatmul.bf16.gmra.mxu0 %v834
  %v1857 = vpop.f32.mrf.mxu0
  %v1858 = vadd.f32 %v1599, %v1857
  %v1859 = vpop.f32.mrf.mxu0
  %v1860 = vadd.f32 %v1601, %v1859
  %1861 = vmatmul.bf16.gmra.mxu0 %v837
  %v1862 = vpop.f32.mrf.mxu0
  %v1863 = vadd.f32 %v1604, %v1862
  %v1864 = vpop.f32.mrf.mxu0
  %v1865 = vadd.f32 %v1606, %v1864
  %1866 = vmatmul.bf16.gmra.mxu0 %v840
  %v1867 = vpop.f32.mrf.mxu0
  %v1868 = vadd.f32 %v1609, %v1867
  %v1869 = vpop.f32.mrf.mxu0
  %v1870 = vadd.f32 %v1611, %v1869
  %1871 = vmatmul.bf16.gmra.mxu0 %v843
  %v1872 = vpop.f32.mrf.mxu0
  %v1873 = vadd.f32 %v1614, %v1872
  %v1874 = vpop.f32.mrf.mxu0
  %v1875 = vadd.f32 %v1616, %v1874
  %1876 = vmatmul.bf16.gmra.mxu0 %v846
  %v1877 = vpop.f32.mrf.mxu0
  %v1878 = vadd.f32 %v1619, %v1877
  %v1879 = vpop.f32.mrf.mxu0
  %v1880 = vadd.f32 %v1621, %v1879
  %1881 = vmatmul.bf16.gmra.mxu0 %v849
  %v1882 = vpop.f32.mrf.mxu0
  %v1883 = vadd.f32 %v1624, %v1882
  %v1884 = vpop.f32.mrf.mxu0
  %v1885 = vadd.f32 %v1626, %v1884
  %1886 = vdwg.mxu0
  %v1887 = vld [vmem:[%s3] sm:$0x1]
  %v1888 = vld [vmem:[%s4] sm:$0x1]
  %vm1889 = vcmask 261120
  %v1890 = vsel %vm1889, %v1638, 0.0
  %v1891 = vsel %vm1889, %v1640, 0.0
  %v1892 = vadd.f32 %v1890, %v1891
  %v1893 = vsel %vm1889, %v1643, 0.0
  %v1894 = vadd.f32 %v1892, %v1893
  %v1895 = vsel %vm1889, %v1645, 0.0
  %v1896 = vadd.f32 %v1894, %v1895
  %v1897 = vsel %vm1889, %v1648, 0.0
  %v1898 = vadd.f32 %v1896, %v1897
  %v1899 = vsel %vm1889, %v1650, 0.0
  %v1900 = vadd.f32 %v1898, %v1899
  %v1901 = vsel %vm1889, %v1653, 0.0
  %v1902 = vadd.f32 %v1900, %v1901
  %v1903 = vsel %vm1889, %v1655, 0.0
  %v1904 = vadd.f32 %v1902, %v1903
  %v1905 = vsel %vm1889, %v1658, 0.0
  %v1906 = vadd.f32 %v1904, %v1905
  %v1907 = vsel %vm1889, %v1660, 0.0
  %v1908 = vadd.f32 %v1906, %v1907
  %v1909 = vsel %vm1889, %v1663, 0.0
  %v1910 = vadd.f32 %v1908, %v1909
  %v1911 = vsel %vm1889, %v1665, 0.0
  %v1912 = vadd.f32 %v1910, %v1911
  %v1913 = vsel %vm1889, %v1668, 0.0
  %v1914 = vadd.f32 %v1912, %v1913
  %v1915 = vsel %vm1889, %v1670, 0.0
  %v1916 = vadd.f32 %v1914, %v1915
  %v1917 = vsel %vm1889, %v1673, 0.0
  %v1918 = vadd.f32 %v1916, %v1917
  %v1919 = vsel %vm1889, %v1675, 0.0
  %v1920 = vadd.f32 %v1918, %v1919
  %v1921 = vsel %vm1889, %v1678, 0.0
  %v1922 = vadd.f32 %v1920, %v1921
  %v1923 = vsel %vm1889, %v1680, 0.0
  %v1924 = vadd.f32 %v1922, %v1923
  %v1925 = vsel %vm1889, %v1683, 0.0
  %v1926 = vadd.f32 %v1924, %v1925
  %v1927 = vsel %vm1889, %v1685, 0.0
  %v1928 = vadd.f32 %v1926, %v1927
  %v1929 = vsel %vm1889, %v1688, 0.0
  %v1930 = vadd.f32 %v1928, %v1929
  %v1931 = vsel %vm1889, %v1690, 0.0
  %v1932 = vadd.f32 %v1930, %v1931
  %v1933 = vsel %vm1889, %v1693, 0.0
  %v1934 = vadd.f32 %v1932, %v1933
  %v1935 = vsel %vm1889, %v1695, 0.0
  %v1936 = vadd.f32 %v1934, %v1935
  %v1937 = vsel %vm1889, %v1698, 0.0
  %v1938 = vadd.f32 %v1936, %v1937
  %v1939 = vsel %vm1889, %v1700, 0.0
  %v1940 = vadd.f32 %v1938, %v1939
  %v1941 = vsel %vm1889, %v1703, 0.0
  %v1942 = vadd.f32 %v1940, %v1941
  %v1943 = vsel %vm1889, %v1705, 0.0
  %v1944 = vadd.f32 %v1942, %v1943
  %v1945 = vsel %vm1889, %v1708, 0.0
  %v1946 = vadd.f32 %v1944, %v1945
  %v1947 = vsel %vm1889, %v1710, 0.0
  %v1948 = vadd.f32 %v1946, %v1947
  %v1949 = vsel %vm1889, %v1713, 0.0
  %v1950 = vadd.f32 %v1948, %v1949
  %v1951 = vsel %vm1889, %v1715, 0.0
  %v1952 = vadd.f32 %v1950, %v1951
  %v1953 = vsel %vm1889, %v1718, 0.0
  %v1954 = vadd.f32 %v1952, %v1953
  %v1955 = vsel %vm1889, %v1720, 0.0
  %v1956 = vadd.f32 %v1954, %v1955
  %v1957 = vsel %vm1889, %v1723, 0.0
  %v1958 = vadd.f32 %v1956, %v1957
  %v1959 = vsel %vm1889, %v1725, 0.0
  %v1960 = vadd.f32 %v1958, %v1959
  %v1961 = vsel %vm1889, %v1728, 0.0
  %v1962 = vadd.f32 %v1960, %v1961
  %v1963 = vsel %vm1889, %v1730, 0.0
  %v1964 = vadd.f32 %v1962, %v1963
  %v1965 = vsel %vm1889, %v1733, 0.0
  %v1966 = vadd.f32 %v1964, %v1965
  %v1967 = vsel %vm1889, %v1735, 0.0
  %v1968 = vadd.f32 %v1966, %v1967
  %v1969 = vsel %vm1889, %v1738, 0.0
  %v1970 = vadd.f32 %v1968, %v1969
  %v1971 = vsel %vm1889, %v1740, 0.0
  %v1972 = vadd.f32 %v1970, %v1971
  %v1973 = vsel %vm1889, %v1743, 0.0
  %v1974 = vadd.f32 %v1972, %v1973
  %v1975 = vsel %vm1889, %v1745, 0.0
  %v1976 = vadd.f32 %v1974, %v1975
  %v1977 = vsel %vm1889, %v1748, 0.0
  %v1978 = vadd.f32 %v1976, %v1977
  %v1979 = vsel %vm1889, %v1750, 0.0
  %v1980 = vadd.f32 %v1978, %v1979
  %v1981 = vsel %vm1889, %v1753, 0.0
  %v1982 = vadd.f32 %v1980, %v1981
  %v1983 = vsel %vm1889, %v1755, 0.0
  %v1984 = vadd.f32 %v1982, %v1983
  %v1985 = vsel %vm1889, %v1758, 0.0
  %v1986 = vadd.f32 %v1984, %v1985
  %v1987 = vsel %vm1889, %v1760, 0.0
  %v1988 = vadd.f32 %v1986, %v1987
  %v1989 = vsel %vm1889, %v1763, 0.0
  %v1990 = vadd.f32 %v1988, %v1989
  %v1991 = vsel %vm1889, %v1765, 0.0
  %v1992 = vadd.f32 %v1990, %v1991
  %v1993 = vsel %vm1889, %v1768, 0.0
  %v1994 = vadd.f32 %v1992, %v1993
  %v1995 = vsel %vm1889, %v1770, 0.0
  %v1996 = vadd.f32 %v1994, %v1995
  %v1997 = vsel %vm1889, %v1773, 0.0
  %v1998 = vadd.f32 %v1996, %v1997
  %v1999 = vsel %vm1889, %v1775, 0.0
  %v2000 = vadd.f32 %v1998, %v1999
  %v2001 = vsel %vm1889, %v1778, 0.0
  %v2002 = vadd.f32 %v2000, %v2001
  %v2003 = vsel %vm1889, %v1780, 0.0
  %v2004 = vadd.f32 %v2002, %v2003
  %v2005 = vsel %vm1889, %v1783, 0.0
  %v2006 = vadd.f32 %v2004, %v2005
  %v2007 = vsel %vm1889, %v1785, 0.0
  %v2008 = vadd.f32 %v2006, %v2007
  %v2009 = vsel %vm1889, %v1788, 0.0
  %v2010 = vadd.f32 %v2008, %v2009
  %v2011 = vsel %vm1889, %v1790, 0.0
  %v2012 = vadd.f32 %v2010, %v2011
  %v2013 = vsel %vm1889, %v1793, 0.0
  %v2014 = vadd.f32 %v2012, %v2013
  %v2015 = vsel %vm1889, %v1795, 0.0
  %v2016 = vadd.f32 %v2014, %v2015
  %v2017 = vsel %vm1889, %v1798, 0.0
  %v2018 = vadd.f32 %v2016, %v2017
  %v2019 = vsel %vm1889, %v1800, 0.0
  %v2020 = vadd.f32 %v2018, %v2019
  %v2021 = vsel %vm1889, %v1803, 0.0
  %v2022 = vadd.f32 %v2020, %v2021
  %v2023 = vsel %vm1889, %v1805, 0.0
  %v2024 = vadd.f32 %v2022, %v2023
  %v2025 = vsel %vm1889, %v1808, 0.0
  %v2026 = vadd.f32 %v2024, %v2025
  %v2027 = vsel %vm1889, %v1810, 0.0
  %v2028 = vadd.f32 %v2026, %v2027
  %v2029 = vsel %vm1889, %v1813, 0.0
  %v2030 = vadd.f32 %v2028, %v2029
  %v2031 = vsel %vm1889, %v1815, 0.0
  %v2032 = vadd.f32 %v2030, %v2031
  %v2033 = vsel %vm1889, %v1818, 0.0
  %v2034 = vadd.f32 %v2032, %v2033
  %v2035 = vsel %vm1889, %v1820, 0.0
  %v2036 = vadd.f32 %v2034, %v2035
  %v2037 = vsel %vm1889, %v1823, 0.0
  %v2038 = vadd.f32 %v2036, %v2037
  %v2039 = vsel %vm1889, %v1825, 0.0
  %v2040 = vadd.f32 %v2038, %v2039
  %v2041 = vsel %vm1889, %v1828, 0.0
  %v2042 = vadd.f32 %v2040, %v2041
  %v2043 = vsel %vm1889, %v1830, 0.0
  %v2044 = vadd.f32 %v2042, %v2043
  %v2045 = vsel %vm1889, %v1833, 0.0
  %v2046 = vadd.f32 %v2044, %v2045
  %v2047 = vsel %vm1889, %v1835, 0.0
  %v2048 = vadd.f32 %v2046, %v2047
  %v2049 = vsel %vm1889, %v1838, 0.0
  %v2050 = vadd.f32 %v2048, %v2049
  %v2051 = vsel %vm1889, %v1840, 0.0
  %v2052 = vadd.f32 %v2050, %v2051
  %v2053 = vsel %vm1889, %v1843, 0.0
  %v2054 = vadd.f32 %v2052, %v2053
  %v2055 = vsel %vm1889, %v1845, 0.0
  %v2056 = vadd.f32 %v2054, %v2055
  %v2057 = vsel %vm1889, %v1848, 0.0
  %v2058 = vadd.f32 %v2056, %v2057
  %v2059 = vsel %vm1889, %v1850, 0.0
  %v2060 = vadd.f32 %v2058, %v2059
  %v2061 = vsel %vm1889, %v1853, 0.0
  %v2062 = vadd.f32 %v2060, %v2061
  %v2063 = vsel %vm1889, %v1855, 0.0
  %v2064 = vadd.f32 %v2062, %v2063
  %v2065 = vsel %vm1889, %v1858, 0.0
  %v2066 = vadd.f32 %v2064, %v2065
  %v2067 = vsel %vm1889, %v1860, 0.0
  %v2068 = vadd.f32 %v2066, %v2067
  %v2069 = vsel %vm1889, %v1863, 0.0
  %v2070 = vadd.f32 %v2068, %v2069
  %v2071 = vsel %vm1889, %v1865, 0.0
  %v2072 = vadd.f32 %v2070, %v2071
  %v2073 = vsel %vm1889, %v1868, 0.0
  %v2074 = vadd.f32 %v2072, %v2073
  %v2075 = vsel %vm1889, %v1870, 0.0
  %v2076 = vadd.f32 %v2074, %v2075
  %v2077 = vsel %vm1889, %v1873, 0.0
  %v2078 = vadd.f32 %v2076, %v2077
  %v2079 = vsel %vm1889, %v1875, 0.0
  %v2080 = vadd.f32 %v2078, %v2079
  %v2081 = vsel %vm1889, %v1878, 0.0
  %v2082 = vadd.f32 %v2080, %v2081
  %v2083 = vsel %vm1889, %v1880, 0.0
  %v2084 = vadd.f32 %v2082, %v2083
  %v2085 = vsel %vm1889, %v1883, 0.0
  %v2086 = vadd.f32 %v2084, %v2085
  %v2087 = vsel %vm1889, %v1885, 0.0
  %v2088 = vadd.f32 %v2086, %v2087
  %v2089 = vrot.slane %v2088, 4
  %v2090 = vadd.f32 %v2088, %v2089
  %v2091 = vrot.slane %v2090, 2
  %v2092 = vadd.f32 %v2090, %v2091
  %v2093 = vrot.slane %v2092, 1
  %v2094 = vadd.f32 %v2092, %v2093
  %v2095 = vrcp.pop 800.0
  %v2096 = vmul.f32 800.0, %v2095
  %v2097 = vsub.f32 1.0, %v2096
  %v2098 = vmul.f32 %v2095, %v2097
  %v2099 = vadd.f32 %v2095, %v2098
  %vm2100 = vweird.f32 %v2095
  %v2101 = vsel %vm2100, %v2095, %v2099
  %v2102 = vmul.f32 %v2094, %v2101
  %v2103 = vmul.f32 %v1638, %v1638
  %v2104 = vmul.f32 %v1640, %v1640
  %v2105 = vmul.f32 %v1643, %v1643
  %v2106 = vmul.f32 %v1645, %v1645
  %v2107 = vmul.f32 %v1648, %v1648
  %v2108 = vmul.f32 %v1650, %v1650
  %v2109 = vmul.f32 %v1653, %v1653
  %v2110 = vmul.f32 %v1655, %v1655
  %v2111 = vmul.f32 %v1658, %v1658
  %v2112 = vmul.f32 %v1660, %v1660
  %v2113 = vmul.f32 %v1663, %v1663
  %v2114 = vmul.f32 %v1665, %v1665
  %v2115 = vmul.f32 %v1668, %v1668
  %v2116 = vmul.f32 %v1670, %v1670
  %v2117 = vmul.f32 %v1673, %v1673
  %v2118 = vmul.f32 %v1675, %v1675
  %v2119 = vmul.f32 %v1678, %v1678
  %v2120 = vmul.f32 %v1680, %v1680
  %v2121 = vmul.f32 %v1683, %v1683
  %v2122 = vmul.f32 %v1685, %v1685
  %v2123 = vmul.f32 %v1688, %v1688
  %v2124 = vmul.f32 %v1690, %v1690
  %v2125 = vmul.f32 %v1693, %v1693
  %v2126 = vmul.f32 %v1695, %v1695
  %v2127 = vmul.f32 %v1698, %v1698
  %v2128 = vmul.f32 %v1700, %v1700
  %v2129 = vmul.f32 %v1703, %v1703
  %v2130 = vmul.f32 %v1705, %v1705
  %v2131 = vmul.f32 %v1708, %v1708
  %v2132 = vmul.f32 %v1710, %v1710
  %v2133 = vmul.f32 %v1713, %v1713
  %v2134 = vmul.f32 %v1715, %v1715
  %v2135 = vmul.f32 %v1718, %v1718
  %v2136 = vmul.f32 %v1720, %v1720
  %v2137 = vmul.f32 %v1723, %v1723
  %v2138 = vmul.f32 %v1725, %v1725
  %v2139 = vmul.f32 %v1728, %v1728
  %v2140 = vmul.f32 %v1730, %v1730
  %v2141 = vmul.f32 %v1733, %v1733
  %v2142 = vmul.f32 %v1735, %v1735
  %v2143 = vmul.f32 %v1738, %v1738
  %v2144 = vmul.f32 %v1740, %v1740
  %v2145 = vmul.f32 %v1743, %v1743
  %v2146 = vmul.f32 %v1745, %v1745
  %v2147 = vmul.f32 %v1748, %v1748
  %v2148 = vmul.f32 %v1750, %v1750
  %v2149 = vmul.f32 %v1753, %v1753
  %v2150 = vmul.f32 %v1755, %v1755
  %v2151 = vmul.f32 %v1758, %v1758
  %v2152 = vmul.f32 %v1760, %v1760
  %v2153 = vmul.f32 %v1763, %v1763
  %v2154 = vmul.f32 %v1765, %v1765
  %v2155 = vmul.f32 %v1768, %v1768
  %v2156 = vmul.f32 %v1770, %v1770
  %v2157 = vmul.f32 %v1773, %v1773
  %v2158 = vmul.f32 %v1775, %v1775
  %v2159 = vmul.f32 %v1778, %v1778
  %v2160 = vmul.f32 %v1780, %v1780
  %v2161 = vmul.f32 %v1783, %v1783
  %v2162 = vmul.f32 %v1785, %v1785
  %v2163 = vmul.f32 %v1788, %v1788
  %v2164 = vmul.f32 %v1790, %v1790
  %v2165 = vmul.f32 %v1793, %v1793
  %v2166 = vmul.f32 %v1795, %v1795
  %v2167 = vmul.f32 %v1798, %v1798
  %v2168 = vmul.f32 %v1800, %v1800
  %v2169 = vmul.f32 %v1803, %v1803
  %v2170 = vmul.f32 %v1805, %v1805
  %v2171 = vmul.f32 %v1808, %v1808
  %v2172 = vmul.f32 %v1810, %v1810
  %v2173 = vmul.f32 %v1813, %v1813
  %v2174 = vmul.f32 %v1815, %v1815
  %v2175 = vmul.f32 %v1818, %v1818
  %v2176 = vmul.f32 %v1820, %v1820
  %v2177 = vmul.f32 %v1823, %v1823
  %v2178 = vmul.f32 %v1825, %v1825
  %v2179 = vmul.f32 %v1828, %v1828
  %v2180 = vmul.f32 %v1830, %v1830
  %v2181 = vmul.f32 %v1833, %v1833
  %v2182 = vmul.f32 %v1835, %v1835
  %v2183 = vmul.f32 %v1838, %v1838
  %v2184 = vmul.f32 %v1840, %v1840
  %v2185 = vmul.f32 %v1843, %v1843
  %v2186 = vmul.f32 %v1845, %v1845
  %v2187 = vmul.f32 %v1848, %v1848
  %v2188 = vmul.f32 %v1850, %v1850
  %v2189 = vmul.f32 %v1853, %v1853
  %v2190 = vmul.f32 %v1855, %v1855
  %v2191 = vmul.f32 %v1858, %v1858
  %v2192 = vmul.f32 %v1860, %v1860
  %v2193 = vmul.f32 %v1863, %v1863
  %v2194 = vmul.f32 %v1865, %v1865
  %v2195 = vmul.f32 %v1868, %v1868
  %v2196 = vmul.f32 %v1870, %v1870
  %v2197 = vmul.f32 %v1873, %v1873
  %v2198 = vmul.f32 %v1875, %v1875
  %v2199 = vmul.f32 %v1878, %v1878
  %v2200 = vmul.f32 %v1880, %v1880
  %v2201 = vmul.f32 %v1883, %v1883
  %v2202 = vmul.f32 %v1885, %v1885
  %v2203 = vsel %vm1889, %v2103, 0.0
  %v2204 = vsel %vm1889, %v2104, 0.0
  %v2205 = vadd.f32 %v2203, %v2204
  %v2206 = vsel %vm1889, %v2105, 0.0
  %v2207 = vadd.f32 %v2205, %v2206
  %v2208 = vsel %vm1889, %v2106, 0.0
  %v2209 = vadd.f32 %v2207, %v2208
  %v2210 = vsel %vm1889, %v2107, 0.0
  %v2211 = vadd.f32 %v2209, %v2210
  %v2212 = vsel %vm1889, %v2108, 0.0
  %v2213 = vadd.f32 %v2211, %v2212
  %v2214 = vsel %vm1889, %v2109, 0.0
  %v2215 = vadd.f32 %v2213, %v2214
  %v2216 = vsel %vm1889, %v2110, 0.0
  %v2217 = vadd.f32 %v2215, %v2216
  %v2218 = vsel %vm1889, %v2111, 0.0
  %v2219 = vadd.f32 %v2217, %v2218
  %v2220 = vsel %vm1889, %v2112, 0.0
  %v2221 = vadd.f32 %v2219, %v2220
  %v2222 = vsel %vm1889, %v2113, 0.0
  %v2223 = vadd.f32 %v2221, %v2222
  %v2224 = vsel %vm1889, %v2114, 0.0
  %v2225 = vadd.f32 %v2223, %v2224
  %v2226 = vsel %vm1889, %v2115, 0.0
  %v2227 = vadd.f32 %v2225, %v2226
  %v2228 = vsel %vm1889, %v2116, 0.0
  %v2229 = vadd.f32 %v2227, %v2228
  %v2230 = vsel %vm1889, %v2117, 0.0
  %v2231 = vadd.f32 %v2229, %v2230
  %v2232 = vsel %vm1889, %v2118, 0.0
  %v2233 = vadd.f32 %v2231, %v2232
  %v2234 = vsel %vm1889, %v2119, 0.0
  %v2235 = vadd.f32 %v2233, %v2234
  %v2236 = vsel %vm1889, %v2120, 0.0
  %v2237 = vadd.f32 %v2235, %v2236
  %v2238 = vsel %vm1889, %v2121, 0.0
  %v2239 = vadd.f32 %v2237, %v2238
  %v2240 = vsel %vm1889, %v2122, 0.0
  %v2241 = vadd.f32 %v2239, %v2240
  %v2242 = vsel %vm1889, %v2123, 0.0
  %v2243 = vadd.f32 %v2241, %v2242
  %v2244 = vsel %vm1889, %v2124, 0.0
  %v2245 = vadd.f32 %v2243, %v2244
  %v2246 = vsel %vm1889, %v2125, 0.0
  %v2247 = vadd.f32 %v2245, %v2246
  %v2248 = vsel %vm1889, %v2126, 0.0
  %v2249 = vadd.f32 %v2247, %v2248
  %v2250 = vsel %vm1889, %v2127, 0.0
  %v2251 = vadd.f32 %v2249, %v2250
  %v2252 = vsel %vm1889, %v2128, 0.0
  %v2253 = vadd.f32 %v2251, %v2252
  %v2254 = vsel %vm1889, %v2129, 0.0
  %v2255 = vadd.f32 %v2253, %v2254
  %v2256 = vsel %vm1889, %v2130, 0.0
  %v2257 = vadd.f32 %v2255, %v2256
  %v2258 = vsel %vm1889, %v2131, 0.0
  %v2259 = vadd.f32 %v2257, %v2258
  %v2260 = vsel %vm1889, %v2132, 0.0
  %v2261 = vadd.f32 %v2259, %v2260
  %v2262 = vsel %vm1889, %v2133, 0.0
  %v2263 = vadd.f32 %v2261, %v2262
  %v2264 = vsel %vm1889, %v2134, 0.0
  %v2265 = vadd.f32 %v2263, %v2264
  %v2266 = vsel %vm1889, %v2135, 0.0
  %v2267 = vadd.f32 %v2265, %v2266
  %v2268 = vsel %vm1889, %v2136, 0.0
  %v2269 = vadd.f32 %v2267, %v2268
  %v2270 = vsel %vm1889, %v2137, 0.0
  %v2271 = vadd.f32 %v2269, %v2270
  %v2272 = vsel %vm1889, %v2138, 0.0
  %v2273 = vadd.f32 %v2271, %v2272
  %v2274 = vsel %vm1889, %v2139, 0.0
  %v2275 = vadd.f32 %v2273, %v2274
  %v2276 = vsel %vm1889, %v2140, 0.0
  %v2277 = vadd.f32 %v2275, %v2276
  %v2278 = vsel %vm1889, %v2141, 0.0
  %v2279 = vadd.f32 %v2277, %v2278
  %v2280 = vsel %vm1889, %v2142, 0.0
  %v2281 = vadd.f32 %v2279, %v2280
  %v2282 = vsel %vm1889, %v2143, 0.0
  %v2283 = vadd.f32 %v2281, %v2282
  %v2284 = vsel %vm1889, %v2144, 0.0
  %v2285 = vadd.f32 %v2283, %v2284
  %v2286 = vsel %vm1889, %v2145, 0.0
  %v2287 = vadd.f32 %v2285, %v2286
  %v2288 = vsel %vm1889, %v2146, 0.0
  %v2289 = vadd.f32 %v2287, %v2288
  %v2290 = vsel %vm1889, %v2147, 0.0
  %v2291 = vadd.f32 %v2289, %v2290
  %v2292 = vsel %vm1889, %v2148, 0.0
  %v2293 = vadd.f32 %v2291, %v2292
  %v2294 = vsel %vm1889, %v2149, 0.0
  %v2295 = vadd.f32 %v2293, %v2294
  %v2296 = vsel %vm1889, %v2150, 0.0
  %v2297 = vadd.f32 %v2295, %v2296
  %v2298 = vsel %vm1889, %v2151, 0.0
  %v2299 = vadd.f32 %v2297, %v2298
  %v2300 = vsel %vm1889, %v2152, 0.0
  %v2301 = vadd.f32 %v2299, %v2300
  %v2302 = vsel %vm1889, %v2153, 0.0
  %v2303 = vadd.f32 %v2301, %v2302
  %v2304 = vsel %vm1889, %v2154, 0.0
  %v2305 = vadd.f32 %v2303, %v2304
  %v2306 = vsel %vm1889, %v2155, 0.0
  %v2307 = vadd.f32 %v2305, %v2306
  %v2308 = vsel %vm1889, %v2156, 0.0
  %v2309 = vadd.f32 %v2307, %v2308
  %v2310 = vsel %vm1889, %v2157, 0.0
  %v2311 = vadd.f32 %v2309, %v2310
  %v2312 = vsel %vm1889, %v2158, 0.0
  %v2313 = vadd.f32 %v2311, %v2312
  %v2314 = vsel %vm1889, %v2159, 0.0
  %v2315 = vadd.f32 %v2313, %v2314
  %v2316 = vsel %vm1889, %v2160, 0.0
  %v2317 = vadd.f32 %v2315, %v2316
  %v2318 = vsel %vm1889, %v2161, 0.0
  %v2319 = vadd.f32 %v2317, %v2318
  %v2320 = vsel %vm1889, %v2162, 0.0
  %v2321 = vadd.f32 %v2319, %v2320
  %v2322 = vsel %vm1889, %v2163, 0.0
  %v2323 = vadd.f32 %v2321, %v2322
  %v2324 = vsel %vm1889, %v2164, 0.0
  %v2325 = vadd.f32 %v2323, %v2324
  %v2326 = vsel %vm1889, %v2165, 0.0
  %v2327 = vadd.f32 %v2325, %v2326
  %v2328 = vsel %vm1889, %v2166, 0.0
  %v2329 = vadd.f32 %v2327, %v2328
  %v2330 = vsel %vm1889, %v2167, 0.0
  %v2331 = vadd.f32 %v2329, %v2330
  %v2332 = vsel %vm1889, %v2168, 0.0
  %v2333 = vadd.f32 %v2331, %v2332
  %v2334 = vsel %vm1889, %v2169, 0.0
  %v2335 = vadd.f32 %v2333, %v2334
  %v2336 = vsel %vm1889, %v2170, 0.0
  %v2337 = vadd.f32 %v2335, %v2336
  %v2338 = vsel %vm1889, %v2171, 0.0
  %v2339 = vadd.f32 %v2337, %v2338
  %v2340 = vsel %vm1889, %v2172, 0.0
  %v2341 = vadd.f32 %v2339, %v2340
  %v2342 = vsel %vm1889, %v2173, 0.0
  %v2343 = vadd.f32 %v2341, %v2342
  %v2344 = vsel %vm1889, %v2174, 0.0
  %v2345 = vadd.f32 %v2343, %v2344
  %v2346 = vsel %vm1889, %v2175, 0.0
  %v2347 = vadd.f32 %v2345, %v2346
  %v2348 = vsel %vm1889, %v2176, 0.0
  %v2349 = vadd.f32 %v2347, %v2348
  %v2350 = vsel %vm1889, %v2177, 0.0
  %v2351 = vadd.f32 %v2349, %v2350
  %v2352 = vsel %vm1889, %v2178, 0.0
  %v2353 = vadd.f32 %v2351, %v2352
  %v2354 = vsel %vm1889, %v2179, 0.0
  %v2355 = vadd.f32 %v2353, %v2354
  %v2356 = vsel %vm1889, %v2180, 0.0
  %v2357 = vadd.f32 %v2355, %v2356
  %v2358 = vsel %vm1889, %v2181, 0.0
  %v2359 = vadd.f32 %v2357, %v2358
  %v2360 = vsel %vm1889, %v2182, 0.0
  %v2361 = vadd.f32 %v2359, %v2360
  %v2362 = vsel %vm1889, %v2183, 0.0
  %v2363 = vadd.f32 %v2361, %v2362
  %v2364 = vsel %vm1889, %v2184, 0.0
  %v2365 = vadd.f32 %v2363, %v2364
  %v2366 = vsel %vm1889, %v2185, 0.0
  %v2367 = vadd.f32 %v2365, %v2366
  %v2368 = vsel %vm1889, %v2186, 0.0
  %v2369 = vadd.f32 %v2367, %v2368
  %v2370 = vsel %vm1889, %v2187, 0.0
  %v2371 = vadd.f32 %v2369, %v2370
  %v2372 = vsel %vm1889, %v2188, 0.0
  %v2373 = vadd.f32 %v2371, %v2372
  %v2374 = vsel %vm1889, %v2189, 0.0
  %v2375 = vadd.f32 %v2373, %v2374
  %v2376 = vsel %vm1889, %v2190, 0.0
  %v2377 = vadd.f32 %v2375, %v2376
  %v2378 = vsel %vm1889, %v2191, 0.0
  %v2379 = vadd.f32 %v2377, %v2378
  %v2380 = vsel %vm1889, %v2192, 0.0
  %v2381 = vadd.f32 %v2379, %v2380
  %v2382 = vsel %vm1889, %v2193, 0.0
  %v2383 = vadd.f32 %v2381, %v2382
  %v2384 = vsel %vm1889, %v2194, 0.0
  %v2385 = vadd.f32 %v2383, %v2384
  %v2386 = vsel %vm1889, %v2195, 0.0
  %v2387 = vadd.f32 %v2385, %v2386
  %v2388 = vsel %vm1889, %v2196, 0.0
  %v2389 = vadd.f32 %v2387, %v2388
  %v2390 = vsel %vm1889, %v2197, 0.0
  %v2391 = vadd.f32 %v2389, %v2390
  %v2392 = vsel %vm1889, %v2198, 0.0
  %v2393 = vadd.f32 %v2391, %v2392
  %v2394 = vsel %vm1889, %v2199, 0.0
  %v2395 = vadd.f32 %v2393, %v2394
  %v2396 = vsel %vm1889, %v2200, 0.0
  %v2397 = vadd.f32 %v2395, %v2396
  %v2398 = vsel %vm1889, %v2201, 0.0
  %v2399 = vadd.f32 %v2397, %v2398
  %v2400 = vsel %vm1889, %v2202, 0.0
  %v2401 = vadd.f32 %v2399, %v2400
  %v2402 = vrot.slane %v2401, 4
  %v2403 = vadd.f32 %v2401, %v2402
  %v2404 = vrot.slane %v2403, 2
  %v2405 = vadd.f32 %v2403, %v2404
  %v2406 = vrot.slane %v2405, 1
  %v2407 = vadd.f32 %v2405, %v2406
  %v2408 = vmul.f32 %v2407, %v2101
  %v2409 = vmul.f32 %v2102, %v2102
  %v2410 = vsub.f32 %v2408, %v2409
  %v2411 = vadd.f32 %v2410, 1e-05
  %v2412 = vrsqrt.pop %v2411
  %v2413 = vmul.f32 %v2412, %v2411
  %v2414 = vmul.f32 %v2413, %v2412
  %v2415 = vmul.f32 0.5, %v2414
  %v2416 = vsub.f32 1.5, %v2415
  %v2417 = vmul.f32 %v2412, %v2416
  %vm2418 = vweird.f32 %v2411
  %vm2419 = vweird.f32 %v2412
  %vm2420 = vmor %vm2418, %vm2419
  %v2421 = vsel %vm2420, %v2412, %v2417
  %v2422 = vmul.f32 %v1887, %v2421
  %v2424 = vperm.slane %v2422, 0
  %v2426 = vmul.f32 %v1638, %v2424
  %v2427 = vmul.f32 %v1640, %v2424
  %v2428 = vmul.f32 %v1643, %v2424
  %v2429 = vmul.f32 %v1645, %v2424
  %v2430 = vmul.f32 %v1648, %v2424
  %v2431 = vmul.f32 %v1650, %v2424
  %v2432 = vmul.f32 %v1653, %v2424
  %v2433 = vmul.f32 %v1655, %v2424
  %v2434 = vmul.f32 %v1658, %v2424
  %v2435 = vmul.f32 %v1660, %v2424
  %v2436 = vmul.f32 %v1663, %v2424
  %v2437 = vmul.f32 %v1665, %v2424
  %v2438 = vmul.f32 %v1668, %v2424
  %v2439 = vmul.f32 %v1670, %v2424
  %v2440 = vmul.f32 %v1673, %v2424
  %v2441 = vmul.f32 %v1675, %v2424
  %v2442 = vmul.f32 %v1678, %v2424
  %v2443 = vmul.f32 %v1680, %v2424
  %v2444 = vmul.f32 %v1683, %v2424
  %v2445 = vmul.f32 %v1685, %v2424
  %v2446 = vmul.f32 %v1688, %v2424
  %v2447 = vmul.f32 %v1690, %v2424
  %v2448 = vmul.f32 %v1693, %v2424
  %v2449 = vmul.f32 %v1695, %v2424
  %v2450 = vmul.f32 %v1698, %v2424
  %v2451 = vmul.f32 %v1700, %v2424
  %v2452 = vmul.f32 %v1703, %v2424
  %v2453 = vmul.f32 %v1705, %v2424
  %v2454 = vmul.f32 %v1708, %v2424
  %v2455 = vmul.f32 %v1710, %v2424
  %v2456 = vmul.f32 %v1713, %v2424
  %v2457 = vmul.f32 %v1715, %v2424
  %v2458 = vmul.f32 %v1718, %v2424
  %v2459 = vmul.f32 %v1720, %v2424
  %v2460 = vmul.f32 %v1723, %v2424
  %v2461 = vmul.f32 %v1725, %v2424
  %v2462 = vmul.f32 %v1728, %v2424
  %v2463 = vmul.f32 %v1730, %v2424
  %v2464 = vmul.f32 %v1733, %v2424
  %v2465 = vmul.f32 %v1735, %v2424
  %v2466 = vmul.f32 %v1738, %v2424
  %v2467 = vmul.f32 %v1740, %v2424
  %v2468 = vmul.f32 %v1743, %v2424
  %v2469 = vmul.f32 %v1745, %v2424
  %v2470 = vmul.f32 %v1748, %v2424
  %v2471 = vmul.f32 %v1750, %v2424
  %v2472 = vmul.f32 %v1753, %v2424
  %v2473 = vmul.f32 %v1755, %v2424
  %v2474 = vmul.f32 %v1758, %v2424
  %v2475 = vmul.f32 %v1760, %v2424
  %v2476 = vmul.f32 %v1763, %v2424
  %v2477 = vmul.f32 %v1765, %v2424
  %v2478 = vmul.f32 %v1768, %v2424
  %v2479 = vmul.f32 %v1770, %v2424
  %v2480 = vmul.f32 %v1773, %v2424
  %v2481 = vmul.f32 %v1775, %v2424
  %v2482 = vmul.f32 %v1778, %v2424
  %v2483 = vmul.f32 %v1780, %v2424
  %v2484 = vmul.f32 %v1783, %v2424
  %v2485 = vmul.f32 %v1785, %v2424
  %v2486 = vmul.f32 %v1788, %v2424
  %v2487 = vmul.f32 %v1790, %v2424
  %v2488 = vmul.f32 %v1793, %v2424
  %v2489 = vmul.f32 %v1795, %v2424
  %v2490 = vmul.f32 %v1798, %v2424
  %v2491 = vmul.f32 %v1800, %v2424
  %v2492 = vmul.f32 %v1803, %v2424
  %v2493 = vmul.f32 %v1805, %v2424
  %v2494 = vmul.f32 %v1808, %v2424
  %v2495 = vmul.f32 %v1810, %v2424
  %v2496 = vmul.f32 %v1813, %v2424
  %v2497 = vmul.f32 %v1815, %v2424
  %v2498 = vmul.f32 %v1818, %v2424
  %v2499 = vmul.f32 %v1820, %v2424
  %v2500 = vmul.f32 %v1823, %v2424
  %v2501 = vmul.f32 %v1825, %v2424
  %v2502 = vmul.f32 %v1828, %v2424
  %v2503 = vmul.f32 %v1830, %v2424
  %v2504 = vmul.f32 %v1833, %v2424
  %v2505 = vmul.f32 %v1835, %v2424
  %v2506 = vmul.f32 %v1838, %v2424
  %v2507 = vmul.f32 %v1840, %v2424
  %v2508 = vmul.f32 %v1843, %v2424
  %v2509 = vmul.f32 %v1845, %v2424
  %v2510 = vmul.f32 %v1848, %v2424
  %v2511 = vmul.f32 %v1850, %v2424
  %v2512 = vmul.f32 %v1853, %v2424
  %v2513 = vmul.f32 %v1855, %v2424
  %v2514 = vmul.f32 %v1858, %v2424
  %v2515 = vmul.f32 %v1860, %v2424
  %v2516 = vmul.f32 %v1863, %v2424
  %v2517 = vmul.f32 %v1865, %v2424
  %v2518 = vmul.f32 %v1868, %v2424
  %v2519 = vmul.f32 %v1870, %v2424
  %v2520 = vmul.f32 %v1873, %v2424
  %v2521 = vmul.f32 %v1875, %v2424
  %v2522 = vmul.f32 %v1878, %v2424
  %v2523 = vmul.f32 %v1880, %v2424
  %v2524 = vmul.f32 %v1883, %v2424
  %v2525 = vmul.f32 %v1885, %v2424
  %v2526 = vmul.f32 %v2102, %v2422
  %v2527 = vsub.f32 %v1888, %v2526
  %v2529 = vperm.slane %v2527, 0
  %v2531 = vadd.f32 %v2426, %v2529
  %v2532 = vadd.f32 %v2427, %v2529
  %v2533 = vadd.f32 %v2428, %v2529
  %v2534 = vadd.f32 %v2429, %v2529
  %v2535 = vadd.f32 %v2430, %v2529
  %v2536 = vadd.f32 %v2431, %v2529
  %v2537 = vadd.f32 %v2432, %v2529
  %v2538 = vadd.f32 %v2433, %v2529
  %v2539 = vadd.f32 %v2434, %v2529
  %v2540 = vadd.f32 %v2435, %v2529
  %v2541 = vadd.f32 %v2436, %v2529
  %v2542 = vadd.f32 %v2437, %v2529
  %v2543 = vadd.f32 %v2438, %v2529
  %v2544 = vadd.f32 %v2439, %v2529
  %v2545 = vadd.f32 %v2440, %v2529
  %v2546 = vadd.f32 %v2441, %v2529
  %v2547 = vadd.f32 %v2442, %v2529
  %v2548 = vadd.f32 %v2443, %v2529
  %v2549 = vadd.f32 %v2444, %v2529
  %v2550 = vadd.f32 %v2445, %v2529
  %v2551 = vadd.f32 %v2446, %v2529
  %v2552 = vadd.f32 %v2447, %v2529
  %v2553 = vadd.f32 %v2448, %v2529
  %v2554 = vadd.f32 %v2449, %v2529
  %v2555 = vadd.f32 %v2450, %v2529
  %v2556 = vadd.f32 %v2451, %v2529
  %v2557 = vadd.f32 %v2452, %v2529
  %v2558 = vadd.f32 %v2453, %v2529
  %v2559 = vadd.f32 %v2454, %v2529
  %v2560 = vadd.f32 %v2455, %v2529
  %v2561 = vadd.f32 %v2456, %v2529
  %v2562 = vadd.f32 %v2457, %v2529
  %v2563 = vadd.f32 %v2458, %v2529
  %v2564 = vadd.f32 %v2459, %v2529
  %v2565 = vadd.f32 %v2460, %v2529
  %v2566 = vadd.f32 %v2461, %v2529
  %v2567 = vadd.f32 %v2462, %v2529
  %v2568 = vadd.f32 %v2463, %v2529
  %v2569 = vadd.f32 %v2464, %v2529
  %v2570 = vadd.f32 %v2465, %v2529
  %v2571 = vadd.f32 %v2466, %v2529
  %v2572 = vadd.f32 %v2467, %v2529
  %v2573 = vadd.f32 %v2468, %v2529
  %v2574 = vadd.f32 %v2469, %v2529
  %v2575 = vadd.f32 %v2470, %v2529
  %v2576 = vadd.f32 %v2471, %v2529
  %v2577 = vadd.f32 %v2472, %v2529
  %v2578 = vadd.f32 %v2473, %v2529
  %v2579 = vadd.f32 %v2474, %v2529
  %v2580 = vadd.f32 %v2475, %v2529
  %v2581 = vadd.f32 %v2476, %v2529
  %v2582 = vadd.f32 %v2477, %v2529
  %v2583 = vadd.f32 %v2478, %v2529
  %v2584 = vadd.f32 %v2479, %v2529
  %v2585 = vadd.f32 %v2480, %v2529
  %v2586 = vadd.f32 %v2481, %v2529
  %v2587 = vadd.f32 %v2482, %v2529
  %v2588 = vadd.f32 %v2483, %v2529
  %v2589 = vadd.f32 %v2484, %v2529
  %v2590 = vadd.f32 %v2485, %v2529
  %v2591 = vadd.f32 %v2486, %v2529
  %v2592 = vadd.f32 %v2487, %v2529
  %v2593 = vadd.f32 %v2488, %v2529
  %v2594 = vadd.f32 %v2489, %v2529
  %v2595 = vadd.f32 %v2490, %v2529
  %v2596 = vadd.f32 %v2491, %v2529
  %v2597 = vadd.f32 %v2492, %v2529
  %v2598 = vadd.f32 %v2493, %v2529
  %v2599 = vadd.f32 %v2494, %v2529
  %v2600 = vadd.f32 %v2495, %v2529
  %v2601 = vadd.f32 %v2496, %v2529
  %v2602 = vadd.f32 %v2497, %v2529
  %v2603 = vadd.f32 %v2498, %v2529
  %v2604 = vadd.f32 %v2499, %v2529
  %v2605 = vadd.f32 %v2500, %v2529
  %v2606 = vadd.f32 %v2501, %v2529
  %v2607 = vadd.f32 %v2502, %v2529
  %v2608 = vadd.f32 %v2503, %v2529
  %v2609 = vadd.f32 %v2504, %v2529
  %v2610 = vadd.f32 %v2505, %v2529
  %v2611 = vadd.f32 %v2506, %v2529
  %v2612 = vadd.f32 %v2507, %v2529
  %v2613 = vadd.f32 %v2508, %v2529
  %v2614 = vadd.f32 %v2509, %v2529
  %v2615 = vadd.f32 %v2510, %v2529
  %v2616 = vadd.f32 %v2511, %v2529
  %v2617 = vadd.f32 %v2512, %v2529
  %v2618 = vadd.f32 %v2513, %v2529
  %v2619 = vadd.f32 %v2514, %v2529
  %v2620 = vadd.f32 %v2515, %v2529
  %v2621 = vadd.f32 %v2516, %v2529
  %v2622 = vadd.f32 %v2517, %v2529
  %v2623 = vadd.f32 %v2518, %v2529
  %v2624 = vadd.f32 %v2519, %v2529
  %v2625 = vadd.f32 %v2520, %v2529
  %v2626 = vadd.f32 %v2521, %v2529
  %v2627 = vadd.f32 %v2522, %v2529
  %v2628 = vadd.f32 %v2523, %v2529
  %v2629 = vadd.f32 %v2524, %v2529
  %v2630 = vadd.f32 %v2525, %v2529
  %v2631 = vmax.f32 %v2531, 0.0
  %v2632 = vmax.f32 %v2532, 0.0
  %v2633 = vmax.f32 %v2533, 0.0
  %v2634 = vmax.f32 %v2534, 0.0
  %v2635 = vmax.f32 %v2535, 0.0
  %v2636 = vmax.f32 %v2536, 0.0
  %v2637 = vmax.f32 %v2537, 0.0
  %v2638 = vmax.f32 %v2538, 0.0
  %v2639 = vmax.f32 %v2539, 0.0
  %v2640 = vmax.f32 %v2540, 0.0
  %v2641 = vmax.f32 %v2541, 0.0
  %v2642 = vmax.f32 %v2542, 0.0
  %v2643 = vmax.f32 %v2543, 0.0
  %v2644 = vmax.f32 %v2544, 0.0
  %v2645 = vmax.f32 %v2545, 0.0
  %v2646 = vmax.f32 %v2546, 0.0
  %v2647 = vmax.f32 %v2547, 0.0
  %v2648 = vmax.f32 %v2548, 0.0
  %v2649 = vmax.f32 %v2549, 0.0
  %v2650 = vmax.f32 %v2550, 0.0
  %v2651 = vmax.f32 %v2551, 0.0
  %v2652 = vmax.f32 %v2552, 0.0
  %v2653 = vmax.f32 %v2553, 0.0
  %v2654 = vmax.f32 %v2554, 0.0
  %v2655 = vmax.f32 %v2555, 0.0
  %v2656 = vmax.f32 %v2556, 0.0
  %v2657 = vmax.f32 %v2557, 0.0
  %v2658 = vmax.f32 %v2558, 0.0
  %v2659 = vmax.f32 %v2559, 0.0
  %v2660 = vmax.f32 %v2560, 0.0
  %v2661 = vmax.f32 %v2561, 0.0
  %v2662 = vmax.f32 %v2562, 0.0
  %v2663 = vmax.f32 %v2563, 0.0
  %v2664 = vmax.f32 %v2564, 0.0
  %v2665 = vmax.f32 %v2565, 0.0
  %v2666 = vmax.f32 %v2566, 0.0
  %v2667 = vmax.f32 %v2567, 0.0
  %v2668 = vmax.f32 %v2568, 0.0
  %v2669 = vmax.f32 %v2569, 0.0
  %v2670 = vmax.f32 %v2570, 0.0
  %v2671 = vmax.f32 %v2571, 0.0
  %v2672 = vmax.f32 %v2572, 0.0
  %v2673 = vmax.f32 %v2573, 0.0
  %v2674 = vmax.f32 %v2574, 0.0
  %v2675 = vmax.f32 %v2575, 0.0
  %v2676 = vmax.f32 %v2576, 0.0
  %v2677 = vmax.f32 %v2577, 0.0
  %v2678 = vmax.f32 %v2578, 0.0
  %v2679 = vmax.f32 %v2579, 0.0
  %v2680 = vmax.f32 %v2580, 0.0
  %v2681 = vmax.f32 %v2581, 0.0
  %v2682 = vmax.f32 %v2582, 0.0
  %v2683 = vmax.f32 %v2583, 0.0
  %v2684 = vmax.f32 %v2584, 0.0
  %v2685 = vmax.f32 %v2585, 0.0
  %v2686 = vmax.f32 %v2586, 0.0
  %v2687 = vmax.f32 %v2587, 0.0
  %v2688 = vmax.f32 %v2588, 0.0
  %v2689 = vmax.f32 %v2589, 0.0
  %v2690 = vmax.f32 %v2590, 0.0
  %v2691 = vmax.f32 %v2591, 0.0
  %v2692 = vmax.f32 %v2592, 0.0
  %v2693 = vmax.f32 %v2593, 0.0
  %v2694 = vmax.f32 %v2594, 0.0
  %v2695 = vmax.f32 %v2595, 0.0
  %v2696 = vmax.f32 %v2596, 0.0
  %v2697 = vmax.f32 %v2597, 0.0
  %v2698 = vmax.f32 %v2598, 0.0
  %v2699 = vmax.f32 %v2599, 0.0
  %v2700 = vmax.f32 %v2600, 0.0
  %v2701 = vmax.f32 %v2601, 0.0
  %v2702 = vmax.f32 %v2602, 0.0
  %v2703 = vmax.f32 %v2603, 0.0
  %v2704 = vmax.f32 %v2604, 0.0
  %v2705 = vmax.f32 %v2605, 0.0
  %v2706 = vmax.f32 %v2606, 0.0
  %v2707 = vmax.f32 %v2607, 0.0
  %v2708 = vmax.f32 %v2608, 0.0
  %v2709 = vmax.f32 %v2609, 0.0
  %v2710 = vmax.f32 %v2610, 0.0
  %v2711 = vmax.f32 %v2611, 0.0
  %v2712 = vmax.f32 %v2612, 0.0
  %v2713 = vmax.f32 %v2613, 0.0
  %v2714 = vmax.f32 %v2614, 0.0
  %v2715 = vmax.f32 %v2615, 0.0
  %v2716 = vmax.f32 %v2616, 0.0
  %v2717 = vmax.f32 %v2617, 0.0
  %v2718 = vmax.f32 %v2618, 0.0
  %v2719 = vmax.f32 %v2619, 0.0
  %v2720 = vmax.f32 %v2620, 0.0
  %v2721 = vmax.f32 %v2621, 0.0
  %v2722 = vmax.f32 %v2622, 0.0
  %v2723 = vmax.f32 %v2623, 0.0
  %v2724 = vmax.f32 %v2624, 0.0
  %v2725 = vmax.f32 %v2625, 0.0
  %v2726 = vmax.f32 %v2626, 0.0
  %v2727 = vmax.f32 %v2627, 0.0
  %v2728 = vmax.f32 %v2628, 0.0
  %v2729 = vmax.f32 %v2629, 0.0
  %v2730 = vmax.f32 %v2630, 0.0
  %2731 = vst.msk [vmem:[%s5] sm:$0xff] %vm1889, %v2631
  %2732 = vst.msk [vmem:[%s5 + $0x8] sm:$0xff] %vm1889, %v2632
  %2733 = vst.msk [vmem:[%s5 + $0x10] sm:$0xff] %vm1889, %v2633
  %2734 = vst.msk [vmem:[%s5 + $0x18] sm:$0xff] %vm1889, %v2634
  %2735 = vst.msk [vmem:[%s5 + $0x20] sm:$0xff] %vm1889, %v2635
  %2736 = vst.msk [vmem:[%s5 + $0x28] sm:$0xff] %vm1889, %v2636
  %2737 = vst.msk [vmem:[%s5 + $0x30] sm:$0xff] %vm1889, %v2637
  %2738 = vst.msk [vmem:[%s5 + $0x38] sm:$0xff] %vm1889, %v2638
  %2739 = vst.msk [vmem:[%s5 + $0x40] sm:$0xff] %vm1889, %v2639
  %2740 = vst.msk [vmem:[%s5 + $0x48] sm:$0xff] %vm1889, %v2640
  %2741 = vst.msk [vmem:[%s5 + $0x50] sm:$0xff] %vm1889, %v2641
  %2742 = vst.msk [vmem:[%s5 + $0x58] sm:$0xff] %vm1889, %v2642
  %2743 = vst.msk [vmem:[%s5 + $0x60] sm:$0xff] %vm1889, %v2643
  %2744 = vst.msk [vmem:[%s5 + $0x68] sm:$0xff] %vm1889, %v2644
  %2745 = vst.msk [vmem:[%s5 + $0x70] sm:$0xff] %vm1889, %v2645
  %2746 = vst.msk [vmem:[%s5 + $0x78] sm:$0xff] %vm1889, %v2646
  %2747 = vst.msk [vmem:[%s5 + $0x80] sm:$0xff] %vm1889, %v2647
  %2748 = vst.msk [vmem:[%s5 + $0x88] sm:$0xff] %vm1889, %v2648
  %2749 = vst.msk [vmem:[%s5 + $0x90] sm:$0xff] %vm1889, %v2649
  %2750 = vst.msk [vmem:[%s5 + $0x98] sm:$0xff] %vm1889, %v2650
  %2751 = vst.msk [vmem:[%s5 + $0xa0] sm:$0xff] %vm1889, %v2651
  %2752 = vst.msk [vmem:[%s5 + $0xa8] sm:$0xff] %vm1889, %v2652
  %2753 = vst.msk [vmem:[%s5 + $0xb0] sm:$0xff] %vm1889, %v2653
  %2754 = vst.msk [vmem:[%s5 + $0xb8] sm:$0xff] %vm1889, %v2654
  %2755 = vst.msk [vmem:[%s5 + $0xc0] sm:$0xff] %vm1889, %v2655
  %2756 = vst.msk [vmem:[%s5 + $0xc8] sm:$0xff] %vm1889, %v2656
  %2757 = vst.msk [vmem:[%s5 + $0xd0] sm:$0xff] %vm1889, %v2657
  %2758 = vst.msk [vmem:[%s5 + $0xd8] sm:$0xff] %vm1889, %v2658
  %2759 = vst.msk [vmem:[%s5 + $0xe0] sm:$0xff] %vm1889, %v2659
  %2760 = vst.msk [vmem:[%s5 + $0xe8] sm:$0xff] %vm1889, %v2660
  %2761 = vst.msk [vmem:[%s5 + $0xf0] sm:$0xff] %vm1889, %v2661
  %2762 = vst.msk [vmem:[%s5 + $0xf8] sm:$0xff] %vm1889, %v2662
  %2763 = vst.msk [vmem:[%s5 + $0x100] sm:$0xff] %vm1889, %v2663
  %2764 = vst.msk [vmem:[%s5 + $0x108] sm:$0xff] %vm1889, %v2664
  %2765 = vst.msk [vmem:[%s5 + $0x110] sm:$0xff] %vm1889, %v2665
  %2766 = vst.msk [vmem:[%s5 + $0x118] sm:$0xff] %vm1889, %v2666
  %2767 = vst.msk [vmem:[%s5 + $0x120] sm:$0xff] %vm1889, %v2667
  %2768 = vst.msk [vmem:[%s5 + $0x128] sm:$0xff] %vm1889, %v2668
  %2769 = vst.msk [vmem:[%s5 + $0x130] sm:$0xff] %vm1889, %v2669
  %2770 = vst.msk [vmem:[%s5 + $0x138] sm:$0xff] %vm1889, %v2670
  %2771 = vst.msk [vmem:[%s5 + $0x140] sm:$0xff] %vm1889, %v2671
  %2772 = vst.msk [vmem:[%s5 + $0x148] sm:$0xff] %vm1889, %v2672
  %2773 = vst.msk [vmem:[%s5 + $0x150] sm:$0xff] %vm1889, %v2673
  %2774 = vst.msk [vmem:[%s5 + $0x158] sm:$0xff] %vm1889, %v2674
  %2775 = vst.msk [vmem:[%s5 + $0x160] sm:$0xff] %vm1889, %v2675
  %2776 = vst.msk [vmem:[%s5 + $0x168] sm:$0xff] %vm1889, %v2676
  %2777 = vst.msk [vmem:[%s5 + $0x170] sm:$0xff] %vm1889, %v2677
  %2778 = vst.msk [vmem:[%s5 + $0x178] sm:$0xff] %vm1889, %v2678
  %2779 = vst.msk [vmem:[%s5 + $0x180] sm:$0xff] %vm1889, %v2679
  %2780 = vst.msk [vmem:[%s5 + $0x188] sm:$0xff] %vm1889, %v2680
  %2781 = vst.msk [vmem:[%s5 + $0x190] sm:$0xff] %vm1889, %v2681
  %2782 = vst.msk [vmem:[%s5 + $0x198] sm:$0xff] %vm1889, %v2682
  %2783 = vst.msk [vmem:[%s5 + $0x1a0] sm:$0xff] %vm1889, %v2683
  %2784 = vst.msk [vmem:[%s5 + $0x1a8] sm:$0xff] %vm1889, %v2684
  %2785 = vst.msk [vmem:[%s5 + $0x1b0] sm:$0xff] %vm1889, %v2685
  %2786 = vst.msk [vmem:[%s5 + $0x1b8] sm:$0xff] %vm1889, %v2686
  %2787 = vst.msk [vmem:[%s5 + $0x1c0] sm:$0xff] %vm1889, %v2687
  %2788 = vst.msk [vmem:[%s5 + $0x1c8] sm:$0xff] %vm1889, %v2688
  %2789 = vst.msk [vmem:[%s5 + $0x1d0] sm:$0xff] %vm1889, %v2689
  %2790 = vst.msk [vmem:[%s5 + $0x1d8] sm:$0xff] %vm1889, %v2690
  %2791 = vst.msk [vmem:[%s5 + $0x1e0] sm:$0xff] %vm1889, %v2691
  %2792 = vst.msk [vmem:[%s5 + $0x1e8] sm:$0xff] %vm1889, %v2692
  %2793 = vst.msk [vmem:[%s5 + $0x1f0] sm:$0xff] %vm1889, %v2693
  %2794 = vst.msk [vmem:[%s5 + $0x1f8] sm:$0xff] %vm1889, %v2694
  %2795 = vst.msk [vmem:[%s5 + $0x200] sm:$0xff] %vm1889, %v2695
  %2796 = vst.msk [vmem:[%s5 + $0x208] sm:$0xff] %vm1889, %v2696
  %2797 = vst.msk [vmem:[%s5 + $0x210] sm:$0xff] %vm1889, %v2697
  %2798 = vst.msk [vmem:[%s5 + $0x218] sm:$0xff] %vm1889, %v2698
  %2799 = vst.msk [vmem:[%s5 + $0x220] sm:$0xff] %vm1889, %v2699
  %2800 = vst.msk [vmem:[%s5 + $0x228] sm:$0xff] %vm1889, %v2700
  %2801 = vst.msk [vmem:[%s5 + $0x230] sm:$0xff] %vm1889, %v2701
  %2802 = vst.msk [vmem:[%s5 + $0x238] sm:$0xff] %vm1889, %v2702
  %2803 = vst.msk [vmem:[%s5 + $0x240] sm:$0xff] %vm1889, %v2703
  %2804 = vst.msk [vmem:[%s5 + $0x248] sm:$0xff] %vm1889, %v2704
  %2805 = vst.msk [vmem:[%s5 + $0x250] sm:$0xff] %vm1889, %v2705
  %2806 = vst.msk [vmem:[%s5 + $0x258] sm:$0xff] %vm1889, %v2706
  %2807 = vst.msk [vmem:[%s5 + $0x260] sm:$0xff] %vm1889, %v2707
  %2808 = vst.msk [vmem:[%s5 + $0x268] sm:$0xff] %vm1889, %v2708
  %2809 = vst.msk [vmem:[%s5 + $0x270] sm:$0xff] %vm1889, %v2709
  %2810 = vst.msk [vmem:[%s5 + $0x278] sm:$0xff] %vm1889, %v2710
  %2811 = vst.msk [vmem:[%s5 + $0x280] sm:$0xff] %vm1889, %v2711
  %2812 = vst.msk [vmem:[%s5 + $0x288] sm:$0xff] %vm1889, %v2712
  %2813 = vst.msk [vmem:[%s5 + $0x290] sm:$0xff] %vm1889, %v2713
  %2814 = vst.msk [vmem:[%s5 + $0x298] sm:$0xff] %vm1889, %v2714
  %2815 = vst.msk [vmem:[%s5 + $0x2a0] sm:$0xff] %vm1889, %v2715
  %2816 = vst.msk [vmem:[%s5 + $0x2a8] sm:$0xff] %vm1889, %v2716
  %2817 = vst.msk [vmem:[%s5 + $0x2b0] sm:$0xff] %vm1889, %v2717
  %2818 = vst.msk [vmem:[%s5 + $0x2b8] sm:$0xff] %vm1889, %v2718
  %2819 = vst.msk [vmem:[%s5 + $0x2c0] sm:$0xff] %vm1889, %v2719
  %2820 = vst.msk [vmem:[%s5 + $0x2c8] sm:$0xff] %vm1889, %v2720
  %2821 = vst.msk [vmem:[%s5 + $0x2d0] sm:$0xff] %vm1889, %v2721
  %2822 = vst.msk [vmem:[%s5 + $0x2d8] sm:$0xff] %vm1889, %v2722
  %2823 = vst.msk [vmem:[%s5 + $0x2e0] sm:$0xff] %vm1889, %v2723
  %2824 = vst.msk [vmem:[%s5 + $0x2e8] sm:$0xff] %vm1889, %v2724
  %2825 = vst.msk [vmem:[%s5 + $0x2f0] sm:$0xff] %vm1889, %v2725
  %2826 = vst.msk [vmem:[%s5 + $0x2f8] sm:$0xff] %vm1889, %v2726
  %2827 = vst.msk [vmem:[%s5 + $0x300] sm:$0xff] %vm1889, %v2727
  %2828 = vst.msk [vmem:[%s5 + $0x308] sm:$0xff] %vm1889, %v2728
  %2829 = vst.msk [vmem:[%s5 + $0x310] sm:$0xff] %vm1889, %v2729
  %2830 = vst.msk [vmem:[%s5 + $0x318] sm:$0xff] %vm1889, %v2730
  // Predicated region
  $region22: #{cvae_forward.7} parent=0 // pred_check
    _
  $region23: #{cvae_forward.7} parent=0 // pred_check_branch
    %2832 = sbr.rel (0) target = $region25
  $region24: #{cvae_forward.7} parent=0 // pred_region
    _
  $region25: #{cvae_forward.7} parent=0 // pred_fallthru
    _
  // Predicated region
  $region26: #{cvae_forward.7} parent=0 // pred_check
    _
  $region27: #{cvae_forward.7} parent=0 // pred_check_branch
    %2834 = sbr.rel (0) target = $region29
  $region28: #{cvae_forward.7} parent=0 // pred_region
    _
  $region29: #{cvae_forward.7} parent=0 // pred_fallthru
    _

// kernel: cvae_forward.8
$region0: #{cvae_forward.8}
  #allocation0 [shape = 'u32[]', space=smem, size = 0x4, offset = 0x4, fixed_abs, tag = 'smem constant byte address 0x4 - core index']
  #allocation1 [shape = 'u32[72,128]{1,0:T(1,128)}', space=vmem, size = 0x9000, scoped, tag = 'internal scratch']
  %s0 = inlined_call_operand.vmem [shape: f32[128,288], index: 0, kind: input, shape index: {}]
  %s1 = inlined_call_operand.vmem [shape: f32[288,64], index: 1, kind: input, shape index: {}]
  %s2 = inlined_call_operand.vmem [shape: f32[1,64], index: 2, kind: input, shape index: {}]
  %s3 = inlined_call_operand.vmem [shape: f32[1,64], index: 3, kind: input, shape index: {}]
  %s4 = inlined_call_operand.vmem [shape: f32[1,64], index: 4, kind: input, shape index: {}]
  %s5 = inlined_call_operand.vmem [shape: f32[128,64], index: 5, kind: output, shape index: {}]
  %s6 = sld [smem:[#allocation0]]
  $region30: #{cvae_forward.8} parent=0
    _
  %s8 = ssub.s32 1, %s6
  %s9 = scalar_select 0, %s8, %s6
  // Predicated region
  $region2: #{cvae_forward.8} parent=0 // pred_check
    _
  $region3: #{cvae_forward.8} parent=0 // pred_check_branch
    %11 = sbr.rel (0) target = $region5
  $region4: #{cvae_forward.8} parent=0 // pred_region
    _
  $region5: #{cvae_forward.8} parent=0 // pred_fallthru
    _
  // Predicated region
  $region6: #{cvae_forward.8} parent=0 // pred_check
    _
  $region7: #{cvae_forward.8} parent=0 // pred_check_branch
    %13 = sbr.rel (0) target = $region9
  $region8: #{cvae_forward.8} parent=0 // pred_region
    _
  $region9: #{cvae_forward.8} parent=0 // pred_fallthru
    _
  // Predicated region
  $region10: #{cvae_forward.8} parent=0 // pred_check
    _
  $region11: #{cvae_forward.8} parent=0 // pred_check_branch
    %15 = sbr.rel (0) target = $region13
  $region12: #{cvae_forward.8} parent=0 // pred_region
    _
  $region13: #{cvae_forward.8} parent=0 // pred_fallthru
    _
  // Predicated region
  $region14: #{cvae_forward.8} parent=0 // pred_check
    _
  $region15: #{cvae_forward.8} parent=0 // pred_check_branch
    %17 = sbr.rel (0) target = $region17
  $region16: #{cvae_forward.8} parent=0 // pred_region
    _
  $region17: #{cvae_forward.8} parent=0 // pred_fallthru
    _
  // Predicated region
  $region18: #{cvae_forward.8} parent=0 // pred_check
    _
  $region19: #{cvae_forward.8} parent=0 // pred_check_branch
    %19 = sbr.rel (0) target = $region21
  $region20: #{cvae_forward.8} parent=0 // pred_region
    _
  $region21: #{cvae_forward.8} parent=0 // pred_fallthru
    _
  %v21 = vld [vmem:[%s0] sm:$0xff]
  %v22 = vld [vmem:[%s0 + $0x8] sm:$0xff]
  %v23 = vld [vmem:[%s0 + $0x10] sm:$0xff]
  %v24 = vld [vmem:[%s0 + $0x18] sm:$0xff]
  %v25 = vld [vmem:[%s0 + $0x20] sm:$0xff]
  %v26 = vld [vmem:[%s0 + $0x28] sm:$0xff]
  %v27 = vld [vmem:[%s0 + $0x30] sm:$0xff]
  %v28 = vld [vmem:[%s0 + $0x38] sm:$0xff]
  %v29 = vld [vmem:[%s0 + $0x40] sm:$0xff]
  %v30 = vld [vmem:[%s0 + $0x48] sm:$0xff]
  %v31 = vld [vmem:[%s0 + $0x50] sm:$0xff]
  %v32 = vld [vmem:[%s0 + $0x58] sm:$0xff]
  %v33 = vld [vmem:[%s0 + $0x60] sm:$0xff]
  %v34 = vld [vmem:[%s0 + $0x68] sm:$0xff]
  %v35 = vld [vmem:[%s0 + $0x70] sm:$0xff]
  %v36 = vld [vmem:[%s0 + $0x78] sm:$0xff]
  %v37 = vld [vmem:[%s0 + $0x80] sm:$0xff]
  %v38 = vld [vmem:[%s0 + $0x88] sm:$0xff]
  %v39 = vld [vmem:[%s0 + $0x90] sm:$0xff]
  %v40 = vld [vmem:[%s0 + $0x98] sm:$0xff]
  %v41 = vld [vmem:[%s0 + $0xa0] sm:$0xff]
  %v42 = vld [vmem:[%s0 + $0xa8] sm:$0xff]
  %v43 = vld [vmem:[%s0 + $0xb0] sm:$0xff]
  %v44 = vld [vmem:[%s0 + $0xb8] sm:$0xff]
  %v45 = vld [vmem:[%s0 + $0xc0] sm:$0xff]
  %v46 = vld [vmem:[%s0 + $0xc8] sm:$0xff]
  %v47 = vld [vmem:[%s0 + $0xd0] sm:$0xff]
  %v48 = vld [vmem:[%s0 + $0xd8] sm:$0xff]
  %v49 = vld [vmem:[%s0 + $0xe0] sm:$0xff]
  %v50 = vld [vmem:[%s0 + $0xe8] sm:$0xff]
  %v51 = vld [vmem:[%s0 + $0xf0] sm:$0xff]
  %v52 = vld [vmem:[%s0 + $0xf8] sm:$0xff]
  %v53 = vld [vmem:[%s0 + $0x100] sm:$0xff]
  %v54 = vld [vmem:[%s0 + $0x108] sm:$0xff]
  %v55 = vld [vmem:[%s0 + $0x110] sm:$0xff]
  %v56 = vld [vmem:[%s0 + $0x118] sm:$0xff]
  %v57 = vld [vmem:[%s0 + $0x120] sm:$0xff]
  %v58 = vld [vmem:[%s0 + $0x128] sm:$0xff]
  %v59 = vld [vmem:[%s0 + $0x130] sm:$0xff]
  %v60 = vld [vmem:[%s0 + $0x138] sm:$0xff]
  %v61 = vld [vmem:[%s0 + $0x140] sm:$0xff]
  %v62 = vld [vmem:[%s0 + $0x148] sm:$0xff]
  %v63 = vld [vmem:[%s0 + $0x150] sm:$0xff]
  %v64 = vld [vmem:[%s0 + $0x158] sm:$0xff]
  %v65 = vld [vmem:[%s0 + $0x160] sm:$0xff]
  %v66 = vld [vmem:[%s0 + $0x168] sm:$0xff]
  %v67 = vld [vmem:[%s0 + $0x170] sm:$0xff]
  %v68 = vld [vmem:[%s0 + $0x178] sm:$0xff]
  %v69 = vld [vmem:[%s1] sm:$0xff]
  %v70 = vld [vmem:[%s1 + $0x8] sm:$0xff]
  %v71 = vld [vmem:[%s1 + $0x10] sm:$0xff]
  %v72 = vld [vmem:[%s1 + $0x18] sm:$0xff]
  %v73 = vld [vmem:[%s1 + $0x20] sm:$0xff]
  %v74 = vld [vmem:[%s1 + $0x28] sm:$0xff]
  %v75 = vld [vmem:[%s1 + $0x30] sm:$0xff]
  %v76 = vld [vmem:[%s1 + $0x38] sm:$0xff]
  %v77 = vld [vmem:[%s1 + $0x40] sm:$0xff]
  %v78 = vld [vmem:[%s1 + $0x48] sm:$0xff]
  %v79 = vld [vmem:[%s1 + $0x50] sm:$0xff]
  %v80 = vld [vmem:[%s1 + $0x58] sm:$0xff]
  %v81 = vld [vmem:[%s1 + $0x60] sm:$0xff]
  %v82 = vld [vmem:[%s1 + $0x68] sm:$0xff]
  %v83 = vld [vmem:[%s1 + $0x70] sm:$0xff]
  %v84 = vld [vmem:[%s1 + $0x78] sm:$0xff]
  %v85 = vld [vmem:[%s1 + $0x80] sm:$0xff]
  %v86 = vld [vmem:[%s1 + $0x88] sm:$0xff]
  %v87 = vld [vmem:[%s1 + $0x90] sm:$0xff]
  %v88 = vld [vmem:[%s1 + $0x98] sm:$0xff]
  %v89 = vld [vmem:[%s1 + $0xa0] sm:$0xff]
  %v90 = vld [vmem:[%s1 + $0xa8] sm:$0xff]
  %v91 = vld [vmem:[%s1 + $0xb0] sm:$0xff]
  %v92 = vld [vmem:[%s1 + $0xb8] sm:$0xff]
  %v93 = vld [vmem:[%s1 + $0xc0] sm:$0xff]
  %v94 = vld [vmem:[%s1 + $0xc8] sm:$0xff]
  %v95 = vld [vmem:[%s1 + $0xd0] sm:$0xff]
  %v96 = vld [vmem:[%s1 + $0xd8] sm:$0xff]
  %v97 = vld [vmem:[%s1 + $0xe0] sm:$0xff]
  %v98 = vld [vmem:[%s1 + $0xe8] sm:$0xff]
  %v99 = vld [vmem:[%s1 + $0xf0] sm:$0xff]
  %v100 = vld [vmem:[%s1 + $0xf8] sm:$0xff]
  %v101 = vld [vmem:[%s1 + $0x100] sm:$0xff]
  %v102 = vld [vmem:[%s1 + $0x108] sm:$0xff]
  %v103 = vld [vmem:[%s1 + $0x110] sm:$0xff]
  %v104 = vld [vmem:[%s1 + $0x118] sm:$0xff]
  %v105 = vpack.c.bf16 %v24, %v21
  %v106 = vpack.c.bf16 %v25, %v22
  %v107 = vpack.c.bf16 %v26, %v23
  %v108 = vpack.c.bf16 %v30, %v27
  %v109 = vpack.c.bf16 %v31, %v28
  %v110 = vpack.c.bf16 %v32, %v29
  %v111 = vpack.c.bf16 %v36, %v33
  %v112 = vpack.c.bf16 %v37, %v34
  %v113 = vpack.c.bf16 %v38, %v35
  %v114 = vpack.c.bf16 %v42, %v39
  %v115 = vpack.c.bf16 %v43, %v40
  %v116 = vpack.c.bf16 %v44, %v41
  %v117 = vpack.c.bf16 %v48, %v45
  %v118 = vpack.c.bf16 %v49, %v46
  %v119 = vpack.c.bf16 %v50, %v47
  %v120 = vpack.c.bf16 %v54, %v51
  %v121 = vpack.c.bf16 %v55, %v52
  %v122 = vpack.c.bf16 %v56, %v53
  %v123 = vpack.c.bf16 %v60, %v57
  %v124 = vpack.c.bf16 %v61, %v58
  %v125 = vpack.c.bf16 %v62, %v59
  %v126 = vpack.c.bf16 %v66, %v63
  %v127 = vpack.c.bf16 %v67, %v64
  %v128 = vpack.c.bf16 %v68, %v65
  %v129 = vpack.c.bf16 %v70, %v69
  %v130 = vpack.c.bf16 %v72, %v71
  %v131 = vpack.c.bf16 %v74, %v73
  %v132 = vpack.c.bf16 %v76, %v75
  %v133 = vpack.c.bf16 %v78, %v77
  %v134 = vpack.c.bf16 %v80, %v79
  %v135 = vpack.c.bf16 %v82, %v81
  %v136 = vpack.c.bf16 %v84, %v83
  %v137 = vpack.c.bf16 %v86, %v85
  %v138 = vpack.c.bf16 %v88, %v87
  %v139 = vpack.c.bf16 %v90, %v89
  %v140 = vpack.c.bf16 %v92, %v91
  %v141 = vpack.c.bf16 %v94, %v93
  %v142 = vpack.c.bf16 %v96, %v95
  %v143 = vpack.c.bf16 %v98, %v97
  %v144 = vpack.c.bf16 %v100, %v99
  %v145 = vpack.c.bf16 %v102, %v101
  %v146 = vpack.c.bf16 %v104, %v103
  %v147 = vld [vmem:[%s2] sm:$0x1]
  %v149 = vperm.slane %v147, 0
  %vm151 = vcmask 261120
  %v153 = vsel %vm151, %v107, 0
  %v156 = vsel %vm151, %v110, 0
  %v159 = vsel %vm151, %v113, 0
  %v162 = vsel %vm151, %v116, 0
  %v165 = vsel %vm151, %v119, 0
  %v168 = vsel %vm151, %v122, 0
  %v171 = vsel %vm151, %v125, 0
  %v174 = vsel %vm151, %v128, 0
  %176 = vmatpush.bf16.msra.mxu0 %v136
  %177 = vmatpush.bf16.msra.mxu0 %v135
  %178 = vmatpush.bf16.msra.mxu0 %v134
  %179 = vmatpush.bf16.msra.mxu0 %v133
  %180 = vmatpush.bf16.msra.mxu0 %v132
  %181 = vmatpush.bf16.msra.mxu0 %v131
  %182 = vmatpush.bf16.msra.mxu0 %v130
  %183 = vmatpush.bf16.msra.mxu0 %v129
  %184 = vmatmul.bf16.gmra.mxu0 %v105
  %v185 = vpop.f32.mrf.mxu0
  %v186 = vadd.f32 %v149, %v185
  %v187 = vpop.f32.mrf.mxu0
  %v188 = vadd.f32 %v149, %v187
  %189 = vmatmul.bf16.gmra.mxu0 %v108
  %v190 = vpop.f32.mrf.mxu0
  %v191 = vadd.f32 %v149, %v190
  %v192 = vpop.f32.mrf.mxu0
  %v193 = vadd.f32 %v149, %v192
  %194 = vmatmul.bf16.gmra.mxu0 %v111
  %v195 = vpop.f32.mrf.mxu0
  %v196 = vadd.f32 %v149, %v195
  %v197 = vpop.f32.mrf.mxu0
  %v198 = vadd.f32 %v149, %v197
  %199 = vmatmul.bf16.gmra.mxu0 %v114
  %v200 = vpop.f32.mrf.mxu0
  %v201 = vadd.f32 %v149, %v200
  %v202 = vpop.f32.mrf.mxu0
  %v203 = vadd.f32 %v149, %v202
  %204 = vmatmul.bf16.gmra.mxu0 %v117
  %v205 = vpop.f32.mrf.mxu0
  %v206 = vadd.f32 %v149, %v205
  %v207 = vpop.f32.mrf.mxu0
  %v208 = vadd.f32 %v149, %v207
  %209 = vmatmul.bf16.gmra.mxu0 %v120
  %v210 = vpop.f32.mrf.mxu0
  %v211 = vadd.f32 %v149, %v210
  %v212 = vpop.f32.mrf.mxu0
  %v213 = vadd.f32 %v149, %v212
  %214 = vmatmul.bf16.gmra.mxu0 %v123
  %v215 = vpop.f32.mrf.mxu0
  %v216 = vadd.f32 %v149, %v215
  %v217 = vpop.f32.mrf.mxu0
  %v218 = vadd.f32 %v149, %v217
  %219 = vmatmul.bf16.gmra.mxu0 %v126
  %v220 = vpop.f32.mrf.mxu0
  %v221 = vadd.f32 %v149, %v220
  %v222 = vpop.f32.mrf.mxu0
  %v223 = vadd.f32 %v149, %v222
  %224 = vdwg.mxu0
  %225 = vmatpush.bf16.msra.mxu0 %v144
  %226 = vmatpush.bf16.msra.mxu0 %v143
  %227 = vmatpush.bf16.msra.mxu0 %v142
  %228 = vmatpush.bf16.msra.mxu0 %v141
  %229 = vmatpush.bf16.msra.mxu0 %v140
  %230 = vmatpush.bf16.msra.mxu0 %v139
  %231 = vmatpush.bf16.msra.mxu0 %v138
  %232 = vmatpush.bf16.msra.mxu0 %v137
  %233 = vmatmul.bf16.gmra.mxu0 %v106
  %v234 = vpop.f32.mrf.mxu0
  %v235 = vadd.f32 %v186, %v234
  %v236 = vpop.f32.mrf.mxu0
  %v237 = vadd.f32 %v188, %v236
  %238 = vmatmul.bf16.gmra.mxu0 %v109
  %v239 = vpop.f32.mrf.mxu0
  %v240 = vadd.f32 %v191, %v239
  %v241 = vpop.f32.mrf.mxu0
  %v242 = vadd.f32 %v193, %v241
  %243 = vmatmul.bf16.gmra.mxu0 %v112
  %v244 = vpop.f32.mrf.mxu0
  %v245 = vadd.f32 %v196, %v244
  %v246 = vpop.f32.mrf.mxu0
  %v247 = vadd.f32 %v198, %v246
  %248 = vmatmul.bf16.gmra.mxu0 %v115
  %v249 = vpop.f32.mrf.mxu0
  %v250 = vadd.f32 %v201, %v249
  %v251 = vpop.f32.mrf.mxu0
  %v252 = vadd.f32 %v203, %v251
  %253 = vmatmul.bf16.gmra.mxu0 %v118
  %v254 = vpop.f32.mrf.mxu0
  %v255 = vadd.f32 %v206, %v254
  %v256 = vpop.f32.mrf.mxu0
  %v257 = vadd.f32 %v208, %v256
  %258 = vmatmul.bf16.gmra.mxu0 %v121
  %v259 = vpop.f32.mrf.mxu0
  %v260 = vadd.f32 %v211, %v259
  %v261 = vpop.f32.mrf.mxu0
  %v262 = vadd.f32 %v213, %v261
  %263 = vmatmul.bf16.gmra.mxu0 %v124
  %v264 = vpop.f32.mrf.mxu0
  %v265 = vadd.f32 %v216, %v264
  %v266 = vpop.f32.mrf.mxu0
  %v267 = vadd.f32 %v218, %v266
  %268 = vmatmul.bf16.gmra.mxu0 %v127
  %v269 = vpop.f32.mrf.mxu0
  %v270 = vadd.f32 %v221, %v269
  %v271 = vpop.f32.mrf.mxu0
  %v272 = vadd.f32 %v223, %v271
  %273 = vdwg.mxu0
  %274 = vmatpush.bf16.msra.mxu0 0
  %275 = vmatpush.bf16.msra.mxu0 0
  %276 = vmatpush.bf16.msra.mxu0 0
  %277 = vmatpush.bf16.msra.mxu0 0
  %278 = vmatpush.bf16.msra.mxu0 0
  %279 = vmatpush.bf16.msra.mxu0 0
  %280 = vmatpush.bf16.msra.mxu0 %v146
  %281 = vmatpush.bf16.msra.mxu0 %v145
  %282 = vmatmul.bf16.gmra.mxu0 %v153
  %v283 = vpop.f32.mrf.mxu0
  %v284 = vadd.f32 %v235, %v283
  %v285 = vpop.f32.mrf.mxu0
  %v286 = vadd.f32 %v237, %v285
  %287 = vmatmul.bf16.gmra.mxu0 %v156
  %v288 = vpop.f32.mrf.mxu0
  %v289 = vadd.f32 %v240, %v288
  %v290 = vpop.f32.mrf.mxu0
  %v291 = vadd.f32 %v242, %v290
  %292 = vmatmul.bf16.gmra.mxu0 %v159
  %v293 = vpop.f32.mrf.mxu0
  %v294 = vadd.f32 %v245, %v293
  %v295 = vpop.f32.mrf.mxu0
  %v296 = vadd.f32 %v247, %v295
  %297 = vmatmul.bf16.gmra.mxu0 %v162
  %v298 = vpop.f32.mrf.mxu0
  %v299 = vadd.f32 %v250, %v298
  %v300 = vpop.f32.mrf.mxu0
  %v301 = vadd.f32 %v252, %v300
  %302 = vmatmul.bf16.gmra.mxu0 %v165
  %v303 = vpop.f32.mrf.mxu0
  %v304 = vadd.f32 %v255, %v303
  %v305 = vpop.f32.mrf.mxu0
  %v306 = vadd.f32 %v257, %v305
  %307 = vmatmul.bf16.gmra.mxu0 %v168
  %v308 = vpop.f32.mrf.mxu0
  %v309 = vadd.f32 %v260, %v308
  %v310 = vpop.f32.mrf.mxu0
  %v311 = vadd.f32 %v262, %v310
  %312 = vmatmul.bf16.gmra.mxu0 %v171
  %v313 = vpop.f32.mrf.mxu0
  %v314 = vadd.f32 %v265, %v313
  %v315 = vpop.f32.mrf.mxu0
  %v316 = vadd.f32 %v267, %v315
  %317 = vmatmul.bf16.gmra.mxu0 %v174
  %v318 = vpop.f32.mrf.mxu0
  %v319 = vadd.f32 %v270, %v318
  %v320 = vpop.f32.mrf.mxu0
  %v321 = vadd.f32 %v272, %v320
  %322 = vdwg.mxu0
  %v323 = vld [vmem:[%s3] sm:$0x1]
  %v324 = vld [vmem:[%s4] sm:$0x1]
  %vm325 = vcmask 523264
  %v326 = vsel %vm325, %v284, 0.0
  %v327 = vsel %vm325, %v286, 0.0
  %v328 = vadd.f32 %v326, %v327
  %v329 = vsel %vm325, %v289, 0.0
  %v330 = vadd.f32 %v328, %v329
  %v331 = vsel %vm325, %v291, 0.0
  %v332 = vadd.f32 %v330, %v331
  %v333 = vsel %vm325, %v294, 0.0
  %v334 = vadd.f32 %v332, %v333
  %v335 = vsel %vm325, %v296, 0.0
  %v336 = vadd.f32 %v334, %v335
  %v337 = vsel %vm325, %v299, 0.0
  %v338 = vadd.f32 %v336, %v337
  %v339 = vsel %vm325, %v301, 0.0
  %v340 = vadd.f32 %v338, %v339
  %v341 = vsel %vm325, %v304, 0.0
  %v342 = vadd.f32 %v340, %v341
  %v343 = vsel %vm325, %v306, 0.0
  %v344 = vadd.f32 %v342, %v343
  %v345 = vsel %vm325, %v309, 0.0
  %v346 = vadd.f32 %v344, %v345
  %v347 = vsel %vm325, %v311, 0.0
  %v348 = vadd.f32 %v346, %v347
  %v349 = vsel %vm325, %v314, 0.0
  %v350 = vadd.f32 %v348, %v349
  %v351 = vsel %vm325, %v316, 0.0
  %v352 = vadd.f32 %v350, %v351
  %v353 = vsel %vm325, %v319, 0.0
  %v354 = vadd.f32 %v352, %v353
  %v355 = vsel %vm325, %v321, 0.0
  %v356 = vadd.f32 %v354, %v355
  %v357 = vrot.slane %v356, 4
  %v358 = vadd.f32 %v356, %v357
  %v359 = vrot.slane %v358, 2
  %v360 = vadd.f32 %v358, %v359
  %v361 = vrot.slane %v360, 1
  %v362 = vadd.f32 %v360, %v361
  %v363 = vrcp.pop 128.0
  %v364 = vmul.f32 128.0, %v363
  %v365 = vsub.f32 1.0, %v364
  %v366 = vmul.f32 %v363, %v365
  %v367 = vadd.f32 %v363, %v366
  %vm368 = vweird.f32 %v363
  %v369 = vsel %vm368, %v363, %v367
  %v370 = vmul.f32 %v362, %v369
  %v371 = vmul.f32 %v284, %v284
  %v372 = vmul.f32 %v286, %v286
  %v373 = vmul.f32 %v289, %v289
  %v374 = vmul.f32 %v291, %v291
  %v375 = vmul.f32 %v294, %v294
  %v376 = vmul.f32 %v296, %v296
  %v377 = vmul.f32 %v299, %v299
  %v378 = vmul.f32 %v301, %v301
  %v379 = vmul.f32 %v304, %v304
  %v380 = vmul.f32 %v306, %v306
  %v381 = vmul.f32 %v309, %v309
  %v382 = vmul.f32 %v311, %v311
  %v383 = vmul.f32 %v314, %v314
  %v384 = vmul.f32 %v316, %v316
  %v385 = vmul.f32 %v319, %v319
  %v386 = vmul.f32 %v321, %v321
  %v387 = vsel %vm325, %v371, 0.0
  %v388 = vsel %vm325, %v372, 0.0
  %v389 = vadd.f32 %v387, %v388
  %v390 = vsel %vm325, %v373, 0.0
  %v391 = vadd.f32 %v389, %v390
  %v392 = vsel %vm325, %v374, 0.0
  %v393 = vadd.f32 %v391, %v392
  %v394 = vsel %vm325, %v375, 0.0
  %v395 = vadd.f32 %v393, %v394
  %v396 = vsel %vm325, %v376, 0.0
  %v397 = vadd.f32 %v395, %v396
  %v398 = vsel %vm325, %v377, 0.0
  %v399 = vadd.f32 %v397, %v398
  %v400 = vsel %vm325, %v378, 0.0
  %v401 = vadd.f32 %v399, %v400
  %v402 = vsel %vm325, %v379, 0.0
  %v403 = vadd.f32 %v401, %v402
  %v404 = vsel %vm325, %v380, 0.0
  %v405 = vadd.f32 %v403, %v404
  %v406 = vsel %vm325, %v381, 0.0
  %v407 = vadd.f32 %v405, %v406
  %v408 = vsel %vm325, %v382, 0.0
  %v409 = vadd.f32 %v407, %v408
  %v410 = vsel %vm325, %v383, 0.0
  %v411 = vadd.f32 %v409, %v410
  %v412 = vsel %vm325, %v384, 0.0
  %v413 = vadd.f32 %v411, %v412
  %v414 = vsel %vm325, %v385, 0.0
  %v415 = vadd.f32 %v413, %v414
  %v416 = vsel %vm325, %v386, 0.0
  %v417 = vadd.f32 %v415, %v416
  %v418 = vrot.slane %v417, 4
  %v419 = vadd.f32 %v417, %v418
  %v420 = vrot.slane %v419, 2
  %v421 = vadd.f32 %v419, %v420
  %v422 = vrot.slane %v421, 1
  %v423 = vadd.f32 %v421, %v422
  %v424 = vmul.f32 %v423, %v369
  %v425 = vmul.f32 %v370, %v370
  %v426 = vsub.f32 %v424, %v425
  %v427 = vadd.f32 %v426, 1e-05
  %v428 = vrsqrt.pop %v427
  %v429 = vmul.f32 %v428, %v427
  %v430 = vmul.f32 %v429, %v428
  %v431 = vmul.f32 0.5, %v430
  %v432 = vsub.f32 1.5, %v431
  %v433 = vmul.f32 %v428, %v432
  %vm434 = vweird.f32 %v427
  %vm435 = vweird.f32 %v428
  %vm436 = vmor %vm434, %vm435
  %v437 = vsel %vm436, %v428, %v433
  %v438 = vmul.f32 %v323, %v437
  %v440 = vperm.slane %v438, 0
  %v442 = vmul.f32 %v284, %v440
  %v443 = vmul.f32 %v286, %v440
  %v444 = vmul.f32 %v289, %v440
  %v445 = vmul.f32 %v291, %v440
  %v446 = vmul.f32 %v294, %v440
  %v447 = vmul.f32 %v296, %v440
  %v448 = vmul.f32 %v299, %v440
  %v449 = vmul.f32 %v301, %v440
  %v450 = vmul.f32 %v304, %v440
  %v451 = vmul.f32 %v306, %v440
  %v452 = vmul.f32 %v309, %v440
  %v453 = vmul.f32 %v311, %v440
  %v454 = vmul.f32 %v314, %v440
  %v455 = vmul.f32 %v316, %v440
  %v456 = vmul.f32 %v319, %v440
  %v457 = vmul.f32 %v321, %v440
  %v458 = vmul.f32 %v370, %v438
  %v459 = vsub.f32 %v324, %v458
  %v461 = vperm.slane %v459, 0
  %v463 = vadd.f32 %v442, %v461
  %v464 = vadd.f32 %v443, %v461
  %v465 = vadd.f32 %v444, %v461
  %v466 = vadd.f32 %v445, %v461
  %v467 = vadd.f32 %v446, %v461
  %v468 = vadd.f32 %v447, %v461
  %v469 = vadd.f32 %v448, %v461
  %v470 = vadd.f32 %v449, %v461
  %v471 = vadd.f32 %v450, %v461
  %v472 = vadd.f32 %v451, %v461
  %v473 = vadd.f32 %v452, %v461
  %v474 = vadd.f32 %v453, %v461
  %v475 = vadd.f32 %v454, %v461
  %v476 = vadd.f32 %v455, %v461
  %v477 = vadd.f32 %v456, %v461
  %v478 = vadd.f32 %v457, %v461
  %v479 = vmax.f32 %v463, 0.0
  %v480 = vmax.f32 %v464, 0.0
  %v481 = vmax.f32 %v465, 0.0
  %v482 = vmax.f32 %v466, 0.0
  %v483 = vmax.f32 %v467, 0.0
  %v484 = vmax.f32 %v468, 0.0
  %v485 = vmax.f32 %v469, 0.0
  %v486 = vmax.f32 %v470, 0.0
  %v487 = vmax.f32 %v471, 0.0
  %v488 = vmax.f32 %v472, 0.0
  %v489 = vmax.f32 %v473, 0.0
  %v490 = vmax.f32 %v474, 0.0
  %v491 = vmax.f32 %v475, 0.0
  %v492 = vmax.f32 %v476, 0.0
  %v493 = vmax.f32 %v477, 0.0
  %v494 = vmax.f32 %v478, 0.0
  %495 = vst.msk [vmem:[%s5] sm:$0xff] %vm325, %v479
  %496 = vst.msk [vmem:[%s5 + $0x8] sm:$0xff] %vm325, %v480
  %497 = vst.msk [vmem:[%s5 + $0x10] sm:$0xff] %vm325, %v481
  %498 = vst.msk [vmem:[%s5 + $0x18] sm:$0xff] %vm325, %v482
  %499 = vst.msk [vmem:[%s5 + $0x20] sm:$0xff] %vm325, %v483
  %500 = vst.msk [vmem:[%s5 + $0x28] sm:$0xff] %vm325, %v484
  %501 = vst.msk [vmem:[%s5 + $0x30] sm:$0xff] %vm325, %v485
  %502 = vst.msk [vmem:[%s5 + $0x38] sm:$0xff] %vm325, %v486
  %503 = vst.msk [vmem:[%s5 + $0x40] sm:$0xff] %vm325, %v487
  %504 = vst.msk [vmem:[%s5 + $0x48] sm:$0xff] %vm325, %v488
  %505 = vst.msk [vmem:[%s5 + $0x50] sm:$0xff] %vm325, %v489
  %506 = vst.msk [vmem:[%s5 + $0x58] sm:$0xff] %vm325, %v490
  %507 = vst.msk [vmem:[%s5 + $0x60] sm:$0xff] %vm325, %v491
  %508 = vst.msk [vmem:[%s5 + $0x68] sm:$0xff] %vm325, %v492
  %509 = vst.msk [vmem:[%s5 + $0x70] sm:$0xff] %vm325, %v493
  %510 = vst.msk [vmem:[%s5 + $0x78] sm:$0xff] %vm325, %v494
  // Predicated region
  $region22: #{cvae_forward.8} parent=0 // pred_check
    _
  $region23: #{cvae_forward.8} parent=0 // pred_check_branch
    %512 = sbr.rel (0) target = $region25
  $region24: #{cvae_forward.8} parent=0 // pred_region
    _
  $region25: #{cvae_forward.8} parent=0 // pred_fallthru
    _
  // Predicated region
  $region26: #{cvae_forward.8} parent=0 // pred_check
    _
  $region27: #{cvae_forward.8} parent=0 // pred_check_branch
    %514 = sbr.rel (0) target = $region29
  $region28: #{cvae_forward.8} parent=0 // pred_region
    _
  $region29: #{cvae_forward.8} parent=0 // pred_fallthru
    _

// kernel: cvae_forward.9
$region0: #{cvae_forward.9}
  #allocation0 [shape = 'u32[]', space=smem, size = 0x4, offset = 0x4, fixed_abs, tag = 'smem constant byte address 0x4 - core index']
  #allocation1 [shape = 'u32[72,128]{1,0:T(1,128)}', space=vmem, size = 0x9000, scoped, tag = 'internal scratch']
  %s0 = inlined_call_operand.vmem [shape: f32[72,576], index: 0, kind: input, shape index: {}]
  %s1 = inlined_call_operand.vmem [shape: f32[576,64], index: 1, kind: input, shape index: {}]
  %s2 = inlined_call_operand.vmem [shape: f32[1,64], index: 2, kind: input, shape index: {}]
  %s3 = inlined_call_operand.vmem [shape: f32[1,64], index: 3, kind: input, shape index: {}]
  %s4 = inlined_call_operand.vmem [shape: f32[1,64], index: 4, kind: input, shape index: {}]
  %s5 = inlined_call_operand.vmem [shape: f32[72,64], index: 5, kind: output, shape index: {}]
  %s6 = sld [smem:[#allocation0]]
  $region30: #{cvae_forward.9} parent=0
    _
  %s8 = ssub.s32 1, %s6
  %s9 = scalar_select 0, %s8, %s6
  // Predicated region
  $region2: #{cvae_forward.9} parent=0 // pred_check
    _
  $region3: #{cvae_forward.9} parent=0 // pred_check_branch
    %11 = sbr.rel (0) target = $region5
  $region4: #{cvae_forward.9} parent=0 // pred_region
    _
  $region5: #{cvae_forward.9} parent=0 // pred_fallthru
    _
  // Predicated region
  $region6: #{cvae_forward.9} parent=0 // pred_check
    _
  $region7: #{cvae_forward.9} parent=0 // pred_check_branch
    %13 = sbr.rel (0) target = $region9
  $region8: #{cvae_forward.9} parent=0 // pred_region
    _
  $region9: #{cvae_forward.9} parent=0 // pred_fallthru
    _
  // Predicated region
  $region10: #{cvae_forward.9} parent=0 // pred_check
    _
  $region11: #{cvae_forward.9} parent=0 // pred_check_branch
    %15 = sbr.rel (0) target = $region13
  $region12: #{cvae_forward.9} parent=0 // pred_region
    _
  $region13: #{cvae_forward.9} parent=0 // pred_fallthru
    _
  // Predicated region
  $region14: #{cvae_forward.9} parent=0 // pred_check
    _
  $region15: #{cvae_forward.9} parent=0 // pred_check_branch
    %17 = sbr.rel (0) target = $region17
  $region16: #{cvae_forward.9} parent=0 // pred_region
    _
  $region17: #{cvae_forward.9} parent=0 // pred_fallthru
    _
  // Predicated region
  $region18: #{cvae_forward.9} parent=0 // pred_check
    _
  $region19: #{cvae_forward.9} parent=0 // pred_check_branch
    %19 = sbr.rel (0) target = $region21
  $region20: #{cvae_forward.9} parent=0 // pred_region
    _
  $region21: #{cvae_forward.9} parent=0 // pred_fallthru
    _
  %v21 = vld [vmem:[%s0] sm:$0xff]
  %v22 = vld [vmem:[%s0 + $0x8] sm:$0xff]
  %v23 = vld [vmem:[%s0 + $0x10] sm:$0xff]
  %v24 = vld [vmem:[%s0 + $0x18] sm:$0xff]
  %v25 = vld [vmem:[%s0 + $0x20] sm:$0xff]
  %v26 = vld [vmem:[%s0 + $0x28] sm:$0xff]
  %v27 = vld [vmem:[%s0 + $0x30] sm:$0xff]
  %v28 = vld [vmem:[%s0 + $0x38] sm:$0xff]
  %v29 = vld [vmem:[%s0 + $0x40] sm:$0xff]
  %v30 = vld [vmem:[%s0 + $0x48] sm:$0xff]
  %v31 = vld [vmem:[%s0 + $0x50] sm:$0xff]
  %v32 = vld [vmem:[%s0 + $0x58] sm:$0xff]
  %v33 = vld [vmem:[%s0 + $0x60] sm:$0xff]
  %v34 = vld [vmem:[%s0 + $0x68] sm:$0xff]
  %v35 = vld [vmem:[%s0 + $0x70] sm:$0xff]
  %v36 = vld [vmem:[%s0 + $0x78] sm:$0xff]
  %v37 = vld [vmem:[%s0 + $0x80] sm:$0xff]
  %v38 = vld [vmem:[%s0 + $0x88] sm:$0xff]
  %v39 = vld [vmem:[%s0 + $0x90] sm:$0xff]
  %v40 = vld [vmem:[%s0 + $0x98] sm:$0xff]
  %v41 = vld [vmem:[%s0 + $0xa0] sm:$0xff]
  %v42 = vld [vmem:[%s0 + $0xa8] sm:$0xff]
  %v43 = vld [vmem:[%s0 + $0xb0] sm:$0xff]
  %v44 = vld [vmem:[%s0 + $0xb8] sm:$0xff]
  %v45 = vld [vmem:[%s0 + $0xc0] sm:$0xff]
  %v46 = vld [vmem:[%s0 + $0xc8] sm:$0xff]
  %v47 = vld [vmem:[%s0 + $0xd0] sm:$0xff]
  %v48 = vld [vmem:[%s0 + $0xd8] sm:$0xff]
  %v49 = vld [vmem:[%s0 + $0xe0] sm:$0xff]
  %v50 = vld [vmem:[%s0 + $0xe8] sm:$0xff]
  %v51 = vld [vmem:[%s0 + $0xf0] sm:$0xff]
  %v52 = vld [vmem:[%s0 + $0xf8] sm:$0xff]
  %v53 = vld [vmem:[%s0 + $0x100] sm:$0xff]
  %v54 = vld [vmem:[%s0 + $0x108] sm:$0xff]
  %v55 = vld [vmem:[%s0 + $0x110] sm:$0xff]
  %v56 = vld [vmem:[%s0 + $0x118] sm:$0xff]
  %v57 = vld [vmem:[%s0 + $0x120] sm:$0xff]
  %v58 = vld [vmem:[%s0 + $0x128] sm:$0xff]
  %v59 = vld [vmem:[%s0 + $0x130] sm:$0xff]
  %v60 = vld [vmem:[%s0 + $0x138] sm:$0xff]
  %v61 = vld [vmem:[%s0 + $0x140] sm:$0xff]
  %v62 = vld [vmem:[%s0 + $0x148] sm:$0xff]
  %v63 = vld [vmem:[%s0 + $0x150] sm:$0xff]
  %v64 = vld [vmem:[%s0 + $0x158] sm:$0xff]
  %v65 = vld [vmem:[%s0 + $0x160] sm:$0xff]
  %v66 = vld [vmem:[%s1] sm:$0xff]
  %v67 = vld [vmem:[%s1 + $0x8] sm:$0xff]
  %v68 = vld [vmem:[%s1 + $0x10] sm:$0xff]
  %v69 = vld [vmem:[%s1 + $0x18] sm:$0xff]
  %v70 = vld [vmem:[%s1 + $0x20] sm:$0xff]
  %v71 = vld [vmem:[%s1 + $0x28] sm:$0xff]
  %v72 = vld [vmem:[%s1 + $0x30] sm:$0xff]
  %v73 = vld [vmem:[%s1 + $0x38] sm:$0xff]
  %v74 = vld [vmem:[%s1 + $0x40] sm:$0xff]
  %v75 = vld [vmem:[%s1 + $0x48] sm:$0xff]
  %v76 = vld [vmem:[%s1 + $0x50] sm:$0xff]
  %v77 = vld [vmem:[%s1 + $0x58] sm:$0xff]
  %v78 = vld [vmem:[%s1 + $0x60] sm:$0xff]
  %v79 = vld [vmem:[%s1 + $0x68] sm:$0xff]
  %v80 = vld [vmem:[%s1 + $0x70] sm:$0xff]
  %v81 = vld [vmem:[%s1 + $0x78] sm:$0xff]
  %v82 = vld [vmem:[%s1 + $0x80] sm:$0xff]
  %v83 = vld [vmem:[%s1 + $0x88] sm:$0xff]
  %v84 = vld [vmem:[%s1 + $0x90] sm:$0xff]
  %v85 = vld [vmem:[%s1 + $0x98] sm:$0xff]
  %v86 = vld [vmem:[%s1 + $0xa0] sm:$0xff]
  %v87 = vld [vmem:[%s1 + $0xa8] sm:$0xff]
  %v88 = vld [vmem:[%s1 + $0xb0] sm:$0xff]
  %v89 = vld [vmem:[%s1 + $0xb8] sm:$0xff]
  %v90 = vld [vmem:[%s1 + $0xc0] sm:$0xff]
  %v91 = vld [vmem:[%s1 + $0xc8] sm:$0xff]
  %v92 = vld [vmem:[%s1 + $0xd0] sm:$0xff]
  %v93 = vld [vmem:[%s1 + $0xd8] sm:$0xff]
  %v94 = vld [vmem:[%s1 + $0xe0] sm:$0xff]
  %v95 = vld [vmem:[%s1 + $0xe8] sm:$0xff]
  %v96 = vld [vmem:[%s1 + $0xf0] sm:$0xff]
  %v97 = vld [vmem:[%s1 + $0xf8] sm:$0xff]
  %v98 = vld [vmem:[%s1 + $0x100] sm:$0xff]
  %v99 = vld [vmem:[%s1 + $0x108] sm:$0xff]
  %v100 = vld [vmem:[%s1 + $0x110] sm:$0xff]
  %v101 = vld [vmem:[%s1 + $0x118] sm:$0xff]
  %v102 = vld [vmem:[%s1 + $0x120] sm:$0xff]
  %v103 = vld [vmem:[%s1 + $0x128] sm:$0xff]
  %v104 = vld [vmem:[%s1 + $0x130] sm:$0xff]
  %v105 = vld [vmem:[%s1 + $0x138] sm:$0xff]
  %v106 = vld [vmem:[%s1 + $0x140] sm:$0xff]
  %v107 = vld [vmem:[%s1 + $0x148] sm:$0xff]
  %v108 = vld [vmem:[%s1 + $0x150] sm:$0xff]
  %v109 = vld [vmem:[%s1 + $0x158] sm:$0xff]
  %v110 = vld [vmem:[%s1 + $0x160] sm:$0xff]
  %v111 = vld [vmem:[%s1 + $0x168] sm:$0xff]
  %v112 = vld [vmem:[%s1 + $0x170] sm:$0xff]
  %v113 = vld [vmem:[%s1 + $0x178] sm:$0xff]
  %v114 = vld [vmem:[%s1 + $0x180] sm:$0xff]
  %v115 = vld [vmem:[%s1 + $0x188] sm:$0xff]
  %v116 = vld [vmem:[%s1 + $0x190] sm:$0xff]
  %v117 = vld [vmem:[%s1 + $0x198] sm:$0xff]
  %v118 = vld [vmem:[%s1 + $0x1a0] sm:$0xff]
  %v119 = vld [vmem:[%s1 + $0x1a8] sm:$0xff]
  %v120 = vld [vmem:[%s1 + $0x1b0] sm:$0xff]
  %v121 = vld [vmem:[%s1 + $0x1b8] sm:$0xff]
  %v122 = vld [vmem:[%s1 + $0x1c0] sm:$0xff]
  %v123 = vld [vmem:[%s1 + $0x1c8] sm:$0xff]
  %v124 = vld [vmem:[%s1 + $0x1d0] sm:$0xff]
  %v125 = vld [vmem:[%s1 + $0x1d8] sm:$0xff]
  %v126 = vld [vmem:[%s1 + $0x1e0] sm:$0xff]
  %v127 = vld [vmem:[%s1 + $0x1e8] sm:$0xff]
  %v128 = vld [vmem:[%s1 + $0x1f0] sm:$0xff]
  %v129 = vld [vmem:[%s1 + $0x1f8] sm:$0xff]
  %v130 = vld [vmem:[%s1 + $0x200] sm:$0xff]
  %v131 = vld [vmem:[%s1 + $0x208] sm:$0xff]
  %v132 = vld [vmem:[%s1 + $0x210] sm:$0xff]
  %v133 = vld [vmem:[%s1 + $0x218] sm:$0xff]
  %v134 = vld [vmem:[%s1 + $0x220] sm:$0xff]
  %v135 = vld [vmem:[%s1 + $0x228] sm:$0xff]
  %v136 = vld [vmem:[%s1 + $0x230] sm:$0xff]
  %v137 = vld [vmem:[%s1 + $0x238] sm:$0xff]
  %v138 = vpack.c.bf16 %v26, %v21
  %v139 = vpack.c.bf16 %v27, %v22
  %v140 = vpack.c.bf16 %v28, %v23
  %v141 = vpack.c.bf16 %v29, %v24
  %v142 = vpack.c.bf16 %v30, %v25
  %v143 = vpack.c.bf16 %v36, %v31
  %v144 = vpack.c.bf16 %v37, %v32
  %v145 = vpack.c.bf16 %v38, %v33
  %v146 = vpack.c.bf16 %v39, %v34
  %v147 = vpack.c.bf16 %v40, %v35
  %v148 = vpack.c.bf16 %v46, %v41
  %v149 = vpack.c.bf16 %v47, %v42
  %v150 = vpack.c.bf16 %v48, %v43
  %v151 = vpack.c.bf16 %v49, %v44
  %v152 = vpack.c.bf16 %v50, %v45
  %v153 = vpack.c.bf16 %v56, %v51
  %v154 = vpack.c.bf16 %v57, %v52
  %v155 = vpack.c.bf16 %v58, %v53
  %v156 = vpack.c.bf16 %v59, %v54
  %v157 = vpack.c.bf16 %v60, %v55
  %v158 = vpack.c.bf16 %v61, %v61
  %v159 = vpack.c.bf16 %v62, %v62
  %v160 = vpack.c.bf16 %v63, %v63
  %v161 = vpack.c.bf16 %v64, %v64
  %v162 = vpack.c.bf16 %v65, %v65
  %v163 = vpack.c.bf16 %v67, %v66
  %v164 = vpack.c.bf16 %v69, %v68
  %v165 = vpack.c.bf16 %v71, %v70
  %v166 = vpack.c.bf16 %v73, %v72
  %v167 = vpack.c.bf16 %v75, %v74
  %v168 = vpack.c.bf16 %v77, %v76
  %v169 = vpack.c.bf16 %v79, %v78
  %v170 = vpack.c.bf16 %v81, %v80
  %v171 = vpack.c.bf16 %v83, %v82
  %v172 = vpack.c.bf16 %v85, %v84
  %v173 = vpack.c.bf16 %v87, %v86
  %v174 = vpack.c.bf16 %v89, %v88
  %v175 = vpack.c.bf16 %v91, %v90
  %v176 = vpack.c.bf16 %v93, %v92
  %v177 = vpack.c.bf16 %v95, %v94
  %v178 = vpack.c.bf16 %v97, %v96
  %v179 = vpack.c.bf16 %v99, %v98
  %v180 = vpack.c.bf16 %v101, %v100
  %v181 = vpack.c.bf16 %v103, %v102
  %v182 = vpack.c.bf16 %v105, %v104
  %v183 = vpack.c.bf16 %v107, %v106
  %v184 = vpack.c.bf16 %v109, %v108
  %v185 = vpack.c.bf16 %v111, %v110
  %v186 = vpack.c.bf16 %v113, %v112
  %v187 = vpack.c.bf16 %v115, %v114
  %v188 = vpack.c.bf16 %v117, %v116
  %v189 = vpack.c.bf16 %v119, %v118
  %v190 = vpack.c.bf16 %v121, %v120
  %v191 = vpack.c.bf16 %v123, %v122
  %v192 = vpack.c.bf16 %v125, %v124
  %v193 = vpack.c.bf16 %v127, %v126
  %v194 = vpack.c.bf16 %v129, %v128
  %v195 = vpack.c.bf16 %v131, %v130
  %v196 = vpack.c.bf16 %v133, %v132
  %v197 = vpack.c.bf16 %v135, %v134
  %v198 = vpack.c.bf16 %v137, %v136
  %v199 = vld [vmem:[%s2] sm:$0x1]
  %v201 = vperm.slane %v199, 0
  %vm203 = vcmask 523264
  %v205 = vsel %vm203, %v142, 0
  %v208 = vsel %vm203, %v147, 0
  %v211 = vsel %vm203, %v152, 0
  %v214 = vsel %vm203, %v157, 0
  %v217 = vsel %vm203, %v162, 0
  %219 = vmatpush.bf16.msra.mxu0 %v170
  %220 = vmatpush.bf16.msra.mxu0 %v169
  %221 = vmatpush.bf16.msra.mxu0 %v168
  %222 = vmatpush.bf16.msra.mxu0 %v167
  %223 = vmatpush.bf16.msra.mxu0 %v166
  %224 = vmatpush.bf16.msra.mxu0 %v165
  %225 = vmatpush.bf16.msra.mxu0 %v164
  %226 = vmatpush.bf16.msra.mxu0 %v163
  %227 = vmatmul.bf16.gmra.mxu0 %v138
  %v228 = vpop.f32.mrf.mxu0
  %v229 = vadd.f32 %v201, %v228
  %v230 = vpop.f32.mrf.mxu0
  %v231 = vadd.f32 %v201, %v230
  %232 = vmatmul.bf16.gmra.mxu0 %v143
  %v233 = vpop.f32.mrf.mxu0
  %v234 = vadd.f32 %v201, %v233
  %v235 = vpop.f32.mrf.mxu0
  %v236 = vadd.f32 %v201, %v235
  %237 = vmatmul.bf16.gmra.mxu0 %v148
  %v238 = vpop.f32.mrf.mxu0
  %v239 = vadd.f32 %v201, %v238
  %v240 = vpop.f32.mrf.mxu0
  %v241 = vadd.f32 %v201, %v240
  %242 = vmatmul.bf16.gmra.mxu0 %v153
  %v243 = vpop.f32.mrf.mxu0
  %v244 = vadd.f32 %v201, %v243
  %v245 = vpop.f32.mrf.mxu0
  %v246 = vadd.f32 %v201, %v245
  %247 = vmatmul.bf16.gmra.mxu0 %v158
  %v248 = vpop.f32.mrf.mxu0
  %v249 = vadd.f32 %v201, %v248
  %v250 = vpop.f32.mrf.mxu0
  %251 = vdwg.mxu0
  %252 = vmatpush.bf16.msra.mxu0 %v178
  %253 = vmatpush.bf16.msra.mxu0 %v177
  %254 = vmatpush.bf16.msra.mxu0 %v176
  %255 = vmatpush.bf16.msra.mxu0 %v175
  %256 = vmatpush.bf16.msra.mxu0 %v174
  %257 = vmatpush.bf16.msra.mxu0 %v173
  %258 = vmatpush.bf16.msra.mxu0 %v172
  %259 = vmatpush.bf16.msra.mxu0 %v171
  %260 = vmatmul.bf16.gmra.mxu0 %v139
  %v261 = vpop.f32.mrf.mxu0
  %v262 = vadd.f32 %v229, %v261
  %v263 = vpop.f32.mrf.mxu0
  %v264 = vadd.f32 %v231, %v263
  %265 = vmatmul.bf16.gmra.mxu0 %v144
  %v266 = vpop.f32.mrf.mxu0
  %v267 = vadd.f32 %v234, %v266
  %v268 = vpop.f32.mrf.mxu0
  %v269 = vadd.f32 %v236, %v268
  %270 = vmatmul.bf16.gmra.mxu0 %v149
  %v271 = vpop.f32.mrf.mxu0
  %v272 = vadd.f32 %v239, %v271
  %v273 = vpop.f32.mrf.mxu0
  %v274 = vadd.f32 %v241, %v273
  %275 = vmatmul.bf16.gmra.mxu0 %v154
  %v276 = vpop.f32.mrf.mxu0
  %v277 = vadd.f32 %v244, %v276
  %v278 = vpop.f32.mrf.mxu0
  %v279 = vadd.f32 %v246, %v278
  %280 = vmatmul.bf16.gmra.mxu0 %v159
  %v281 = vpop.f32.mrf.mxu0
  %v282 = vadd.f32 %v249, %v281
  %v283 = vpop.f32.mrf.mxu0
  %284 = vdwg.mxu0
  %285 = vmatpush.bf16.msra.mxu0 %v186
  %286 = vmatpush.bf16.msra.mxu0 %v185
  %287 = vmatpush.bf16.msra.mxu0 %v184
  %288 = vmatpush.bf16.msra.mxu0 %v183
  %289 = vmatpush.bf16.msra.mxu0 %v182
  %290 = vmatpush.bf16.msra.mxu0 %v181
  %291 = vmatpush.bf16.msra.mxu0 %v180
  %292 = vmatpush.bf16.msra.mxu0 %v179
  %293 = vmatmul.bf16.gmra.mxu0 %v140
  %v294 = vpop.f32.mrf.mxu0
  %v295 = vadd.f32 %v262, %v294
  %v296 = vpop.f32.mrf.mxu0
  %v297 = vadd.f32 %v264, %v296
  %298 = vmatmul.bf16.gmra.mxu0 %v145
  %v299 = vpop.f32.mrf.mxu0
  %v300 = vadd.f32 %v267, %v299
  %v301 = vpop.f32.mrf.mxu0
  %v302 = vadd.f32 %v269, %v301
  %303 = vmatmul.bf16.gmra.mxu0 %v150
  %v304 = vpop.f32.mrf.mxu0
  %v305 = vadd.f32 %v272, %v304
  %v306 = vpop.f32.mrf.mxu0
  %v307 = vadd.f32 %v274, %v306
  %308 = vmatmul.bf16.gmra.mxu0 %v155
  %v309 = vpop.f32.mrf.mxu0
  %v310 = vadd.f32 %v277, %v309
  %v311 = vpop.f32.mrf.mxu0
  %v312 = vadd.f32 %v279, %v311
  %313 = vmatmul.bf16.gmra.mxu0 %v160
  %v314 = vpop.f32.mrf.mxu0
  %v315 = vadd.f32 %v282, %v314
  %v316 = vpop.f32.mrf.mxu0
  %317 = vdwg.mxu0
  %318 = vmatpush.bf16.msra.mxu0 %v194
  %319 = vmatpush.bf16.msra.mxu0 %v193
  %320 = vmatpush.bf16.msra.mxu0 %v192
  %321 = vmatpush.bf16.msra.mxu0 %v191
  %322 = vmatpush.bf16.msra.mxu0 %v190
  %323 = vmatpush.bf16.msra.mxu0 %v189
  %324 = vmatpush.bf16.msra.mxu0 %v188
  %325 = vmatpush.bf16.msra.mxu0 %v187
  %326 = vmatmul.bf16.gmra.mxu0 %v141
  %v327 = vpop.f32.mrf.mxu0
  %v328 = vadd.f32 %v295, %v327
  %v329 = vpop.f32.mrf.mxu0
  %v330 = vadd.f32 %v297, %v329
  %331 = vmatmul.bf16.gmra.mxu0 %v146
  %v332 = vpop.f32.mrf.mxu0
  %v333 = vadd.f32 %v300, %v332
  %v334 = vpop.f32.mrf.mxu0
  %v335 = vadd.f32 %v302, %v334
  %336 = vmatmul.bf16.gmra.mxu0 %v151
  %v337 = vpop.f32.mrf.mxu0
  %v338 = vadd.f32 %v305, %v337
  %v339 = vpop.f32.mrf.mxu0
  %v340 = vadd.f32 %v307, %v339
  %341 = vmatmul.bf16.gmra.mxu0 %v156
  %v342 = vpop.f32.mrf.mxu0
  %v343 = vadd.f32 %v310, %v342
  %v344 = vpop.f32.mrf.mxu0
  %v345 = vadd.f32 %v312, %v344
  %346 = vmatmul.bf16.gmra.mxu0 %v161
  %v347 = vpop.f32.mrf.mxu0
  %v348 = vadd.f32 %v315, %v347
  %v349 = vpop.f32.mrf.mxu0
  %350 = vdwg.mxu0
  %351 = vmatpush.bf16.msra.mxu0 0
  %352 = vmatpush.bf16.msra.mxu0 0
  %353 = vmatpush.bf16.msra.mxu0 0
  %354 = vmatpush.bf16.msra.mxu0 0
  %355 = vmatpush.bf16.msra.mxu0 %v198
  %356 = vmatpush.bf16.msra.mxu0 %v197
  %357 = vmatpush.bf16.msra.mxu0 %v196
  %358 = vmatpush.bf16.msra.mxu0 %v195
  %359 = vmatmul.bf16.gmra.mxu0 %v205
  %v360 = vpop.f32.mrf.mxu0
  %v361 = vadd.f32 %v328, %v360
  %v362 = vpop.f32.mrf.mxu0
  %v363 = vadd.f32 %v330, %v362
  %364 = vmatmul.bf16.gmra.mxu0 %v208
  %v365 = vpop.f32.mrf.mxu0
  %v366 = vadd.f32 %v333, %v365
  %v367 = vpop.f32.mrf.mxu0
  %v368 = vadd.f32 %v335, %v367
  %369 = vmatmul.bf16.gmra.mxu0 %v211
  %v370 = vpop.f32.mrf.mxu0
  %v371 = vadd.f32 %v338, %v370
  %v372 = vpop.f32.mrf.mxu0
  %v373 = vadd.f32 %v340, %v372
  %374 = vmatmul.bf16.gmra.mxu0 %v214
  %v375 = vpop.f32.mrf.mxu0
  %v376 = vadd.f32 %v343, %v375
  %v377 = vpop.f32.mrf.mxu0
  %v378 = vadd.f32 %v345, %v377
  %379 = vmatmul.bf16.gmra.mxu0 %v217
  %v380 = vpop.f32.mrf.mxu0
  %v381 = vadd.f32 %v348, %v380
  %v382 = vpop.f32.mrf.mxu0
  %383 = vdwg.mxu0
  %v384 = vld [vmem:[%s3] sm:$0x1]
  %v385 = vld [vmem:[%s4] sm:$0x1]
  %v386 = vsel %vm203, %v361, 0.0
  %v387 = vsel %vm203, %v363, 0.0
  %v388 = vadd.f32 %v386, %v387
  %v389 = vsel %vm203, %v366, 0.0
  %v390 = vadd.f32 %v388, %v389
  %v391 = vsel %vm203, %v368, 0.0
  %v392 = vadd.f32 %v390, %v391
  %v393 = vsel %vm203, %v371, 0.0
  %v394 = vadd.f32 %v392, %v393
  %v395 = vsel %vm203, %v373, 0.0
  %v396 = vadd.f32 %v394, %v395
  %v397 = vsel %vm203, %v376, 0.0
  %v398 = vadd.f32 %v396, %v397
  %v399 = vsel %vm203, %v378, 0.0
  %v400 = vadd.f32 %v398, %v399
  %v401 = vsel %vm203, %v381, 0.0
  %v402 = vadd.f32 %v400, %v401
  %v403 = vrot.slane %v402, 4
  %v404 = vadd.f32 %v402, %v403
  %v405 = vrot.slane %v404, 2
  %v406 = vadd.f32 %v404, %v405
  %v407 = vrot.slane %v406, 1
  %v408 = vadd.f32 %v406, %v407
  %v409 = vrcp.pop 72.0
  %v410 = vmul.f32 72.0, %v409
  %v411 = vsub.f32 1.0, %v410
  %v412 = vmul.f32 %v409, %v411
  %v413 = vadd.f32 %v409, %v412
  %vm414 = vweird.f32 %v409
  %v415 = vsel %vm414, %v409, %v413
  %v416 = vmul.f32 %v408, %v415
  %v417 = vmul.f32 %v361, %v361
  %v418 = vmul.f32 %v363, %v363
  %v419 = vmul.f32 %v366, %v366
  %v420 = vmul.f32 %v368, %v368
  %v421 = vmul.f32 %v371, %v371
  %v422 = vmul.f32 %v373, %v373
  %v423 = vmul.f32 %v376, %v376
  %v424 = vmul.f32 %v378, %v378
  %v425 = vmul.f32 %v381, %v381
  %v426 = vsel %vm203, %v417, 0.0
  %v427 = vsel %vm203, %v418, 0.0
  %v428 = vadd.f32 %v426, %v427
  %v429 = vsel %vm203, %v419, 0.0
  %v430 = vadd.f32 %v428, %v429
  %v431 = vsel %vm203, %v420, 0.0
  %v432 = vadd.f32 %v430, %v431
  %v433 = vsel %vm203, %v421, 0.0
  %v434 = vadd.f32 %v432, %v433
  %v435 = vsel %vm203, %v422, 0.0
  %v436 = vadd.f32 %v434, %v435
  %v437 = vsel %vm203, %v423, 0.0
  %v438 = vadd.f32 %v436, %v437
  %v439 = vsel %vm203, %v424, 0.0
  %v440 = vadd.f32 %v438, %v439
  %v441 = vsel %vm203, %v425, 0.0
  %v442 = vadd.f32 %v440, %v441
  %v443 = vrot.slane %v442, 4
  %v444 = vadd.f32 %v442, %v443
  %v445 = vrot.slane %v444, 2
  %v446 = vadd.f32 %v444, %v445
  %v447 = vrot.slane %v446, 1
  %v448 = vadd.f32 %v446, %v447
  %v449 = vmul.f32 %v448, %v415
  %v450 = vmul.f32 %v416, %v416
  %v451 = vsub.f32 %v449, %v450
  %v452 = vadd.f32 %v451, 1e-05
  %v453 = vrsqrt.pop %v452
  %v454 = vmul.f32 %v453, %v452
  %v455 = vmul.f32 %v454, %v453
  %v456 = vmul.f32 0.5, %v455
  %v457 = vsub.f32 1.5, %v456
  %v458 = vmul.f32 %v453, %v457
  %vm459 = vweird.f32 %v452
  %vm460 = vweird.f32 %v453
  %vm461 = vmor %vm459, %vm460
  %v462 = vsel %vm461, %v453, %v458
  %v463 = vmul.f32 %v384, %v462
  %v465 = vperm.slane %v463, 0
  %v467 = vmul.f32 %v361, %v465
  %v468 = vmul.f32 %v363, %v465
  %v469 = vmul.f32 %v366, %v465
  %v470 = vmul.f32 %v368, %v465
  %v471 = vmul.f32 %v371, %v465
  %v472 = vmul.f32 %v373, %v465
  %v473 = vmul.f32 %v376, %v465
  %v474 = vmul.f32 %v378, %v465
  %v475 = vmul.f32 %v381, %v465
  %v476 = vmul.f32 %v416, %v463
  %v477 = vsub.f32 %v385, %v476
  %v479 = vperm.slane %v477, 0
  %v481 = vadd.f32 %v467, %v479
  %v482 = vadd.f32 %v468, %v479
  %v483 = vadd.f32 %v469, %v479
  %v484 = vadd.f32 %v470, %v479
  %v485 = vadd.f32 %v471, %v479
  %v486 = vadd.f32 %v472, %v479
  %v487 = vadd.f32 %v473, %v479
  %v488 = vadd.f32 %v474, %v479
  %v489 = vadd.f32 %v475, %v479
  %v490 = vmax.f32 %v481, 0.0
  %v491 = vmax.f32 %v482, 0.0
  %v492 = vmax.f32 %v483, 0.0
  %v493 = vmax.f32 %v484, 0.0
  %v494 = vmax.f32 %v485, 0.0
  %v495 = vmax.f32 %v486, 0.0
  %v496 = vmax.f32 %v487, 0.0
  %v497 = vmax.f32 %v488, 0.0
  %v498 = vmax.f32 %v489, 0.0
  %499 = vst.msk [vmem:[%s5] sm:$0xff] %vm203, %v490
  %500 = vst.msk [vmem:[%s5 + $0x8] sm:$0xff] %vm203, %v491
  %501 = vst.msk [vmem:[%s5 + $0x10] sm:$0xff] %vm203, %v492
  %502 = vst.msk [vmem:[%s5 + $0x18] sm:$0xff] %vm203, %v493
  %503 = vst.msk [vmem:[%s5 + $0x20] sm:$0xff] %vm203, %v494
  %504 = vst.msk [vmem:[%s5 + $0x28] sm:$0xff] %vm203, %v495
  %505 = vst.msk [vmem:[%s5 + $0x30] sm:$0xff] %vm203, %v496
  %506 = vst.msk [vmem:[%s5 + $0x38] sm:$0xff] %vm203, %v497
  %507 = vst.msk [vmem:[%s5 + $0x40] sm:$0xff] %vm203, %v498
  // Predicated region
  $region22: #{cvae_forward.9} parent=0 // pred_check
    _
  $region23: #{cvae_forward.9} parent=0 // pred_check_branch
    %509 = sbr.rel (0) target = $region25
  $region24: #{cvae_forward.9} parent=0 // pred_region
    _
  $region25: #{cvae_forward.9} parent=0 // pred_fallthru
    _
  // Predicated region
  $region26: #{cvae_forward.9} parent=0 // pred_check
    _
  $region27: #{cvae_forward.9} parent=0 // pred_check_branch
    %511 = sbr.rel (0) target = $region29
  $region28: #{cvae_forward.9} parent=0 // pred_region
    _
  $region29: #{cvae_forward.9} parent=0 // pred_fallthru
    _

// kernel: cvae_forward.11
$region0: #{cvae_forward.11}
  #allocation0 [shape = 'u32[]', space=smem, size = 0x4, offset = 0x4, fixed_abs, tag = 'smem constant byte address 0x4 - core index']
  #allocation1 [shape = 'u32[72,128]{1,0:T(1,128)}', space=vmem, size = 0x9000, scoped, tag = 'internal scratch']
  %s0 = inlined_call_operand.vmem [shape: f32[2,16], index: 0, kind: input, shape index: {}]
  %s1 = inlined_call_operand.vmem [shape: f32[2,16], index: 1, kind: input, shape index: {}]
  %s2 = inlined_call_operand.vmem [shape: f32[16,64], index: 2, kind: input, shape index: {}]
  %s3 = inlined_call_operand.vmem [shape: f32[16,64], index: 3, kind: input, shape index: {}]
  %s4 = inlined_call_operand.vmem [shape: f32[1,64], index: 4, kind: input, shape index: {}]
  %s5 = inlined_call_operand.hbm [shape: f32[1,64], index: 5, kind: input, shape index: {}]
  %s6 = inlined_call_operand.hbm [shape: f32[1,64], index: 6, kind: input, shape index: {}]
  %s7 = inlined_call_operand.vmem [shape: f32[64,128], index: 7, kind: input, shape index: {}]
  %s8 = inlined_call_operand.hbm [shape: f32[1,128], index: 8, kind: input, shape index: {}]
  %s9 = inlined_call_operand.hbm [shape: f32[1,128], index: 9, kind: input, shape index: {}]
  %s10 = inlined_call_operand.hbm [shape: f32[1,128], index: 10, kind: input, shape index: {}]
  %s11 = inlined_call_operand.vmem [shape: f32[128,256], index: 11, kind: input, shape index: {}]
  %s12 = inlined_call_operand.vmem [shape: f32[1,256], index: 12, kind: input, shape index: {}]
  %s13 = inlined_call_operand.vmem [shape: f32[1,256], index: 13, kind: input, shape index: {}]
  %s14 = inlined_call_operand.vmem [shape: f32[1,256], index: 14, kind: input, shape index: {}]
  %s15 = inlined_call_operand.vmem [shape: f32[256,896], index: 15, kind: input, shape index: {}]
  %s16 = inlined_call_operand.vmem [shape: f32[1,896], index: 16, kind: input, shape index: {}]
  %s17 = inlined_call_operand.vmem [shape: f32[2,896], index: 17, kind: output, shape index: {}]
  %s18 = sld [smem:[#allocation0]]
  $region98: #{cvae_forward.11} parent=0
    _
  %s20 = ssub.s32 1, %s18
  %s21 = scalar_select 0, %s20, %s18
  $region1: #{cvae_forward.11} parent=0
    #allocation2 [shape = 'u8[512]{0}', space=vmem, size = 0x400, scoped, tag = 'input window, operand 5, single buffered']
    #allocation3 [shape = 's32[1]{0}', space=sflag, size = 0x4, scoped, tag = 'scoped memory for cvae_forward.11']
    #allocation4 [shape = 'u8[512]{0}', space=vmem, size = 0x400, scoped, tag = 'input window, operand 6, single buffered']
    #allocation5 [shape = 's32[1]{0}', space=sflag, size = 0x4, scoped, tag = 'scoped memory for cvae_forward.11']
    #allocation6 [shape = 'u8[512]{0}', space=vmem, size = 0x400, scoped, tag = 'input window, operand 8, single buffered']
    #allocation7 [shape = 'u8[512]{0}', space=vmem, size = 0x400, scoped, tag = 'input window, operand 9, single buffered']
    #allocation8 [shape = 's32[1]{0}', space=sflag, size = 0x4, scoped, tag = 'scoped memory for cvae_forward.11']
    #allocation9 [shape = 'u8[512]{0}', space=vmem, size = 0x400, scoped, tag = 'input window, operand 10, single buffered']
    %22 = vsyncpa [#allocation3], 0
    %23 = vsyncpa [#allocation5], 0
    %24 = vsyncpa [#allocation8], 0
    // Predicated region
    $region2: #{cvae_forward.11} parent=1 // pred_check
      _
    $region3: #{cvae_forward.11} parent=1 // pred_check_branch
      %26 = sbr.rel (0) target = $region5
    $region4: #{cvae_forward.11} parent=1 // pred_region
      _
    $region5: #{cvae_forward.11} parent=1 // pred_fallthru
      _
    // Predicated region
    $region6: #{cvae_forward.11} parent=1 // pred_check
      _
    $region7: #{cvae_forward.11} parent=1 // pred_check_branch
      %28 = sbr.rel (0) target = $region9
    $region8: #{cvae_forward.11} parent=1 // pred_region
      _
    $region9: #{cvae_forward.11} parent=1 // pred_fallthru
      _
    // Predicated region
    $region10: #{cvae_forward.11} parent=1 // pred_check
      _
    $region11: #{cvae_forward.11} parent=1 // pred_check_branch
      %30 = sbr.rel (0) target = $region13
    $region12: #{cvae_forward.11} parent=1 // pred_region
      _
    $region13: #{cvae_forward.11} parent=1 // pred_fallthru
      _
    // Predicated region
    $region14: #{cvae_forward.11} parent=1 // pred_check
      _
    $region15: #{cvae_forward.11} parent=1 // pred_check_branch
      %32 = sbr.rel (0) target = $region17
    $region16: #{cvae_forward.11} parent=1 // pred_region
      _
    $region17: #{cvae_forward.11} parent=1 // pred_fallthru
      _
    // Predicated region
    $region18: #{cvae_forward.11} parent=1 // pred_check
      _
    $region19: #{cvae_forward.11} parent=1 // pred_check_branch
      %34 = sbr.rel (0) target = $region21
    $region20: #{cvae_forward.11} parent=1 // pred_region
      _
    $region21: #{cvae_forward.11} parent=1 // pred_fallthru
      _
    // Predicated region
    $region22: #{cvae_forward.11} parent=1 // pred_check
      _
    $region23: #{cvae_forward.11} parent=1 // pred_check_branch
      %36 = sbr.rel (0) target = $region25
    $region24: #{cvae_forward.11} parent=1 // pred_region
      %38 = vsyncadd [#allocation3], 0
      %s40 = sshll.u32 %s5, 4
      %s41 = int_to_ptr.hbm [resolvable:$true] %s40
      %s42 = sshll.u32 [#allocation2], 4
      %s43 = int_to_ptr.vmem [resolvable:$true] %s42
      %45 = dma.hbm_to_vmem [thread:$0]  %s41, 16, %s43, [#allocation3]
    $region25: #{cvae_forward.11} parent=1 // pred_fallthru
      _
    // Predicated region
    $region26: #{cvae_forward.11} parent=1 // pred_check
      _
    $region27: #{cvae_forward.11} parent=1 // pred_check_branch
      %47 = sbr.rel (0) target = $region29
    $region28: #{cvae_forward.11} parent=1 // pred_region
      %49 = vsyncadd [#allocation5], 0
      %s51 = sshll.u32 %s6, 4
      %s52 = int_to_ptr.hbm [resolvable:$true] %s51
      %s53 = sshll.u32 [#allocation4], 4
      %s54 = int_to_ptr.vmem [resolvable:$true] %s53
      %56 = dma.hbm_to_vmem [thread:$0]  %s52, 16, %s54, [#allocation5]
    $region29: #{cvae_forward.11} parent=1 // pred_fallthru
      _
    // Predicated region
    $region30: #{cvae_forward.11} parent=1 // pred_check
      _
    $region31: #{cvae_forward.11} parent=1 // pred_check_branch
      %58 = sbr.rel (0) target = $region33
    $region32: #{cvae_forward.11} parent=1 // pred_region
      _
    $region33: #{cvae_forward.11} parent=1 // pred_fallthru
      _
    // Predicated region
    $region34: #{cvae_forward.11} parent=1 // pred_check
      _
    $region35: #{cvae_forward.11} parent=1 // pred_check_branch
      %60 = sbr.rel (0) target = $region37
    $region36: #{cvae_forward.11} parent=1 // pred_region
      %62 = vsyncadd [#allocation5], 0
      %s64 = sshll.u32 %s8, 4
      %s65 = int_to_ptr.hbm [resolvable:$true] %s64
      %s66 = sshll.u32 [#allocation6], 4
      %s67 = int_to_ptr.vmem [resolvable:$true] %s66
      %69 = dma.hbm_to_vmem [thread:$0]  %s65, 16, %s67, [#allocation5]
    $region37: #{cvae_forward.11} parent=1 // pred_fallthru
      _
    // Predicated region
    $region38: #{cvae_forward.11} parent=1 // pred_check
      _
    $region39: #{cvae_forward.11} parent=1 // pred_check_branch
      %71 = sbr.rel (0) target = $region41
    $region40: #{cvae_forward.11} parent=1 // pred_region
      %73 = vsyncadd [#allocation8], 0
      %s75 = sshll.u32 %s9, 4
      %s76 = int_to_ptr.hbm [resolvable:$true] %s75
      %s77 = sshll.u32 [#allocation7], 4
      %s78 = int_to_ptr.vmem [resolvable:$true] %s77
      %80 = dma.hbm_to_vmem [thread:$0]  %s76, 16, %s78, [#allocation8]
    $region41: #{cvae_forward.11} parent=1 // pred_fallthru
      _
    // Predicated region
    $region42: #{cvae_forward.11} parent=1 // pred_check
      _
    $region43: #{cvae_forward.11} parent=1 // pred_check_branch
      %82 = sbr.rel (0) target = $region45
    $region44: #{cvae_forward.11} parent=1 // pred_region
      %84 = vsyncadd [#allocation8], 0
      %s86 = sshll.u32 %s10, 4
      %s87 = int_to_ptr.hbm [resolvable:$true] %s86
      %s88 = sshll.u32 [#allocation9], 4
      %s89 = int_to_ptr.vmem [resolvable:$true] %s88
      %91 = dma.hbm_to_vmem [thread:$0]  %s87, 16, %s89, [#allocation8]
    $region45: #{cvae_forward.11} parent=1 // pred_fallthru
      _
    // Predicated region
    $region46: #{cvae_forward.11} parent=1 // pred_check
      _
    $region47: #{cvae_forward.11} parent=1 // pred_check_branch
      %93 = sbr.rel (0) target = $region49
    $region48: #{cvae_forward.11} parent=1 // pred_region
      _
    $region49: #{cvae_forward.11} parent=1 // pred_fallthru
      _
    // Predicated region
    $region50: #{cvae_forward.11} parent=1 // pred_check
      _
    $region51: #{cvae_forward.11} parent=1 // pred_check_branch
      %95 = sbr.rel (0) target = $region53
    $region52: #{cvae_forward.11} parent=1 // pred_region
      _
    $region53: #{cvae_forward.11} parent=1 // pred_fallthru
      _
    // Predicated region
    $region54: #{cvae_forward.11} parent=1 // pred_check
      _
    $region55: #{cvae_forward.11} parent=1 // pred_check_branch
      %97 = sbr.rel (0) target = $region57
    $region56: #{cvae_forward.11} parent=1 // pred_region
      _
    $region57: #{cvae_forward.11} parent=1 // pred_fallthru
      _
    // Predicated region
    $region58: #{cvae_forward.11} parent=1 // pred_check
      _
    $region59: #{cvae_forward.11} parent=1 // pred_check_branch
      %99 = sbr.rel (0) target = $region61
    $region60: #{cvae_forward.11} parent=1 // pred_region
      _
    $region61: #{cvae_forward.11} parent=1 // pred_fallthru
      _
    // Predicated region
    $region62: #{cvae_forward.11} parent=1 // pred_check
      _
    $region63: #{cvae_forward.11} parent=1 // pred_check_branch
      %101 = sbr.rel (0) target = $region65
    $region64: #{cvae_forward.11} parent=1 // pred_region
      _
    $region65: #{cvae_forward.11} parent=1 // pred_fallthru
      _
    // Predicated region
    $region66: #{cvae_forward.11} parent=1 // pred_check
      _
    $region67: #{cvae_forward.11} parent=1 // pred_check_branch
      %103 = sbr.rel (0) target = $region69
    $region68: #{cvae_forward.11} parent=1 // pred_region
      _
    $region69: #{cvae_forward.11} parent=1 // pred_fallthru
      _
    // Predicated region
    $region70: #{cvae_forward.11} parent=1 // pred_check
      _
    $region71: #{cvae_forward.11} parent=1 // pred_check_branch
      %105 = sbr.rel (0) target = $region73
    $region72: #{cvae_forward.11} parent=1 // pred_region
      %107 = dma.done [#allocation3], 16
    $region73: #{cvae_forward.11} parent=1 // pred_fallthru
      _
    // Predicated region
    $region74: #{cvae_forward.11} parent=1 // pred_check
      _
    $region75: #{cvae_forward.11} parent=1 // pred_check_branch
      %109 = sbr.rel (0) target = $region77
    $region76: #{cvae_forward.11} parent=1 // pred_region
      %111 = dma.done [#allocation5], 16
    $region77: #{cvae_forward.11} parent=1 // pred_fallthru
      _
    // Predicated region
    $region78: #{cvae_forward.11} parent=1 // pred_check
      _
    $region79: #{cvae_forward.11} parent=1 // pred_check_branch
      %113 = sbr.rel (0) target = $region81
    $region80: #{cvae_forward.11} parent=1 // pred_region
      %115 = dma.done [#allocation5], 16
    $region81: #{cvae_forward.11} parent=1 // pred_fallthru
      _
    // Predicated region
    $region82: #{cvae_forward.11} parent=1 // pred_check
      _
    $region83: #{cvae_forward.11} parent=1 // pred_check_branch
      %117 = sbr.rel (0) target = $region85
    $region84: #{cvae_forward.11} parent=1 // pred_region
      %119 = dma.done [#allocation8], 16
    $region85: #{cvae_forward.11} parent=1 // pred_fallthru
      _
    // Predicated region
    $region86: #{cvae_forward.11} parent=1 // pred_check
      _
    $region87: #{cvae_forward.11} parent=1 // pred_check_branch
      %121 = sbr.rel (0) target = $region89
    $region88: #{cvae_forward.11} parent=1 // pred_region
      %123 = dma.done [#allocation8], 16
    $region89: #{cvae_forward.11} parent=1 // pred_fallthru
      _
    %v125 = vld [vmem:[%s0] sm:$0x3]
    %v126 = vld [vmem:[%s1] sm:$0x3]
    %v127 = vld [vmem:[%s2] sm:$0xff]
    %v128 = vld [vmem:[%s2 + $0x8] sm:$0xff]
    %v129 = vpack.c.bf16 %v125, %v125
    %v130 = vpack.c.bf16 %v128, %v127
    %v131 = vld [vmem:[%s3] sm:$0xff]
    %v132 = vld [vmem:[%s3 + $0x8] sm:$0xff]
    %v133 = vpack.c.bf16 %v126, %v126
    %v134 = vpack.c.bf16 %v132, %v131
    %vm135 = vcmask 130048
    %v137 = vsel %vm135, %v133, 0
    %139 = vmatpush.bf16.msra.mxu0 0
    %140 = vmatpush.bf16.msra.mxu0 0
    %141 = vmatpush.bf16.msra.mxu0 0
    %142 = vmatpush.bf16.msra.mxu0 0
    %143 = vmatpush.bf16.msra.mxu0 0
    %144 = vmatpush.bf16.msra.mxu0 0
    %145 = vmatpush.bf16.msra.mxu0 0
    %146 = vmatpush.bf16.msra.mxu0 %v134
    %147 = vmatmul.bf16.gmra.mxu0 %v137
    %v148 = vpop.f32.mrf.mxu0
    %v149 = vadd.f32 0.0, %v148
    %v150 = vpop.f32.mrf.mxu0
    %151 = vdwg.mxu0
    %v153 = vsel %vm135, %v129, 0
    %155 = vmatpush.bf16.msra.mxu0 0
    %156 = vmatpush.bf16.msra.mxu0 0
    %157 = vmatpush.bf16.msra.mxu0 0
    %158 = vmatpush.bf16.msra.mxu0 0
    %159 = vmatpush.bf16.msra.mxu0 0
    %160 = vmatpush.bf16.msra.mxu0 0
    %161 = vmatpush.bf16.msra.mxu0 0
    %162 = vmatpush.bf16.msra.mxu0 %v130
    %163 = vmatmul.bf16.gmra.mxu0 %v153
    %v164 = vpop.f32.mrf.mxu0
    %v165 = vadd.f32 %v149, %v164
    %v166 = vpop.f32.mrf.mxu0
    %167 = vdwg.mxu0
    %v168 = vld [vmem:[%s4] sm:$0x1]
    %v170 = vperm.slane %v168, 0
    %v172 = vadd.f32 %v165, %v170
    %v173 = vld [vmem:[#allocation2] sm:$0x1]
    %v174 = vld [vmem:[#allocation4] sm:$0x1]
    %vm175 = vcmask 517120
    %v176 = vsel %vm175, %v172, 0.0
    %v177 = vrot.slane %v176, 4
    %v178 = vadd.f32 %v176, %v177
    %v179 = vrot.slane %v178, 2
    %v180 = vadd.f32 %v178, %v179
    %v181 = vrot.slane %v180, 1
    %v182 = vadd.f32 %v180, %v181
    %v183 = vrcp.pop 2.0
    %v184 = vmul.f32 2.0, %v183
    %v185 = vsub.f32 1.0, %v184
    %v186 = vmul.f32 %v183, %v185
    %v187 = vadd.f32 %v183, %v186
    %vm188 = vweird.f32 %v183
    %v189 = vsel %vm188, %v183, %v187
    %v190 = vmul.f32 %v182, %v189
    %v191 = vmul.f32 %v172, %v172
    %v192 = vsel %vm175, %v191, 0.0
    %v193 = vrot.slane %v192, 4
    %v194 = vadd.f32 %v192, %v193
    %v195 = vrot.slane %v194, 2
    %v196 = vadd.f32 %v194, %v195
    %v197 = vrot.slane %v196, 1
    %v198 = vadd.f32 %v196, %v197
    %v199 = vmul.f32 %v198, %v189
    %v200 = vmul.f32 %v190, %v190
    %v201 = vsub.f32 %v199, %v200
    %v202 = vadd.f32 %v201, 1e-05
    %v203 = vrsqrt.pop %v202
    %v204 = vmul.f32 %v203, %v202
    %v205 = vmul.f32 %v204, %v203
    %v206 = vmul.f32 0.5, %v205
    %v207 = vsub.f32 1.5, %v206
    %v208 = vmul.f32 %v203, %v207
    %vm209 = vweird.f32 %v202
    %vm210 = vweird.f32 %v203
    %vm211 = vmor %vm209, %vm210
    %v212 = vsel %vm211, %v203, %v208
    %v213 = vmul.f32 %v173, %v212
    %v215 = vperm.slane %v213, 0
    %v217 = vmul.f32 %v172, %v215
    %v218 = vmul.f32 %v190, %v213
    %v219 = vsub.f32 %v174, %v218
    %v221 = vperm.slane %v219, 0
    %v223 = vadd.f32 %v217, %v221
    %v224 = vmax.f32 %v223, 0.0
    %v225 = vld [vmem:[%s7] sm:$0xff]
    %v226 = vld [vmem:[%s7 + $0x8] sm:$0xff]
    %v227 = vld [vmem:[%s7 + $0x10] sm:$0xff]
    %v228 = vld [vmem:[%s7 + $0x18] sm:$0xff]
    %v229 = vld [vmem:[%s7 + $0x20] sm:$0xff]
    %v230 = vld [vmem:[%s7 + $0x28] sm:$0xff]
    %v231 = vld [vmem:[%s7 + $0x30] sm:$0xff]
    %v232 = vld [vmem:[%s7 + $0x38] sm:$0xff]
    %v233 = vpack.c.bf16 %v224, %v224
    %v234 = vpack.c.bf16 %v226, %v225
    %v235 = vpack.c.bf16 %v228, %v227
    %v236 = vpack.c.bf16 %v230, %v229
    %v237 = vpack.c.bf16 %v232, %v231
    %v238 = vld [vmem:[#allocation6] sm:$0x1]
    %v240 = vperm.slane %v238, 0
    %vm242 = vcmask 523264
    %v244 = vsel %vm242, %v233, 0
    %246 = vmatpush.bf16.msra.mxu0 0
    %247 = vmatpush.bf16.msra.mxu0 0
    %248 = vmatpush.bf16.msra.mxu0 0
    %249 = vmatpush.bf16.msra.mxu0 0
    %250 = vmatpush.bf16.msra.mxu0 %v237
    %251 = vmatpush.bf16.msra.mxu0 %v236
    %252 = vmatpush.bf16.msra.mxu0 %v235
    %253 = vmatpush.bf16.msra.mxu0 %v234
    %254 = vmatmul.bf16.gmra.mxu0 %v244
    %v255 = vpop.f32.mrf.mxu0
    %v256 = vadd.f32 %v240, %v255
    %v257 = vpop.f32.mrf.mxu0
    %258 = vdwg.mxu0
    %v259 = vld [vmem:[#allocation7] sm:$0x1]
    %v260 = vld [vmem:[#allocation9] sm:$0x1]
    %vm261 = vcmask 1041408
    %v262 = vsel %vm261, %v256, 0.0
    %v263 = vrot.slane %v262, 4
    %v264 = vadd.f32 %v262, %v263
    %v265 = vrot.slane %v264, 2
    %v266 = vadd.f32 %v264, %v265
    %v267 = vrot.slane %v266, 1
    %v268 = vadd.f32 %v266, %v267
    %v269 = vmul.f32 %v268, %v189
    %v270 = vmul.f32 %v256, %v256
    %v271 = vsel %vm261, %v270, 0.0
    %v272 = vrot.slane %v271, 4
    %v273 = vadd.f32 %v271, %v272
    %v274 = vrot.slane %v273, 2
    %v275 = vadd.f32 %v273, %v274
    %v276 = vrot.slane %v275, 1
    %v277 = vadd.f32 %v275, %v276
    %v278 = vmul.f32 %v277, %v189
    %v279 = vmul.f32 %v269, %v269
    %v280 = vsub.f32 %v278, %v279
    %v281 = vadd.f32 %v280, 1e-05
    %v282 = vrsqrt.pop %v281
    %v283 = vmul.f32 %v282, %v281
    %v284 = vmul.f32 %v283, %v282
    %v285 = vmul.f32 0.5, %v284
    %v286 = vsub.f32 1.5, %v285
    %v287 = vmul.f32 %v282, %v286
    %vm288 = vweird.f32 %v281
    %vm289 = vweird.f32 %v282
    %vm290 = vmor %vm288, %vm289
    %v291 = vsel %vm290, %v282, %v287
    %v292 = vmul.f32 %v259, %v291
    %v294 = vperm.slane %v292, 0
    %v296 = vmul.f32 %v256, %v294
    %v297 = vmul.f32 %v269, %v292
    %v298 = vsub.f32 %v260, %v297
    %v300 = vperm.slane %v298, 0
    %v302 = vadd.f32 %v296, %v300
    %v303 = vmax.f32 %v302, 0.0
    %v304 = vld [vmem:[%s11] sm:$0xff]
    %v305 = vld [vmem:[%s11 + $0x8] sm:$0xff]
    %v306 = vld [vmem:[%s11 + $0x10] sm:$0xff]
    %v307 = vld [vmem:[%s11 + $0x18] sm:$0xff]
    %v308 = vld [vmem:[%s11 + $0x20] sm:$0xff]
    %v309 = vld [vmem:[%s11 + $0x28] sm:$0xff]
    %v310 = vld [vmem:[%s11 + $0x30] sm:$0xff]
    %v311 = vld [vmem:[%s11 + $0x38] sm:$0xff]
    %v312 = vld [vmem:[%s11 + $0x40] sm:$0xff]
    %v313 = vld [vmem:[%s11 + $0x48] sm:$0xff]
    %v314 = vld [vmem:[%s11 + $0x50] sm:$0xff]
    %v315 = vld [vmem:[%s11 + $0x58] sm:$0xff]
    %v316 = vld [vmem:[%s11 + $0x60] sm:$0xff]
    %v317 = vld [vmem:[%s11 + $0x68] sm:$0xff]
    %v318 = vld [vmem:[%s11 + $0x70] sm:$0xff]
    %v319 = vld [vmem:[%s11 + $0x78] sm:$0xff]
    %v320 = vld [vmem:[%s11 + $0x80] sm:$0xff]
    %v321 = vld [vmem:[%s11 + $0x88] sm:$0xff]
    %v322 = vld [vmem:[%s11 + $0x90] sm:$0xff]
    %v323 = vld [vmem:[%s11 + $0x98] sm:$0xff]
    %v324 = vld [vmem:[%s11 + $0xa0] sm:$0xff]
    %v325 = vld [vmem:[%s11 + $0xa8] sm:$0xff]
    %v326 = vld [vmem:[%s11 + $0xb0] sm:$0xff]
    %v327 = vld [vmem:[%s11 + $0xb8] sm:$0xff]
    %v328 = vld [vmem:[%s11 + $0xc0] sm:$0xff]
    %v329 = vld [vmem:[%s11 + $0xc8] sm:$0xff]
    %v330 = vld [vmem:[%s11 + $0xd0] sm:$0xff]
    %v331 = vld [vmem:[%s11 + $0xd8] sm:$0xff]
    %v332 = vld [vmem:[%s11 + $0xe0] sm:$0xff]
    %v333 = vld [vmem:[%s11 + $0xe8] sm:$0xff]
    %v334 = vld [vmem:[%s11 + $0xf0] sm:$0xff]
    %v335 = vld [vmem:[%s11 + $0xf8] sm:$0xff]
    %v336 = vpack.c.bf16 %v303, %v303
    %v337 = vpack.c.bf16 %v306, %v304
    %v338 = vpack.c.bf16 %v307, %v305
    %v339 = vpack.c.bf16 %v310, %v308
    %v340 = vpack.c.bf16 %v311, %v309
    %v341 = vpack.c.bf16 %v314, %v312
    %v342 = vpack.c.bf16 %v315, %v313
    %v343 = vpack.c.bf16 %v318, %v316
    %v344 = vpack.c.bf16 %v319, %v317
    %v345 = vpack.c.bf16 %v322, %v320
    %v346 = vpack.c.bf16 %v323, %v321
    %v347 = vpack.c.bf16 %v326, %v324
    %v348 = vpack.c.bf16 %v327, %v325
    %v349 = vpack.c.bf16 %v330, %v328
    %v350 = vpack.c.bf16 %v331, %v329
    %v351 = vpack.c.bf16 %v334, %v332
    %v352 = vpack.c.bf16 %v335, %v333
    %v353 = vld [vmem:[%s12] sm:$0x3]
    %v355 = vperm.slane %v353, 0
    %v356 = vperm.slane %v353, 1
    %359 = vmatpush.bf16.msra.mxu0 %v351
    %360 = vmatpush.bf16.msra.mxu0 %v349
    %361 = vmatpush.bf16.msra.mxu0 %v347
    %362 = vmatpush.bf16.msra.mxu0 %v345
    %363 = vmatpush.bf16.msra.mxu0 %v343
    %364 = vmatpush.bf16.msra.mxu0 %v341
    %365 = vmatpush.bf16.msra.mxu0 %v339
    %366 = vmatpush.bf16.msra.mxu0 %v337
    %367 = vmatmul.bf16.gmra.mxu0 %v336
    %v368 = vpop.f32.mrf.mxu0
    %v369 = vadd.f32 %v355, %v368
    %v370 = vpop.f32.mrf.mxu0
    %371 = vdwg.mxu0
    %372 = vmatpush.bf16.msra.mxu0 %v352
    %373 = vmatpush.bf16.msra.mxu0 %v350
    %374 = vmatpush.bf16.msra.mxu0 %v348
    %375 = vmatpush.bf16.msra.mxu0 %v346
    %376 = vmatpush.bf16.msra.mxu0 %v344
    %377 = vmatpush.bf16.msra.mxu0 %v342
    %378 = vmatpush.bf16.msra.mxu0 %v340
    %379 = vmatpush.bf16.msra.mxu0 %v338
    %380 = vmatmul.bf16.gmra.mxu0 %v336
    %v381 = vpop.f32.mrf.mxu0
    %v382 = vadd.f32 %v356, %v381
    %v383 = vpop.f32.mrf.mxu0
    %384 = vdwg.mxu0
    %v385 = vld [vmem:[%s13] sm:$0x3]
    %v386 = vld [vmem:[%s14] sm:$0x3]
    %v387 = vsel %vm261, %v369, 0.0
    %v388 = vrot.slane %v387, 4
    %v389 = vadd.f32 %v387, %v388
    %v390 = vrot.slane %v389, 2
    %v391 = vadd.f32 %v389, %v390
    %v392 = vrot.slane %v391, 1
    %v393 = vadd.f32 %v391, %v392
    %v394 = vsel %vm261, %v382, 0.0
    %v395 = vrot.slane %v394, 4
    %v396 = vadd.f32 %v394, %v395
    %v397 = vrot.slane %v396, 2
    %v398 = vadd.f32 %v396, %v397
    %v399 = vrot.slane %v398, 1
    %v400 = vadd.f32 %v398, %v399
    %v401 = vmul.f32 %v393, %v189
    %v402 = vmul.f32 %v400, %v189
    %v403 = vmul.f32 %v369, %v369
    %v404 = vmul.f32 %v382, %v382
    %v405 = vsel %vm261, %v403, 0.0
    %v406 = vrot.slane %v405, 4
    %v407 = vadd.f32 %v405, %v406
    %v408 = vrot.slane %v407, 2
    %v409 = vadd.f32 %v407, %v408
    %v410 = vrot.slane %v409, 1
    %v411 = vadd.f32 %v409, %v410
    %v412 = vsel %vm261, %v404, 0.0
    %v413 = vrot.slane %v412, 4
    %v414 = vadd.f32 %v412, %v413
    %v415 = vrot.slane %v414, 2
    %v416 = vadd.f32 %v414, %v415
    %v417 = vrot.slane %v416, 1
    %v418 = vadd.f32 %v416, %v417
    %v419 = vmul.f32 %v411, %v189
    %v420 = vmul.f32 %v418, %v189
    %v421 = vmul.f32 %v401, %v401
    %v422 = vmul.f32 %v402, %v402
    %v423 = vsub.f32 %v419, %v421
    %v424 = vsub.f32 %v420, %v422
    %v425 = vadd.f32 %v423, 1e-05
    %v426 = vadd.f32 %v424, 1e-05
    %v427 = vrsqrt.pop %v425
    %v428 = vmul.f32 %v427, %v425
    %v429 = vmul.f32 %v428, %v427
    %v430 = vmul.f32 0.5, %v429
    %v431 = vsub.f32 1.5, %v430
    %v432 = vmul.f32 %v427, %v431
    %vm433 = vweird.f32 %v425
    %vm434 = vweird.f32 %v427
    %vm435 = vmor %vm433, %vm434
    %v436 = vsel %vm435, %v427, %v432
    %v437 = vrsqrt.pop %v426
    %v438 = vmul.f32 %v437, %v426
    %v439 = vmul.f32 %v438, %v437
    %v440 = vmul.f32 0.5, %v439
    %v441 = vsub.f32 1.5, %v440
    %v442 = vmul.f32 %v437, %v441
    %vm443 = vweird.f32 %v426
    %vm444 = vweird.f32 %v437
    %vm445 = vmor %vm443, %vm444
    %v446 = vsel %vm445, %v437, %v442
    %v449 = vrot.slane %v446, 7
    %vm450 = vcmask 1040384
    %v451 = vsel %vm450, %v436, %v449
    %v453 = vmul.f32 %v385, %v451
    %v455 = vperm.slane %v453, 0
    %v456 = vperm.slane %v453, 1
    %v459 = vmul.f32 %v369, %v455
    %v460 = vmul.f32 %v382, %v456
    %v461 = vmul.f32 %v401, %v455
    %v462 = vmul.f32 %v402, %v456
    %v465 = vrot.slane %v462, 7
    %v466 = vsel %vm450, %v461, %v465
    %v468 = vsub.f32 %v386, %v466
    %v470 = vperm.slane %v468, 0
    %v471 = vperm.slane %v468, 1
    %v474 = vadd.f32 %v459, %v470
    %v475 = vadd.f32 %v460, %v471
    %v476 = vmax.f32 %v474, 0.0
    %v477 = vmax.f32 %v475, 0.0
    %v478 = vld [vmem:[%s15] sm:$0xff]
    %v479 = vld [vmem:[%s15 + $0x8] sm:$0xff]
    %v480 = vld [vmem:[%s15 + $0x10] sm:$0xff]
    %v481 = vld [vmem:[%s15 + $0x18] sm:$0xff]
    %v482 = vld [vmem:[%s15 + $0x20] sm:$0xff]
    %v483 = vld [vmem:[%s15 + $0x28] sm:$0xff]
    %v484 = vld [vmem:[%s15 + $0x30] sm:$0xff]
    %v485 = vld [vmem:[%s15 + $0x38] sm:$0xff]
    %v486 = vld [vmem:[%s15 + $0x40] sm:$0xff]
    %v487 = vld [vmem:[%s15 + $0x48] sm:$0xff]
    %v488 = vld [vmem:[%s15 + $0x50] sm:$0xff]
    %v489 = vld [vmem:[%s15 + $0x58] sm:$0xff]
    %v490 = vld [vmem:[%s15 + $0x60] sm:$0xff]
    %v491 = vld [vmem:[%s15 + $0x68] sm:$0xff]
    %v492 = vld [vmem:[%s15 + $0x70] sm:$0xff]
    %v493 = vld [vmem:[%s15 + $0x78] sm:$0xff]
    %v494 = vld [vmem:[%s15 + $0x80] sm:$0xff]
    %v495 = vld [vmem:[%s15 + $0x88] sm:$0xff]
    %v496 = vld [vmem:[%s15 + $0x90] sm:$0xff]
    %v497 = vld [vmem:[%s15 + $0x98] sm:$0xff]
    %v498 = vld [vmem:[%s15 + $0xa0] sm:$0xff]
    %v499 = vld [vmem:[%s15 + $0xa8] sm:$0xff]
    %v500 = vld [vmem:[%s15 + $0xb0] sm:$0xff]
    %v501 = vld [vmem:[%s15 + $0xb8] sm:$0xff]
    %v502 = vld [vmem:[%s15 + $0xc0] sm:$0xff]
    %v503 = vld [vmem:[%s15 + $0xc8] sm:$0xff]
    %v504 = vld [vmem:[%s15 + $0xd0] sm:$0xff]
    %v505 = vld [vmem:[%s15 + $0xd8] sm:$0xff]
    %v506 = vld [vmem:[%s15 + $0xe0] sm:$0xff]
    %v507 = vld [vmem:[%s15 + $0xe8] sm:$0xff]
    %v508 = vld [vmem:[%s15 + $0xf0] sm:$0xff]
    %v509 = vld [vmem:[%s15 + $0xf8] sm:$0xff]
    %v510 = vld [vmem:[%s15 + $0x100] sm:$0xff]
    %v511 = vld [vmem:[%s15 + $0x108] sm:$0xff]
    %v512 = vld [vmem:[%s15 + $0x110] sm:$0xff]
    %v513 = vld [vmem:[%s15 + $0x118] sm:$0xff]
    %v514 = vld [vmem:[%s15 + $0x120] sm:$0xff]
    %v515 = vld [vmem:[%s15 + $0x128] sm:$0xff]
    %v516 = vld [vmem:[%s15 + $0x130] sm:$0xff]
    %v517 = vld [vmem:[%s15 + $0x138] sm:$0xff]
    %v518 = vld [vmem:[%s15 + $0x140] sm:$0xff]
    %v519 = vld [vmem:[%s15 + $0x148] sm:$0xff]
    %v520 = vld [vmem:[%s15 + $0x150] sm:$0xff]
    %v521 = vld [vmem:[%s15 + $0x158] sm:$0xff]
    %v522 = vld [vmem:[%s15 + $0x160] sm:$0xff]
    %v523 = vld [vmem:[%s15 + $0x168] sm:$0xff]
    %v524 = vld [vmem:[%s15 + $0x170] sm:$0xff]
    %v525 = vld [vmem:[%s15 + $0x178] sm:$0xff]
    %v526 = vld [vmem:[%s15 + $0x180] sm:$0xff]
    %v527 = vld [vmem:[%s15 + $0x188] sm:$0xff]
    %v528 = vld [vmem:[%s15 + $0x190] sm:$0xff]
    %v529 = vld [vmem:[%s15 + $0x198] sm:$0xff]
    %v530 = vld [vmem:[%s15 + $0x1a0] sm:$0xff]
    %v531 = vld [vmem:[%s15 + $0x1a8] sm:$0xff]
    %v532 = vld [vmem:[%s15 + $0x1b0] sm:$0xff]
    %v533 = vld [vmem:[%s15 + $0x1b8] sm:$0xff]
    %v534 = vld [vmem:[%s15 + $0x1c0] sm:$0xff]
    %v535 = vld [vmem:[%s15 + $0x1c8] sm:$0xff]
    %v536 = vld [vmem:[%s15 + $0x1d0] sm:$0xff]
    %v537 = vld [vmem:[%s15 + $0x1d8] sm:$0xff]
    %v538 = vld [vmem:[%s15 + $0x1e0] sm:$0xff]
    %v539 = vld [vmem:[%s15 + $0x1e8] sm:$0xff]
    %v540 = vld [vmem:[%s15 + $0x1f0] sm:$0xff]
    %v541 = vld [vmem:[%s15 + $0x1f8] sm:$0xff]
    %v542 = vld [vmem:[%s15 + $0x200] sm:$0xff]
    %v543 = vld [vmem:[%s15 + $0x208] sm:$0xff]
    %v544 = vld [vmem:[%s15 + $0x210] sm:$0xff]
    %v545 = vld [vmem:[%s15 + $0x218] sm:$0xff]
    %v546 = vld [vmem:[%s15 + $0x220] sm:$0xff]
    %v547 = vld [vmem:[%s15 + $0x228] sm:$0xff]
    %v548 = vld [vmem:[%s15 + $0x230] sm:$0xff]
    %v549 = vld [vmem:[%s15 + $0x238] sm:$0xff]
    %v550 = vld [vmem:[%s15 + $0x240] sm:$0xff]
    %v551 = vld [vmem:[%s15 + $0x248] sm:$0xff]
    %v552 = vld [vmem:[%s15 + $0x250] sm:$0xff]
    %v553 = vld [vmem:[%s15 + $0x258] sm:$0xff]
    %v554 = vld [vmem:[%s15 + $0x260] sm:$0xff]
    %v555 = vld [vmem:[%s15 + $0x268] sm:$0xff]
    %v556 = vld [vmem:[%s15 + $0x270] sm:$0xff]
    %v557 = vld [vmem:[%s15 + $0x278] sm:$0xff]
    %v558 = vld [vmem:[%s15 + $0x280] sm:$0xff]
    %v559 = vld [vmem:[%s15 + $0x288] sm:$0xff]
    %v560 = vld [vmem:[%s15 + $0x290] sm:$0xff]
    %v561 = vld [vmem:[%s15 + $0x298] sm:$0xff]
    %v562 = vld [vmem:[%s15 + $0x2a0] sm:$0xff]
    %v563 = vld [vmem:[%s15 + $0x2a8] sm:$0xff]
    %v564 = vld [vmem:[%s15 + $0x2b0] sm:$0xff]
    %v565 = vld [vmem:[%s15 + $0x2b8] sm:$0xff]
    %v566 = vld [vmem:[%s15 + $0x2c0] sm:$0xff]
    %v567 = vld [vmem:[%s15 + $0x2c8] sm:$0xff]
    %v568 = vld [vmem:[%s15 + $0x2d0] sm:$0xff]
    %v569 = vld [vmem:[%s15 + $0x2d8] sm:$0xff]
    %v570 = vld [vmem:[%s15 + $0x2e0] sm:$0xff]
    %v571 = vld [vmem:[%s15 + $0x2e8] sm:$0xff]
    %v572 = vld [vmem:[%s15 + $0x2f0] sm:$0xff]
    %v573 = vld [vmem:[%s15 + $0x2f8] sm:$0xff]
    %v574 = vld [vmem:[%s15 + $0x300] sm:$0xff]
    %v575 = vld [vmem:[%s15 + $0x308] sm:$0xff]
    %v576 = vld [vmem:[%s15 + $0x310] sm:$0xff]
    %v577 = vld [vmem:[%s15 + $0x318] sm:$0xff]
    %v578 = vld [vmem:[%s15 + $0x320] sm:$0xff]
    %v579 = vld [vmem:[%s15 + $0x328] sm:$0xff]
    %v580 = vld [vmem:[%s15 + $0x330] sm:$0xff]
    %v581 = vld [vmem:[%s15 + $0x338] sm:$0xff]
    %v582 = vld [vmem:[%s15 + $0x340] sm:$0xff]
    %v583 = vld [vmem:[%s15 + $0x348] sm:$0xff]
    %v584 = vld [vmem:[%s15 + $0x350] sm:$0xff]
    %v585 = vld [vmem:[%s15 + $0x358] sm:$0xff]
    %v586 = vld [vmem:[%s15 + $0x360] sm:$0xff]
    %v587 = vld [vmem:[%s15 + $0x368] sm:$0xff]
    %v588 = vld [vmem:[%s15 + $0x370] sm:$0xff]
    %v589 = vld [vmem:[%s15 + $0x378] sm:$0xff]
    %v590 = vld [vmem:[%s15 + $0x380] sm:$0xff]
    %v591 = vld [vmem:[%s15 + $0x388] sm:$0xff]
    %v592 = vld [vmem:[%s15 + $0x390] sm:$0xff]
    %v593 = vld [vmem:[%s15 + $0x398] sm:$0xff]
    %v594 = vld [vmem:[%s15 + $0x3a0] sm:$0xff]
    %v595 = vld [vmem:[%s15 + $0x3a8] sm:$0xff]
    %v596 = vld [vmem:[%s15 + $0x3b0] sm:$0xff]
    %v597 = vld [vmem:[%s15 + $0x3b8] sm:$0xff]
    %v598 = vld [vmem:[%s15 + $0x3c0] sm:$0xff]
    %v599 = vld [vmem:[%s15 + $0x3c8] sm:$0xff]
    %v600 = vld [vmem:[%s15 + $0x3d0] sm:$0xff]
    %v601 = vld [vmem:[%s15 + $0x3d8] sm:$0xff]
    %v602 = vld [vmem:[%s15 + $0x3e0] sm:$0xff]
    %v603 = vld [vmem:[%s15 + $0x3e8] sm:$0xff]
    %v604 = vld [vmem:[%s15 + $0x3f0] sm:$0xff]
    %v605 = vld [vmem:[%s15 + $0x3f8] sm:$0xff]
    %v606 = vld [vmem:[%s15 + $0x400] sm:$0xff]
    %v607 = vld [vmem:[%s15 + $0x408] sm:$0xff]
    %v608 = vld [vmem:[%s15 + $0x410] sm:$0xff]
    %v609 = vld [vmem:[%s15 + $0x418] sm:$0xff]
    %v610 = vld [vmem:[%s15 + $0x420] sm:$0xff]
    %v611 = vld [vmem:[%s15 + $0x428] sm:$0xff]
    %v612 = vld [vmem:[%s15 + $0x430] sm:$0xff]
    %v613 = vld [vmem:[%s15 + $0x438] sm:$0xff]
    %v614 = vld [vmem:[%s15 + $0x440] sm:$0xff]
    %v615 = vld [vmem:[%s15 + $0x448] sm:$0xff]
    %v616 = vld [vmem:[%s15 + $0x450] sm:$0xff]
    %v617 = vld [vmem:[%s15 + $0x458] sm:$0xff]
    %v618 = vld [vmem:[%s15 + $0x460] sm:$0xff]
    %v619 = vld [vmem:[%s15 + $0x468] sm:$0xff]
    %v620 = vld [vmem:[%s15 + $0x470] sm:$0xff]
    %v621 = vld [vmem:[%s15 + $0x478] sm:$0xff]
    %v622 = vld [vmem:[%s15 + $0x480] sm:$0xff]
    %v623 = vld [vmem:[%s15 + $0x488] sm:$0xff]
    %v624 = vld [vmem:[%s15 + $0x490] sm:$0xff]
    %v625 = vld [vmem:[%s15 + $0x498] sm:$0xff]
    %v626 = vld [vmem:[%s15 + $0x4a0] sm:$0xff]
    %v627 = vld [vmem:[%s15 + $0x4a8] sm:$0xff]
    %v628 = vld [vmem:[%s15 + $0x4b0] sm:$0xff]
    %v629 = vld [vmem:[%s15 + $0x4b8] sm:$0xff]
    %v630 = vld [vmem:[%s15 + $0x4c0] sm:$0xff]
    %v631 = vld [vmem:[%s15 + $0x4c8] sm:$0xff]
    %v632 = vld [vmem:[%s15 + $0x4d0] sm:$0xff]
    %v633 = vld [vmem:[%s15 + $0x4d8] sm:$0xff]
    %v634 = vld [vmem:[%s15 + $0x4e0] sm:$0xff]
    %v635 = vld [vmem:[%s15 + $0x4e8] sm:$0xff]
    %v636 = vld [vmem:[%s15 + $0x4f0] sm:$0xff]
    %v637 = vld [vmem:[%s15 + $0x4f8] sm:$0xff]
    %v638 = vld [vmem:[%s15 + $0x500] sm:$0xff]
    %v639 = vld [vmem:[%s15 + $0x508] sm:$0xff]
    %v640 = vld [vmem:[%s15 + $0x510] sm:$0xff]
    %v641 = vld [vmem:[%s15 + $0x518] sm:$0xff]
    %v642 = vld [vmem:[%s15 + $0x520] sm:$0xff]
    %v643 = vld [vmem:[%s15 + $0x528] sm:$0xff]
    %v644 = vld [vmem:[%s15 + $0x530] sm:$0xff]
    %v645 = vld [vmem:[%s15 + $0x538] sm:$0xff]
    %v646 = vld [vmem:[%s15 + $0x540] sm:$0xff]
    %v647 = vld [vmem:[%s15 + $0x548] sm:$0xff]
    %v648 = vld [vmem:[%s15 + $0x550] sm:$0xff]
    %v649 = vld [vmem:[%s15 + $0x558] sm:$0xff]
    %v650 = vld [vmem:[%s15 + $0x560] sm:$0xff]
    %v651 = vld [vmem:[%s15 + $0x568] sm:$0xff]
    %v652 = vld [vmem:[%s15 + $0x570] sm:$0xff]
    %v653 = vld [vmem:[%s15 + $0x578] sm:$0xff]
    %v654 = vld [vmem:[%s15 + $0x580] sm:$0xff]
    %v655 = vld [vmem:[%s15 + $0x588] sm:$0xff]
    %v656 = vld [vmem:[%s15 + $0x590] sm:$0xff]
    %v657 = vld [vmem:[%s15 + $0x598] sm:$0xff]
    %v658 = vld [vmem:[%s15 + $0x5a0] sm:$0xff]
    %v659 = vld [vmem:[%s15 + $0x5a8] sm:$0xff]
    %v660 = vld [vmem:[%s15 + $0x5b0] sm:$0xff]
    %v661 = vld [vmem:[%s15 + $0x5b8] sm:$0xff]
    %v662 = vld [vmem:[%s15 + $0x5c0] sm:$0xff]
    %v663 = vld [vmem:[%s15 + $0x5c8] sm:$0xff]
    %v664 = vld [vmem:[%s15 + $0x5d0] sm:$0xff]
    %v665 = vld [vmem:[%s15 + $0x5d8] sm:$0xff]
    %v666 = vld [vmem:[%s15 + $0x5e0] sm:$0xff]
    %v667 = vld [vmem:[%s15 + $0x5e8] sm:$0xff]
    %v668 = vld [vmem:[%s15 + $0x5f0] sm:$0xff]
    %v669 = vld [vmem:[%s15 + $0x5f8] sm:$0xff]
    %v670 = vld [vmem:[%s15 + $0x600] sm:$0xff]
    %v671 = vld [vmem:[%s15 + $0x608] sm:$0xff]
    %v672 = vld [vmem:[%s15 + $0x610] sm:$0xff]
    %v673 = vld [vmem:[%s15 + $0x618] sm:$0xff]
    %v674 = vld [vmem:[%s15 + $0x620] sm:$0xff]
    %v675 = vld [vmem:[%s15 + $0x628] sm:$0xff]
    %v676 = vld [vmem:[%s15 + $0x630] sm:$0xff]
    %v677 = vld [vmem:[%s15 + $0x638] sm:$0xff]
    %v678 = vld [vmem:[%s15 + $0x640] sm:$0xff]
    %v679 = vld [vmem:[%s15 + $0x648] sm:$0xff]
    %v680 = vld [vmem:[%s15 + $0x650] sm:$0xff]
    %v681 = vld [vmem:[%s15 + $0x658] sm:$0xff]
    %v682 = vld [vmem:[%s15 + $0x660] sm:$0xff]
    %v683 = vld [vmem:[%s15 + $0x668] sm:$0xff]
    %v684 = vld [vmem:[%s15 + $0x670] sm:$0xff]
    %v685 = vld [vmem:[%s15 + $0x678] sm:$0xff]
    %v686 = vld [vmem:[%s15 + $0x680] sm:$0xff]
    %v687 = vld [vmem:[%s15 + $0x688] sm:$0xff]
    %v688 = vld [vmem:[%s15 + $0x690] sm:$0xff]
    %v689 = vld [vmem:[%s15 + $0x698] sm:$0xff]
    %v690 = vld [vmem:[%s15 + $0x6a0] sm:$0xff]
    %v691 = vld [vmem:[%s15 + $0x6a8] sm:$0xff]
    %v692 = vld [vmem:[%s15 + $0x6b0] sm:$0xff]
    %v693 = vld [vmem:[%s15 + $0x6b8] sm:$0xff]
    %v694 = vld [vmem:[%s15 + $0x6c0] sm:$0xff]
    %v695 = vld [vmem:[%s15 + $0x6c8] sm:$0xff]
    %v696 = vld [vmem:[%s15 + $0x6d0] sm:$0xff]
    %v697 = vld [vmem:[%s15 + $0x6d8] sm:$0xff]
    %v698 = vld [vmem:[%s15 + $0x6e0] sm:$0xff]
    %v699 = vld [vmem:[%s15 + $0x6e8] sm:$0xff]
    %v700 = vld [vmem:[%s15 + $0x6f0] sm:$0xff]
    %v701 = vld [vmem:[%s15 + $0x6f8] sm:$0xff]
    %v702 = vpack.c.bf16 %v476, %v476
    %v703 = vpack.c.bf16 %v477, %v477
    %v704 = vpack.c.bf16 %v485, %v478
    %v705 = vpack.c.bf16 %v486, %v479
    %v706 = vpack.c.bf16 %v487, %v480
    %v707 = vpack.c.bf16 %v488, %v481
    %v708 = vpack.c.bf16 %v489, %v482
    %v709 = vpack.c.bf16 %v490, %v483
    %v710 = vpack.c.bf16 %v491, %v484
    %v711 = vpack.c.bf16 %v499, %v492
    %v712 = vpack.c.bf16 %v500, %v493
    %v713 = vpack.c.bf16 %v501, %v494
    %v714 = vpack.c.bf16 %v502, %v495
    %v715 = vpack.c.bf16 %v503, %v496
    %v716 = vpack.c.bf16 %v504, %v497
    %v717 = vpack.c.bf16 %v505, %v498
    %v718 = vpack.c.bf16 %v513, %v506
    %v719 = vpack.c.bf16 %v514, %v507
    %v720 = vpack.c.bf16 %v515, %v508
    %v721 = vpack.c.bf16 %v516, %v509
    %v722 = vpack.c.bf16 %v517, %v510
    %v723 = vpack.c.bf16 %v518, %v511
    %v724 = vpack.c.bf16 %v519, %v512
    %v725 = vpack.c.bf16 %v527, %v520
    %v726 = vpack.c.bf16 %v528, %v521
    %v727 = vpack.c.bf16 %v529, %v522
    %v728 = vpack.c.bf16 %v530, %v523
    %v729 = vpack.c.bf16 %v531, %v524
    %v730 = vpack.c.bf16 %v532, %v525
    %v731 = vpack.c.bf16 %v533, %v526
    %v732 = vpack.c.bf16 %v541, %v534
    %v733 = vpack.c.bf16 %v542, %v535
    %v734 = vpack.c.bf16 %v543, %v536
    %v735 = vpack.c.bf16 %v544, %v537
    %v736 = vpack.c.bf16 %v545, %v538
    %v737 = vpack.c.bf16 %v546, %v539
    %v738 = vpack.c.bf16 %v547, %v540
    %v739 = vpack.c.bf16 %v555, %v548
    %v740 = vpack.c.bf16 %v556, %v549
    %v741 = vpack.c.bf16 %v557, %v550
    %v742 = vpack.c.bf16 %v558, %v551
    %v743 = vpack.c.bf16 %v559, %v552
    %v744 = vpack.c.bf16 %v560, %v553
    %v745 = vpack.c.bf16 %v561, %v554
    %v746 = vpack.c.bf16 %v569, %v562
    %v747 = vpack.c.bf16 %v570, %v563
    %v748 = vpack.c.bf16 %v571, %v564
    %v749 = vpack.c.bf16 %v572, %v565
    %v750 = vpack.c.bf16 %v573, %v566
    %v751 = vpack.c.bf16 %v574, %v567
    %v752 = vpack.c.bf16 %v575, %v568
    %v753 = vpack.c.bf16 %v583, %v576
    %v754 = vpack.c.bf16 %v584, %v577
    %v755 = vpack.c.bf16 %v585, %v578
    %v756 = vpack.c.bf16 %v586, %v579
    %v757 = vpack.c.bf16 %v587, %v580
    %v758 = vpack.c.bf16 %v588, %v581
    %v759 = vpack.c.bf16 %v589, %v582
    %v760 = vpack.c.bf16 %v597, %v590
    %v761 = vpack.c.bf16 %v598, %v591
    %v762 = vpack.c.bf16 %v599, %v592
    %v763 = vpack.c.bf16 %v600, %v593
    %v764 = vpack.c.bf16 %v601, %v594
    %v765 = vpack.c.bf16 %v602, %v595
    %v766 = vpack.c.bf16 %v603, %v596
    %v767 = vpack.c.bf16 %v611, %v604
    %v768 = vpack.c.bf16 %v612, %v605
    %v769 = vpack.c.bf16 %v613, %v606
    %v770 = vpack.c.bf16 %v614, %v607
    %v771 = vpack.c.bf16 %v615, %v608
    %v772 = vpack.c.bf16 %v616, %v609
    %v773 = vpack.c.bf16 %v617, %v610
    %v774 = vpack.c.bf16 %v625, %v618
    %v775 = vpack.c.bf16 %v626, %v619
    %v776 = vpack.c.bf16 %v627, %v620
    %v777 = vpack.c.bf16 %v628, %v621
    %v778 = vpack.c.bf16 %v629, %v622
    %v779 = vpack.c.bf16 %v630, %v623
    %v780 = vpack.c.bf16 %v631, %v624
    %v781 = vpack.c.bf16 %v639, %v632
    %v782 = vpack.c.bf16 %v640, %v633
    %v783 = vpack.c.bf16 %v641, %v634
    %v784 = vpack.c.bf16 %v642, %v635
    %v785 = vpack.c.bf16 %v643, %v636
    %v786 = vpack.c.bf16 %v644, %v637
    %v787 = vpack.c.bf16 %v645, %v638
    %v788 = vpack.c.bf16 %v653, %v646
    %v789 = vpack.c.bf16 %v654, %v647
    %v790 = vpack.c.bf16 %v655, %v648
    %v791 = vpack.c.bf16 %v656, %v649
    %v792 = vpack.c.bf16 %v657, %v650
    %v793 = vpack.c.bf16 %v658, %v651
    %v794 = vpack.c.bf16 %v659, %v652
    %v795 = vpack.c.bf16 %v667, %v660
    %v796 = vpack.c.bf16 %v668, %v661
    %v797 = vpack.c.bf16 %v669, %v662
    %v798 = vpack.c.bf16 %v670, %v663
    %v799 = vpack.c.bf16 %v671, %v664
    %v800 = vpack.c.bf16 %v672, %v665
    %v801 = vpack.c.bf16 %v673, %v666
    %v802 = vpack.c.bf16 %v681, %v674
    %v803 = vpack.c.bf16 %v682, %v675
    %v804 = vpack.c.bf16 %v683, %v676
    %v805 = vpack.c.bf16 %v684, %v677
    %v806 = vpack.c.bf16 %v685, %v678
    %v807 = vpack.c.bf16 %v686, %v679
    %v808 = vpack.c.bf16 %v687, %v680
    %v809 = vpack.c.bf16 %v695, %v688
    %v810 = vpack.c.bf16 %v696, %v689
    %v811 = vpack.c.bf16 %v697, %v690
    %v812 = vpack.c.bf16 %v698, %v691
    %v813 = vpack.c.bf16 %v699, %v692
    %v814 = vpack.c.bf16 %v700, %v693
    %v815 = vpack.c.bf16 %v701, %v694
    %v816 = vld [vmem:[%s16] sm:$0xff]
    %v818 = vperm.slane %v816, 0
    %v819 = vperm.slane %v816, 1
    %v820 = vperm.slane %v816, 2
    %v821 = vperm.slane %v816, 3
    %v822 = vperm.slane %v816, 4
    %v823 = vperm.slane %v816, 5
    %v824 = vperm.slane %v816, 6
    %832 = vmatpush.bf16.msra.mxu0 %v753
    %833 = vmatpush.bf16.msra.mxu0 %v746
    %834 = vmatpush.bf16.msra.mxu0 %v739
    %835 = vmatpush.bf16.msra.mxu0 %v732
    %836 = vmatpush.bf16.msra.mxu0 %v725
    %837 = vmatpush.bf16.msra.mxu0 %v718
    %838 = vmatpush.bf16.msra.mxu0 %v711
    %839 = vmatpush.bf16.msra.mxu0 %v704
    %840 = vmatmul.bf16.gmra.mxu0 %v702
    %v841 = vpop.f32.mrf.mxu0
    %v842 = vadd.f32 %v818, %v841
    %v843 = vpop.f32.mrf.mxu0
    %844 = vdwg.mxu0
    %845 = vmatpush.bf16.msra.mxu0 %v809
    %846 = vmatpush.bf16.msra.mxu0 %v802
    %847 = vmatpush.bf16.msra.mxu0 %v795
    %848 = vmatpush.bf16.msra.mxu0 %v788
    %849 = vmatpush.bf16.msra.mxu0 %v781
    %850 = vmatpush.bf16.msra.mxu0 %v774
    %851 = vmatpush.bf16.msra.mxu0 %v767
    %852 = vmatpush.bf16.msra.mxu0 %v760
    %853 = vmatmul.bf16.gmra.mxu0 %v703
    %v854 = vpop.f32.mrf.mxu0
    %v855 = vadd.f32 %v842, %v854
    %v856 = vpop.f32.mrf.mxu0
    %857 = vdwg.mxu0
    %858 = vmatpush.bf16.msra.mxu0 %v754
    %859 = vmatpush.bf16.msra.mxu0 %v747
    %860 = vmatpush.bf16.msra.mxu0 %v740
    %861 = vmatpush.bf16.msra.mxu0 %v733
    %862 = vmatpush.bf16.msra.mxu0 %v726
    %863 = vmatpush.bf16.msra.mxu0 %v719
    %864 = vmatpush.bf16.msra.mxu0 %v712
    %865 = vmatpush.bf16.msra.mxu0 %v705
    %866 = vmatmul.bf16.gmra.mxu0 %v702
    %v867 = vpop.f32.mrf.mxu0
    %v868 = vadd.f32 %v819, %v867
    %v869 = vpop.f32.mrf.mxu0
    %870 = vdwg.mxu0
    %871 = vmatpush.bf16.msra.mxu0 %v810
    %872 = vmatpush.bf16.msra.mxu0 %v803
    %873 = vmatpush.bf16.msra.mxu0 %v796
    %874 = vmatpush.bf16.msra.mxu0 %v789
    %875 = vmatpush.bf16.msra.mxu0 %v782
    %876 = vmatpush.bf16.msra.mxu0 %v775
    %877 = vmatpush.bf16.msra.mxu0 %v768
    %878 = vmatpush.bf16.msra.mxu0 %v761
    %879 = vmatmul.bf16.gmra.mxu0 %v703
    %v880 = vpop.f32.mrf.mxu0
    %v881 = vadd.f32 %v868, %v880
    %v882 = vpop.f32.mrf.mxu0
    %883 = vdwg.mxu0
    %884 = vmatpush.bf16.msra.mxu0 %v755
    %885 = vmatpush.bf16.msra.mxu0 %v748
    %886 = vmatpush.bf16.msra.mxu0 %v741
    %887 = vmatpush.bf16.msra.mxu0 %v734
    %888 = vmatpush.bf16.msra.mxu0 %v727
    %889 = vmatpush.bf16.msra.mxu0 %v720
    %890 = vmatpush.bf16.msra.mxu0 %v713
    %891 = vmatpush.bf16.msra.mxu0 %v706
    %892 = vmatmul.bf16.gmra.mxu0 %v702
    %v893 = vpop.f32.mrf.mxu0
    %v894 = vadd.f32 %v820, %v893
    %v895 = vpop.f32.mrf.mxu0
    %896 = vdwg.mxu0
    %897 = vmatpush.bf16.msra.mxu0 %v811
    %898 = vmatpush.bf16.msra.mxu0 %v804
    %899 = vmatpush.bf16.msra.mxu0 %v797
    %900 = vmatpush.bf16.msra.mxu0 %v790
    %901 = vmatpush.bf16.msra.mxu0 %v783
    %902 = vmatpush.bf16.msra.mxu0 %v776
    %903 = vmatpush.bf16.msra.mxu0 %v769
    %904 = vmatpush.bf16.msra.mxu0 %v762
    %905 = vmatmul.bf16.gmra.mxu0 %v703
    %v906 = vpop.f32.mrf.mxu0
    %v907 = vadd.f32 %v894, %v906
    %v908 = vpop.f32.mrf.mxu0
    %909 = vdwg.mxu0
    %910 = vmatpush.bf16.msra.mxu0 %v756
    %911 = vmatpush.bf16.msra.mxu0 %v749
    %912 = vmatpush.bf16.msra.mxu0 %v742
    %913 = vmatpush.bf16.msra.mxu0 %v735
    %914 = vmatpush.bf16.msra.mxu0 %v728
    %915 = vmatpush.bf16.msra.mxu0 %v721
    %916 = vmatpush.bf16.msra.mxu0 %v714
    %917 = vmatpush.bf16.msra.mxu0 %v707
    %918 = vmatmul.bf16.gmra.mxu0 %v702
    %v919 = vpop.f32.mrf.mxu0
    %v920 = vadd.f32 %v821, %v919
    %v921 = vpop.f32.mrf.mxu0
    %922 = vdwg.mxu0
    %923 = vmatpush.bf16.msra.mxu0 %v812
    %924 = vmatpush.bf16.msra.mxu0 %v805
    %925 = vmatpush.bf16.msra.mxu0 %v798
    %926 = vmatpush.bf16.msra.mxu0 %v791
    %927 = vmatpush.bf16.msra.mxu0 %v784
    %928 = vmatpush.bf16.msra.mxu0 %v777
    %929 = vmatpush.bf16.msra.mxu0 %v770
    %930 = vmatpush.bf16.msra.mxu0 %v763
    %931 = vmatmul.bf16.gmra.mxu0 %v703
    %v932 = vpop.f32.mrf.mxu0
    %v933 = vadd.f32 %v920, %v932
    %v934 = vpop.f32.mrf.mxu0
    %935 = vdwg.mxu0
    %936 = vmatpush.bf16.msra.mxu0 %v757
    %937 = vmatpush.bf16.msra.mxu0 %v750
    %938 = vmatpush.bf16.msra.mxu0 %v743
    %939 = vmatpush.bf16.msra.mxu0 %v736
    %940 = vmatpush.bf16.msra.mxu0 %v729
    %941 = vmatpush.bf16.msra.mxu0 %v722
    %942 = vmatpush.bf16.msra.mxu0 %v715
    %943 = vmatpush.bf16.msra.mxu0 %v708
    %944 = vmatmul.bf16.gmra.mxu0 %v702
    %v945 = vpop.f32.mrf.mxu0
    %v946 = vadd.f32 %v822, %v945
    %v947 = vpop.f32.mrf.mxu0
    %948 = vdwg.mxu0
    %949 = vmatpush.bf16.msra.mxu0 %v813
    %950 = vmatpush.bf16.msra.mxu0 %v806
    %951 = vmatpush.bf16.msra.mxu0 %v799
    %952 = vmatpush.bf16.msra.mxu0 %v792
    %953 = vmatpush.bf16.msra.mxu0 %v785
    %954 = vmatpush.bf16.msra.mxu0 %v778
    %955 = vmatpush.bf16.msra.mxu0 %v771
    %956 = vmatpush.bf16.msra.mxu0 %v764
    %957 = vmatmul.bf16.gmra.mxu0 %v703
    %v958 = vpop.f32.mrf.mxu0
    %v959 = vadd.f32 %v946, %v958
    %v960 = vpop.f32.mrf.mxu0
    %961 = vdwg.mxu0
    %962 = vmatpush.bf16.msra.mxu0 %v758
    %963 = vmatpush.bf16.msra.mxu0 %v751
    %964 = vmatpush.bf16.msra.mxu0 %v744
    %965 = vmatpush.bf16.msra.mxu0 %v737
    %966 = vmatpush.bf16.msra.mxu0 %v730
    %967 = vmatpush.bf16.msra.mxu0 %v723
    %968 = vmatpush.bf16.msra.mxu0 %v716
    %969 = vmatpush.bf16.msra.mxu0 %v709
    %970 = vmatmul.bf16.gmra.mxu0 %v702
    %v971 = vpop.f32.mrf.mxu0
    %v972 = vadd.f32 %v823, %v971
    %v973 = vpop.f32.mrf.mxu0
    %974 = vdwg.mxu0
    %975 = vmatpush.bf16.msra.mxu0 %v814
    %976 = vmatpush.bf16.msra.mxu0 %v807
    %977 = vmatpush.bf16.msra.mxu0 %v800
    %978 = vmatpush.bf16.msra.mxu0 %v793
    %979 = vmatpush.bf16.msra.mxu0 %v786
    %980 = vmatpush.bf16.msra.mxu0 %v779
    %981 = vmatpush.bf16.msra.mxu0 %v772
    %982 = vmatpush.bf16.msra.mxu0 %v765
    %983 = vmatmul.bf16.gmra.mxu0 %v703
    %v984 = vpop.f32.mrf.mxu0
    %v985 = vadd.f32 %v972, %v984
    %v986 = vpop.f32.mrf.mxu0
    %987 = vdwg.mxu0
    %988 = vmatpush.bf16.msra.mxu0 %v759
    %989 = vmatpush.bf16.msra.mxu0 %v752
    %990 = vmatpush.bf16.msra.mxu0 %v745
    %991 = vmatpush.bf16.msra.mxu0 %v738
    %992 = vmatpush.bf16.msra.mxu0 %v731
    %993 = vmatpush.bf16.msra.mxu0 %v724
    %994 = vmatpush.bf16.msra.mxu0 %v717
    %995 = vmatpush.bf16.msra.mxu0 %v710
    %996 = vmatmul.bf16.gmra.mxu0 %v702
    %v997 = vpop.f32.mrf.mxu0
    %v998 = vadd.f32 %v824, %v997
    %v999 = vpop.f32.mrf.mxu0
    %1000 = vdwg.mxu0
    %1001 = vmatpush.bf16.msra.mxu0 %v815
    %1002 = vmatpush.bf16.msra.mxu0 %v808
    %1003 = vmatpush.bf16.msra.mxu0 %v801
    %1004 = vmatpush.bf16.msra.mxu0 %v794
    %1005 = vmatpush.bf16.msra.mxu0 %v787
    %1006 = vmatpush.bf16.msra.mxu0 %v780
    %1007 = vmatpush.bf16.msra.mxu0 %v773
    %1008 = vmatpush.bf16.msra.mxu0 %v766
    %1009 = vmatmul.bf16.gmra.mxu0 %v703
    %v1010 = vpop.f32.mrf.mxu0
    %v1011 = vadd.f32 %v998, %v1010
    %v1012 = vpop.f32.mrf.mxu0
    %1013 = vdwg.mxu0
    %v1014 = vxor.u32 %v855, 2147483648
    %v1015 = vxor.u32 %v881, 2147483648
    %v1016 = vxor.u32 %v907, 2147483648
    %v1017 = vxor.u32 %v933, 2147483648
    %v1018 = vxor.u32 %v959, 2147483648
    %v1019 = vxor.u32 %v985, 2147483648
    %v1020 = vxor.u32 %v1011, 2147483648
    %v1021 = vmul.f32 %v1014, 1.442695
    %v1022 = vpow.pop %v1021
    %v1023 = vmul.f32 %v1015, 1.442695
    %v1024 = vpow.pop %v1023
    %v1025 = vmul.f32 %v1016, 1.442695
    %v1026 = vpow.pop %v1025
    %v1027 = vmul.f32 %v1017, 1.442695
    %v1028 = vpow.pop %v1027
    %v1029 = vmul.f32 %v1018, 1.442695
    %v1030 = vpow.pop %v1029
    %v1031 = vmul.f32 %v1019, 1.442695
    %v1032 = vpow.pop %v1031
    %v1033 = vmul.f32 %v1020, 1.442695
    %v1034 = vpow.pop %v1033
    %v1035 = vadd.f32 %v1022, 1.0
    %v1036 = vadd.f32 %v1024, 1.0
    %v1037 = vadd.f32 %v1026, 1.0
    %v1038 = vadd.f32 %v1028, 1.0
    %v1039 = vadd.f32 %v1030, 1.0
    %v1040 = vadd.f32 %v1032, 1.0
    %v1041 = vadd.f32 %v1034, 1.0
    %v1042 = vrcp.pop %v1035
    %v1043 = vmul.f32 %v1035, %v1042
    %v1044 = vsub.f32 1.0, %v1043
    %v1045 = vmul.f32 %v1042, %v1044
    %v1046 = vadd.f32 %v1042, %v1045
    %vm1047 = vweird.f32 %v1035
    %vm1048 = vweird.f32 %v1042
    %vm1049 = vmor %vm1047, %vm1048
    %v1050 = vsel %vm1049, %v1042, %v1046
    %v1051 = vand.u32 2147483647, %v1035
    %vm1052 = vcmp.eq.f32.partialorder %v1051, 8.507059e+37
    %v1053 = vand.u32 %v1035, 2147483648
    %v1054 = vor.u32 1.1754944e-38, %v1053
    %v1055 = vsel %vm1052, %v1054, %v1050
    %v1056 = vmul.f32 1.0, %v1055
    %v1057 = vrcp.pop %v1036
    %v1058 = vmul.f32 %v1036, %v1057
    %v1059 = vsub.f32 1.0, %v1058
    %v1060 = vmul.f32 %v1057, %v1059
    %v1061 = vadd.f32 %v1057, %v1060
    %vm1062 = vweird.f32 %v1036
    %vm1063 = vweird.f32 %v1057
    %vm1064 = vmor %vm1062, %vm1063
    %v1065 = vsel %vm1064, %v1057, %v1061
    %v1066 = vand.u32 2147483647, %v1036
    %vm1067 = vcmp.eq.f32.partialorder %v1066, 8.507059e+37
    %v1068 = vand.u32 %v1036, 2147483648
    %v1069 = vor.u32 1.1754944e-38, %v1068
    %v1070 = vsel %vm1067, %v1069, %v1065
    %v1071 = vmul.f32 1.0, %v1070
    %v1072 = vrcp.pop %v1037
    %v1073 = vmul.f32 %v1037, %v1072
    %v1074 = vsub.f32 1.0, %v1073
    %v1075 = vmul.f32 %v1072, %v1074
    %v1076 = vadd.f32 %v1072, %v1075
    %vm1077 = vweird.f32 %v1037
    %vm1078 = vweird.f32 %v1072
    %vm1079 = vmor %vm1077, %vm1078
    %v1080 = vsel %vm1079, %v1072, %v1076
    %v1081 = vand.u32 2147483647, %v1037
    %vm1082 = vcmp.eq.f32.partialorder %v1081, 8.507059e+37
    %v1083 = vand.u32 %v1037, 2147483648
    %v1084 = vor.u32 1.1754944e-38, %v1083
    %v1085 = vsel %vm1082, %v1084, %v1080
    %v1086 = vmul.f32 1.0, %v1085
    %v1087 = vrcp.pop %v1038
    %v1088 = vmul.f32 %v1038, %v1087
    %v1089 = vsub.f32 1.0, %v1088
    %v1090 = vmul.f32 %v1087, %v1089
    %v1091 = vadd.f32 %v1087, %v1090
    %vm1092 = vweird.f32 %v1038
    %vm1093 = vweird.f32 %v1087
    %vm1094 = vmor %vm1092, %vm1093
    %v1095 = vsel %vm1094, %v1087, %v1091
    %v1096 = vand.u32 2147483647, %v1038
    %vm1097 = vcmp.eq.f32.partialorder %v1096, 8.507059e+37
    %v1098 = vand.u32 %v1038, 2147483648
    %v1099 = vor.u32 1.1754944e-38, %v1098
    %v1100 = vsel %vm1097, %v1099, %v1095
    %v1101 = vmul.f32 1.0, %v1100
    %v1102 = vrcp.pop %v1039
    %v1103 = vmul.f32 %v1039, %v1102
    %v1104 = vsub.f32 1.0, %v1103
    %v1105 = vmul.f32 %v1102, %v1104
    %v1106 = vadd.f32 %v1102, %v1105
    %vm1107 = vweird.f32 %v1039
    %vm1108 = vweird.f32 %v1102
    %vm1109 = vmor %vm1107, %vm1108
    %v1110 = vsel %vm1109, %v1102, %v1106
    %v1111 = vand.u32 2147483647, %v1039
    %vm1112 = vcmp.eq.f32.partialorder %v1111, 8.507059e+37
    %v1113 = vand.u32 %v1039, 2147483648
    %v1114 = vor.u32 1.1754944e-38, %v1113
    %v1115 = vsel %vm1112, %v1114, %v1110
    %v1116 = vmul.f32 1.0, %v1115
    %v1117 = vrcp.pop %v1040
    %v1118 = vmul.f32 %v1040, %v1117
    %v1119 = vsub.f32 1.0, %v1118
    %v1120 = vmul.f32 %v1117, %v1119
    %v1121 = vadd.f32 %v1117, %v1120
    %vm1122 = vweird.f32 %v1040
    %vm1123 = vweird.f32 %v1117
    %vm1124 = vmor %vm1122, %vm1123
    %v1125 = vsel %vm1124, %v1117, %v1121
    %v1126 = vand.u32 2147483647, %v1040
    %vm1127 = vcmp.eq.f32.partialorder %v1126, 8.507059e+37
    %v1128 = vand.u32 %v1040, 2147483648
    %v1129 = vor.u32 1.1754944e-38, %v1128
    %v1130 = vsel %vm1127, %v1129, %v1125
    %v1131 = vmul.f32 1.0, %v1130
    %v1132 = vrcp.pop %v1041
    %v1133 = vmul.f32 %v1041, %v1132
    %v1134 = vsub.f32 1.0, %v1133
    %v1135 = vmul.f32 %v1132, %v1134
    %v1136 = vadd.f32 %v1132, %v1135
    %vm1137 = vweird.f32 %v1041
    %vm1138 = vweird.f32 %v1132
    %vm1139 = vmor %vm1137, %vm1138
    %v1140 = vsel %vm1139, %v1132, %v1136
    %v1141 = vand.u32 2147483647, %v1041
    %vm1142 = vcmp.eq.f32.partialorder %v1141, 8.507059e+37
    %v1143 = vand.u32 %v1041, 2147483648
    %v1144 = vor.u32 1.1754944e-38, %v1143
    %v1145 = vsel %vm1142, %v1144, %v1140
    %v1146 = vmul.f32 1.0, %v1145
    %v1154 = vrot.slane %v1071, 6
    %v1155 = vrot.slane %v1086, 4
    %v1156 = vrot.slane %v1101, 2
    %v1157 = vrot.slane %v1131, 6
    %v1158 = vrot.slane %v1146, 4
    %v1159 = vsel %vm261, %v1056, %v1154
    %vm1160 = vcmask 1045508
    %v1161 = vsel %vm1160, %v1155, %v1156
    %vm1162 = vcmask 1043456
    %v1163 = vsel %vm1162, %v1159, %v1161
    %v1164 = vsel %vm261, %v1116, %v1157
    %v1165 = vsel %vm1162, %v1164, %v1158
    %1168 = vst [vmem:[%s17] sm:$0xff] %v1163
    %1169 = vst [vmem:[%s17 + $0x8] sm:$0x3f] %v1165
    // Predicated region
    $region90: #{cvae_forward.11} parent=1 // pred_check
      _
    $region91: #{cvae_forward.11} parent=1 // pred_check_branch
      %1171 = sbr.rel (0) target = $region93
    $region92: #{cvae_forward.11} parent=1 // pred_region
      _
    $region93: #{cvae_forward.11} parent=1 // pred_fallthru
      _
    // Predicated region
    $region94: #{cvae_forward.11} parent=1 // pred_check
      _
    $region95: #{cvae_forward.11} parent=1 // pred_check_branch
      %1173 = sbr.rel (0) target = $region97
    $region96: #{cvae_forward.11} parent=1 // pred_region
      _
    $region97: #{cvae_forward.11} parent=1 // pred_fallthru
      _
    %1174 = vsyncpa [#allocation3], 1
    %1175 = vsyncpa [#allocation5], 1
    %1176 = vsyncpa [#allocation8], 1

// kernel: cvae_forward.10
$region0: #{cvae_forward.10}
  #allocation0 [shape = 'u32[]', space=smem, size = 0x4, offset = 0x4, fixed_abs, tag = 'smem constant byte address 0x4 - core index']
  #allocation1 [shape = 'u32[72,128]{1,0:T(1,128)}', space=vmem, size = 0x9000, scoped, tag = 'internal scratch']
  %s0 = inlined_call_operand.vmem [shape: f32[2,576], index: 0, kind: input, shape index: {}]
  %s1 = inlined_call_operand.vmem [shape: f32[2,16], index: 1, kind: input, shape index: {}]
  %s2 = inlined_call_operand.vmem [shape: f32[576,256], index: 2, kind: input, shape index: {}]
  %s3 = inlined_call_operand.vmem [shape: f32[1,256], index: 3, kind: input, shape index: {}]
  %s4 = inlined_call_operand.vmem [shape: f32[1,256], index: 4, kind: input, shape index: {}]
  %s5 = inlined_call_operand.vmem [shape: f32[1,256], index: 5, kind: input, shape index: {}]
  %s6 = inlined_call_operand.vmem [shape: f32[256,128], index: 6, kind: input, shape index: {}]
  %s7 = inlined_call_operand.vmem [shape: f32[1,128], index: 7, kind: input, shape index: {}]
  %s8 = inlined_call_operand.vmem [shape: f32[1,128], index: 8, kind: input, shape index: {}]
  %s9 = inlined_call_operand.vmem [shape: f32[1,128], index: 9, kind: input, shape index: {}]
  %s10 = inlined_call_operand.vmem [shape: f32[128,128], index: 10, kind: input, shape index: {}]
  %s11 = inlined_call_operand.vmem [shape: f32[16,128], index: 11, kind: input, shape index: {}]
  %s12 = inlined_call_operand.vmem [shape: f32[1,128], index: 12, kind: input, shape index: {}]
  %s13 = inlined_call_operand.vmem [shape: f32[1,128], index: 13, kind: input, shape index: {}]
  %s14 = inlined_call_operand.vmem [shape: f32[1,128], index: 14, kind: input, shape index: {}]
  %s15 = inlined_call_operand.vmem [shape: f32[128,32], index: 15, kind: input, shape index: {}]
  %s16 = inlined_call_operand.vmem [shape: f32[1,32], index: 16, kind: input, shape index: {}]
  %s17 = inlined_call_operand.vmem [shape: f32[2,32], index: 17, kind: output, shape index: {}]
  %s18 = sld [smem:[#allocation0]]
  $region78: #{cvae_forward.10} parent=0
    _
  %s20 = ssub.s32 1, %s18
  %s21 = scalar_select 0, %s20, %s18
  // Predicated region
  $region2: #{cvae_forward.10} parent=0 // pred_check
    _
  $region3: #{cvae_forward.10} parent=0 // pred_check_branch
    %23 = sbr.rel (0) target = $region5
  $region4: #{cvae_forward.10} parent=0 // pred_region
    _
  $region5: #{cvae_forward.10} parent=0 // pred_fallthru
    _
  // Predicated region
  $region6: #{cvae_forward.10} parent=0 // pred_check
    _
  $region7: #{cvae_forward.10} parent=0 // pred_check_branch
    %25 = sbr.rel (0) target = $region9
  $region8: #{cvae_forward.10} parent=0 // pred_region
    _
  $region9: #{cvae_forward.10} parent=0 // pred_fallthru
    _
  // Predicated region
  $region10: #{cvae_forward.10} parent=0 // pred_check
    _
  $region11: #{cvae_forward.10} parent=0 // pred_check_branch
    %27 = sbr.rel (0) target = $region13
  $region12: #{cvae_forward.10} parent=0 // pred_region
    _
  $region13: #{cvae_forward.10} parent=0 // pred_fallthru
    _
  // Predicated region
  $region14: #{cvae_forward.10} parent=0 // pred_check
    _
  $region15: #{cvae_forward.10} parent=0 // pred_check_branch
    %29 = sbr.rel (0) target = $region17
  $region16: #{cvae_forward.10} parent=0 // pred_region
    _
  $region17: #{cvae_forward.10} parent=0 // pred_fallthru
    _
  // Predicated region
  $region18: #{cvae_forward.10} parent=0 // pred_check
    _
  $region19: #{cvae_forward.10} parent=0 // pred_check_branch
    %31 = sbr.rel (0) target = $region21
  $region20: #{cvae_forward.10} parent=0 // pred_region
    _
  $region21: #{cvae_forward.10} parent=0 // pred_fallthru
    _
  // Predicated region
  $region22: #{cvae_forward.10} parent=0 // pred_check
    _
  $region23: #{cvae_forward.10} parent=0 // pred_check_branch
    %33 = sbr.rel (0) target = $region25
  $region24: #{cvae_forward.10} parent=0 // pred_region
    _
  $region25: #{cvae_forward.10} parent=0 // pred_fallthru
    _
  // Predicated region
  $region26: #{cvae_forward.10} parent=0 // pred_check
    _
  $region27: #{cvae_forward.10} parent=0 // pred_check_branch
    %35 = sbr.rel (0) target = $region29
  $region28: #{cvae_forward.10} parent=0 // pred_region
    _
  $region29: #{cvae_forward.10} parent=0 // pred_fallthru
    _
  // Predicated region
  $region30: #{cvae_forward.10} parent=0 // pred_check
    _
  $region31: #{cvae_forward.10} parent=0 // pred_check_branch
    %37 = sbr.rel (0) target = $region33
  $region32: #{cvae_forward.10} parent=0 // pred_region
    _
  $region33: #{cvae_forward.10} parent=0 // pred_fallthru
    _
  // Predicated region
  $region34: #{cvae_forward.10} parent=0 // pred_check
    _
  $region35: #{cvae_forward.10} parent=0 // pred_check_branch
    %39 = sbr.rel (0) target = $region37
  $region36: #{cvae_forward.10} parent=0 // pred_region
    _
  $region37: #{cvae_forward.10} parent=0 // pred_fallthru
    _
  // Predicated region
  $region38: #{cvae_forward.10} parent=0 // pred_check
    _
  $region39: #{cvae_forward.10} parent=0 // pred_check_branch
    %41 = sbr.rel (0) target = $region41
  $region40: #{cvae_forward.10} parent=0 // pred_region
    _
  $region41: #{cvae_forward.10} parent=0 // pred_fallthru
    _
  // Predicated region
  $region42: #{cvae_forward.10} parent=0 // pred_check
    _
  $region43: #{cvae_forward.10} parent=0 // pred_check_branch
    %43 = sbr.rel (0) target = $region45
  $region44: #{cvae_forward.10} parent=0 // pred_region
    _
  $region45: #{cvae_forward.10} parent=0 // pred_fallthru
    _
  // Predicated region
  $region46: #{cvae_forward.10} parent=0 // pred_check
    _
  $region47: #{cvae_forward.10} parent=0 // pred_check_branch
    %45 = sbr.rel (0) target = $region49
  $region48: #{cvae_forward.10} parent=0 // pred_region
    _
  $region49: #{cvae_forward.10} parent=0 // pred_fallthru
    _
  // Predicated region
  $region50: #{cvae_forward.10} parent=0 // pred_check
    _
  $region51: #{cvae_forward.10} parent=0 // pred_check_branch
    %47 = sbr.rel (0) target = $region53
  $region52: #{cvae_forward.10} parent=0 // pred_region
    _
  $region53: #{cvae_forward.10} parent=0 // pred_fallthru
    _
  // Predicated region
  $region54: #{cvae_forward.10} parent=0 // pred_check
    _
  $region55: #{cvae_forward.10} parent=0 // pred_check_branch
    %49 = sbr.rel (0) target = $region57
  $region56: #{cvae_forward.10} parent=0 // pred_region
    _
  $region57: #{cvae_forward.10} parent=0 // pred_fallthru
    _
  // Predicated region
  $region58: #{cvae_forward.10} parent=0 // pred_check
    _
  $region59: #{cvae_forward.10} parent=0 // pred_check_branch
    %51 = sbr.rel (0) target = $region61
  $region60: #{cvae_forward.10} parent=0 // pred_region
    _
  $region61: #{cvae_forward.10} parent=0 // pred_fallthru
    _
  // Predicated region
  $region62: #{cvae_forward.10} parent=0 // pred_check
    _
  $region63: #{cvae_forward.10} parent=0 // pred_check_branch
    %53 = sbr.rel (0) target = $region65
  $region64: #{cvae_forward.10} parent=0 // pred_region
    _
  $region65: #{cvae_forward.10} parent=0 // pred_fallthru
    _
  // Predicated region
  $region66: #{cvae_forward.10} parent=0 // pred_check
    _
  $region67: #{cvae_forward.10} parent=0 // pred_check_branch
    %55 = sbr.rel (0) target = $region69
  $region68: #{cvae_forward.10} parent=0 // pred_region
    _
  $region69: #{cvae_forward.10} parent=0 // pred_fallthru
    _
  %v57 = vld [vmem:[%s0] sm:$0xff]
  %v58 = vld [vmem:[%s0 + $0x8] sm:$0x3]
  %v59 = vld [vmem:[%s1] sm:$0x3]
  %v60 = vld [vmem:[%s2] sm:$0xff]
  %v61 = vld [vmem:[%s2 + $0x8] sm:$0xff]
  %v62 = vld [vmem:[%s2 + $0x10] sm:$0xff]
  %v63 = vld [vmem:[%s2 + $0x18] sm:$0xff]
  %v64 = vld [vmem:[%s2 + $0x20] sm:$0xff]
  %v65 = vld [vmem:[%s2 + $0x28] sm:$0xff]
  %v66 = vld [vmem:[%s2 + $0x30] sm:$0xff]
  %v67 = vld [vmem:[%s2 + $0x38] sm:$0xff]
  %v68 = vld [vmem:[%s2 + $0x40] sm:$0xff]
  %v69 = vld [vmem:[%s2 + $0x48] sm:$0xff]
  %v70 = vld [vmem:[%s2 + $0x50] sm:$0xff]
  %v71 = vld [vmem:[%s2 + $0x58] sm:$0xff]
  %v72 = vld [vmem:[%s2 + $0x60] sm:$0xff]
  %v73 = vld [vmem:[%s2 + $0x68] sm:$0xff]
  %v74 = vld [vmem:[%s2 + $0x70] sm:$0xff]
  %v75 = vld [vmem:[%s2 + $0x78] sm:$0xff]
  %v76 = vld [vmem:[%s2 + $0x80] sm:$0xff]
  %v77 = vld [vmem:[%s2 + $0x88] sm:$0xff]
  %v78 = vld [vmem:[%s2 + $0x90] sm:$0xff]
  %v79 = vld [vmem:[%s2 + $0x98] sm:$0xff]
  %v80 = vld [vmem:[%s2 + $0xa0] sm:$0xff]
  %v81 = vld [vmem:[%s2 + $0xa8] sm:$0xff]
  %v82 = vld [vmem:[%s2 + $0xb0] sm:$0xff]
  %v83 = vld [vmem:[%s2 + $0xb8] sm:$0xff]
  %v84 = vld [vmem:[%s2 + $0xc0] sm:$0xff]
  %v85 = vld [vmem:[%s2 + $0xc8] sm:$0xff]
  %v86 = vld [vmem:[%s2 + $0xd0] sm:$0xff]
  %v87 = vld [vmem:[%s2 + $0xd8] sm:$0xff]
  %v88 = vld [vmem:[%s2 + $0xe0] sm:$0xff]
  %v89 = vld [vmem:[%s2 + $0xe8] sm:$0xff]
  %v90 = vld [vmem:[%s2 + $0xf0] sm:$0xff]
  %v91 = vld [vmem:[%s2 + $0xf8] sm:$0xff]
  %v92 = vld [vmem:[%s2 + $0x100] sm:$0xff]
  %v93 = vld [vmem:[%s2 + $0x108] sm:$0xff]
  %v94 = vld [vmem:[%s2 + $0x110] sm:$0xff]
  %v95 = vld [vmem:[%s2 + $0x118] sm:$0xff]
  %v96 = vld [vmem:[%s2 + $0x120] sm:$0xff]
  %v97 = vld [vmem:[%s2 + $0x128] sm:$0xff]
  %v98 = vld [vmem:[%s2 + $0x130] sm:$0xff]
  %v99 = vld [vmem:[%s2 + $0x138] sm:$0xff]
  %v100 = vld [vmem:[%s2 + $0x140] sm:$0xff]
  %v101 = vld [vmem:[%s2 + $0x148] sm:$0xff]
  %v102 = vld [vmem:[%s2 + $0x150] sm:$0xff]
  %v103 = vld [vmem:[%s2 + $0x158] sm:$0xff]
  %v104 = vld [vmem:[%s2 + $0x160] sm:$0xff]
  %v105 = vld [vmem:[%s2 + $0x168] sm:$0xff]
  %v106 = vld [vmem:[%s2 + $0x170] sm:$0xff]
  %v107 = vld [vmem:[%s2 + $0x178] sm:$0xff]
  %v108 = vld [vmem:[%s2 + $0x180] sm:$0xff]
  %v109 = vld [vmem:[%s2 + $0x188] sm:$0xff]
  %v110 = vld [vmem:[%s2 + $0x190] sm:$0xff]
  %v111 = vld [vmem:[%s2 + $0x198] sm:$0xff]
  %v112 = vld [vmem:[%s2 + $0x1a0] sm:$0xff]
  %v113 = vld [vmem:[%s2 + $0x1a8] sm:$0xff]
  %v114 = vld [vmem:[%s2 + $0x1b0] sm:$0xff]
  %v115 = vld [vmem:[%s2 + $0x1b8] sm:$0xff]
  %v116 = vld [vmem:[%s2 + $0x1c0] sm:$0xff]
  %v117 = vld [vmem:[%s2 + $0x1c8] sm:$0xff]
  %v118 = vld [vmem:[%s2 + $0x1d0] sm:$0xff]
  %v119 = vld [vmem:[%s2 + $0x1d8] sm:$0xff]
  %v120 = vld [vmem:[%s2 + $0x1e0] sm:$0xff]
  %v121 = vld [vmem:[%s2 + $0x1e8] sm:$0xff]
  %v122 = vld [vmem:[%s2 + $0x1f0] sm:$0xff]
  %v123 = vld [vmem:[%s2 + $0x1f8] sm:$0xff]
  %v124 = vld [vmem:[%s2 + $0x200] sm:$0xff]
  %v125 = vld [vmem:[%s2 + $0x208] sm:$0xff]
  %v126 = vld [vmem:[%s2 + $0x210] sm:$0xff]
  %v127 = vld [vmem:[%s2 + $0x218] sm:$0xff]
  %v128 = vld [vmem:[%s2 + $0x220] sm:$0xff]
  %v129 = vld [vmem:[%s2 + $0x228] sm:$0xff]
  %v130 = vld [vmem:[%s2 + $0x230] sm:$0xff]
  %v131 = vld [vmem:[%s2 + $0x238] sm:$0xff]
  %v132 = vld [vmem:[%s2 + $0x240] sm:$0xff]
  %v133 = vld [vmem:[%s2 + $0x248] sm:$0xff]
  %v134 = vld [vmem:[%s2 + $0x250] sm:$0xff]
  %v135 = vld [vmem:[%s2 + $0x258] sm:$0xff]
  %v136 = vld [vmem:[%s2 + $0x260] sm:$0xff]
  %v137 = vld [vmem:[%s2 + $0x268] sm:$0xff]
  %v138 = vld [vmem:[%s2 + $0x270] sm:$0xff]
  %v139 = vld [vmem:[%s2 + $0x278] sm:$0xff]
  %v140 = vld [vmem:[%s2 + $0x280] sm:$0xff]
  %v141 = vld [vmem:[%s2 + $0x288] sm:$0xff]
  %v142 = vld [vmem:[%s2 + $0x290] sm:$0xff]
  %v143 = vld [vmem:[%s2 + $0x298] sm:$0xff]
  %v144 = vld [vmem:[%s2 + $0x2a0] sm:$0xff]
  %v145 = vld [vmem:[%s2 + $0x2a8] sm:$0xff]
  %v146 = vld [vmem:[%s2 + $0x2b0] sm:$0xff]
  %v147 = vld [vmem:[%s2 + $0x2b8] sm:$0xff]
  %v148 = vld [vmem:[%s2 + $0x2c0] sm:$0xff]
  %v149 = vld [vmem:[%s2 + $0x2c8] sm:$0xff]
  %v150 = vld [vmem:[%s2 + $0x2d0] sm:$0xff]
  %v151 = vld [vmem:[%s2 + $0x2d8] sm:$0xff]
  %v152 = vld [vmem:[%s2 + $0x2e0] sm:$0xff]
  %v153 = vld [vmem:[%s2 + $0x2e8] sm:$0xff]
  %v154 = vld [vmem:[%s2 + $0x2f0] sm:$0xff]
  %v155 = vld [vmem:[%s2 + $0x2f8] sm:$0xff]
  %v156 = vld [vmem:[%s2 + $0x300] sm:$0xff]
  %v157 = vld [vmem:[%s2 + $0x308] sm:$0xff]
  %v158 = vld [vmem:[%s2 + $0x310] sm:$0xff]
  %v159 = vld [vmem:[%s2 + $0x318] sm:$0xff]
  %v160 = vld [vmem:[%s2 + $0x320] sm:$0xff]
  %v161 = vld [vmem:[%s2 + $0x328] sm:$0xff]
  %v162 = vld [vmem:[%s2 + $0x330] sm:$0xff]
  %v163 = vld [vmem:[%s2 + $0x338] sm:$0xff]
  %v164 = vld [vmem:[%s2 + $0x340] sm:$0xff]
  %v165 = vld [vmem:[%s2 + $0x348] sm:$0xff]
  %v166 = vld [vmem:[%s2 + $0x350] sm:$0xff]
  %v167 = vld [vmem:[%s2 + $0x358] sm:$0xff]
  %v168 = vld [vmem:[%s2 + $0x360] sm:$0xff]
  %v169 = vld [vmem:[%s2 + $0x368] sm:$0xff]
  %v170 = vld [vmem:[%s2 + $0x370] sm:$0xff]
  %v171 = vld [vmem:[%s2 + $0x378] sm:$0xff]
  %v172 = vld [vmem:[%s2 + $0x380] sm:$0xff]
  %v173 = vld [vmem:[%s2 + $0x388] sm:$0xff]
  %v174 = vld [vmem:[%s2 + $0x390] sm:$0xff]
  %v175 = vld [vmem:[%s2 + $0x398] sm:$0xff]
  %v176 = vld [vmem:[%s2 + $0x3a0] sm:$0xff]
  %v177 = vld [vmem:[%s2 + $0x3a8] sm:$0xff]
  %v178 = vld [vmem:[%s2 + $0x3b0] sm:$0xff]
  %v179 = vld [vmem:[%s2 + $0x3b8] sm:$0xff]
  %v180 = vld [vmem:[%s2 + $0x3c0] sm:$0xff]
  %v181 = vld [vmem:[%s2 + $0x3c8] sm:$0xff]
  %v182 = vld [vmem:[%s2 + $0x3d0] sm:$0xff]
  %v183 = vld [vmem:[%s2 + $0x3d8] sm:$0xff]
  %v184 = vld [vmem:[%s2 + $0x3e0] sm:$0xff]
  %v185 = vld [vmem:[%s2 + $0x3e8] sm:$0xff]
  %v186 = vld [vmem:[%s2 + $0x3f0] sm:$0xff]
  %v187 = vld [vmem:[%s2 + $0x3f8] sm:$0xff]
  %v188 = vld [vmem:[%s2 + $0x400] sm:$0xff]
  %v189 = vld [vmem:[%s2 + $0x408] sm:$0xff]
  %v190 = vld [vmem:[%s2 + $0x410] sm:$0xff]
  %v191 = vld [vmem:[%s2 + $0x418] sm:$0xff]
  %v192 = vld [vmem:[%s2 + $0x420] sm:$0xff]
  %v193 = vld [vmem:[%s2 + $0x428] sm:$0xff]
  %v194 = vld [vmem:[%s2 + $0x430] sm:$0xff]
  %v195 = vld [vmem:[%s2 + $0x438] sm:$0xff]
  %v196 = vld [vmem:[%s2 + $0x440] sm:$0xff]
  %v197 = vld [vmem:[%s2 + $0x448] sm:$0xff]
  %v198 = vld [vmem:[%s2 + $0x450] sm:$0xff]
  %v199 = vld [vmem:[%s2 + $0x458] sm:$0xff]
  %v200 = vld [vmem:[%s2 + $0x460] sm:$0xff]
  %v201 = vld [vmem:[%s2 + $0x468] sm:$0xff]
  %v202 = vld [vmem:[%s2 + $0x470] sm:$0xff]
  %v203 = vld [vmem:[%s2 + $0x478] sm:$0xff]
  %206 = vst [vmem:[#allocation1] ss:$4 sm:$0xff] %v57
  %s207 = scalar_lea.vmem [#allocation1], 32
  %208 = vst [vmem:[%s207] ss:$4 sm:$0xff] %v58
  %v209 = vld.sshfl [vmem:[#allocation1] sm:$0xff pattern:$0x73625140]
  %v210 = vld.sshfl [vmem:[#allocation1 + $0x8] sm:$0xff pattern:$0x73625140]
  %v211 = vld.sshfl [vmem:[#allocation1 + $0x10] sm:$0xff pattern:$0x73625140]
  %v212 = vld.sshfl [vmem:[#allocation1 + $0x18] sm:$0xff pattern:$0x73625140]
  %v213 = vld.sshfl [vmem:[#allocation1 + $0x20] sm:$0xff pattern:$0x73625140]
  %v219 = vpack.c.bf16 %v209, %v209
  %v220 = vpack.c.bf16 %v210, %v210
  %v221 = vpack.c.bf16 %v211, %v211
  %v222 = vpack.c.bf16 %v212, %v212
  %v223 = vpack.c.bf16 %v213, %v213
  %v224 = vpack.c.bf16 %v62, %v60
  %v225 = vpack.c.bf16 %v63, %v61
  %v226 = vpack.c.bf16 %v66, %v64
  %v227 = vpack.c.bf16 %v67, %v65
  %v228 = vpack.c.bf16 %v70, %v68
  %v229 = vpack.c.bf16 %v71, %v69
  %v230 = vpack.c.bf16 %v74, %v72
  %v231 = vpack.c.bf16 %v75, %v73
  %v232 = vpack.c.bf16 %v78, %v76
  %v233 = vpack.c.bf16 %v79, %v77
  %v234 = vpack.c.bf16 %v82, %v80
  %v235 = vpack.c.bf16 %v83, %v81
  %v236 = vpack.c.bf16 %v86, %v84
  %v237 = vpack.c.bf16 %v87, %v85
  %v238 = vpack.c.bf16 %v90, %v88
  %v239 = vpack.c.bf16 %v91, %v89
  %v240 = vpack.c.bf16 %v94, %v92
  %v241 = vpack.c.bf16 %v95, %v93
  %v242 = vpack.c.bf16 %v98, %v96
  %v243 = vpack.c.bf16 %v99, %v97
  %v244 = vpack.c.bf16 %v102, %v100
  %v245 = vpack.c.bf16 %v103, %v101
  %v246 = vpack.c.bf16 %v106, %v104
  %v247 = vpack.c.bf16 %v107, %v105
  %v248 = vpack.c.bf16 %v110, %v108
  %v249 = vpack.c.bf16 %v111, %v109
  %v250 = vpack.c.bf16 %v114, %v112
  %v251 = vpack.c.bf16 %v115, %v113
  %v252 = vpack.c.bf16 %v118, %v116
  %v253 = vpack.c.bf16 %v119, %v117
  %v254 = vpack.c.bf16 %v122, %v120
  %v255 = vpack.c.bf16 %v123, %v121
  %v256 = vpack.c.bf16 %v126, %v124
  %v257 = vpack.c.bf16 %v127, %v125
  %v258 = vpack.c.bf16 %v130, %v128
  %v259 = vpack.c.bf16 %v131, %v129
  %v260 = vpack.c.bf16 %v134, %v132
  %v261 = vpack.c.bf16 %v135, %v133
  %v262 = vpack.c.bf16 %v138, %v136
  %v263 = vpack.c.bf16 %v139, %v137
  %v264 = vpack.c.bf16 %v142, %v140
  %v265 = vpack.c.bf16 %v143, %v141
  %v266 = vpack.c.bf16 %v146, %v144
  %v267 = vpack.c.bf16 %v147, %v145
  %v268 = vpack.c.bf16 %v150, %v148
  %v269 = vpack.c.bf16 %v151, %v149
  %v270 = vpack.c.bf16 %v154, %v152
  %v271 = vpack.c.bf16 %v155, %v153
  %v272 = vpack.c.bf16 %v158, %v156
  %v273 = vpack.c.bf16 %v159, %v157
  %v274 = vpack.c.bf16 %v162, %v160
  %v275 = vpack.c.bf16 %v163, %v161
  %v276 = vpack.c.bf16 %v166, %v164
  %v277 = vpack.c.bf16 %v167, %v165
  %v278 = vpack.c.bf16 %v170, %v168
  %v279 = vpack.c.bf16 %v171, %v169
  %v280 = vpack.c.bf16 %v174, %v172
  %v281 = vpack.c.bf16 %v175, %v173
  %v282 = vpack.c.bf16 %v178, %v176
  %v283 = vpack.c.bf16 %v179, %v177
  %v284 = vpack.c.bf16 %v182, %v180
  %v285 = vpack.c.bf16 %v183, %v181
  %v286 = vpack.c.bf16 %v186, %v184
  %v287 = vpack.c.bf16 %v187, %v185
  %v288 = vpack.c.bf16 %v190, %v188
  %v289 = vpack.c.bf16 %v191, %v189
  %v290 = vpack.c.bf16 %v194, %v192
  %v291 = vpack.c.bf16 %v195, %v193
  %v292 = vpack.c.bf16 %v198, %v196
  %v293 = vpack.c.bf16 %v199, %v197
  %v294 = vpack.c.bf16 %v202, %v200
  %v295 = vpack.c.bf16 %v203, %v201
  %v296 = vld [vmem:[%s3] sm:$0x3]
  %v298 = vperm.slane %v296, 0
  %v299 = vperm.slane %v296, 1
  %vm302 = vcmask 523264
  %v304 = vsel %vm302, %v223, 0
  %306 = vmatpush.bf16.msra.mxu0 %v238
  %307 = vmatpush.bf16.msra.mxu0 %v236
  %308 = vmatpush.bf16.msra.mxu0 %v234
  %309 = vmatpush.bf16.msra.mxu0 %v232
  %310 = vmatpush.bf16.msra.mxu0 %v230
  %311 = vmatpush.bf16.msra.mxu0 %v228
  %312 = vmatpush.bf16.msra.mxu0 %v226
  %313 = vmatpush.bf16.msra.mxu0 %v224
  %314 = vmatmul.bf16.gmra.mxu0 %v219
  %v315 = vpop.f32.mrf.mxu0
  %v316 = vadd.f32 %v298, %v315
  %v317 = vpop.f32.mrf.mxu0
  %318 = vdwg.mxu0
  %319 = vmatpush.bf16.msra.mxu0 %v254
  %320 = vmatpush.bf16.msra.mxu0 %v252
  %321 = vmatpush.bf16.msra.mxu0 %v250
  %322 = vmatpush.bf16.msra.mxu0 %v248
  %323 = vmatpush.bf16.msra.mxu0 %v246
  %324 = vmatpush.bf16.msra.mxu0 %v244
  %325 = vmatpush.bf16.msra.mxu0 %v242
  %326 = vmatpush.bf16.msra.mxu0 %v240
  %327 = vmatmul.bf16.gmra.mxu0 %v220
  %v328 = vpop.f32.mrf.mxu0
  %v329 = vadd.f32 %v316, %v328
  %v330 = vpop.f32.mrf.mxu0
  %331 = vdwg.mxu0
  %332 = vmatpush.bf16.msra.mxu0 %v270
  %333 = vmatpush.bf16.msra.mxu0 %v268
  %334 = vmatpush.bf16.msra.mxu0 %v266
  %335 = vmatpush.bf16.msra.mxu0 %v264
  %336 = vmatpush.bf16.msra.mxu0 %v262
  %337 = vmatpush.bf16.msra.mxu0 %v260
  %338 = vmatpush.bf16.msra.mxu0 %v258
  %339 = vmatpush.bf16.msra.mxu0 %v256
  %340 = vmatmul.bf16.gmra.mxu0 %v221
  %v341 = vpop.f32.mrf.mxu0
  %v342 = vadd.f32 %v329, %v341
  %v343 = vpop.f32.mrf.mxu0
  %344 = vdwg.mxu0
  %345 = vmatpush.bf16.msra.mxu0 %v286
  %346 = vmatpush.bf16.msra.mxu0 %v284
  %347 = vmatpush.bf16.msra.mxu0 %v282
  %348 = vmatpush.bf16.msra.mxu0 %v280
  %349 = vmatpush.bf16.msra.mxu0 %v278
  %350 = vmatpush.bf16.msra.mxu0 %v276
  %351 = vmatpush.bf16.msra.mxu0 %v274
  %352 = vmatpush.bf16.msra.mxu0 %v272
  %353 = vmatmul.bf16.gmra.mxu0 %v222
  %v354 = vpop.f32.mrf.mxu0
  %v355 = vadd.f32 %v342, %v354
  %v356 = vpop.f32.mrf.mxu0
  %357 = vdwg.mxu0
  %358 = vmatpush.bf16.msra.mxu0 0
  %359 = vmatpush.bf16.msra.mxu0 0
  %360 = vmatpush.bf16.msra.mxu0 0
  %361 = vmatpush.bf16.msra.mxu0 0
  %362 = vmatpush.bf16.msra.mxu0 %v294
  %363 = vmatpush.bf16.msra.mxu0 %v292
  %364 = vmatpush.bf16.msra.mxu0 %v290
  %365 = vmatpush.bf16.msra.mxu0 %v288
  %366 = vmatmul.bf16.gmra.mxu0 %v304
  %v367 = vpop.f32.mrf.mxu0
  %v368 = vadd.f32 %v355, %v367
  %v369 = vpop.f32.mrf.mxu0
  %370 = vdwg.mxu0
  %371 = vmatpush.bf16.msra.mxu0 %v239
  %372 = vmatpush.bf16.msra.mxu0 %v237
  %373 = vmatpush.bf16.msra.mxu0 %v235
  %374 = vmatpush.bf16.msra.mxu0 %v233
  %375 = vmatpush.bf16.msra.mxu0 %v231
  %376 = vmatpush.bf16.msra.mxu0 %v229
  %377 = vmatpush.bf16.msra.mxu0 %v227
  %378 = vmatpush.bf16.msra.mxu0 %v225
  %379 = vmatmul.bf16.gmra.mxu0 %v219
  %v380 = vpop.f32.mrf.mxu0
  %v381 = vadd.f32 %v299, %v380
  %v382 = vpop.f32.mrf.mxu0
  %383 = vdwg.mxu0
  %384 = vmatpush.bf16.msra.mxu0 %v255
  %385 = vmatpush.bf16.msra.mxu0 %v253
  %386 = vmatpush.bf16.msra.mxu0 %v251
  %387 = vmatpush.bf16.msra.mxu0 %v249
  %388 = vmatpush.bf16.msra.mxu0 %v247
  %389 = vmatpush.bf16.msra.mxu0 %v245
  %390 = vmatpush.bf16.msra.mxu0 %v243
  %391 = vmatpush.bf16.msra.mxu0 %v241
  %392 = vmatmul.bf16.gmra.mxu0 %v220
  %v393 = vpop.f32.mrf.mxu0
  %v394 = vadd.f32 %v381, %v393
  %v395 = vpop.f32.mrf.mxu0
  %396 = vdwg.mxu0
  %397 = vmatpush.bf16.msra.mxu0 %v271
  %398 = vmatpush.bf16.msra.mxu0 %v269
  %399 = vmatpush.bf16.msra.mxu0 %v267
  %400 = vmatpush.bf16.msra.mxu0 %v265
  %401 = vmatpush.bf16.msra.mxu0 %v263
  %402 = vmatpush.bf16.msra.mxu0 %v261
  %403 = vmatpush.bf16.msra.mxu0 %v259
  %404 = vmatpush.bf16.msra.mxu0 %v257
  %405 = vmatmul.bf16.gmra.mxu0 %v221
  %v406 = vpop.f32.mrf.mxu0
  %v407 = vadd.f32 %v394, %v406
  %v408 = vpop.f32.mrf.mxu0
  %409 = vdwg.mxu0
  %410 = vmatpush.bf16.msra.mxu0 %v287
  %411 = vmatpush.bf16.msra.mxu0 %v285
  %412 = vmatpush.bf16.msra.mxu0 %v283
  %413 = vmatpush.bf16.msra.mxu0 %v281
  %414 = vmatpush.bf16.msra.mxu0 %v279
  %415 = vmatpush.bf16.msra.mxu0 %v277
  %416 = vmatpush.bf16.msra.mxu0 %v275
  %417 = vmatpush.bf16.msra.mxu0 %v273
  %418 = vmatmul.bf16.gmra.mxu0 %v222
  %v419 = vpop.f32.mrf.mxu0
  %v420 = vadd.f32 %v407, %v419
  %v421 = vpop.f32.mrf.mxu0
  %422 = vdwg.mxu0
  %423 = vmatpush.bf16.msra.mxu0 0
  %424 = vmatpush.bf16.msra.mxu0 0
  %425 = vmatpush.bf16.msra.mxu0 0
  %426 = vmatpush.bf16.msra.mxu0 0
  %427 = vmatpush.bf16.msra.mxu0 %v295
  %428 = vmatpush.bf16.msra.mxu0 %v293
  %429 = vmatpush.bf16.msra.mxu0 %v291
  %430 = vmatpush.bf16.msra.mxu0 %v289
  %431 = vmatmul.bf16.gmra.mxu0 %v304
  %v432 = vpop.f32.mrf.mxu0
  %v433 = vadd.f32 %v420, %v432
  %v434 = vpop.f32.mrf.mxu0
  %435 = vdwg.mxu0
  %v436 = vld [vmem:[%s4] sm:$0x3]
  %v437 = vld [vmem:[%s5] sm:$0x3]
  %vm438 = vcmask 1041408
  %v439 = vsel %vm438, %v368, 0.0
  %v440 = vrot.slane %v439, 4
  %v441 = vadd.f32 %v439, %v440
  %v442 = vrot.slane %v441, 2
  %v443 = vadd.f32 %v441, %v442
  %v444 = vrot.slane %v443, 1
  %v445 = vadd.f32 %v443, %v444
  %v446 = vsel %vm438, %v433, 0.0
  %v447 = vrot.slane %v446, 4
  %v448 = vadd.f32 %v446, %v447
  %v449 = vrot.slane %v448, 2
  %v450 = vadd.f32 %v448, %v449
  %v451 = vrot.slane %v450, 1
  %v452 = vadd.f32 %v450, %v451
  %v453 = vrcp.pop 2.0
  %v454 = vmul.f32 2.0, %v453
  %v455 = vsub.f32 1.0, %v454
  %v456 = vmul.f32 %v453, %v455
  %v457 = vadd.f32 %v453, %v456
  %vm458 = vweird.f32 %v453
  %v459 = vsel %vm458, %v453, %v457
  %v460 = vmul.f32 %v445, %v459
  %v461 = vmul.f32 %v452, %v459
  %v462 = vmul.f32 %v368, %v368
  %v463 = vmul.f32 %v433, %v433
  %v464 = vsel %vm438, %v462, 0.0
  %v465 = vrot.slane %v464, 4
  %v466 = vadd.f32 %v464, %v465
  %v467 = vrot.slane %v466, 2
  %v468 = vadd.f32 %v466, %v467
  %v469 = vrot.slane %v468, 1
  %v470 = vadd.f32 %v468, %v469
  %v471 = vsel %vm438, %v463, 0.0
  %v472 = vrot.slane %v471, 4
  %v473 = vadd.f32 %v471, %v472
  %v474 = vrot.slane %v473, 2
  %v475 = vadd.f32 %v473, %v474
  %v476 = vrot.slane %v475, 1
  %v477 = vadd.f32 %v475, %v476
  %v478 = vmul.f32 %v470, %v459
  %v479 = vmul.f32 %v477, %v459
  %v480 = vmul.f32 %v460, %v460
  %v481 = vmul.f32 %v461, %v461
  %v482 = vsub.f32 %v478, %v480
  %v483 = vsub.f32 %v479, %v481
  %v484 = vadd.f32 %v482, 1e-05
  %v485 = vadd.f32 %v483, 1e-05
  %v486 = vrsqrt.pop %v484
  %v487 = vmul.f32 %v486, %v484
  %v488 = vmul.f32 %v487, %v486
  %v489 = vmul.f32 0.5, %v488
  %v490 = vsub.f32 1.5, %v489
  %v491 = vmul.f32 %v486, %v490
  %vm492 = vweird.f32 %v484
  %vm493 = vweird.f32 %v486
  %vm494 = vmor %vm492, %vm493
  %v495 = vsel %vm494, %v486, %v491
  %v496 = vrsqrt.pop %v485
  %v497 = vmul.f32 %v496, %v485
  %v498 = vmul.f32 %v497, %v496
  %v499 = vmul.f32 0.5, %v498
  %v500 = vsub.f32 1.5, %v499
  %v501 = vmul.f32 %v496, %v500
  %vm502 = vweird.f32 %v485
  %vm503 = vweird.f32 %v496
  %vm504 = vmor %vm502, %vm503
  %v505 = vsel %vm504, %v496, %v501
  %v508 = vrot.slane %v505, 7
  %vm509 = vcmask 1040384
  %v510 = vsel %vm509, %v495, %v508
  %v512 = vmul.f32 %v436, %v510
  %v514 = vperm.slane %v512, 0
  %v515 = vperm.slane %v512, 1
  %v518 = vmul.f32 %v368, %v514
  %v519 = vmul.f32 %v433, %v515
  %v520 = vmul.f32 %v460, %v514
  %v521 = vmul.f32 %v461, %v515
  %v524 = vrot.slane %v521, 7
  %v525 = vsel %vm509, %v520, %v524
  %v527 = vsub.f32 %v437, %v525
  %v529 = vperm.slane %v527, 0
  %v530 = vperm.slane %v527, 1
  %v533 = vadd.f32 %v518, %v529
  %v534 = vadd.f32 %v519, %v530
  %v535 = vmax.f32 %v533, 0.0
  %v536 = vmax.f32 %v534, 0.0
  %v537 = vld [vmem:[%s6] sm:$0xff]
  %v538 = vld [vmem:[%s6 + $0x8] sm:$0xff]
  %v539 = vld [vmem:[%s6 + $0x10] sm:$0xff]
  %v540 = vld [vmem:[%s6 + $0x18] sm:$0xff]
  %v541 = vld [vmem:[%s6 + $0x20] sm:$0xff]
  %v542 = vld [vmem:[%s6 + $0x28] sm:$0xff]
  %v543 = vld [vmem:[%s6 + $0x30] sm:$0xff]
  %v544 = vld [vmem:[%s6 + $0x38] sm:$0xff]
  %v545 = vld [vmem:[%s6 + $0x40] sm:$0xff]
  %v546 = vld [vmem:[%s6 + $0x48] sm:$0xff]
  %v547 = vld [vmem:[%s6 + $0x50] sm:$0xff]
  %v548 = vld [vmem:[%s6 + $0x58] sm:$0xff]
  %v549 = vld [vmem:[%s6 + $0x60] sm:$0xff]
  %v550 = vld [vmem:[%s6 + $0x68] sm:$0xff]
  %v551 = vld [vmem:[%s6 + $0x70] sm:$0xff]
  %v552 = vld [vmem:[%s6 + $0x78] sm:$0xff]
  %v553 = vld [vmem:[%s6 + $0x80] sm:$0xff]
  %v554 = vld [vmem:[%s6 + $0x88] sm:$0xff]
  %v555 = vld [vmem:[%s6 + $0x90] sm:$0xff]
  %v556 = vld [vmem:[%s6 + $0x98] sm:$0xff]
  %v557 = vld [vmem:[%s6 + $0xa0] sm:$0xff]
  %v558 = vld [vmem:[%s6 + $0xa8] sm:$0xff]
  %v559 = vld [vmem:[%s6 + $0xb0] sm:$0xff]
  %v560 = vld [vmem:[%s6 + $0xb8] sm:$0xff]
  %v561 = vld [vmem:[%s6 + $0xc0] sm:$0xff]
  %v562 = vld [vmem:[%s6 + $0xc8] sm:$0xff]
  %v563 = vld [vmem:[%s6 + $0xd0] sm:$0xff]
  %v564 = vld [vmem:[%s6 + $0xd8] sm:$0xff]
  %v565 = vld [vmem:[%s6 + $0xe0] sm:$0xff]
  %v566 = vld [vmem:[%s6 + $0xe8] sm:$0xff]
  %v567 = vld [vmem:[%s6 + $0xf0] sm:$0xff]
  %v568 = vld [vmem:[%s6 + $0xf8] sm:$0xff]
  %v569 = vpack.c.bf16 %v535, %v535
  %v570 = vpack.c.bf16 %v536, %v536
  %v571 = vpack.c.bf16 %v538, %v537
  %v572 = vpack.c.bf16 %v540, %v539
  %v573 = vpack.c.bf16 %v542, %v541
  %v574 = vpack.c.bf16 %v544, %v543
  %v575 = vpack.c.bf16 %v546, %v545
  %v576 = vpack.c.bf16 %v548, %v547
  %v577 = vpack.c.bf16 %v550, %v549
  %v578 = vpack.c.bf16 %v552, %v551
  %v579 = vpack.c.bf16 %v554, %v553
  %v580 = vpack.c.bf16 %v556, %v555
  %v581 = vpack.c.bf16 %v558, %v557
  %v582 = vpack.c.bf16 %v560, %v559
  %v583 = vpack.c.bf16 %v562, %v561
  %v584 = vpack.c.bf16 %v564, %v563
  %v585 = vpack.c.bf16 %v566, %v565
  %v586 = vpack.c.bf16 %v568, %v567
  %v587 = vld [vmem:[%s7] sm:$0x1]
  %v589 = vperm.slane %v587, 0
  %591 = vmatpush.bf16.msra.mxu0 %v578
  %592 = vmatpush.bf16.msra.mxu0 %v577
  %593 = vmatpush.bf16.msra.mxu0 %v576
  %594 = vmatpush.bf16.msra.mxu0 %v575
  %595 = vmatpush.bf16.msra.mxu0 %v574
  %596 = vmatpush.bf16.msra.mxu0 %v573
  %597 = vmatpush.bf16.msra.mxu0 %v572
  %598 = vmatpush.bf16.msra.mxu0 %v571
  %599 = vmatmul.bf16.gmra.mxu0 %v569
  %v600 = vpop.f32.mrf.mxu0
  %v601 = vadd.f32 %v589, %v600
  %v602 = vpop.f32.mrf.mxu0
  %603 = vdwg.mxu0
  %604 = vmatpush.bf16.msra.mxu0 %v586
  %605 = vmatpush.bf16.msra.mxu0 %v585
  %606 = vmatpush.bf16.msra.mxu0 %v584
  %607 = vmatpush.bf16.msra.mxu0 %v583
  %608 = vmatpush.bf16.msra.mxu0 %v582
  %609 = vmatpush.bf16.msra.mxu0 %v581
  %610 = vmatpush.bf16.msra.mxu0 %v580
  %611 = vmatpush.bf16.msra.mxu0 %v579
  %612 = vmatmul.bf16.gmra.mxu0 %v570
  %v613 = vpop.f32.mrf.mxu0
  %v614 = vadd.f32 %v601, %v613
  %v615 = vpop.f32.mrf.mxu0
  %616 = vdwg.mxu0
  %v617 = vld [vmem:[%s8] sm:$0x1]
  %v618 = vld [vmem:[%s9] sm:$0x1]
  %v619 = vsel %vm438, %v614, 0.0
  %v620 = vrot.slane %v619, 4
  %v621 = vadd.f32 %v619, %v620
  %v622 = vrot.slane %v621, 2
  %v623 = vadd.f32 %v621, %v622
  %v624 = vrot.slane %v623, 1
  %v625 = vadd.f32 %v623, %v624
  %v626 = vmul.f32 %v625, %v459
  %v627 = vmul.f32 %v614, %v614
  %v628 = vsel %vm438, %v627, 0.0
  %v629 = vrot.slane %v628, 4
  %v630 = vadd.f32 %v628, %v629
  %v631 = vrot.slane %v630, 2
  %v632 = vadd.f32 %v630, %v631
  %v633 = vrot.slane %v632, 1
  %v634 = vadd.f32 %v632, %v633
  %v635 = vmul.f32 %v634, %v459
  %v636 = vmul.f32 %v626, %v626
  %v637 = vsub.f32 %v635, %v636
  %v638 = vadd.f32 %v637, 1e-05
  %v639 = vrsqrt.pop %v638
  %v640 = vmul.f32 %v639, %v638
  %v641 = vmul.f32 %v640, %v639
  %v642 = vmul.f32 0.5, %v641
  %v643 = vsub.f32 1.5, %v642
  %v644 = vmul.f32 %v639, %v643
  %vm645 = vweird.f32 %v638
  %vm646 = vweird.f32 %v639
  %vm647 = vmor %vm645, %vm646
  %v648 = vsel %vm647, %v639, %v644
  %v649 = vmul.f32 %v617, %v648
  %v651 = vperm.slane %v649, 0
  %v653 = vmul.f32 %v614, %v651
  %v654 = vmul.f32 %v626, %v649
  %v655 = vsub.f32 %v618, %v654
  %v657 = vperm.slane %v655, 0
  %v659 = vadd.f32 %v653, %v657
  %v660 = vmax.f32 %v659, 0.0
  %v661 = vld [vmem:[%s10] sm:$0xff]
  %v662 = vld [vmem:[%s10 + $0x8] sm:$0xff]
  %v663 = vld [vmem:[%s10 + $0x10] sm:$0xff]
  %v664 = vld [vmem:[%s10 + $0x18] sm:$0xff]
  %v665 = vld [vmem:[%s10 + $0x20] sm:$0xff]
  %v666 = vld [vmem:[%s10 + $0x28] sm:$0xff]
  %v667 = vld [vmem:[%s10 + $0x30] sm:$0xff]
  %v668 = vld [vmem:[%s10 + $0x38] sm:$0xff]
  %v669 = vld [vmem:[%s10 + $0x40] sm:$0xff]
  %v670 = vld [vmem:[%s10 + $0x48] sm:$0xff]
  %v671 = vld [vmem:[%s10 + $0x50] sm:$0xff]
  %v672 = vld [vmem:[%s10 + $0x58] sm:$0xff]
  %v673 = vld [vmem:[%s10 + $0x60] sm:$0xff]
  %v674 = vld [vmem:[%s10 + $0x68] sm:$0xff]
  %v675 = vld [vmem:[%s10 + $0x70] sm:$0xff]
  %v676 = vld [vmem:[%s10 + $0x78] sm:$0xff]
  %v677 = vpack.c.bf16 %v660, %v660
  %v678 = vpack.c.bf16 %v662, %v661
  %v679 = vpack.c.bf16 %v664, %v663
  %v680 = vpack.c.bf16 %v666, %v665
  %v681 = vpack.c.bf16 %v668, %v667
  %v682 = vpack.c.bf16 %v670, %v669
  %v683 = vpack.c.bf16 %v672, %v671
  %v684 = vpack.c.bf16 %v674, %v673
  %v685 = vpack.c.bf16 %v676, %v675
  %v686 = vld [vmem:[%s11] sm:$0xff]
  %v687 = vld [vmem:[%s11 + $0x8] sm:$0xff]
  %v688 = vpack.c.bf16 %v59, %v59
  %v689 = vpack.c.bf16 %v687, %v686
  %vm690 = vcmask 130048
  %v692 = vsel %vm690, %v688, 0
  %694 = vmatpush.bf16.msra.mxu0 0
  %695 = vmatpush.bf16.msra.mxu0 0
  %696 = vmatpush.bf16.msra.mxu0 0
  %697 = vmatpush.bf16.msra.mxu0 0
  %698 = vmatpush.bf16.msra.mxu0 0
  %699 = vmatpush.bf16.msra.mxu0 0
  %700 = vmatpush.bf16.msra.mxu0 0
  %701 = vmatpush.bf16.msra.mxu0 %v689
  %702 = vmatmul.bf16.gmra.mxu0 %v692
  %v703 = vpop.f32.mrf.mxu0
  %v704 = vadd.f32 0.0, %v703
  %v705 = vpop.f32.mrf.mxu0
  %706 = vdwg.mxu0
  %707 = vmatpush.bf16.msra.mxu0 %v685
  %708 = vmatpush.bf16.msra.mxu0 %v684
  %709 = vmatpush.bf16.msra.mxu0 %v683
  %710 = vmatpush.bf16.msra.mxu0 %v682
  %711 = vmatpush.bf16.msra.mxu0 %v681
  %712 = vmatpush.bf16.msra.mxu0 %v680
  %713 = vmatpush.bf16.msra.mxu0 %v679
  %714 = vmatpush.bf16.msra.mxu0 %v678
  %715 = vmatmul.bf16.gmra.mxu0 %v677
  %v716 = vpop.f32.mrf.mxu0
  %v717 = vadd.f32 %v704, %v716
  %v718 = vpop.f32.mrf.mxu0
  %719 = vdwg.mxu0
  %v720 = vld [vmem:[%s12] sm:$0x1]
  %v722 = vperm.slane %v720, 0
  %v724 = vadd.f32 %v717, %v722
  %v725 = vld [vmem:[%s13] sm:$0x1]
  %v726 = vld [vmem:[%s14] sm:$0x1]
  %v727 = vsel %vm438, %v724, 0.0
  %v728 = vrot.slane %v727, 4
  %v729 = vadd.f32 %v727, %v728
  %v730 = vrot.slane %v729, 2
  %v731 = vadd.f32 %v729, %v730
  %v732 = vrot.slane %v731, 1
  %v733 = vadd.f32 %v731, %v732
  %v734 = vmul.f32 %v733, %v459
  %v735 = vmul.f32 %v724, %v724
  %v736 = vsel %vm438, %v735, 0.0
  %v737 = vrot.slane %v736, 4
  %v738 = vadd.f32 %v736, %v737
  %v739 = vrot.slane %v738, 2
  %v740 = vadd.f32 %v738, %v739
  %v741 = vrot.slane %v740, 1
  %v742 = vadd.f32 %v740, %v741
  %v743 = vmul.f32 %v742, %v459
  %v744 = vmul.f32 %v734, %v734
  %v745 = vsub.f32 %v743, %v744
  %v746 = vadd.f32 %v745, 1e-05
  %v747 = vrsqrt.pop %v746
  %v748 = vmul.f32 %v747, %v746
  %v749 = vmul.f32 %v748, %v747
  %v750 = vmul.f32 0.5, %v749
  %v751 = vsub.f32 1.5, %v750
  %v752 = vmul.f32 %v747, %v751
  %vm753 = vweird.f32 %v746
  %vm754 = vweird.f32 %v747
  %vm755 = vmor %vm753, %vm754
  %v756 = vsel %vm755, %v747, %v752
  %v757 = vmul.f32 %v725, %v756
  %v759 = vperm.slane %v757, 0
  %v761 = vmul.f32 %v724, %v759
  %v762 = vmul.f32 %v734, %v757
  %v763 = vsub.f32 %v726, %v762
  %v765 = vperm.slane %v763, 0
  %v767 = vadd.f32 %v761, %v765
  %v768 = vmax.f32 %v767, 0.0
  %v769 = vld [vmem:[%s15] sm:$0xff]
  %v770 = vld [vmem:[%s15 + $0x8] sm:$0xff]
  %v771 = vld [vmem:[%s15 + $0x10] sm:$0xff]
  %v772 = vld [vmem:[%s15 + $0x18] sm:$0xff]
  %v773 = vld [vmem:[%s15 + $0x20] sm:$0xff]
  %v774 = vld [vmem:[%s15 + $0x28] sm:$0xff]
  %v775 = vld [vmem:[%s15 + $0x30] sm:$0xff]
  %v776 = vld [vmem:[%s15 + $0x38] sm:$0xff]
  %v777 = vld [vmem:[%s15 + $0x40] sm:$0xff]
  %v778 = vld [vmem:[%s15 + $0x48] sm:$0xff]
  %v779 = vld [vmem:[%s15 + $0x50] sm:$0xff]
  %v780 = vld [vmem:[%s15 + $0x58] sm:$0xff]
  %v781 = vld [vmem:[%s15 + $0x60] sm:$0xff]
  %v782 = vld [vmem:[%s15 + $0x68] sm:$0xff]
  %v783 = vld [vmem:[%s15 + $0x70] sm:$0xff]
  %v784 = vld [vmem:[%s15 + $0x78] sm:$0xff]
  %v785 = vpack.c.bf16 %v768, %v768
  %v786 = vpack.c.bf16 %v770, %v769
  %v787 = vpack.c.bf16 %v772, %v771
  %v788 = vpack.c.bf16 %v774, %v773
  %v789 = vpack.c.bf16 %v776, %v775
  %v790 = vpack.c.bf16 %v778, %v777
  %v791 = vpack.c.bf16 %v780, %v779
  %v792 = vpack.c.bf16 %v782, %v781
  %v793 = vpack.c.bf16 %v784, %v783
  %v794 = vld [vmem:[%s16] sm:$0x1]
  %v796 = vperm.slane %v794, 0
  %798 = vmatpush.bf16.msra.mxu0 %v793
  %799 = vmatpush.bf16.msra.mxu0 %v792
  %800 = vmatpush.bf16.msra.mxu0 %v791
  %801 = vmatpush.bf16.msra.mxu0 %v790
  %802 = vmatpush.bf16.msra.mxu0 %v789
  %803 = vmatpush.bf16.msra.mxu0 %v788
  %804 = vmatpush.bf16.msra.mxu0 %v787
  %805 = vmatpush.bf16.msra.mxu0 %v786
  %806 = vmatmul.bf16.gmra.mxu0 %v785
  %v807 = vpop.f32.mrf.mxu0
  %v808 = vadd.f32 %v796, %v807
  %v809 = vpop.f32.mrf.mxu0
  %810 = vdwg.mxu0
  %vm811 = vcmask 254976
  %812 = vst.msk [vmem:[%s17] sm:$0x3] %vm811, %v808
  // Predicated region
  $region70: #{cvae_forward.10} parent=0 // pred_check
    _
  $region71: #{cvae_forward.10} parent=0 // pred_check_branch
    %814 = sbr.rel (0) target = $region73
  $region72: #{cvae_forward.10} parent=0 // pred_region
    _
  $region73: #{cvae_forward.10} parent=0 // pred_fallthru
    _
  // Predicated region
  $region74: #{cvae_forward.10} parent=0 // pred_check
    _
  $region75: #{cvae_forward.10} parent=0 // pred_check_branch
    %816 = sbr.rel (0) target = $region77
  $region76: #{cvae_forward.10} parent=0 // pred_region
    _
  $region77: #{cvae_forward.10} parent=0 // pred_fallthru
    _

</llo_original>
